<compile_context>
chip_gen: v5e
topology: v5e:2x2
jax: 0.10.0
libtpu: 0.0.40
codegen_flags: <defaults>
</compile_context>

<pallas_src>
import numpy as np
import jax
import jax.numpy as jnp
from jax.experimental import pallas as pl
from jax.experimental.pallas import tpu as pltpu

# ----------------------------- model dimensions ----------------------------------
H = 24            # hidden_lstm
HA = 24           # hidden_attention
HD = 64           # hidden_dense
E_PEP = 20        # pep_embed_dim
E_WV = 16         # cdr3a_wv / cdr3b_wv embedding dim (synthetic word vectors)
E_PAD = 20        # per-run embedding width, padded
BATCH = 2         # true batch size
BP = 8            # batch padded to one full sublane tile

PEP_IDX = np.arange(0, 9)
CDR3A_IDX = np.arange(24, 39)
CDR3B_IDX = np.arange(52, 69)

SEQ_INFO = {                      # name -> (column indices, embedding dim)
    'pep':   (PEP_IDX,   E_PEP),
    'cdr3a': (CDR3A_IDX, E_WV),
    'cdr3b': (CDR3B_IDX, E_WV),
}
# Run order == torch.cat order: [cdr3a_f, cdr3a_r, cdr3b_f, cdr3b_r, pep_f, pep_r]
RUN_DEFS = [('cdr3a', 'f'), ('cdr3a', 'r'), ('cdr3b', 'f'), ('cdr3b', 'r'),
            ('pep', 'f'), ('pep', 'r')]
R = len(RUN_DEFS)                 # 6 runs
RH = R * H                        # 144: lane-packed hidden width
RA = R * HA                       # 144: lane-packed attention width
RE = R * E_PAD                    # 120: lane-packed embedding width
GS = 256                          # lane stride per fused LSTM gate block (128-aligned, >= RH)
L_MAX = max(len(SEQ_INFO[n][0]) for n, _ in RUN_DEFS)   # 17
LB = L_MAX * BP                   # 136 flattened (time, batch) rows; row = t*BP + b


def _sigmoid(x):
    # approx EUP reciprocal keeps the divide off the exact-divide/Newton path.
    return pl.reciprocal(1.0 + jnp.exp(-x), approx=True)


# --------------------------------------------------------------------------------
# The single fused kernel.
# --------------------------------------------------------------------------------
def fused_net_kernel(emb_ref,                      # (LB, RE)  time-flattened, lane-packed embeddings
                     wih_ref, whh_ref, b_ref,      # (RE,4GS),(RH,4GS),(1,4GS) fused-gate block-diag LSTM
                     wk_ref, bk_ref, q_ref,        # (RH,RA),(1,RA),(1,RA)     block-diag attention
                     ones_ref,                     # (RA,RH)  block-ones: segment-sum + replicate
                     attb_ref,                     # (LB,RH)  additive softmax mask (-1e30 at pad steps)
                     w1_ref, b1_ref, w2_ref, b2_ref,
                     out_ref,                      # (BP, 1)
                     xp_ref, hs_ref, e_ref):       # scratch: (LB,4GS),(LB,RH),(LB,RH)

    # ---- Phase 1 (hoisted, off the serial chain): input projection + bias for all
    # runs, all timesteps at once.  One matmul per gate block: each wih column block
    # streams through the MXU exactly once with all 136 M rows (full sublane fill).
    emb = emb_ref[...]                                            # (LB, RE)
    for g in range(4):                                            # static unroll (4 gate blocks)
        cs = g * GS
        xp_ref[:, pl.ds(cs, GS)] = (
            jnp.dot(emb, wih_ref[:, pl.ds(cs, GS)],
                    preferred_element_type=jnp.float32)
            + b_ref[:, pl.ds(cs, GS)])

    # ---- Phase 2: fused 6-run bi-LSTM recurrence.  One block-diagonal
    # (BP,144)x(144,1024) matmul per step is the only thing on the serial chain;
    # gate blocks start at 128-aligned lanes, xp/hs slices are aligned (8,*) tiles.
    # Fully unrolled (L_MAX = 17, static) for cross-step scheduling visibility.
    whh = whh_ref[...]
    h = jnp.zeros((BP, RH), jnp.float32)
    c = jnp.zeros((BP, RH), jnp.float32)
    for t in range(L_MAX):                                        # static unroll
        row = t * BP
        gates = xp_ref[pl.ds(row, BP), :] + jnp.dot(
            h, whh, preferred_element_type=jnp.float32)           # bias already in xp
        i_g = _sigmoid(gates[:, 0 * GS:0 * GS + RH])
        f_g = _sigmoid(gates[:, 1 * GS:1 * GS + RH])
        g_g = jnp.tanh(gates[:, 2 * GS:2 * GS + RH])
        o_g = _sigmoid(gates[:, 3 * GS:3 * GS + RH])
        c = f_g * c + i_g * g_g
        h = o_g * jnp.tanh(c)
        hs_ref[pl.ds(row, BP), :] = h

    # ---- Phase 3 (hoisted): attention projection for all runs & timesteps as TWO
    # big matmuls (weights streamed once).  The block-ones matmul does the per-run
    # lane reduction + broadcast; the softmax mask is folded into the e write.
    k = jnp.tanh(jnp.dot(hs_ref[...], wk_ref[...],
                         preferred_element_type=jnp.float32) + bk_ref[...])
    e_ref[...] = (jnp.dot(k * q_ref[...], ones_ref[...],
                          preferred_element_type=jnp.float32)
                  + attb_ref[...])                                # pad steps -> -1e30

    # ---- Phase 4: masked softmax over time + attention pooling -> (BP, 144) feature
    # slab in torch.cat lane order; dense head in place.  All slices are aligned
    # (8,144) tiles; softmax divide replaced by an approx EUP reciprocal.
    m = e_ref[pl.ds(0, BP), :]
    for t in range(1, L_MAX):                                     # static unroll
        m = jnp.maximum(m, e_ref[pl.ds(t * BP, BP), :])
    s = jnp.zeros((BP, RH), jnp.float32)
    acc = jnp.zeros((BP, RH), jnp.float32)
    for t in range(L_MAX):                                        # static unroll
        row = t * BP
        p = jnp.exp(e_ref[pl.ds(row, BP), :] - m)
        s = s + p
        acc = acc + p * hs_ref[pl.ds(row, BP), :]
    feats = acc * pl.reciprocal(s, approx=True)                   # (BP, RH)

    h1 = jnp.maximum(
        jnp.dot(feats, w1_ref[...], preferred_element_type=jnp.float32) + b1_ref[...], 0.0)
    logit = jnp.dot(h1, w2_ref[...], preferred_element_type=jnp.float32) + b2_ref[...]
    out_ref[...] = _sigmoid(logit)


def fused_forward(emb_flat, pp):
    vmem = pl.BlockSpec(memory_space=pltpu.MemorySpace.VMEM)
    return pl.pallas_call(
        fused_net_kernel,
        out_shape=jax.ShapeDtypeStruct((BP, 1), jnp.float32),
        in_specs=[vmem] * 13,
        out_specs=vmem,
        scratch_shapes=[
            pltpu.VMEM((LB, 4 * GS), jnp.float32),   # hoisted input projections (+bias)
            pltpu.VMEM((LB, RH), jnp.float32),       # per-step hidden states (all runs)
            pltpu.VMEM((LB, RH), jnp.float32),       # masked attention logits (segment-replicated)
        ],
    )(emb_flat, pp['wih'], pp['whh'], pp['b'],
      pp['wk'], pp['bk'], pp['q'], pp['ones_blk'], pp['att_bias'],
      pp['w1'], pp['b1'], pp['w2'], pp['b2'])


# --------------------------------------------------------------------------------
# Parameters (deterministic, synthetic) and one-time block-diagonal packing.
# --------------------------------------------------------------------------------
def init_params(key):
    keys = iter(jax.random.split(key, 64))

    def nrm(shape, scale=0.1):
        return jax.random.normal(next(keys), shape, jnp.float32) * scale

    params = {'embed': {
        'pep':   nrm((21, E_PEP)).at[20].set(0.0),   # row 20 = padding row (zeros)
        'cdr3a': nrm((21, E_WV)).at[20].set(0.0),
        'cdr3b': nrm((21, E_WV)).at[20].set(0.0),
    }}
    for name, (_, E) in SEQ_INFO.items():
        params[name] = {}
        for d in ('f', 'r'):
            params[name][d] = {
                'wih': nrm((E, 4 * H)),     # gate order [i|f|g|o], (in, out) orientation
                'whh': nrm((H, 4 * H)),
                'b':   nrm((1, 4 * H)),     # b_ih + b_hh combined
                'wk':  nrm((H, HA)),        # attention key projection
                'bk':  nrm((1, HA)),
                'q':   nrm((1, HA)),        # attention query vector
            }
    params['dense'] = {'w1': nrm((RH, HD)), 'b1': nrm((1, HD)),
                       'w2': nrm((HD, 1)),  'b2': nrm((1, 1))}
    return params


def pack_params(params):
    """One-time packing into block-diagonal, fused-gate, lane-aligned matrices."""
    wih = np.zeros((RE, 4 * GS), np.float32)
    whh = np.zeros((RH, 4 * GS), np.float32)
    b = np.zeros((1, 4 * GS), np.float32)
    wk = np.zeros((RH, RA), np.float32)
    bk = np.zeros((1, RA), np.float32)
    q = np.zeros((1, RA), np.float32)
    lens = []
    for r, (name, d) in enumerate(RUN_DEFS):
        idx, E = SEQ_INFO[name]
        lens.append(len(idx))
        p = {k: np.asarray(v) for k, v in params[name][d].items()}
        for g in range(4):
            cs = g * GS + r * H
            wih[r * E_PAD:r * E_PAD + E, cs:cs + H] = p['wih'][:, g * H:(g + 1) * H]
            whh[r * H:(r + 1) * H, cs:cs + H] = p['whh'][:, g * H:(g + 1) * H]
            b[:, cs:cs + H] = p['b'][:, g * H:(g + 1) * H]
        wk[r * H:(r + 1) * H, r * HA:(r + 1) * HA] = p['wk']
        bk[:, r * HA:(r + 1) * HA] = p['bk']
        q[:, r * HA:(r + 1) * HA] = p['q']

    # Gate-slice correctness relies on lanes RH..GS of every gate block being zero.
    for g in range(4):
        assert not wih[:, g * GS + RH:(g + 1) * GS].any()
        assert not whh[:, g * GS + RH:(g + 1) * GS].any()
        assert not b[:, g * GS + RH:(g + 1) * GS].any()

    # Block-ones matrix: sums each run's HA-lane segment and replicates the scalar
    # logit across that run's H-lane segment (one MXU matmul in the kernel).
    ones_blk = np.kron(np.eye(R), np.ones((HA, H))).astype(np.float32)

    # Additive softmax mask, pre-flattened to the kernel's (t*BP + b, lane) layout:
    # -1e30 at timesteps beyond each run's fixed window length.
    lane_len = np.repeat(np.asarray(lens), H)                                   # (RH,)
    msk = np.where(np.arange(L_MAX)[:, None] < lane_len[None, :], 0.0, -1e30)   # (L, RH)
    att_bias = np.repeat(msk, BP, axis=0).astype(np.float32)                    # (LB, RH)

    j = jnp.asarray
    return {'embed': params['embed'],
            'wih': j(wih), 'whh': j(whh), 'b': j(b),
            'wk': j(wk), 'bk': j(bk), 'q': j(q),
            'ones_blk': j(ones_blk), 'att_bias': j(att_bias),
            'w1': params['dense']['w1'], 'b1': params['dense']['b1'],
            'w2': params['dense']['w2'], 'b2': params['dense']['b2']}


# --------------------------------------------------------------------------------
# Forward pass: embedding gather + padding/flatten glue in JAX, rest in Pallas.
# --------------------------------------------------------------------------------
def embed_attention_net(x, pp):
    B = x.shape[0]
    cols = []
    for name, d in RUN_DEFS:
        idx, E = SEQ_INFO[name]
        seq = x[:, idx].astype(jnp.int32)                 # (B, L_s)
        emb = jnp.take(pp['embed'][name], seq, axis=0)    # (B, L_s, E)  embedding lookup (glue)
        if d == 'r':
            emb = emb[:, ::-1, :]                         # reverse direction: reversed time
        emb = jnp.transpose(emb, (1, 0, 2))               # (L_s, B, E)  time-major
        emb = jnp.pad(emb, ((0, L_MAX - emb.shape[0]), (0, BP - B), (0, E_PAD - E)))
        cols.append(emb)
    emb_big = jnp.concatenate(cols, axis=2).astype(jnp.float32)   # (L_MAX, BP, RE)
    emb_flat = emb_big.reshape(LB, RE)                    # row = t*BP + b (XLA-side reshape)
    out = fused_forward(emb_flat, pp)                     # (BP, 1) sigmoid output
    return out[:B]                                        # drop batch padding rows


if __name__ == "__main__":
    key = jax.random.PRNGKey(0)
    pkey, xkey = jax.random.split(key)
    params = init_params(pkey)
    packed = pack_params(params)
    # Input: batch of flattened index vectors (needs >= 69 columns for the cdr3b slice).
    x = jax.random.randint(xkey, (BATCH, 69), 0, 21).astype(jnp.float32)

    out = jax.jit(embed_attention_net)(x, packed)
    out = jax.block_until_ready(out)
    assert out.shape == (BATCH, 1), out.shape
    assert bool(jnp.all(jnp.isfinite(out)))
    print("KERNEL_OK")
</pallas_src>

<mosaic_0001>
module attributes {stable_mosaic.version = 11 : i64} {
  func.func @fused_net_kernel(%arg0: memref<136x120xf32, #tpu.memory_space<vmem>>, %arg1: memref<120x1024xf32, #tpu.memory_space<vmem>>, %arg2: memref<144x1024xf32, #tpu.memory_space<vmem>>, %arg3: memref<1x1024xf32, #tpu.memory_space<vmem>>, %arg4: memref<144x144xf32, #tpu.memory_space<vmem>>, %arg5: memref<1x144xf32, #tpu.memory_space<vmem>>, %arg6: memref<1x144xf32, #tpu.memory_space<vmem>>, %arg7: memref<144x144xf32, #tpu.memory_space<vmem>>, %arg8: memref<136x144xf32, #tpu.memory_space<vmem>>, %arg9: memref<144x64xf32, #tpu.memory_space<vmem>>, %arg10: memref<1x64xf32, #tpu.memory_space<vmem>>, %arg11: memref<64x1xf32, #tpu.memory_space<vmem>>, %arg12: memref<1x1xf32, #tpu.memory_space<vmem>>, %arg13: memref<8x1xf32, #tpu.memory_space<vmem>>, %arg14: memref<136x1024xf32, #tpu.memory_space<vmem>>, %arg15: memref<136x144xf32, #tpu.memory_space<vmem>>, %arg16: memref<136x144xf32, #tpu.memory_space<vmem>>) attributes {dimension_semantics = [], scalar_prefetch = 0 : i64, scratch_operands = 3 : i64, tpu.core_type = #tpu.core_type<tc>} {
    %c0 = arith.constant 0 : index
    %c0_0 = arith.constant 0 : index
    %0 = vector.load %arg0[%c0, %c0_0] : memref<136x120xf32, #tpu.memory_space<vmem>>, vector<136x120xf32>
    %c0_1 = arith.constant 0 : index
    %c0_2 = arith.constant 0 : index
    %1 = vector.load %arg1[%c0_1, %c0_2] : memref<120x1024xf32, #tpu.memory_space<vmem>>, vector<120x256xf32>
    %cst = arith.constant dense<0.000000e+00> : vector<136x256xf32>
    %2 = tpu.matmul %0, %1, %cst {dimension_numbers = #tpu.dot_dimension_numbers<[1], [0], [0], [1], [0, 0, 1, 1], [], []>} : vector<136x120xf32>, vector<120x256xf32>, vector<136x256xf32> -> vector<136x256xf32>
    %c0_3 = arith.constant 0 : index
    %c0_4 = arith.constant 0 : index
    %3 = vector.load %arg3[%c0_3, %c0_4] : memref<1x1024xf32, #tpu.memory_space<vmem>>, vector<1x256xf32>
    %4 = vector.broadcast %3 : vector<1x256xf32> to vector<136x256xf32>
    %5 = arith.addf %2, %4 : vector<136x256xf32>
    %c0_5 = arith.constant 0 : index
    %c0_6 = arith.constant 0 : index
    %6 = vector.load %arg14[%c0_5, %c0_6] : memref<136x1024xf32, #tpu.memory_space<vmem>>, vector<136x256xf32>
    tpu.vector_store %arg14[%c0_5, %c0_6], %5 {strides = array<i32>} : memref<136x1024xf32, #tpu.memory_space<vmem>>, vector<136x256xf32>,
    %c0_7 = arith.constant 0 : index
    %c256 = arith.constant 256 : index
    %7 = vector.load %arg1[%c0_7, %c256] : memref<120x1024xf32, #tpu.memory_space<vmem>>, vector<120x256xf32>
    %cst_8 = arith.constant dense<0.000000e+00> : vector<136x256xf32>
    %8 = tpu.matmul %0, %7, %cst_8 {dimension_numbers = #tpu.dot_dimension_numbers<[1], [0], [0], [1], [0, 0, 1, 1], [], []>} : vector<136x120xf32>, vector<120x256xf32>, vector<136x256xf32> -> vector<136x256xf32>
    %c0_9 = arith.constant 0 : index
    %c256_10 = arith.constant 256 : index
    %9 = vector.load %arg3[%c0_9, %c256_10] : memref<1x1024xf32, #tpu.memory_space<vmem>>, vector<1x256xf32>
    %10 = vector.broadcast %9 : vector<1x256xf32> to vector<136x256xf32>
    %11 = arith.addf %8, %10 : vector<136x256xf32>
    %c0_11 = arith.constant 0 : index
    %c256_12 = arith.constant 256 : index
    %12 = vector.load %arg14[%c0_11, %c256_12] : memref<136x1024xf32, #tpu.memory_space<vmem>>, vector<136x256xf32>
    tpu.vector_store %arg14[%c0_11, %c256_12], %11 {strides = array<i32>} : memref<136x1024xf32, #tpu.memory_space<vmem>>, vector<136x256xf32>,
    %c0_13 = arith.constant 0 : index
    %c512 = arith.constant 512 : index
    %13 = vector.load %arg1[%c0_13, %c512] : memref<120x1024xf32, #tpu.memory_space<vmem>>, vector<120x256xf32>
    %cst_14 = arith.constant dense<0.000000e+00> : vector<136x256xf32>
    %14 = tpu.matmul %0, %13, %cst_14 {dimension_numbers = #tpu.dot_dimension_numbers<[1], [0], [0], [1], [0, 0, 1, 1], [], []>} : vector<136x120xf32>, vector<120x256xf32>, vector<136x256xf32> -> vector<136x256xf32>
    %c0_15 = arith.constant 0 : index
    %c512_16 = arith.constant 512 : index
    %15 = vector.load %arg3[%c0_15, %c512_16] : memref<1x1024xf32, #tpu.memory_space<vmem>>, vector<1x256xf32>
    %16 = vector.broadcast %15 : vector<1x256xf32> to vector<136x256xf32>
    %17 = arith.addf %14, %16 : vector<136x256xf32>
    %c0_17 = arith.constant 0 : index
    %c512_18 = arith.constant 512 : index
    %18 = vector.load %arg14[%c0_17, %c512_18] : memref<136x1024xf32, #tpu.memory_space<vmem>>, vector<136x256xf32>
    tpu.vector_store %arg14[%c0_17, %c512_18], %17 {strides = array<i32>} : memref<136x1024xf32, #tpu.memory_space<vmem>>, vector<136x256xf32>,
    %c0_19 = arith.constant 0 : index
    %c768 = arith.constant 768 : index
    %19 = vector.load %arg1[%c0_19, %c768] : memref<120x1024xf32, #tpu.memory_space<vmem>>, vector<120x256xf32>
    %cst_20 = arith.constant dense<0.000000e+00> : vector<136x256xf32>
    %20 = tpu.matmul %0, %19, %cst_20 {dimension_numbers = #tpu.dot_dimension_numbers<[1], [0], [0], [1], [0, 0, 1, 1], [], []>} : vector<136x120xf32>, vector<120x256xf32>, vector<136x256xf32> -> vector<136x256xf32>
    %c0_21 = arith.constant 0 : index
    %c768_22 = arith.constant 768 : index
    %21 = vector.load %arg3[%c0_21, %c768_22] : memref<1x1024xf32, #tpu.memory_space<vmem>>, vector<1x256xf32>
    %22 = vector.broadcast %21 : vector<1x256xf32> to vector<136x256xf32>
    %23 = arith.addf %20, %22 : vector<136x256xf32>
    %c0_23 = arith.constant 0 : index
    %c768_24 = arith.constant 768 : index
    %24 = vector.load %arg14[%c0_23, %c768_24] : memref<136x1024xf32, #tpu.memory_space<vmem>>, vector<136x256xf32>
    tpu.vector_store %arg14[%c0_23, %c768_24], %23 {strides = array<i32>} : memref<136x1024xf32, #tpu.memory_space<vmem>>, vector<136x256xf32>,
    %c0_25 = arith.constant 0 : index
    %c0_26 = arith.constant 0 : index
    %25 = vector.load %arg2[%c0_25, %c0_26] : memref<144x1024xf32, #tpu.memory_space<vmem>>, vector<144x1024xf32>
    %cst_27 = arith.constant 0.000000e+00 : f32
    %26 = vector.broadcast %cst_27 : f32 to vector<8x144xf32>
    %cst_28 = arith.constant 0.000000e+00 : f32
    %27 = vector.broadcast %cst_28 : f32 to vector<8x144xf32>
    %c0_29 = arith.constant 0 : index
    %c0_30 = arith.constant 0 : index
    %28 = vector.load %arg14[%c0_29, %c0_30] : memref<136x1024xf32, #tpu.memory_space<vmem>>, vector<8x1024xf32>
    %cst_31 = arith.constant dense<0.000000e+00> : vector<8x1024xf32>
    %29 = tpu.matmul %26, %25, %cst_31 {dimension_numbers = #tpu.dot_dimension_numbers<[1], [0], [0], [1], [0, 0, 1, 1], [], []>} : vector<8x144xf32>, vector<144x1024xf32>, vector<8x1024xf32> -> vector<8x1024xf32>
    %30 = arith.addf %28, %29 : vector<8x1024xf32>
    %31 = vector.extract_strided_slice %30 {offsets = [0, 0], sizes = [8, 144], strides = [1, 1]} : vector<8x1024xf32> to vector<8x144xf32>
    %cst_32 = arith.constant 0.000000e+00 : f32
    %32 = vector.broadcast %cst_32 : f32 to vector<8x144xf32>
    %33 = arith.subf %32, %31 : vector<8x144xf32>
    %34 = math.exp %33 : vector<8x144xf32>
    %cst_33 = arith.constant 1.000000e+00 : f32
    %35 = vector.broadcast %cst_33 : f32 to vector<8x144xf32>
    %36 = arith.addf %35, %34 : vector<8x144xf32>
    %37 = tpu.reciprocal %36 {approx = true} : vector<8x144xf32> -> vector<8x144xf32>
    %38 = vector.extract_strided_slice %30 {offsets = [0, 256], sizes = [8, 144], strides = [1, 1]} : vector<8x1024xf32> to vector<8x144xf32>
    %cst_34 = arith.constant 0.000000e+00 : f32
    %39 = vector.broadcast %cst_34 : f32 to vector<8x144xf32>
    %40 = arith.subf %39, %38 : vector<8x144xf32>
    %41 = math.exp %40 : vector<8x144xf32>
    %cst_35 = arith.constant 1.000000e+00 : f32
    %42 = vector.broadcast %cst_35 : f32 to vector<8x144xf32>
    %43 = arith.addf %42, %41 : vector<8x144xf32>
    %44 = tpu.reciprocal %43 {approx = true} : vector<8x144xf32> -> vector<8x144xf32>
    %45 = vector.extract_strided_slice %30 {offsets = [0, 512], sizes = [8, 144], strides = [1, 1]} : vector<8x1024xf32> to vector<8x144xf32>
    %46 = math.tanh %45 : vector<8x144xf32>
    %47 = vector.extract_strided_slice %30 {offsets = [0, 768], sizes = [8, 144], strides = [1, 1]} : vector<8x1024xf32> to vector<8x144xf32>
    %cst_36 = arith.constant 0.000000e+00 : f32
    %48 = vector.broadcast %cst_36 : f32 to vector<8x144xf32>
    %49 = arith.subf %48, %47 : vector<8x144xf32>
    %50 = math.exp %49 : vector<8x144xf32>
    %cst_37 = arith.constant 1.000000e+00 : f32
    %51 = vector.broadcast %cst_37 : f32 to vector<8x144xf32>
    %52 = arith.addf %51, %50 : vector<8x144xf32>
    %53 = tpu.reciprocal %52 {approx = true} : vector<8x144xf32> -> vector<8x144xf32>
    %54 = arith.mulf %44, %27 : vector<8x144xf32>
    %55 = arith.mulf %37, %46 : vector<8x144xf32>
    %56 = arith.addf %54, %55 : vector<8x144xf32>
    %57 = math.tanh %56 : vector<8x144xf32>
    %58 = arith.mulf %53, %57 : vector<8x144xf32>
    %c0_38 = arith.constant 0 : index
    %c0_39 = arith.constant 0 : index
    %59 = vector.load %arg15[%c0_38, %c0_39] : memref<136x144xf32, #tpu.memory_space<vmem>>, vector<8x144xf32>
    tpu.vector_store %arg15[%c0_38, %c0_39], %58 {strides = array<i32>} : memref<136x144xf32, #tpu.memory_space<vmem>>, vector<8x144xf32>,
    %c8 = arith.constant 8 : index
    %c0_40 = arith.constant 0 : index
    %60 = vector.load %arg14[%c8, %c0_40] : memref<136x1024xf32, #tpu.memory_space<vmem>>, vector<8x1024xf32>
    %cst_41 = arith.constant dense<0.000000e+00> : vector<8x1024xf32>
    %61 = tpu.matmul %58, %25, %cst_41 {dimension_numbers = #tpu.dot_dimension_numbers<[1], [0], [0], [1], [0, 0, 1, 1], [], []>} : vector<8x144xf32>, vector<144x1024xf32>, vector<8x1024xf32> -> vector<8x1024xf32>
    %62 = arith.addf %60, %61 : vector<8x1024xf32>
    %63 = vector.extract_strided_slice %62 {offsets = [0, 0], sizes = [8, 144], strides = [1, 1]} : vector<8x1024xf32> to vector<8x144xf32>
    %cst_42 = arith.constant 0.000000e+00 : f32
    %64 = vector.broadcast %cst_42 : f32 to vector<8x144xf32>
    %65 = arith.subf %64, %63 : vector<8x144xf32>
    %66 = math.exp %65 : vector<8x144xf32>
    %cst_43 = arith.constant 1.000000e+00 : f32
    %67 = vector.broadcast %cst_43 : f32 to vector<8x144xf32>
    %68 = arith.addf %67, %66 : vector<8x144xf32>
    %69 = tpu.reciprocal %68 {approx = true} : vector<8x144xf32> -> vector<8x144xf32>
    %70 = vector.extract_strided_slice %62 {offsets = [0, 256], sizes = [8, 144], strides = [1, 1]} : vector<8x1024xf32> to vector<8x144xf32>
    %cst_44 = arith.constant 0.000000e+00 : f32
    %71 = vector.broadcast %cst_44 : f32 to vector<8x144xf32>
    %72 = arith.subf %71, %70 : vector<8x144xf32>
    %73 = math.exp %72 : vector<8x144xf32>
    %cst_45 = arith.constant 1.000000e+00 : f32
    %74 = vector.broadcast %cst_45 : f32 to vector<8x144xf32>
    %75 = arith.addf %74, %73 : vector<8x144xf32>
    %76 = tpu.reciprocal %75 {approx = true} : vector<8x144xf32> -> vector<8x144xf32>
    %77 = vector.extract_strided_slice %62 {offsets = [0, 512], sizes = [8, 144], strides = [1, 1]} : vector<8x1024xf32> to vector<8x144xf32>
    %78 = math.tanh %77 : vector<8x144xf32>
    %79 = vector.extract_strided_slice %62 {offsets = [0, 768], sizes = [8, 144], strides = [1, 1]} : vector<8x1024xf32> to vector<8x144xf32>
    %cst_46 = arith.constant 0.000000e+00 : f32
    %80 = vector.broadcast %cst_46 : f32 to vector<8x144xf32>
    %81 = arith.subf %80, %79 : vector<8x144xf32>
    %82 = math.exp %81 : vector<8x144xf32>
    %cst_47 = arith.constant 1.000000e+00 : f32
    %83 = vector.broadcast %cst_47 : f32 to vector<8x144xf32>
    %84 = arith.addf %83, %82 : vector<8x144xf32>
    %85 = tpu.reciprocal %84 {approx = true} : vector<8x144xf32> -> vector<8x144xf32>
    %86 = arith.mulf %76, %56 : vector<8x144xf32>
    %87 = arith.mulf %69, %78 : vector<8x144xf32>
    %88 = arith.addf %86, %87 : vector<8x144xf32>
    %89 = math.tanh %88 : vector<8x144xf32>
    %90 = arith.mulf %85, %89 : vector<8x144xf32>
    %c8_48 = arith.constant 8 : index
    %c0_49 = arith.constant 0 : index
    %91 = vector.load %arg15[%c8_48, %c0_49] : memref<136x144xf32, #tpu.memory_space<vmem>>, vector<8x144xf32>
    tpu.vector_store %arg15[%c8_48, %c0_49], %90 {strides = array<i32>} : memref<136x144xf32, #tpu.memory_space<vmem>>, vector<8x144xf32>,
    %c16 = arith.constant 16 : index
    %c0_50 = arith.constant 0 : index
    %92 = vector.load %arg14[%c16, %c0_50] : memref<136x1024xf32, #tpu.memory_space<vmem>>, vector<8x1024xf32>
    %cst_51 = arith.constant dense<0.000000e+00> : vector<8x1024xf32>
    %93 = tpu.matmul %90, %25, %cst_51 {dimension_numbers = #tpu.dot_dimension_numbers<[1], [0], [0], [1], [0, 0, 1, 1], [], []>} : vector<8x144xf32>, vector<144x1024xf32>, vector<8x1024xf32> -> vector<8x1024xf32>
    %94 = arith.addf %92, %93 : vector<8x1024xf32>
    %95 = vector.extract_strided_slice %94 {offsets = [0, 0], sizes = [8, 144], strides = [1, 1]} : vector<8x1024xf32> to vector<8x144xf32>
    %cst_52 = arith.constant 0.000000e+00 : f32
    %96 = vector.broadcast %cst_52 : f32 to vector<8x144xf32>
    %97 = arith.subf %96, %95 : vector<8x144xf32>
    %98 = math.exp %97 : vector<8x144xf32>
    %cst_53 = arith.constant 1.000000e+00 : f32
    %99 = vector.broadcast %cst_53 : f32 to vector<8x144xf32>
    %100 = arith.addf %99, %98 : vector<8x144xf32>
    %101 = tpu.reciprocal %100 {approx = true} : vector<8x144xf32> -> vector<8x144xf32>
    %102 = vector.extract_strided_slice %94 {offsets = [0, 256], sizes = [8, 144], strides = [1, 1]} : vector<8x1024xf32> to vector<8x144xf32>
    %cst_54 = arith.constant 0.000000e+00 : f32
    %103 = vector.broadcast %cst_54 : f32 to vector<8x144xf32>
    %104 = arith.subf %103, %102 : vector<8x144xf32>
    %105 = math.exp %104 : vector<8x144xf32>
    %cst_55 = arith.constant 1.000000e+00 : f32
    %106 = vector.broadcast %cst_55 : f32 to vector<8x144xf32>
    %107 = arith.addf %106, %105 : vector<8x144xf32>
    %108 = tpu.reciprocal %107 {approx = true} : vector<8x144xf32> -> vector<8x144xf32>
    %109 = vector.extract_strided_slice %94 {offsets = [0, 512], sizes = [8, 144], strides = [1, 1]} : vector<8x1024xf32> to vector<8x144xf32>
    %110 = math.tanh %109 : vector<8x144xf32>
    %111 = vector.extract_strided_slice %94 {offsets = [0, 768], sizes = [8, 144], strides = [1, 1]} : vector<8x1024xf32> to vector<8x144xf32>
    %cst_56 = arith.constant 0.000000e+00 : f32
    %112 = vector.broadcast %cst_56 : f32 to vector<8x144xf32>
    %113 = arith.subf %112, %111 : vector<8x144xf32>
    %114 = math.exp %113 : vector<8x144xf32>
    %cst_57 = arith.constant 1.000000e+00 : f32
    %115 = vector.broadcast %cst_57 : f32 to vector<8x144xf32>
    %116 = arith.addf %115, %114 : vector<8x144xf32>
    %117 = tpu.reciprocal %116 {approx = true} : vector<8x144xf32> -> vector<8x144xf32>
    %118 = arith.mulf %108, %88 : vector<8x144xf32>
    %119 = arith.mulf %101, %110 : vector<8x144xf32>
    %120 = arith.addf %118, %119 : vector<8x144xf32>
    %121 = math.tanh %120 : vector<8x144xf32>
    %122 = arith.mulf %117, %121 : vector<8x144xf32>
    %c16_58 = arith.constant 16 : index
    %c0_59 = arith.constant 0 : index
    %123 = vector.load %arg15[%c16_58, %c0_59] : memref<136x144xf32, #tpu.memory_space<vmem>>, vector<8x144xf32>
    tpu.vector_store %arg15[%c16_58, %c0_59], %122 {strides = array<i32>} : memref<136x144xf32, #tpu.memory_space<vmem>>, vector<8x144xf32>,
    %c24 = arith.constant 24 : index
    %c0_60 = arith.constant 0 : index
    %124 = vector.load %arg14[%c24, %c0_60] : memref<136x1024xf32, #tpu.memory_space<vmem>>, vector<8x1024xf32>
    %cst_61 = arith.constant dense<0.000000e+00> : vector<8x1024xf32>
    %125 = tpu.matmul %122, %25, %cst_61 {dimension_numbers = #tpu.dot_dimension_numbers<[1], [0], [0], [1], [0, 0, 1, 1], [], []>} : vector<8x144xf32>, vector<144x1024xf32>, vector<8x1024xf32> -> vector<8x1024xf32>
    %126 = arith.addf %124, %125 : vector<8x1024xf32>
    %127 = vector.extract_strided_slice %126 {offsets = [0, 0], sizes = [8, 144], strides = [1, 1]} : vector<8x1024xf32> to vector<8x144xf32>
    %cst_62 = arith.constant 0.000000e+00 : f32
    %128 = vector.broadcast %cst_62 : f32 to vector<8x144xf32>
    %129 = arith.subf %128, %127 : vector<8x144xf32>
    %130 = math.exp %129 : vector<8x144xf32>
    %cst_63 = arith.constant 1.000000e+00 : f32
    %131 = vector.broadcast %cst_63 : f32 to vector<8x144xf32>
    %132 = arith.addf %131, %130 : vector<8x144xf32>
    %133 = tpu.reciprocal %132 {approx = true} : vector<8x144xf32> -> vector<8x144xf32>
    %134 = vector.extract_strided_slice %126 {offsets = [0, 256], sizes = [8, 144], strides = [1, 1]} : vector<8x1024xf32> to vector<8x144xf32>
    %cst_64 = arith.constant 0.000000e+00 : f32
    %135 = vector.broadcast %cst_64 : f32 to vector<8x144xf32>
    %136 = arith.subf %135, %134 : vector<8x144xf32>
    %137 = math.exp %136 : vector<8x144xf32>
    %cst_65 = arith.constant 1.000000e+00 : f32
    %138 = vector.broadcast %cst_65 : f32 to vector<8x144xf32>
    %139 = arith.addf %138, %137 : vector<8x144xf32>
    %140 = tpu.reciprocal %139 {approx = true} : vector<8x144xf32> -> vector<8x144xf32>
    %141 = vector.extract_strided_slice %126 {offsets = [0, 512], sizes = [8, 144], strides = [1, 1]} : vector<8x1024xf32> to vector<8x144xf32>
    %142 = math.tanh %141 : vector<8x144xf32>
    %143 = vector.extract_strided_slice %126 {offsets = [0, 768], sizes = [8, 144], strides = [1, 1]} : vector<8x1024xf32> to vector<8x144xf32>
    %cst_66 = arith.constant 0.000000e+00 : f32
    %144 = vector.broadcast %cst_66 : f32 to vector<8x144xf32>
    %145 = arith.subf %144, %143 : vector<8x144xf32>
    %146 = math.exp %145 : vector<8x144xf32>
    %cst_67 = arith.constant 1.000000e+00 : f32
    %147 = vector.broadcast %cst_67 : f32 to vector<8x144xf32>
    %148 = arith.addf %147, %146 : vector<8x144xf32>
    %149 = tpu.reciprocal %148 {approx = true} : vector<8x144xf32> -> vector<8x144xf32>
    %150 = arith.mulf %140, %120 : vector<8x144xf32>
    %151 = arith.mulf %133, %142 : vector<8x144xf32>
    %152 = arith.addf %150, %151 : vector<8x144xf32>
    %153 = math.tanh %152 : vector<8x144xf32>
    %154 = arith.mulf %149, %153 : vector<8x144xf32>
    %c24_68 = arith.constant 24 : index
    %c0_69 = arith.constant 0 : index
    %155 = vector.load %arg15[%c24_68, %c0_69] : memref<136x144xf32, #tpu.memory_space<vmem>>, vector<8x144xf32>
    tpu.vector_store %arg15[%c24_68, %c0_69], %154 {strides = array<i32>} : memref<136x144xf32, #tpu.memory_space<vmem>>, vector<8x144xf32>,
    %c32 = arith.constant 32 : index
    %c0_70 = arith.constant 0 : index
    %156 = vector.load %arg14[%c32, %c0_70] : memref<136x1024xf32, #tpu.memory_space<vmem>>, vector<8x1024xf32>
    %cst_71 = arith.constant dense<0.000000e+00> : vector<8x1024xf32>
    %157 = tpu.matmul %154, %25, %cst_71 {dimension_numbers = #tpu.dot_dimension_numbers<[1], [0], [0], [1], [0, 0, 1, 1], [], []>} : vector<8x144xf32>, vector<144x1024xf32>, vector<8x1024xf32> -> vector<8x1024xf32>
    %158 = arith.addf %156, %157 : vector<8x1024xf32>
    %159 = vector.extract_strided_slice %158 {offsets = [0, 0], sizes = [8, 144], strides = [1, 1]} : vector<8x1024xf32> to vector<8x144xf32>
    %cst_72 = arith.constant 0.000000e+00 : f32
    %160 = vector.broadcast %cst_72 : f32 to vector<8x144xf32>
    %161 = arith.subf %160, %159 : vector<8x144xf32>
    %162 = math.exp %161 : vector<8x144xf32>
    %cst_73 = arith.constant 1.000000e+00 : f32
    %163 = vector.broadcast %cst_73 : f32 to vector<8x144xf32>
    %164 = arith.addf %163, %162 : vector<8x144xf32>
    %165 = tpu.reciprocal %164 {approx = true} : vector<8x144xf32> -> vector<8x144xf32>
    %166 = vector.extract_strided_slice %158 {offsets = [0, 256], sizes = [8, 144], strides = [1, 1]} : vector<8x1024xf32> to vector<8x144xf32>
    %cst_74 = arith.constant 0.000000e+00 : f32
    %167 = vector.broadcast %cst_74 : f32 to vector<8x144xf32>
    %168 = arith.subf %167, %166 : vector<8x144xf32>
    %169 = math.exp %168 : vector<8x144xf32>
    %cst_75 = arith.constant 1.000000e+00 : f32
    %170 = vector.broadcast %cst_75 : f32 to vector<8x144xf32>
    %171 = arith.addf %170, %169 : vector<8x144xf32>
    %172 = tpu.reciprocal %171 {approx = true} : vector<8x144xf32> -> vector<8x144xf32>
    %173 = vector.extract_strided_slice %158 {offsets = [0, 512], sizes = [8, 144], strides = [1, 1]} : vector<8x1024xf32> to vector<8x144xf32>
    %174 = math.tanh %173 : vector<8x144xf32>
    %175 = vector.extract_strided_slice %158 {offsets = [0, 768], sizes = [8, 144], strides = [1, 1]} : vector<8x1024xf32> to vector<8x144xf32>
    %cst_76 = arith.constant 0.000000e+00 : f32
    %176 = vector.broadcast %cst_76 : f32 to vector<8x144xf32>
    %177 = arith.subf %176, %175 : vector<8x144xf32>
    %178 = math.exp %177 : vector<8x144xf32>
    %cst_77 = arith.constant 1.000000e+00 : f32
    %179 = vector.broadcast %cst_77 : f32 to vector<8x144xf32>
    %180 = arith.addf %179, %178 : vector<8x144xf32>
    %181 = tpu.reciprocal %180 {approx = true} : vector<8x144xf32> -> vector<8x144xf32>
    %182 = arith.mulf %172, %152 : vector<8x144xf32>
    %183 = arith.mulf %165, %174 : vector<8x144xf32>
    %184 = arith.addf %182, %183 : vector<8x144xf32>
    %185 = math.tanh %184 : vector<8x144xf32>
    %186 = arith.mulf %181, %185 : vector<8x144xf32>
    %c32_78 = arith.constant 32 : index
    %c0_79 = arith.constant 0 : index
    %187 = vector.load %arg15[%c32_78, %c0_79] : memref<136x144xf32, #tpu.memory_space<vmem>>, vector<8x144xf32>
    tpu.vector_store %arg15[%c32_78, %c0_79], %186 {strides = array<i32>} : memref<136x144xf32, #tpu.memory_space<vmem>>, vector<8x144xf32>,
    %c40 = arith.constant 40 : index
    %c0_80 = arith.constant 0 : index
    %188 = vector.load %arg14[%c40, %c0_80] : memref<136x1024xf32, #tpu.memory_space<vmem>>, vector<8x1024xf32>
    %cst_81 = arith.constant dense<0.000000e+00> : vector<8x1024xf32>
    %189 = tpu.matmul %186, %25, %cst_81 {dimension_numbers = #tpu.dot_dimension_numbers<[1], [0], [0], [1], [0, 0, 1, 1], [], []>} : vector<8x144xf32>, vector<144x1024xf32>, vector<8x1024xf32> -> vector<8x1024xf32>
    %190 = arith.addf %188, %189 : vector<8x1024xf32>
    %191 = vector.extract_strided_slice %190 {offsets = [0, 0], sizes = [8, 144], strides = [1, 1]} : vector<8x1024xf32> to vector<8x144xf32>
    %cst_82 = arith.constant 0.000000e+00 : f32
    %192 = vector.broadcast %cst_82 : f32 to vector<8x144xf32>
    %193 = arith.subf %192, %191 : vector<8x144xf32>
    %194 = math.exp %193 : vector<8x144xf32>
    %cst_83 = arith.constant 1.000000e+00 : f32
    %195 = vector.broadcast %cst_83 : f32 to vector<8x144xf32>
    %196 = arith.addf %195, %194 : vector<8x144xf32>
    %197 = tpu.reciprocal %196 {approx = true} : vector<8x144xf32> -> vector<8x144xf32>
    %198 = vector.extract_strided_slice %190 {offsets = [0, 256], sizes = [8, 144], strides = [1, 1]} : vector<8x1024xf32> to vector<8x144xf32>
    %cst_84 = arith.constant 0.000000e+00 : f32
    %199 = vector.broadcast %cst_84 : f32 to vector<8x144xf32>
    %200 = arith.subf %199, %198 : vector<8x144xf32>
    %201 = math.exp %200 : vector<8x144xf32>
    %cst_85 = arith.constant 1.000000e+00 : f32
    %202 = vector.broadcast %cst_85 : f32 to vector<8x144xf32>
    %203 = arith.addf %202, %201 : vector<8x144xf32>
    %204 = tpu.reciprocal %203 {approx = true} : vector<8x144xf32> -> vector<8x144xf32>
    %205 = vector.extract_strided_slice %190 {offsets = [0, 512], sizes = [8, 144], strides = [1, 1]} : vector<8x1024xf32> to vector<8x144xf32>
    %206 = math.tanh %205 : vector<8x144xf32>
    %207 = vector.extract_strided_slice %190 {offsets = [0, 768], sizes = [8, 144], strides = [1, 1]} : vector<8x1024xf32> to vector<8x144xf32>
    %cst_86 = arith.constant 0.000000e+00 : f32
    %208 = vector.broadcast %cst_86 : f32 to vector<8x144xf32>
    %209 = arith.subf %208, %207 : vector<8x144xf32>
    %210 = math.exp %209 : vector<8x144xf32>
    %cst_87 = arith.constant 1.000000e+00 : f32
    %211 = vector.broadcast %cst_87 : f32 to vector<8x144xf32>
    %212 = arith.addf %211, %210 : vector<8x144xf32>
    %213 = tpu.reciprocal %212 {approx = true} : vector<8x144xf32> -> vector<8x144xf32>
    %214 = arith.mulf %204, %184 : vector<8x144xf32>
    %215 = arith.mulf %197, %206 : vector<8x144xf32>
    %216 = arith.addf %214, %215 : vector<8x144xf32>
    %217 = math.tanh %216 : vector<8x144xf32>
    %218 = arith.mulf %213, %217 : vector<8x144xf32>
    %c40_88 = arith.constant 40 : index
    %c0_89 = arith.constant 0 : index
    %219 = vector.load %arg15[%c40_88, %c0_89] : memref<136x144xf32, #tpu.memory_space<vmem>>, vector<8x144xf32>
    tpu.vector_store %arg15[%c40_88, %c0_89], %218 {strides = array<i32>} : memref<136x144xf32, #tpu.memory_space<vmem>>, vector<8x144xf32>,
    %c48 = arith.constant 48 : index
    %c0_90 = arith.constant 0 : index
    %220 = vector.load %arg14[%c48, %c0_90] : memref<136x1024xf32, #tpu.memory_space<vmem>>, vector<8x1024xf32>
    %cst_91 = arith.constant dense<0.000000e+00> : vector<8x1024xf32>
    %221 = tpu.matmul %218, %25, %cst_91 {dimension_numbers = #tpu.dot_dimension_numbers<[1], [0], [0], [1], [0, 0, 1, 1], [], []>} : vector<8x144xf32>, vector<144x1024xf32>, vector<8x1024xf32> -> vector<8x1024xf32>
    %222 = arith.addf %220, %221 : vector<8x1024xf32>
    %223 = vector.extract_strided_slice %222 {offsets = [0, 0], sizes = [8, 144], strides = [1, 1]} : vector<8x1024xf32> to vector<8x144xf32>
    %cst_92 = arith.constant 0.000000e+00 : f32
    %224 = vector.broadcast %cst_92 : f32 to vector<8x144xf32>
    %225 = arith.subf %224, %223 : vector<8x144xf32>
    %226 = math.exp %225 : vector<8x144xf32>
    %cst_93 = arith.constant 1.000000e+00 : f32
    %227 = vector.broadcast %cst_93 : f32 to vector<8x144xf32>
    %228 = arith.addf %227, %226 : vector<8x144xf32>
    %229 = tpu.reciprocal %228 {approx = true} : vector<8x144xf32> -> vector<8x144xf32>
    %230 = vector.extract_strided_slice %222 {offsets = [0, 256], sizes = [8, 144], strides = [1, 1]} : vector<8x1024xf32> to vector<8x144xf32>
    %cst_94 = arith.constant 0.000000e+00 : f32
    %231 = vector.broadcast %cst_94 : f32 to vector<8x144xf32>
    %232 = arith.subf %231, %230 : vector<8x144xf32>
    %233 = math.exp %232 : vector<8x144xf32>
    %cst_95 = arith.constant 1.000000e+00 : f32
    %234 = vector.broadcast %cst_95 : f32 to vector<8x144xf32>
    %235 = arith.addf %234, %233 : vector<8x144xf32>
    %236 = tpu.reciprocal %235 {approx = true} : vector<8x144xf32> -> vector<8x144xf32>
    %237 = vector.extract_strided_slice %222 {offsets = [0, 512], sizes = [8, 144], strides = [1, 1]} : vector<8x1024xf32> to vector<8x144xf32>
    %238 = math.tanh %237 : vector<8x144xf32>
    %239 = vector.extract_strided_slice %222 {offsets = [0, 768], sizes = [8, 144], strides = [1, 1]} : vector<8x1024xf32> to vector<8x144xf32>
    %cst_96 = arith.constant 0.000000e+00 : f32
    %240 = vector.broadcast %cst_96 : f32 to vector<8x144xf32>
    %241 = arith.subf %240, %239 : vector<8x144xf32>
    %242 = math.exp %241 : vector<8x144xf32>
    %cst_97 = arith.constant 1.000000e+00 : f32
    %243 = vector.broadcast %cst_97 : f32 to vector<8x144xf32>
    %244 = arith.addf %243, %242 : vector<8x144xf32>
    %245 = tpu.reciprocal %244 {approx = true} : vector<8x144xf32> -> vector<8x144xf32>
    %246 = arith.mulf %236, %216 : vector<8x144xf32>
    %247 = arith.mulf %229, %238 : vector<8x144xf32>
    %248 = arith.addf %246, %247 : vector<8x144xf32>
    %249 = math.tanh %248 : vector<8x144xf32>
    %250 = arith.mulf %245, %249 : vector<8x144xf32>
    %c48_98 = arith.constant 48 : index
    %c0_99 = arith.constant 0 : index
    %251 = vector.load %arg15[%c48_98, %c0_99] : memref<136x144xf32, #tpu.memory_space<vmem>>, vector<8x144xf32>
    tpu.vector_store %arg15[%c48_98, %c0_99], %250 {strides = array<i32>} : memref<136x144xf32, #tpu.memory_space<vmem>>, vector<8x144xf32>,
    %c56 = arith.constant 56 : index
    %c0_100 = arith.constant 0 : index
    %252 = vector.load %arg14[%c56, %c0_100] : memref<136x1024xf32, #tpu.memory_space<vmem>>, vector<8x1024xf32>
    %cst_101 = arith.constant dense<0.000000e+00> : vector<8x1024xf32>
    %253 = tpu.matmul %250, %25, %cst_101 {dimension_numbers = #tpu.dot_dimension_numbers<[1], [0], [0], [1], [0, 0, 1, 1], [], []>} : vector<8x144xf32>, vector<144x1024xf32>, vector<8x1024xf32> -> vector<8x1024xf32>
    %254 = arith.addf %252, %253 : vector<8x1024xf32>
    %255 = vector.extract_strided_slice %254 {offsets = [0, 0], sizes = [8, 144], strides = [1, 1]} : vector<8x1024xf32> to vector<8x144xf32>
    %cst_102 = arith.constant 0.000000e+00 : f32
    %256 = vector.broadcast %cst_102 : f32 to vector<8x144xf32>
    %257 = arith.subf %256, %255 : vector<8x144xf32>
    %258 = math.exp %257 : vector<8x144xf32>
    %cst_103 = arith.constant 1.000000e+00 : f32
    %259 = vector.broadcast %cst_103 : f32 to vector<8x144xf32>
    %260 = arith.addf %259, %258 : vector<8x144xf32>
    %261 = tpu.reciprocal %260 {approx = true} : vector<8x144xf32> -> vector<8x144xf32>
    %262 = vector.extract_strided_slice %254 {offsets = [0, 256], sizes = [8, 144], strides = [1, 1]} : vector<8x1024xf32> to vector<8x144xf32>
    %cst_104 = arith.constant 0.000000e+00 : f32
    %263 = vector.broadcast %cst_104 : f32 to vector<8x144xf32>
    %264 = arith.subf %263, %262 : vector<8x144xf32>
    %265 = math.exp %264 : vector<8x144xf32>
    %cst_105 = arith.constant 1.000000e+00 : f32
    %266 = vector.broadcast %cst_105 : f32 to vector<8x144xf32>
    %267 = arith.addf %266, %265 : vector<8x144xf32>
    %268 = tpu.reciprocal %267 {approx = true} : vector<8x144xf32> -> vector<8x144xf32>
    %269 = vector.extract_strided_slice %254 {offsets = [0, 512], sizes = [8, 144], strides = [1, 1]} : vector<8x1024xf32> to vector<8x144xf32>
    %270 = math.tanh %269 : vector<8x144xf32>
    %271 = vector.extract_strided_slice %254 {offsets = [0, 768], sizes = [8, 144], strides = [1, 1]} : vector<8x1024xf32> to vector<8x144xf32>
    %cst_106 = arith.constant 0.000000e+00 : f32
    %272 = vector.broadcast %cst_106 : f32 to vector<8x144xf32>
    %273 = arith.subf %272, %271 : vector<8x144xf32>
    %274 = math.exp %273 : vector<8x144xf32>
    %cst_107 = arith.constant 1.000000e+00 : f32
    %275 = vector.broadcast %cst_107 : f32 to vector<8x144xf32>
    %276 = arith.addf %275, %274 : vector<8x144xf32>
    %277 = tpu.reciprocal %276 {approx = true} : vector<8x144xf32> -> vector<8x144xf32>
    %278 = arith.mulf %268, %248 : vector<8x144xf32>
    %279 = arith.mulf %261, %270 : vector<8x144xf32>
    %280 = arith.addf %278, %279 : vector<8x144xf32>
    %281 = math.tanh %280 : vector<8x144xf32>
    %282 = arith.mulf %277, %281 : vector<8x144xf32>
    %c56_108 = arith.constant 56 : index
    %c0_109 = arith.constant 0 : index
    %283 = vector.load %arg15[%c56_108, %c0_109] : memref<136x144xf32, #tpu.memory_space<vmem>>, vector<8x144xf32>
    tpu.vector_store %arg15[%c56_108, %c0_109], %282 {strides = array<i32>} : memref<136x144xf32, #tpu.memory_space<vmem>>, vector<8x144xf32>,
    %c64 = arith.constant 64 : index
    %c0_110 = arith.constant 0 : index
    %284 = vector.load %arg14[%c64, %c0_110] : memref<136x1024xf32, #tpu.memory_space<vmem>>, vector<8x1024xf32>
    %cst_111 = arith.constant dense<0.000000e+00> : vector<8x1024xf32>
    %285 = tpu.matmul %282, %25, %cst_111 {dimension_numbers = #tpu.dot_dimension_numbers<[1], [0], [0], [1], [0, 0, 1, 1], [], []>} : vector<8x144xf32>, vector<144x1024xf32>, vector<8x1024xf32> -> vector<8x1024xf32>
    %286 = arith.addf %284, %285 : vector<8x1024xf32>
    %287 = vector.extract_strided_slice %286 {offsets = [0, 0], sizes = [8, 144], strides = [1, 1]} : vector<8x1024xf32> to vector<8x144xf32>
    %cst_112 = arith.constant 0.000000e+00 : f32
    %288 = vector.broadcast %cst_112 : f32 to vector<8x144xf32>
    %289 = arith.subf %288, %287 : vector<8x144xf32>
    %290 = math.exp %289 : vector<8x144xf32>
    %cst_113 = arith.constant 1.000000e+00 : f32
    %291 = vector.broadcast %cst_113 : f32 to vector<8x144xf32>
    %292 = arith.addf %291, %290 : vector<8x144xf32>
    %293 = tpu.reciprocal %292 {approx = true} : vector<8x144xf32> -> vector<8x144xf32>
    %294 = vector.extract_strided_slice %286 {offsets = [0, 256], sizes = [8, 144], strides = [1, 1]} : vector<8x1024xf32> to vector<8x144xf32>
    %cst_114 = arith.constant 0.000000e+00 : f32
    %295 = vector.broadcast %cst_114 : f32 to vector<8x144xf32>
    %296 = arith.subf %295, %294 : vector<8x144xf32>
    %297 = math.exp %296 : vector<8x144xf32>
    %cst_115 = arith.constant 1.000000e+00 : f32
    %298 = vector.broadcast %cst_115 : f32 to vector<8x144xf32>
    %299 = arith.addf %298, %297 : vector<8x144xf32>
    %300 = tpu.reciprocal %299 {approx = true} : vector<8x144xf32> -> vector<8x144xf32>
    %301 = vector.extract_strided_slice %286 {offsets = [0, 512], sizes = [8, 144], strides = [1, 1]} : vector<8x1024xf32> to vector<8x144xf32>
    %302 = math.tanh %301 : vector<8x144xf32>
    %303 = vector.extract_strided_slice %286 {offsets = [0, 768], sizes = [8, 144], strides = [1, 1]} : vector<8x1024xf32> to vector<8x144xf32>
    %cst_116 = arith.constant 0.000000e+00 : f32
    %304 = vector.broadcast %cst_116 : f32 to vector<8x144xf32>
    %305 = arith.subf %304, %303 : vector<8x144xf32>
    %306 = math.exp %305 : vector<8x144xf32>
    %cst_117 = arith.constant 1.000000e+00 : f32
    %307 = vector.broadcast %cst_117 : f32 to vector<8x144xf32>
    %308 = arith.addf %307, %306 : vector<8x144xf32>
    %309 = tpu.reciprocal %308 {approx = true} : vector<8x144xf32> -> vector<8x144xf32>
    %310 = arith.mulf %300, %280 : vector<8x144xf32>
    %311 = arith.mulf %293, %302 : vector<8x144xf32>
    %312 = arith.addf %310, %311 : vector<8x144xf32>
    %313 = math.tanh %312 : vector<8x144xf32>
    %314 = arith.mulf %309, %313 : vector<8x144xf32>
    %c64_118 = arith.constant 64 : index
    %c0_119 = arith.constant 0 : index
    %315 = vector.load %arg15[%c64_118, %c0_119] : memref<136x144xf32, #tpu.memory_space<vmem>>, vector<8x144xf32>
    tpu.vector_store %arg15[%c64_118, %c0_119], %314 {strides = array<i32>} : memref<136x144xf32, #tpu.memory_space<vmem>>, vector<8x144xf32>,
    %c72 = arith.constant 72 : index
    %c0_120 = arith.constant 0 : index
    %316 = vector.load %arg14[%c72, %c0_120] : memref<136x1024xf32, #tpu.memory_space<vmem>>, vector<8x1024xf32>
    %cst_121 = arith.constant dense<0.000000e+00> : vector<8x1024xf32>
    %317 = tpu.matmul %314, %25, %cst_121 {dimension_numbers = #tpu.dot_dimension_numbers<[1], [0], [0], [1], [0, 0, 1, 1], [], []>} : vector<8x144xf32>, vector<144x1024xf32>, vector<8x1024xf32> -> vector<8x1024xf32>
    %318 = arith.addf %316, %317 : vector<8x1024xf32>
    %319 = vector.extract_strided_slice %318 {offsets = [0, 0], sizes = [8, 144], strides = [1, 1]} : vector<8x1024xf32> to vector<8x144xf32>
    %cst_122 = arith.constant 0.000000e+00 : f32
    %320 = vector.broadcast %cst_122 : f32 to vector<8x144xf32>
    %321 = arith.subf %320, %319 : vector<8x144xf32>
    %322 = math.exp %321 : vector<8x144xf32>
    %cst_123 = arith.constant 1.000000e+00 : f32
    %323 = vector.broadcast %cst_123 : f32 to vector<8x144xf32>
    %324 = arith.addf %323, %322 : vector<8x144xf32>
    %325 = tpu.reciprocal %324 {approx = true} : vector<8x144xf32> -> vector<8x144xf32>
    %326 = vector.extract_strided_slice %318 {offsets = [0, 256], sizes = [8, 144], strides = [1, 1]} : vector<8x1024xf32> to vector<8x144xf32>
    %cst_124 = arith.constant 0.000000e+00 : f32
    %327 = vector.broadcast %cst_124 : f32 to vector<8x144xf32>
    %328 = arith.subf %327, %326 : vector<8x144xf32>
    %329 = math.exp %328 : vector<8x144xf32>
    %cst_125 = arith.constant 1.000000e+00 : f32
    %330 = vector.broadcast %cst_125 : f32 to vector<8x144xf32>
    %331 = arith.addf %330, %329 : vector<8x144xf32>
    %332 = tpu.reciprocal %331 {approx = true} : vector<8x144xf32> -> vector<8x144xf32>
    %333 = vector.extract_strided_slice %318 {offsets = [0, 512], sizes = [8, 144], strides = [1, 1]} : vector<8x1024xf32> to vector<8x144xf32>
    %334 = math.tanh %333 : vector<8x144xf32>
    %335 = vector.extract_strided_slice %318 {offsets = [0, 768], sizes = [8, 144], strides = [1, 1]} : vector<8x1024xf32> to vector<8x144xf32>
    %cst_126 = arith.constant 0.000000e+00 : f32
    %336 = vector.broadcast %cst_126 : f32 to vector<8x144xf32>
    %337 = arith.subf %336, %335 : vector<8x144xf32>
    %338 = math.exp %337 : vector<8x144xf32>
    %cst_127 = arith.constant 1.000000e+00 : f32
    %339 = vector.broadcast %cst_127 : f32 to vector<8x144xf32>
    %340 = arith.addf %339, %338 : vector<8x144xf32>
    %341 = tpu.reciprocal %340 {approx = true} : vector<8x144xf32> -> vector<8x144xf32>
    %342 = arith.mulf %332, %312 : vector<8x144xf32>
    %343 = arith.mulf %325, %334 : vector<8x144xf32>
    %344 = arith.addf %342, %343 : vector<8x144xf32>
    %345 = math.tanh %344 : vector<8x144xf32>
    %346 = arith.mulf %341, %345 : vector<8x144xf32>
    %c72_128 = arith.constant 72 : index
    %c0_129 = arith.constant 0 : index
    %347 = vector.load %arg15[%c72_128, %c0_129] : memref<136x144xf32, #tpu.memory_space<vmem>>, vector<8x144xf32>
    tpu.vector_store %arg15[%c72_128, %c0_129], %346 {strides = array<i32>} : memref<136x144xf32, #tpu.memory_space<vmem>>, vector<8x144xf32>,
    %c80 = arith.constant 80 : index
    %c0_130 = arith.constant 0 : index
    %348 = vector.load %arg14[%c80, %c0_130] : memref<136x1024xf32, #tpu.memory_space<vmem>>, vector<8x1024xf32>
    %cst_131 = arith.constant dense<0.000000e+00> : vector<8x1024xf32>
    %349 = tpu.matmul %346, %25, %cst_131 {dimension_numbers = #tpu.dot_dimension_numbers<[1], [0], [0], [1], [0, 0, 1, 1], [], []>} : vector<8x144xf32>, vector<144x1024xf32>, vector<8x1024xf32> -> vector<8x1024xf32>
    %350 = arith.addf %348, %349 : vector<8x1024xf32>
    %351 = vector.extract_strided_slice %350 {offsets = [0, 0], sizes = [8, 144], strides = [1, 1]} : vector<8x1024xf32> to vector<8x144xf32>
    %cst_132 = arith.constant 0.000000e+00 : f32
    %352 = vector.broadcast %cst_132 : f32 to vector<8x144xf32>
    %353 = arith.subf %352, %351 : vector<8x144xf32>
    %354 = math.exp %353 : vector<8x144xf32>
    %cst_133 = arith.constant 1.000000e+00 : f32
    %355 = vector.broadcast %cst_133 : f32 to vector<8x144xf32>
    %356 = arith.addf %355, %354 : vector<8x144xf32>
    %357 = tpu.reciprocal %356 {approx = true} : vector<8x144xf32> -> vector<8x144xf32>
    %358 = vector.extract_strided_slice %350 {offsets = [0, 256], sizes = [8, 144], strides = [1, 1]} : vector<8x1024xf32> to vector<8x144xf32>
    %cst_134 = arith.constant 0.000000e+00 : f32
    %359 = vector.broadcast %cst_134 : f32 to vector<8x144xf32>
    %360 = arith.subf %359, %358 : vector<8x144xf32>
    %361 = math.exp %360 : vector<8x144xf32>
    %cst_135 = arith.constant 1.000000e+00 : f32
    %362 = vector.broadcast %cst_135 : f32 to vector<8x144xf32>
    %363 = arith.addf %362, %361 : vector<8x144xf32>
    %364 = tpu.reciprocal %363 {approx = true} : vector<8x144xf32> -> vector<8x144xf32>
    %365 = vector.extract_strided_slice %350 {offsets = [0, 512], sizes = [8, 144], strides = [1, 1]} : vector<8x1024xf32> to vector<8x144xf32>
    %366 = math.tanh %365 : vector<8x144xf32>
    %367 = vector.extract_strided_slice %350 {offsets = [0, 768], sizes = [8, 144], strides = [1, 1]} : vector<8x1024xf32> to vector<8x144xf32>
    %cst_136 = arith.constant 0.000000e+00 : f32
    %368 = vector.broadcast %cst_136 : f32 to vector<8x144xf32>
    %369 = arith.subf %368, %367 : vector<8x144xf32>
    %370 = math.exp %369 : vector<8x144xf32>
    %cst_137 = arith.constant 1.000000e+00 : f32
    %371 = vector.broadcast %cst_137 : f32 to vector<8x144xf32>
    %372 = arith.addf %371, %370 : vector<8x144xf32>
    %373 = tpu.reciprocal %372 {approx = true} : vector<8x144xf32> -> vector<8x144xf32>
    %374 = arith.mulf %364, %344 : vector<8x144xf32>
    %375 = arith.mulf %357, %366 : vector<8x144xf32>
    %376 = arith.addf %374, %375 : vector<8x144xf32>
    %377 = math.tanh %376 : vector<8x144xf32>
    %378 = arith.mulf %373, %377 : vector<8x144xf32>
    %c80_138 = arith.constant 80 : index
    %c0_139 = arith.constant 0 : index
    %379 = vector.load %arg15[%c80_138, %c0_139] : memref<136x144xf32, #tpu.memory_space<vmem>>, vector<8x144xf32>
    tpu.vector_store %arg15[%c80_138, %c0_139], %378 {strides = array<i32>} : memref<136x144xf32, #tpu.memory_space<vmem>>, vector<8x144xf32>,
    %c88 = arith.constant 88 : index
    %c0_140 = arith.constant 0 : index
    %380 = vector.load %arg14[%c88, %c0_140] : memref<136x1024xf32, #tpu.memory_space<vmem>>, vector<8x1024xf32>
    %cst_141 = arith.constant dense<0.000000e+00> : vector<8x1024xf32>
    %381 = tpu.matmul %378, %25, %cst_141 {dimension_numbers = #tpu.dot_dimension_numbers<[1], [0], [0], [1], [0, 0, 1, 1], [], []>} : vector<8x144xf32>, vector<144x1024xf32>, vector<8x1024xf32> -> vector<8x1024xf32>
    %382 = arith.addf %380, %381 : vector<8x1024xf32>
    %383 = vector.extract_strided_slice %382 {offsets = [0, 0], sizes = [8, 144], strides = [1, 1]} : vector<8x1024xf32> to vector<8x144xf32>
    %cst_142 = arith.constant 0.000000e+00 : f32
    %384 = vector.broadcast %cst_142 : f32 to vector<8x144xf32>
    %385 = arith.subf %384, %383 : vector<8x144xf32>
    %386 = math.exp %385 : vector<8x144xf32>
    %cst_143 = arith.constant 1.000000e+00 : f32
    %387 = vector.broadcast %cst_143 : f32 to vector<8x144xf32>
    %388 = arith.addf %387, %386 : vector<8x144xf32>
    %389 = tpu.reciprocal %388 {approx = true} : vector<8x144xf32> -> vector<8x144xf32>
    %390 = vector.extract_strided_slice %382 {offsets = [0, 256], sizes = [8, 144], strides = [1, 1]} : vector<8x1024xf32> to vector<8x144xf32>
    %cst_144 = arith.constant 0.000000e+00 : f32
    %391 = vector.broadcast %cst_144 : f32 to vector<8x144xf32>
    %392 = arith.subf %391, %390 : vector<8x144xf32>
    %393 = math.exp %392 : vector<8x144xf32>
    %cst_145 = arith.constant 1.000000e+00 : f32
    %394 = vector.broadcast %cst_145 : f32 to vector<8x144xf32>
    %395 = arith.addf %394, %393 : vector<8x144xf32>
    %396 = tpu.reciprocal %395 {approx = true} : vector<8x144xf32> -> vector<8x144xf32>
    %397 = vector.extract_strided_slice %382 {offsets = [0, 512], sizes = [8, 144], strides = [1, 1]} : vector<8x1024xf32> to vector<8x144xf32>
    %398 = math.tanh %397 : vector<8x144xf32>
    %399 = vector.extract_strided_slice %382 {offsets = [0, 768], sizes = [8, 144], strides = [1, 1]} : vector<8x1024xf32> to vector<8x144xf32>
    %cst_146 = arith.constant 0.000000e+00 : f32
    %400 = vector.broadcast %cst_146 : f32 to vector<8x144xf32>
    %401 = arith.subf %400, %399 : vector<8x144xf32>
    %402 = math.exp %401 : vector<8x144xf32>
    %cst_147 = arith.constant 1.000000e+00 : f32
    %403 = vector.broadcast %cst_147 : f32 to vector<8x144xf32>
    %404 = arith.addf %403, %402 : vector<8x144xf32>
    %405 = tpu.reciprocal %404 {approx = true} : vector<8x144xf32> -> vector<8x144xf32>
    %406 = arith.mulf %396, %376 : vector<8x144xf32>
    %407 = arith.mulf %389, %398 : vector<8x144xf32>
    %408 = arith.addf %406, %407 : vector<8x144xf32>
    %409 = math.tanh %408 : vector<8x144xf32>
    %410 = arith.mulf %405, %409 : vector<8x144xf32>
    %c88_148 = arith.constant 88 : index
    %c0_149 = arith.constant 0 : index
    %411 = vector.load %arg15[%c88_148, %c0_149] : memref<136x144xf32, #tpu.memory_space<vmem>>, vector<8x144xf32>
    tpu.vector_store %arg15[%c88_148, %c0_149], %410 {strides = array<i32>} : memref<136x144xf32, #tpu.memory_space<vmem>>, vector<8x144xf32>,
    %c96 = arith.constant 96 : index
    %c0_150 = arith.constant 0 : index
    %412 = vector.load %arg14[%c96, %c0_150] : memref<136x1024xf32, #tpu.memory_space<vmem>>, vector<8x1024xf32>
    %cst_151 = arith.constant dense<0.000000e+00> : vector<8x1024xf32>
    %413 = tpu.matmul %410, %25, %cst_151 {dimension_numbers = #tpu.dot_dimension_numbers<[1], [0], [0], [1], [0, 0, 1, 1], [], []>} : vector<8x144xf32>, vector<144x1024xf32>, vector<8x1024xf32> -> vector<8x1024xf32>
    %414 = arith.addf %412, %413 : vector<8x1024xf32>
    %415 = vector.extract_strided_slice %414 {offsets = [0, 0], sizes = [8, 144], strides = [1, 1]} : vector<8x1024xf32> to vector<8x144xf32>
    %cst_152 = arith.constant 0.000000e+00 : f32
    %416 = vector.broadcast %cst_152 : f32 to vector<8x144xf32>
    %417 = arith.subf %416, %415 : vector<8x144xf32>
    %418 = math.exp %417 : vector<8x144xf32>
    %cst_153 = arith.constant 1.000000e+00 : f32
    %419 = vector.broadcast %cst_153 : f32 to vector<8x144xf32>
    %420 = arith.addf %419, %418 : vector<8x144xf32>
    %421 = tpu.reciprocal %420 {approx = true} : vector<8x144xf32> -> vector<8x144xf32>
    %422 = vector.extract_strided_slice %414 {offsets = [0, 256], sizes = [8, 144], strides = [1, 1]} : vector<8x1024xf32> to vector<8x144xf32>
    %cst_154 = arith.constant 0.000000e+00 : f32
    %423 = vector.broadcast %cst_154 : f32 to vector<8x144xf32>
    %424 = arith.subf %423, %422 : vector<8x144xf32>
    %425 = math.exp %424 : vector<8x144xf32>
    %cst_155 = arith.constant 1.000000e+00 : f32
    %426 = vector.broadcast %cst_155 : f32 to vector<8x144xf32>
    %427 = arith.addf %426, %425 : vector<8x144xf32>
    %428 = tpu.reciprocal %427 {approx = true} : vector<8x144xf32> -> vector<8x144xf32>
    %429 = vector.extract_strided_slice %414 {offsets = [0, 512], sizes = [8, 144], strides = [1, 1]} : vector<8x1024xf32> to vector<8x144xf32>
    %430 = math.tanh %429 : vector<8x144xf32>
    %431 = vector.extract_strided_slice %414 {offsets = [0, 768], sizes = [8, 144], strides = [1, 1]} : vector<8x1024xf32> to vector<8x144xf32>
    %cst_156 = arith.constant 0.000000e+00 : f32
    %432 = vector.broadcast %cst_156 : f32 to vector<8x144xf32>
    %433 = arith.subf %432, %431 : vector<8x144xf32>
    %434 = math.exp %433 : vector<8x144xf32>
    %cst_157 = arith.constant 1.000000e+00 : f32
    %435 = vector.broadcast %cst_157 : f32 to vector<8x144xf32>
    %436 = arith.addf %435, %434 : vector<8x144xf32>
    %437 = tpu.reciprocal %436 {approx = true} : vector<8x144xf32> -> vector<8x144xf32>
    %438 = arith.mulf %428, %408 : vector<8x144xf32>
    %439 = arith.mulf %421, %430 : vector<8x144xf32>
    %440 = arith.addf %438, %439 : vector<8x144xf32>
    %441 = math.tanh %440 : vector<8x144xf32>
    %442 = arith.mulf %437, %441 : vector<8x144xf32>
    %c96_158 = arith.constant 96 : index
    %c0_159 = arith.constant 0 : index
    %443 = vector.load %arg15[%c96_158, %c0_159] : memref<136x144xf32, #tpu.memory_space<vmem>>, vector<8x144xf32>
    tpu.vector_store %arg15[%c96_158, %c0_159], %442 {strides = array<i32>} : memref<136x144xf32, #tpu.memory_space<vmem>>, vector<8x144xf32>,
    %c104 = arith.constant 104 : index
    %c0_160 = arith.constant 0 : index
    %444 = vector.load %arg14[%c104, %c0_160] : memref<136x1024xf32, #tpu.memory_space<vmem>>, vector<8x1024xf32>
    %cst_161 = arith.constant dense<0.000000e+00> : vector<8x1024xf32>
    %445 = tpu.matmul %442, %25, %cst_161 {dimension_numbers = #tpu.dot_dimension_numbers<[1], [0], [0], [1], [0, 0, 1, 1], [], []>} : vector<8x144xf32>, vector<144x1024xf32>, vector<8x1024xf32> -> vector<8x1024xf32>
    %446 = arith.addf %444, %445 : vector<8x1024xf32>
    %447 = vector.extract_strided_slice %446 {offsets = [0, 0], sizes = [8, 144], strides = [1, 1]} : vector<8x1024xf32> to vector<8x144xf32>
    %cst_162 = arith.constant 0.000000e+00 : f32
    %448 = vector.broadcast %cst_162 : f32 to vector<8x144xf32>
    %449 = arith.subf %448, %447 : vector<8x144xf32>
    %450 = math.exp %449 : vector<8x144xf32>
    %cst_163 = arith.constant 1.000000e+00 : f32
    %451 = vector.broadcast %cst_163 : f32 to vector<8x144xf32>
    %452 = arith.addf %451, %450 : vector<8x144xf32>
    %453 = tpu.reciprocal %452 {approx = true} : vector<8x144xf32> -> vector<8x144xf32>
    %454 = vector.extract_strided_slice %446 {offsets = [0, 256], sizes = [8, 144], strides = [1, 1]} : vector<8x1024xf32> to vector<8x144xf32>
    %cst_164 = arith.constant 0.000000e+00 : f32
    %455 = vector.broadcast %cst_164 : f32 to vector<8x144xf32>
    %456 = arith.subf %455, %454 : vector<8x144xf32>
    %457 = math.exp %456 : vector<8x144xf32>
    %cst_165 = arith.constant 1.000000e+00 : f32
    %458 = vector.broadcast %cst_165 : f32 to vector<8x144xf32>
    %459 = arith.addf %458, %457 : vector<8x144xf32>
    %460 = tpu.reciprocal %459 {approx = true} : vector<8x144xf32> -> vector<8x144xf32>
    %461 = vector.extract_strided_slice %446 {offsets = [0, 512], sizes = [8, 144], strides = [1, 1]} : vector<8x1024xf32> to vector<8x144xf32>
    %462 = math.tanh %461 : vector<8x144xf32>
    %463 = vector.extract_strided_slice %446 {offsets = [0, 768], sizes = [8, 144], strides = [1, 1]} : vector<8x1024xf32> to vector<8x144xf32>
    %cst_166 = arith.constant 0.000000e+00 : f32
    %464 = vector.broadcast %cst_166 : f32 to vector<8x144xf32>
    %465 = arith.subf %464, %463 : vector<8x144xf32>
    %466 = math.exp %465 : vector<8x144xf32>
    %cst_167 = arith.constant 1.000000e+00 : f32
    %467 = vector.broadcast %cst_167 : f32 to vector<8x144xf32>
    %468 = arith.addf %467, %466 : vector<8x144xf32>
    %469 = tpu.reciprocal %468 {approx = true} : vector<8x144xf32> -> vector<8x144xf32>
    %470 = arith.mulf %460, %440 : vector<8x144xf32>
    %471 = arith.mulf %453, %462 : vector<8x144xf32>
    %472 = arith.addf %470, %471 : vector<8x144xf32>
    %473 = math.tanh %472 : vector<8x144xf32>
    %474 = arith.mulf %469, %473 : vector<8x144xf32>
    %c104_168 = arith.constant 104 : index
    %c0_169 = arith.constant 0 : index
    %475 = vector.load %arg15[%c104_168, %c0_169] : memref<136x144xf32, #tpu.memory_space<vmem>>, vector<8x144xf32>
    tpu.vector_store %arg15[%c104_168, %c0_169], %474 {strides = array<i32>} : memref<136x144xf32, #tpu.memory_space<vmem>>, vector<8x144xf32>,
    %c112 = arith.constant 112 : index
    %c0_170 = arith.constant 0 : index
    %476 = vector.load %arg14[%c112, %c0_170] : memref<136x1024xf32, #tpu.memory_space<vmem>>, vector<8x1024xf32>
    %cst_171 = arith.constant dense<0.000000e+00> : vector<8x1024xf32>
    %477 = tpu.matmul %474, %25, %cst_171 {dimension_numbers = #tpu.dot_dimension_numbers<[1], [0], [0], [1], [0, 0, 1, 1], [], []>} : vector<8x144xf32>, vector<144x1024xf32>, vector<8x1024xf32> -> vector<8x1024xf32>
    %478 = arith.addf %476, %477 : vector<8x1024xf32>
    %479 = vector.extract_strided_slice %478 {offsets = [0, 0], sizes = [8, 144], strides = [1, 1]} : vector<8x1024xf32> to vector<8x144xf32>
    %cst_172 = arith.constant 0.000000e+00 : f32
    %480 = vector.broadcast %cst_172 : f32 to vector<8x144xf32>
    %481 = arith.subf %480, %479 : vector<8x144xf32>
    %482 = math.exp %481 : vector<8x144xf32>
    %cst_173 = arith.constant 1.000000e+00 : f32
    %483 = vector.broadcast %cst_173 : f32 to vector<8x144xf32>
    %484 = arith.addf %483, %482 : vector<8x144xf32>
    %485 = tpu.reciprocal %484 {approx = true} : vector<8x144xf32> -> vector<8x144xf32>
    %486 = vector.extract_strided_slice %478 {offsets = [0, 256], sizes = [8, 144], strides = [1, 1]} : vector<8x1024xf32> to vector<8x144xf32>
    %cst_174 = arith.constant 0.000000e+00 : f32
    %487 = vector.broadcast %cst_174 : f32 to vector<8x144xf32>
    %488 = arith.subf %487, %486 : vector<8x144xf32>
    %489 = math.exp %488 : vector<8x144xf32>
    %cst_175 = arith.constant 1.000000e+00 : f32
    %490 = vector.broadcast %cst_175 : f32 to vector<8x144xf32>
    %491 = arith.addf %490, %489 : vector<8x144xf32>
    %492 = tpu.reciprocal %491 {approx = true} : vector<8x144xf32> -> vector<8x144xf32>
    %493 = vector.extract_strided_slice %478 {offsets = [0, 512], sizes = [8, 144], strides = [1, 1]} : vector<8x1024xf32> to vector<8x144xf32>
    %494 = math.tanh %493 : vector<8x144xf32>
    %495 = vector.extract_strided_slice %478 {offsets = [0, 768], sizes = [8, 144], strides = [1, 1]} : vector<8x1024xf32> to vector<8x144xf32>
    %cst_176 = arith.constant 0.000000e+00 : f32
    %496 = vector.broadcast %cst_176 : f32 to vector<8x144xf32>
    %497 = arith.subf %496, %495 : vector<8x144xf32>
    %498 = math.exp %497 : vector<8x144xf32>
    %cst_177 = arith.constant 1.000000e+00 : f32
    %499 = vector.broadcast %cst_177 : f32 to vector<8x144xf32>
    %500 = arith.addf %499, %498 : vector<8x144xf32>
    %501 = tpu.reciprocal %500 {approx = true} : vector<8x144xf32> -> vector<8x144xf32>
    %502 = arith.mulf %492, %472 : vector<8x144xf32>
    %503 = arith.mulf %485, %494 : vector<8x144xf32>
    %504 = arith.addf %502, %503 : vector<8x144xf32>
    %505 = math.tanh %504 : vector<8x144xf32>
    %506 = arith.mulf %501, %505 : vector<8x144xf32>
    %c112_178 = arith.constant 112 : index
    %c0_179 = arith.constant 0 : index
    %507 = vector.load %arg15[%c112_178, %c0_179] : memref<136x144xf32, #tpu.memory_space<vmem>>, vector<8x144xf32>
    tpu.vector_store %arg15[%c112_178, %c0_179], %506 {strides = array<i32>} : memref<136x144xf32, #tpu.memory_space<vmem>>, vector<8x144xf32>,
    %c120 = arith.constant 120 : index
    %c0_180 = arith.constant 0 : index
    %508 = vector.load %arg14[%c120, %c0_180] : memref<136x1024xf32, #tpu.memory_space<vmem>>, vector<8x1024xf32>
    %cst_181 = arith.constant dense<0.000000e+00> : vector<8x1024xf32>
    %509 = tpu.matmul %506, %25, %cst_181 {dimension_numbers = #tpu.dot_dimension_numbers<[1], [0], [0], [1], [0, 0, 1, 1], [], []>} : vector<8x144xf32>, vector<144x1024xf32>, vector<8x1024xf32> -> vector<8x1024xf32>
    %510 = arith.addf %508, %509 : vector<8x1024xf32>
    %511 = vector.extract_strided_slice %510 {offsets = [0, 0], sizes = [8, 144], strides = [1, 1]} : vector<8x1024xf32> to vector<8x144xf32>
    %cst_182 = arith.constant 0.000000e+00 : f32
    %512 = vector.broadcast %cst_182 : f32 to vector<8x144xf32>
    %513 = arith.subf %512, %511 : vector<8x144xf32>
    %514 = math.exp %513 : vector<8x144xf32>
    %cst_183 = arith.constant 1.000000e+00 : f32
    %515 = vector.broadcast %cst_183 : f32 to vector<8x144xf32>
    %516 = arith.addf %515, %514 : vector<8x144xf32>
    %517 = tpu.reciprocal %516 {approx = true} : vector<8x144xf32> -> vector<8x144xf32>
    %518 = vector.extract_strided_slice %510 {offsets = [0, 256], sizes = [8, 144], strides = [1, 1]} : vector<8x1024xf32> to vector<8x144xf32>
    %cst_184 = arith.constant 0.000000e+00 : f32
    %519 = vector.broadcast %cst_184 : f32 to vector<8x144xf32>
    %520 = arith.subf %519, %518 : vector<8x144xf32>
    %521 = math.exp %520 : vector<8x144xf32>
    %cst_185 = arith.constant 1.000000e+00 : f32
    %522 = vector.broadcast %cst_185 : f32 to vector<8x144xf32>
    %523 = arith.addf %522, %521 : vector<8x144xf32>
    %524 = tpu.reciprocal %523 {approx = true} : vector<8x144xf32> -> vector<8x144xf32>
    %525 = vector.extract_strided_slice %510 {offsets = [0, 512], sizes = [8, 144], strides = [1, 1]} : vector<8x1024xf32> to vector<8x144xf32>
    %526 = math.tanh %525 : vector<8x144xf32>
    %527 = vector.extract_strided_slice %510 {offsets = [0, 768], sizes = [8, 144], strides = [1, 1]} : vector<8x1024xf32> to vector<8x144xf32>
    %cst_186 = arith.constant 0.000000e+00 : f32
    %528 = vector.broadcast %cst_186 : f32 to vector<8x144xf32>
    %529 = arith.subf %528, %527 : vector<8x144xf32>
    %530 = math.exp %529 : vector<8x144xf32>
    %cst_187 = arith.constant 1.000000e+00 : f32
    %531 = vector.broadcast %cst_187 : f32 to vector<8x144xf32>
    %532 = arith.addf %531, %530 : vector<8x144xf32>
    %533 = tpu.reciprocal %532 {approx = true} : vector<8x144xf32> -> vector<8x144xf32>
    %534 = arith.mulf %524, %504 : vector<8x144xf32>
    %535 = arith.mulf %517, %526 : vector<8x144xf32>
    %536 = arith.addf %534, %535 : vector<8x144xf32>
    %537 = math.tanh %536 : vector<8x144xf32>
    %538 = arith.mulf %533, %537 : vector<8x144xf32>
    %c120_188 = arith.constant 120 : index
    %c0_189 = arith.constant 0 : index
    %539 = vector.load %arg15[%c120_188, %c0_189] : memref<136x144xf32, #tpu.memory_space<vmem>>, vector<8x144xf32>
    tpu.vector_store %arg15[%c120_188, %c0_189], %538 {strides = array<i32>} : memref<136x144xf32, #tpu.memory_space<vmem>>, vector<8x144xf32>,
    %c128 = arith.constant 128 : index
    %c0_190 = arith.constant 0 : index
    %540 = vector.load %arg14[%c128, %c0_190] : memref<136x1024xf32, #tpu.memory_space<vmem>>, vector<8x1024xf32>
    %cst_191 = arith.constant dense<0.000000e+00> : vector<8x1024xf32>
    %541 = tpu.matmul %538, %25, %cst_191 {dimension_numbers = #tpu.dot_dimension_numbers<[1], [0], [0], [1], [0, 0, 1, 1], [], []>} : vector<8x144xf32>, vector<144x1024xf32>, vector<8x1024xf32> -> vector<8x1024xf32>
    %542 = arith.addf %540, %541 : vector<8x1024xf32>
    %543 = vector.extract_strided_slice %542 {offsets = [0, 0], sizes = [8, 144], strides = [1, 1]} : vector<8x1024xf32> to vector<8x144xf32>
    %cst_192 = arith.constant 0.000000e+00 : f32
    %544 = vector.broadcast %cst_192 : f32 to vector<8x144xf32>
    %545 = arith.subf %544, %543 : vector<8x144xf32>
    %546 = math.exp %545 : vector<8x144xf32>
    %cst_193 = arith.constant 1.000000e+00 : f32
    %547 = vector.broadcast %cst_193 : f32 to vector<8x144xf32>
    %548 = arith.addf %547, %546 : vector<8x144xf32>
    %549 = tpu.reciprocal %548 {approx = true} : vector<8x144xf32> -> vector<8x144xf32>
    %550 = vector.extract_strided_slice %542 {offsets = [0, 256], sizes = [8, 144], strides = [1, 1]} : vector<8x1024xf32> to vector<8x144xf32>
    %cst_194 = arith.constant 0.000000e+00 : f32
    %551 = vector.broadcast %cst_194 : f32 to vector<8x144xf32>
    %552 = arith.subf %551, %550 : vector<8x144xf32>
    %553 = math.exp %552 : vector<8x144xf32>
    %cst_195 = arith.constant 1.000000e+00 : f32
    %554 = vector.broadcast %cst_195 : f32 to vector<8x144xf32>
    %555 = arith.addf %554, %553 : vector<8x144xf32>
    %556 = tpu.reciprocal %555 {approx = true} : vector<8x144xf32> -> vector<8x144xf32>
    %557 = vector.extract_strided_slice %542 {offsets = [0, 512], sizes = [8, 144], strides = [1, 1]} : vector<8x1024xf32> to vector<8x144xf32>
    %558 = math.tanh %557 : vector<8x144xf32>
    %559 = vector.extract_strided_slice %542 {offsets = [0, 768], sizes = [8, 144], strides = [1, 1]} : vector<8x1024xf32> to vector<8x144xf32>
    %cst_196 = arith.constant 0.000000e+00 : f32
    %560 = vector.broadcast %cst_196 : f32 to vector<8x144xf32>
    %561 = arith.subf %560, %559 : vector<8x144xf32>
    %562 = math.exp %561 : vector<8x144xf32>
    %cst_197 = arith.constant 1.000000e+00 : f32
    %563 = vector.broadcast %cst_197 : f32 to vector<8x144xf32>
    %564 = arith.addf %563, %562 : vector<8x144xf32>
    %565 = tpu.reciprocal %564 {approx = true} : vector<8x144xf32> -> vector<8x144xf32>
    %566 = arith.mulf %556, %536 : vector<8x144xf32>
    %567 = arith.mulf %549, %558 : vector<8x144xf32>
    %568 = arith.addf %566, %567 : vector<8x144xf32>
    %569 = math.tanh %568 : vector<8x144xf32>
    %570 = arith.mulf %565, %569 : vector<8x144xf32>
    %c128_198 = arith.constant 128 : index
    %c0_199 = arith.constant 0 : index
    %571 = vector.load %arg15[%c128_198, %c0_199] : memref<136x144xf32, #tpu.memory_space<vmem>>, vector<8x144xf32>
    tpu.vector_store %arg15[%c128_198, %c0_199], %570 {strides = array<i32>} : memref<136x144xf32, #tpu.memory_space<vmem>>, vector<8x144xf32>,
    %c0_200 = arith.constant 0 : index
    %c0_201 = arith.constant 0 : index
    %572 = vector.load %arg15[%c0_200, %c0_201] : memref<136x144xf32, #tpu.memory_space<vmem>>, vector<136x144xf32>
    %c0_202 = arith.constant 0 : index
    %c0_203 = arith.constant 0 : index
    %573 = vector.load %arg4[%c0_202, %c0_203] : memref<144x144xf32, #tpu.memory_space<vmem>>, vector<144x144xf32>
    %cst_204 = arith.constant dense<0.000000e+00> : vector<136x144xf32>
    %574 = tpu.matmul %572, %573, %cst_204 {dimension_numbers = #tpu.dot_dimension_numbers<[1], [0], [0], [1], [0, 0, 1, 1], [], []>} : vector<136x144xf32>, vector<144x144xf32>, vector<136x144xf32> -> vector<136x144xf32>
    %c0_205 = arith.constant 0 : index
    %c0_206 = arith.constant 0 : index
    %575 = vector.load %arg5[%c0_205, %c0_206] : memref<1x144xf32, #tpu.memory_space<vmem>>, vector<1x144xf32>
    %576 = vector.broadcast %575 : vector<1x144xf32> to vector<136x144xf32>
    %577 = arith.addf %574, %576 : vector<136x144xf32>
    %578 = math.tanh %577 : vector<136x144xf32>
    %c0_207 = arith.constant 0 : index
    %c0_208 = arith.constant 0 : index
    %579 = vector.load %arg6[%c0_207, %c0_208] : memref<1x144xf32, #tpu.memory_space<vmem>>, vector<1x144xf32>
    %580 = vector.broadcast %579 : vector<1x144xf32> to vector<136x144xf32>
    %581 = arith.mulf %578, %580 : vector<136x144xf32>
    %c0_209 = arith.constant 0 : index
    %c0_210 = arith.constant 0 : index
    %582 = vector.load %arg7[%c0_209, %c0_210] : memref<144x144xf32, #tpu.memory_space<vmem>>, vector<144x144xf32>
    %cst_211 = arith.constant dense<0.000000e+00> : vector<136x144xf32>
    %583 = tpu.matmul %581, %582, %cst_211 {dimension_numbers = #tpu.dot_dimension_numbers<[1], [0], [0], [1], [0, 0, 1, 1], [], []>} : vector<136x144xf32>, vector<144x144xf32>, vector<136x144xf32> -> vector<136x144xf32>
    %c0_212 = arith.constant 0 : index
    %c0_213 = arith.constant 0 : index
    %584 = vector.load %arg8[%c0_212, %c0_213] : memref<136x144xf32, #tpu.memory_space<vmem>>, vector<136x144xf32>
    %585 = arith.addf %583, %584 : vector<136x144xf32>
    %c0_214 = arith.constant 0 : index
    %c0_215 = arith.constant 0 : index
    %586 = vector.load %arg16[%c0_214, %c0_215] : memref<136x144xf32, #tpu.memory_space<vmem>>, vector<136x144xf32>
    tpu.vector_store %arg16[%c0_214, %c0_215], %585 {strides = array<i32>} : memref<136x144xf32, #tpu.memory_space<vmem>>, vector<136x144xf32>,
    %c0_216 = arith.constant 0 : index
    %c0_217 = arith.constant 0 : index
    %587 = vector.load %arg16[%c0_216, %c0_217] : memref<136x144xf32, #tpu.memory_space<vmem>>, vector<8x144xf32>
    %c8_218 = arith.constant 8 : index
    %c0_219 = arith.constant 0 : index
    %588 = vector.load %arg16[%c8_218, %c0_219] : memref<136x144xf32, #tpu.memory_space<vmem>>, vector<8x144xf32>
    %589 = arith.maximumf %587, %588 : vector<8x144xf32>
    %c16_220 = arith.constant 16 : index
    %c0_221 = arith.constant 0 : index
    %590 = vector.load %arg16[%c16_220, %c0_221] : memref<136x144xf32, #tpu.memory_space<vmem>>, vector<8x144xf32>
    %591 = arith.maximumf %589, %590 : vector<8x144xf32>
    %c24_222 = arith.constant 24 : index
    %c0_223 = arith.constant 0 : index
    %592 = vector.load %arg16[%c24_222, %c0_223] : memref<136x144xf32, #tpu.memory_space<vmem>>, vector<8x144xf32>
    %593 = arith.maximumf %591, %592 : vector<8x144xf32>
    %c32_224 = arith.constant 32 : index
    %c0_225 = arith.constant 0 : index
    %594 = vector.load %arg16[%c32_224, %c0_225] : memref<136x144xf32, #tpu.memory_space<vmem>>, vector<8x144xf32>
    %595 = arith.maximumf %593, %594 : vector<8x144xf32>
    %c40_226 = arith.constant 40 : index
    %c0_227 = arith.constant 0 : index
    %596 = vector.load %arg16[%c40_226, %c0_227] : memref<136x144xf32, #tpu.memory_space<vmem>>, vector<8x144xf32>
    %597 = arith.maximumf %595, %596 : vector<8x144xf32>
    %c48_228 = arith.constant 48 : index
    %c0_229 = arith.constant 0 : index
    %598 = vector.load %arg16[%c48_228, %c0_229] : memref<136x144xf32, #tpu.memory_space<vmem>>, vector<8x144xf32>
    %599 = arith.maximumf %597, %598 : vector<8x144xf32>
    %c56_230 = arith.constant 56 : index
    %c0_231 = arith.constant 0 : index
    %600 = vector.load %arg16[%c56_230, %c0_231] : memref<136x144xf32, #tpu.memory_space<vmem>>, vector<8x144xf32>
    %601 = arith.maximumf %599, %600 : vector<8x144xf32>
    %c64_232 = arith.constant 64 : index
    %c0_233 = arith.constant 0 : index
    %602 = vector.load %arg16[%c64_232, %c0_233] : memref<136x144xf32, #tpu.memory_space<vmem>>, vector<8x144xf32>
    %603 = arith.maximumf %601, %602 : vector<8x144xf32>
    %c72_234 = arith.constant 72 : index
    %c0_235 = arith.constant 0 : index
    %604 = vector.load %arg16[%c72_234, %c0_235] : memref<136x144xf32, #tpu.memory_space<vmem>>, vector<8x144xf32>
    %605 = arith.maximumf %603, %604 : vector<8x144xf32>
    %c80_236 = arith.constant 80 : index
    %c0_237 = arith.constant 0 : index
    %606 = vector.load %arg16[%c80_236, %c0_237] : memref<136x144xf32, #tpu.memory_space<vmem>>, vector<8x144xf32>
    %607 = arith.maximumf %605, %606 : vector<8x144xf32>
    %c88_238 = arith.constant 88 : index
    %c0_239 = arith.constant 0 : index
    %608 = vector.load %arg16[%c88_238, %c0_239] : memref<136x144xf32, #tpu.memory_space<vmem>>, vector<8x144xf32>
    %609 = arith.maximumf %607, %608 : vector<8x144xf32>
    %c96_240 = arith.constant 96 : index
    %c0_241 = arith.constant 0 : index
    %610 = vector.load %arg16[%c96_240, %c0_241] : memref<136x144xf32, #tpu.memory_space<vmem>>, vector<8x144xf32>
    %611 = arith.maximumf %609, %610 : vector<8x144xf32>
    %c104_242 = arith.constant 104 : index
    %c0_243 = arith.constant 0 : index
    %612 = vector.load %arg16[%c104_242, %c0_243] : memref<136x144xf32, #tpu.memory_space<vmem>>, vector<8x144xf32>
    %613 = arith.maximumf %611, %612 : vector<8x144xf32>
    %c112_244 = arith.constant 112 : index
    %c0_245 = arith.constant 0 : index
    %614 = vector.load %arg16[%c112_244, %c0_245] : memref<136x144xf32, #tpu.memory_space<vmem>>, vector<8x144xf32>
    %615 = arith.maximumf %613, %614 : vector<8x144xf32>
    %c120_246 = arith.constant 120 : index
    %c0_247 = arith.constant 0 : index
    %616 = vector.load %arg16[%c120_246, %c0_247] : memref<136x144xf32, #tpu.memory_space<vmem>>, vector<8x144xf32>
    %617 = arith.maximumf %615, %616 : vector<8x144xf32>
    %c128_248 = arith.constant 128 : index
    %c0_249 = arith.constant 0 : index
    %618 = vector.load %arg16[%c128_248, %c0_249] : memref<136x144xf32, #tpu.memory_space<vmem>>, vector<8x144xf32>
    %619 = arith.maximumf %617, %618 : vector<8x144xf32>
    %cst_250 = arith.constant 0.000000e+00 : f32
    %620 = vector.broadcast %cst_250 : f32 to vector<8x144xf32>
    %cst_251 = arith.constant 0.000000e+00 : f32
    %621 = vector.broadcast %cst_251 : f32 to vector<8x144xf32>
    %c0_252 = arith.constant 0 : index
    %c0_253 = arith.constant 0 : index
    %622 = vector.load %arg16[%c0_252, %c0_253] : memref<136x144xf32, #tpu.memory_space<vmem>>, vector<8x144xf32>
    %623 = arith.subf %622, %619 : vector<8x144xf32>
    %624 = math.exp %623 : vector<8x144xf32>
    %625 = arith.addf %620, %624 : vector<8x144xf32>
    %c0_254 = arith.constant 0 : index
    %c0_255 = arith.constant 0 : index
    %626 = vector.load %arg15[%c0_254, %c0_255] : memref<136x144xf32, #tpu.memory_space<vmem>>, vector<8x144xf32>
    %627 = arith.mulf %624, %626 : vector<8x144xf32>
    %628 = arith.addf %621, %627 : vector<8x144xf32>
    %c8_256 = arith.constant 8 : index
    %c0_257 = arith.constant 0 : index
    %629 = vector.load %arg16[%c8_256, %c0_257] : memref<136x144xf32, #tpu.memory_space<vmem>>, vector<8x144xf32>
    %630 = arith.subf %629, %619 : vector<8x144xf32>
    %631 = math.exp %630 : vector<8x144xf32>
    %632 = arith.addf %625, %631 : vector<8x144xf32>
    %c8_258 = arith.constant 8 : index
    %c0_259 = arith.constant 0 : index
    %633 = vector.load %arg15[%c8_258, %c0_259] : memref<136x144xf32, #tpu.memory_space<vmem>>, vector<8x144xf32>
    %634 = arith.mulf %631, %633 : vector<8x144xf32>
    %635 = arith.addf %628, %634 : vector<8x144xf32>
    %c16_260 = arith.constant 16 : index
    %c0_261 = arith.constant 0 : index
    %636 = vector.load %arg16[%c16_260, %c0_261] : memref<136x144xf32, #tpu.memory_space<vmem>>, vector<8x144xf32>
    %637 = arith.subf %636, %619 : vector<8x144xf32>
    %638 = math.exp %637 : vector<8x144xf32>
    %639 = arith.addf %632, %638 : vector<8x144xf32>
    %c16_262 = arith.constant 16 : index
    %c0_263 = arith.constant 0 : index
    %640 = vector.load %arg15[%c16_262, %c0_263] : memref<136x144xf32, #tpu.memory_space<vmem>>, vector<8x144xf32>
    %641 = arith.mulf %638, %640 : vector<8x144xf32>
    %642 = arith.addf %635, %641 : vector<8x144xf32>
    %c24_264 = arith.constant 24 : index
    %c0_265 = arith.constant 0 : index
    %643 = vector.load %arg16[%c24_264, %c0_265] : memref<136x144xf32, #tpu.memory_space<vmem>>, vector<8x144xf32>
    %644 = arith.subf %643, %619 : vector<8x144xf32>
    %645 = math.exp %644 : vector<8x144xf32>
    %646 = arith.addf %639, %645 : vector<8x144xf32>
    %c24_266 = arith.constant 24 : index
    %c0_267 = arith.constant 0 : index
    %647 = vector.load %arg15[%c24_266, %c0_267] : memref<136x144xf32, #tpu.memory_space<vmem>>, vector<8x144xf32>
    %648 = arith.mulf %645, %647 : vector<8x144xf32>
    %649 = arith.addf %642, %648 : vector<8x144xf32>
    %c32_268 = arith.constant 32 : index
    %c0_269 = arith.constant 0 : index
    %650 = vector.load %arg16[%c32_268, %c0_269] : memref<136x144xf32, #tpu.memory_space<vmem>>, vector<8x144xf32>
    %651 = arith.subf %650, %619 : vector<8x144xf32>
    %652 = math.exp %651 : vector<8x144xf32>
    %653 = arith.addf %646, %652 : vector<8x144xf32>
    %c32_270 = arith.constant 32 : index
    %c0_271 = arith.constant 0 : index
    %654 = vector.load %arg15[%c32_270, %c0_271] : memref<136x144xf32, #tpu.memory_space<vmem>>, vector<8x144xf32>
    %655 = arith.mulf %652, %654 : vector<8x144xf32>
    %656 = arith.addf %649, %655 : vector<8x144xf32>
    %c40_272 = arith.constant 40 : index
    %c0_273 = arith.constant 0 : index
    %657 = vector.load %arg16[%c40_272, %c0_273] : memref<136x144xf32, #tpu.memory_space<vmem>>, vector<8x144xf32>
    %658 = arith.subf %657, %619 : vector<8x144xf32>
    %659 = math.exp %658 : vector<8x144xf32>
    %660 = arith.addf %653, %659 : vector<8x144xf32>
    %c40_274 = arith.constant 40 : index
    %c0_275 = arith.constant 0 : index
    %661 = vector.load %arg15[%c40_274, %c0_275] : memref<136x144xf32, #tpu.memory_space<vmem>>, vector<8x144xf32>
    %662 = arith.mulf %659, %661 : vector<8x144xf32>
    %663 = arith.addf %656, %662 : vector<8x144xf32>
    %c48_276 = arith.constant 48 : index
    %c0_277 = arith.constant 0 : index
    %664 = vector.load %arg16[%c48_276, %c0_277] : memref<136x144xf32, #tpu.memory_space<vmem>>, vector<8x144xf32>
    %665 = arith.subf %664, %619 : vector<8x144xf32>
    %666 = math.exp %665 : vector<8x144xf32>
    %667 = arith.addf %660, %666 : vector<8x144xf32>
    %c48_278 = arith.constant 48 : index
    %c0_279 = arith.constant 0 : index
    %668 = vector.load %arg15[%c48_278, %c0_279] : memref<136x144xf32, #tpu.memory_space<vmem>>, vector<8x144xf32>
    %669 = arith.mulf %666, %668 : vector<8x144xf32>
    %670 = arith.addf %663, %669 : vector<8x144xf32>
    %c56_280 = arith.constant 56 : index
    %c0_281 = arith.constant 0 : index
    %671 = vector.load %arg16[%c56_280, %c0_281] : memref<136x144xf32, #tpu.memory_space<vmem>>, vector<8x144xf32>
    %672 = arith.subf %671, %619 : vector<8x144xf32>
    %673 = math.exp %672 : vector<8x144xf32>
    %674 = arith.addf %667, %673 : vector<8x144xf32>
    %c56_282 = arith.constant 56 : index
    %c0_283 = arith.constant 0 : index
    %675 = vector.load %arg15[%c56_282, %c0_283] : memref<136x144xf32, #tpu.memory_space<vmem>>, vector<8x144xf32>
    %676 = arith.mulf %673, %675 : vector<8x144xf32>
    %677 = arith.addf %670, %676 : vector<8x144xf32>
    %c64_284 = arith.constant 64 : index
    %c0_285 = arith.constant 0 : index
    %678 = vector.load %arg16[%c64_284, %c0_285] : memref<136x144xf32, #tpu.memory_space<vmem>>, vector<8x144xf32>
    %679 = arith.subf %678, %619 : vector<8x144xf32>
    %680 = math.exp %679 : vector<8x144xf32>
    %681 = arith.addf %674, %680 : vector<8x144xf32>
    %c64_286 = arith.constant 64 : index
    %c0_287 = arith.constant 0 : index
    %682 = vector.load %arg15[%c64_286, %c0_287] : memref<136x144xf32, #tpu.memory_space<vmem>>, vector<8x144xf32>
    %683 = arith.mulf %680, %682 : vector<8x144xf32>
    %684 = arith.addf %677, %683 : vector<8x144xf32>
    %c72_288 = arith.constant 72 : index
    %c0_289 = arith.constant 0 : index
    %685 = vector.load %arg16[%c72_288, %c0_289] : memref<136x144xf32, #tpu.memory_space<vmem>>, vector<8x144xf32>
    %686 = arith.subf %685, %619 : vector<8x144xf32>
    %687 = math.exp %686 : vector<8x144xf32>
    %688 = arith.addf %681, %687 : vector<8x144xf32>
    %c72_290 = arith.constant 72 : index
    %c0_291 = arith.constant 0 : index
    %689 = vector.load %arg15[%c72_290, %c0_291] : memref<136x144xf32, #tpu.memory_space<vmem>>, vector<8x144xf32>
    %690 = arith.mulf %687, %689 : vector<8x144xf32>
    %691 = arith.addf %684, %690 : vector<8x144xf32>
    %c80_292 = arith.constant 80 : index
    %c0_293 = arith.constant 0 : index
    %692 = vector.load %arg16[%c80_292, %c0_293] : memref<136x144xf32, #tpu.memory_space<vmem>>, vector<8x144xf32>
    %693 = arith.subf %692, %619 : vector<8x144xf32>
    %694 = math.exp %693 : vector<8x144xf32>
    %695 = arith.addf %688, %694 : vector<8x144xf32>
    %c80_294 = arith.constant 80 : index
    %c0_295 = arith.constant 0 : index
    %696 = vector.load %arg15[%c80_294, %c0_295] : memref<136x144xf32, #tpu.memory_space<vmem>>, vector<8x144xf32>
    %697 = arith.mulf %694, %696 : vector<8x144xf32>
    %698 = arith.addf %691, %697 : vector<8x144xf32>
    %c88_296 = arith.constant 88 : index
    %c0_297 = arith.constant 0 : index
    %699 = vector.load %arg16[%c88_296, %c0_297] : memref<136x144xf32, #tpu.memory_space<vmem>>, vector<8x144xf32>
    %700 = arith.subf %699, %619 : vector<8x144xf32>
    %701 = math.exp %700 : vector<8x144xf32>
    %702 = arith.addf %695, %701 : vector<8x144xf32>
    %c88_298 = arith.constant 88 : index
    %c0_299 = arith.constant 0 : index
    %703 = vector.load %arg15[%c88_298, %c0_299] : memref<136x144xf32, #tpu.memory_space<vmem>>, vector<8x144xf32>
    %704 = arith.mulf %701, %703 : vector<8x144xf32>
    %705 = arith.addf %698, %704 : vector<8x144xf32>
    %c96_300 = arith.constant 96 : index
    %c0_301 = arith.constant 0 : index
    %706 = vector.load %arg16[%c96_300, %c0_301] : memref<136x144xf32, #tpu.memory_space<vmem>>, vector<8x144xf32>
    %707 = arith.subf %706, %619 : vector<8x144xf32>
    %708 = math.exp %707 : vector<8x144xf32>
    %709 = arith.addf %702, %708 : vector<8x144xf32>
    %c96_302 = arith.constant 96 : index
    %c0_303 = arith.constant 0 : index
    %710 = vector.load %arg15[%c96_302, %c0_303] : memref<136x144xf32, #tpu.memory_space<vmem>>, vector<8x144xf32>
    %711 = arith.mulf %708, %710 : vector<8x144xf32>
    %712 = arith.addf %705, %711 : vector<8x144xf32>
    %c104_304 = arith.constant 104 : index
    %c0_305 = arith.constant 0 : index
    %713 = vector.load %arg16[%c104_304, %c0_305] : memref<136x144xf32, #tpu.memory_space<vmem>>, vector<8x144xf32>
    %714 = arith.subf %713, %619 : vector<8x144xf32>
    %715 = math.exp %714 : vector<8x144xf32>
    %716 = arith.addf %709, %715 : vector<8x144xf32>
    %c104_306 = arith.constant 104 : index
    %c0_307 = arith.constant 0 : index
    %717 = vector.load %arg15[%c104_306, %c0_307] : memref<136x144xf32, #tpu.memory_space<vmem>>, vector<8x144xf32>
    %718 = arith.mulf %715, %717 : vector<8x144xf32>
    %719 = arith.addf %712, %718 : vector<8x144xf32>
    %c112_308 = arith.constant 112 : index
    %c0_309 = arith.constant 0 : index
    %720 = vector.load %arg16[%c112_308, %c0_309] : memref<136x144xf32, #tpu.memory_space<vmem>>, vector<8x144xf32>
    %721 = arith.subf %720, %619 : vector<8x144xf32>
    %722 = math.exp %721 : vector<8x144xf32>
    %723 = arith.addf %716, %722 : vector<8x144xf32>
    %c112_310 = arith.constant 112 : index
    %c0_311 = arith.constant 0 : index
    %724 = vector.load %arg15[%c112_310, %c0_311] : memref<136x144xf32, #tpu.memory_space<vmem>>, vector<8x144xf32>
    %725 = arith.mulf %722, %724 : vector<8x144xf32>
    %726 = arith.addf %719, %725 : vector<8x144xf32>
    %c120_312 = arith.constant 120 : index
    %c0_313 = arith.constant 0 : index
    %727 = vector.load %arg16[%c120_312, %c0_313] : memref<136x144xf32, #tpu.memory_space<vmem>>, vector<8x144xf32>
    %728 = arith.subf %727, %619 : vector<8x144xf32>
    %729 = math.exp %728 : vector<8x144xf32>
    %730 = arith.addf %723, %729 : vector<8x144xf32>
    %c120_314 = arith.constant 120 : index
    %c0_315 = arith.constant 0 : index
    %731 = vector.load %arg15[%c120_314, %c0_315] : memref<136x144xf32, #tpu.memory_space<vmem>>, vector<8x144xf32>
    %732 = arith.mulf %729, %731 : vector<8x144xf32>
    %733 = arith.addf %726, %732 : vector<8x144xf32>
    %c128_316 = arith.constant 128 : index
    %c0_317 = arith.constant 0 : index
    %734 = vector.load %arg16[%c128_316, %c0_317] : memref<136x144xf32, #tpu.memory_space<vmem>>, vector<8x144xf32>
    %735 = arith.subf %734, %619 : vector<8x144xf32>
    %736 = math.exp %735 : vector<8x144xf32>
    %737 = arith.addf %730, %736 : vector<8x144xf32>
    %c128_318 = arith.constant 128 : index
    %c0_319 = arith.constant 0 : index
    %738 = vector.load %arg15[%c128_318, %c0_319] : memref<136x144xf32, #tpu.memory_space<vmem>>, vector<8x144xf32>
    %739 = arith.mulf %736, %738 : vector<8x144xf32>
    %740 = arith.addf %733, %739 : vector<8x144xf32>
    %741 = tpu.reciprocal %737 {approx = true} : vector<8x144xf32> -> vector<8x144xf32>
    %742 = arith.mulf %740, %741 : vector<8x144xf32>
    %c0_320 = arith.constant 0 : index
    %c0_321 = arith.constant 0 : index
    %743 = vector.load %arg9[%c0_320, %c0_321] : memref<144x64xf32, #tpu.memory_space<vmem>>, vector<144x64xf32>
    %cst_322 = arith.constant dense<0.000000e+00> : vector<8x64xf32>
    %744 = tpu.matmul %742, %743, %cst_322 {dimension_numbers = #tpu.dot_dimension_numbers<[1], [0], [0], [1], [0, 0, 1, 1], [], []>} : vector<8x144xf32>, vector<144x64xf32>, vector<8x64xf32> -> vector<8x64xf32>
    %c0_323 = arith.constant 0 : index
    %c0_324 = arith.constant 0 : index
    %745 = vector.load %arg10[%c0_323, %c0_324] : memref<1x64xf32, #tpu.memory_space<vmem>>, vector<1x64xf32>
    %746 = vector.broadcast %745 : vector<1x64xf32> to vector<8x64xf32>
    %747 = arith.addf %744, %746 : vector<8x64xf32>
    %cst_325 = arith.constant 0.000000e+00 : f32
    %748 = vector.broadcast %cst_325 : f32 to vector<8x64xf32>
    %749 = arith.maximumf %747, %748 : vector<8x64xf32>
    %c0_326 = arith.constant 0 : index
    %c0_327 = arith.constant 0 : index
    %750 = vector.load %arg11[%c0_326, %c0_327] : memref<64x1xf32, #tpu.memory_space<vmem>>, vector<64x1xf32>
    %cst_328 = arith.constant dense<0.000000e+00> : vector<8x1xf32>
    %751 = tpu.matmul %749, %750, %cst_328 {dimension_numbers = #tpu.dot_dimension_numbers<[1], [0], [0], [1], [0, 0, 1, 1], [], []>} : vector<8x64xf32>, vector<64x1xf32>, vector<8x1xf32> -> vector<8x1xf32>
    %c0_329 = arith.constant 0 : index
    %c0_330 = arith.constant 0 : index
    %752 = vector.load %arg12[%c0_329, %c0_330] : memref<1x1xf32, #tpu.memory_space<vmem>>, vector<1x1xf32>
    %753 = vector.broadcast %752 : vector<1x1xf32> to vector<8x1xf32>
    %754 = arith.addf %751, %753 : vector<8x1xf32>
    %cst_331 = arith.constant 0.000000e+00 : f32
    %755 = vector.broadcast %cst_331 : f32 to vector<8x1xf32>
    %756 = arith.subf %755, %754 : vector<8x1xf32>
    %757 = math.exp %756 : vector<8x1xf32>
    %cst_332 = arith.constant 1.000000e+00 : f32
    %758 = vector.broadcast %cst_332 : f32 to vector<8x1xf32>
    %759 = arith.addf %758, %757 : vector<8x1xf32>
    %760 = tpu.reciprocal %759 {approx = true} : vector<8x1xf32> -> vector<8x1xf32>
    %c0_333 = arith.constant 0 : index
    %c0_334 = arith.constant 0 : index
    %761 = vector.load %arg13[%c0_333, %c0_334] : memref<8x1xf32, #tpu.memory_space<vmem>>, vector<8x1xf32>
    tpu.vector_store %arg13[%c0_333, %c0_334], %760 {strides = array<i32>} : memref<8x1xf32, #tpu.memory_space<vmem>>, vector<8x1xf32>,
    return
  }
}

</mosaic_0001>

<llo_original>
// kernel: embed_attention_net.1
$region0: #{embed_attention_net.1}
  #allocation0 [shape = 'u32[]', space=smem, size = 0x4, offset = 0x4, fixed_abs, tag = 'smem constant byte address 0x4 - core index']
  #allocation1 [shape = 'u32[72,128]{1,0:T(1,128)}', space=vmem, size = 0x9000, scoped, tag = 'internal scratch']
  #allocation2 [shape = 'f32[136,1024]{1,0:T(8,128)}', space=vmem, size = 0x88000, scoped, tag = 'scratch operand']
  #allocation3 [shape = 'f32[136,144]{1,0:T(8,128)}', space=vmem, size = 0x22000, scoped, tag = 'scratch operand']
  #allocation4 [shape = 'f32[136,144]{1,0:T(8,128)}', space=vmem, size = 0x22000, scoped, tag = 'scratch operand']
  #allocation5 [shape = 'f32[1,1]{1,0:T(1,128)S(1)}', space=vmem, size = 0x200, scoped, tag = 'scoped memory for embed_attention_net.1']
  %s0 = inlined_call_operand.vmem [shape: f32[136,120], index: 0, kind: input, shape index: {}]
  %s1 = inlined_call_operand.vmem [shape: f32[120,1024], index: 1, kind: input, shape index: {}]
  %s2 = inlined_call_operand.vmem [shape: f32[144,1024], index: 2, kind: input, shape index: {}]
  %s3 = inlined_call_operand.vmem [shape: f32[1,1024], index: 3, kind: input, shape index: {}]
  %s4 = inlined_call_operand.vmem [shape: f32[144,144], index: 4, kind: input, shape index: {}]
  %s5 = inlined_call_operand.vmem [shape: f32[1,144], index: 5, kind: input, shape index: {}]
  %s6 = inlined_call_operand.vmem [shape: f32[1,144], index: 6, kind: input, shape index: {}]
  %s7 = inlined_call_operand.vmem [shape: f32[144,144], index: 7, kind: input, shape index: {}]
  %s8 = inlined_call_operand.vmem [shape: f32[136,144], index: 8, kind: input, shape index: {}]
  %s9 = inlined_call_operand.vmem [shape: f32[144,64], index: 9, kind: input, shape index: {}]
  %s10 = inlined_call_operand.vmem [shape: f32[1,64], index: 10, kind: input, shape index: {}]
  %s11 = inlined_call_operand.vmem [shape: f32[64,1], index: 11, kind: input, shape index: {}]
  %s12 = inlined_call_operand.<no memory space> [shape: f32[1,1], index: 12, kind: input, shape index: {}]
  %s13 = inlined_call_operand.vmem [shape: f32[8,1], index: 13, kind: output, shape index: {}]
  %s14 = sld [smem:[#allocation0]]
  $region62: #{embed_attention_net.1} parent=0
    _
  %s16 = ssub.s32 1, %s14
  %s17 = scalar_select 0, %s16, %s14
  %v18 = vstv %s12
  %19 = vst [vmem:[#allocation5] sm:$0x1] %v18
  // Predicated region
  $region2: #{embed_attention_net.1} parent=0 // pred_check
    _
  $region3: #{embed_attention_net.1} parent=0 // pred_check_branch
    %21 = sbr.rel (0) target = $region5
  $region4: #{embed_attention_net.1} parent=0 // pred_region
    _
  $region5: #{embed_attention_net.1} parent=0 // pred_fallthru
    _
  // Predicated region
  $region6: #{embed_attention_net.1} parent=0 // pred_check
    _
  $region7: #{embed_attention_net.1} parent=0 // pred_check_branch
    %23 = sbr.rel (0) target = $region9
  $region8: #{embed_attention_net.1} parent=0 // pred_region
    _
  $region9: #{embed_attention_net.1} parent=0 // pred_fallthru
    _
  // Predicated region
  $region10: #{embed_attention_net.1} parent=0 // pred_check
    _
  $region11: #{embed_attention_net.1} parent=0 // pred_check_branch
    %25 = sbr.rel (0) target = $region13
  $region12: #{embed_attention_net.1} parent=0 // pred_region
    _
  $region13: #{embed_attention_net.1} parent=0 // pred_fallthru
    _
  // Predicated region
  $region14: #{embed_attention_net.1} parent=0 // pred_check
    _
  $region15: #{embed_attention_net.1} parent=0 // pred_check_branch
    %27 = sbr.rel (0) target = $region17
  $region16: #{embed_attention_net.1} parent=0 // pred_region
    _
  $region17: #{embed_attention_net.1} parent=0 // pred_fallthru
    _
  // Predicated region
  $region18: #{embed_attention_net.1} parent=0 // pred_check
    _
  $region19: #{embed_attention_net.1} parent=0 // pred_check_branch
    %29 = sbr.rel (0) target = $region21
  $region20: #{embed_attention_net.1} parent=0 // pred_region
    _
  $region21: #{embed_attention_net.1} parent=0 // pred_fallthru
    _
  // Predicated region
  $region22: #{embed_attention_net.1} parent=0 // pred_check
    _
  $region23: #{embed_attention_net.1} parent=0 // pred_check_branch
    %31 = sbr.rel (0) target = $region25
  $region24: #{embed_attention_net.1} parent=0 // pred_region
    _
  $region25: #{embed_attention_net.1} parent=0 // pred_fallthru
    _
  // Predicated region
  $region26: #{embed_attention_net.1} parent=0 // pred_check
    _
  $region27: #{embed_attention_net.1} parent=0 // pred_check_branch
    %33 = sbr.rel (0) target = $region29
  $region28: #{embed_attention_net.1} parent=0 // pred_region
    _
  $region29: #{embed_attention_net.1} parent=0 // pred_fallthru
    _
  // Predicated region
  $region30: #{embed_attention_net.1} parent=0 // pred_check
    _
  $region31: #{embed_attention_net.1} parent=0 // pred_check_branch
    %35 = sbr.rel (0) target = $region33
  $region32: #{embed_attention_net.1} parent=0 // pred_region
    _
  $region33: #{embed_attention_net.1} parent=0 // pred_fallthru
    _
  // Predicated region
  $region34: #{embed_attention_net.1} parent=0 // pred_check
    _
  $region35: #{embed_attention_net.1} parent=0 // pred_check_branch
    %37 = sbr.rel (0) target = $region37
  $region36: #{embed_attention_net.1} parent=0 // pred_region
    _
  $region37: #{embed_attention_net.1} parent=0 // pred_fallthru
    _
  // Predicated region
  $region38: #{embed_attention_net.1} parent=0 // pred_check
    _
  $region39: #{embed_attention_net.1} parent=0 // pred_check_branch
    %39 = sbr.rel (0) target = $region41
  $region40: #{embed_attention_net.1} parent=0 // pred_region
    _
  $region41: #{embed_attention_net.1} parent=0 // pred_fallthru
    _
  // Predicated region
  $region42: #{embed_attention_net.1} parent=0 // pred_check
    _
  $region43: #{embed_attention_net.1} parent=0 // pred_check_branch
    %41 = sbr.rel (0) target = $region45
  $region44: #{embed_attention_net.1} parent=0 // pred_region
    _
  $region45: #{embed_attention_net.1} parent=0 // pred_fallthru
    _
  // Predicated region
  $region46: #{embed_attention_net.1} parent=0 // pred_check
    _
  $region47: #{embed_attention_net.1} parent=0 // pred_check_branch
    %43 = sbr.rel (0) target = $region49
  $region48: #{embed_attention_net.1} parent=0 // pred_region
    _
  $region49: #{embed_attention_net.1} parent=0 // pred_fallthru
    _
  // Predicated region
  $region50: #{embed_attention_net.1} parent=0 // pred_check
    _
  $region51: #{embed_attention_net.1} parent=0 // pred_check_branch
    %45 = sbr.rel (0) target = $region53
  $region52: #{embed_attention_net.1} parent=0 // pred_region
    _
  $region53: #{embed_attention_net.1} parent=0 // pred_fallthru
    _
  %v46 = vld [vmem:[%s0] sm:$0xff]
  %v47 = vld [vmem:[%s0 + $0x8] sm:$0xff]
  %v48 = vld [vmem:[%s0 + $0x10] sm:$0xff]
  %v49 = vld [vmem:[%s0 + $0x18] sm:$0xff]
  %v50 = vld [vmem:[%s0 + $0x20] sm:$0xff]
  %v51 = vld [vmem:[%s0 + $0x28] sm:$0xff]
  %v52 = vld [vmem:[%s0 + $0x30] sm:$0xff]
  %v53 = vld [vmem:[%s0 + $0x38] sm:$0xff]
  %v54 = vld [vmem:[%s0 + $0x40] sm:$0xff]
  %v55 = vld [vmem:[%s0 + $0x48] sm:$0xff]
  %v56 = vld [vmem:[%s0 + $0x50] sm:$0xff]
  %v57 = vld [vmem:[%s0 + $0x58] sm:$0xff]
  %v58 = vld [vmem:[%s0 + $0x60] sm:$0xff]
  %v59 = vld [vmem:[%s0 + $0x68] sm:$0xff]
  %v60 = vld [vmem:[%s0 + $0x70] sm:$0xff]
  %v61 = vld [vmem:[%s0 + $0x78] sm:$0xff]
  %v62 = vld [vmem:[%s0 + $0x80] sm:$0xff]
  %v63 = vld [vmem:[%s1] sm:$0xff]
  %v64 = vld [vmem:[%s1 + $0x8] sm:$0xff]
  %v65 = vld [vmem:[%s1 + $0x40] sm:$0xff]
  %v66 = vld [vmem:[%s1 + $0x48] sm:$0xff]
  %v67 = vld [vmem:[%s1 + $0x80] sm:$0xff]
  %v68 = vld [vmem:[%s1 + $0x88] sm:$0xff]
  %v69 = vld [vmem:[%s1 + $0xc0] sm:$0xff]
  %v70 = vld [vmem:[%s1 + $0xc8] sm:$0xff]
  %v71 = vld [vmem:[%s1 + $0x100] sm:$0xff]
  %v72 = vld [vmem:[%s1 + $0x108] sm:$0xff]
  %v73 = vld [vmem:[%s1 + $0x140] sm:$0xff]
  %v74 = vld [vmem:[%s1 + $0x148] sm:$0xff]
  %v75 = vld [vmem:[%s1 + $0x180] sm:$0xff]
  %v76 = vld [vmem:[%s1 + $0x188] sm:$0xff]
  %v77 = vld [vmem:[%s1 + $0x1c0] sm:$0xff]
  %v78 = vld [vmem:[%s1 + $0x1c8] sm:$0xff]
  %v79 = vld [vmem:[%s1 + $0x200] sm:$0xff]
  %v80 = vld [vmem:[%s1 + $0x208] sm:$0xff]
  %v81 = vld [vmem:[%s1 + $0x240] sm:$0xff]
  %v82 = vld [vmem:[%s1 + $0x248] sm:$0xff]
  %v83 = vld [vmem:[%s1 + $0x280] sm:$0xff]
  %v84 = vld [vmem:[%s1 + $0x288] sm:$0xff]
  %v85 = vld [vmem:[%s1 + $0x2c0] sm:$0xff]
  %v86 = vld [vmem:[%s1 + $0x2c8] sm:$0xff]
  %v87 = vld [vmem:[%s1 + $0x300] sm:$0xff]
  %v88 = vld [vmem:[%s1 + $0x308] sm:$0xff]
  %v89 = vld [vmem:[%s1 + $0x340] sm:$0xff]
  %v90 = vld [vmem:[%s1 + $0x348] sm:$0xff]
  %v91 = vld [vmem:[%s1 + $0x380] sm:$0xff]
  %v92 = vld [vmem:[%s1 + $0x388] sm:$0xff]
  %v93 = vld [vmem:[%s3] sm:$0x3]
  %v95 = vperm.slane %v93, 0
  %v96 = vperm.slane %v93, 1
  %vm99 = vcmask 982016
  %v101 = vsel %vm99, %v46, 0
  %v104 = vsel %vm99, %v47, 0
  %v107 = vsel %vm99, %v48, 0
  %v110 = vsel %vm99, %v49, 0
  %v113 = vsel %vm99, %v50, 0
  %v116 = vsel %vm99, %v51, 0
  %v119 = vsel %vm99, %v52, 0
  %v122 = vsel %vm99, %v53, 0
  %v125 = vsel %vm99, %v54, 0
  %v128 = vsel %vm99, %v55, 0
  %v131 = vsel %vm99, %v56, 0
  %v134 = vsel %vm99, %v57, 0
  %v137 = vsel %vm99, %v58, 0
  %v140 = vsel %vm99, %v59, 0
  %v143 = vsel %vm99, %v60, 0
  %v146 = vsel %vm99, %v61, 0
  %v149 = vsel %vm99, %v62, 0
  %151 = vmatpush.msra.mxu0 0.0
  %152 = vmatpush.msra.mxu0 %v91
  %153 = vmatpush.msra.mxu0 %v89
  %154 = vmatpush.msra.mxu0 %v87
  %155 = vmatpush.msra.mxu0 %v85
  %156 = vmatpush.msra.mxu0 %v83
  %157 = vmatpush.msra.mxu0 %v81
  %158 = vmatpush.msra.mxu0 %v79
  %159 = vmatpush.msra.mxu0 %v77
  %160 = vmatpush.msra.mxu0 %v75
  %161 = vmatpush.msra.mxu0 %v73
  %162 = vmatpush.msra.mxu0 %v71
  %163 = vmatpush.msra.mxu0 %v69
  %164 = vmatpush.msra.mxu0 %v67
  %165 = vmatpush.msra.mxu0 %v65
  %166 = vmatpush.msra.mxu0 %v63
  %167 = vmatmul.f32.gmra.mxu0 %v101
  %v168 = vpop.f32.mrf.mxu0
  %v169 = vadd.f32 %v95, %v168
  %170 = vmatmul.f32.gmra.mxu0 %v104
  %v171 = vpop.f32.mrf.mxu0
  %v172 = vadd.f32 %v95, %v171
  %173 = vmatmul.f32.gmra.mxu0 %v107
  %v174 = vpop.f32.mrf.mxu0
  %v175 = vadd.f32 %v95, %v174
  %176 = vmatmul.f32.gmra.mxu0 %v110
  %v177 = vpop.f32.mrf.mxu0
  %v178 = vadd.f32 %v95, %v177
  %179 = vmatmul.f32.gmra.mxu0 %v113
  %v180 = vpop.f32.mrf.mxu0
  %v181 = vadd.f32 %v95, %v180
  %182 = vmatmul.f32.gmra.mxu0 %v116
  %v183 = vpop.f32.mrf.mxu0
  %v184 = vadd.f32 %v95, %v183
  %185 = vmatmul.f32.gmra.mxu0 %v119
  %v186 = vpop.f32.mrf.mxu0
  %v187 = vadd.f32 %v95, %v186
  %188 = vmatmul.f32.gmra.mxu0 %v122
  %v189 = vpop.f32.mrf.mxu0
  %v190 = vadd.f32 %v95, %v189
  %191 = vmatmul.f32.gmra.mxu0 %v125
  %v192 = vpop.f32.mrf.mxu0
  %v193 = vadd.f32 %v95, %v192
  %194 = vmatmul.f32.gmra.mxu0 %v128
  %v195 = vpop.f32.mrf.mxu0
  %v196 = vadd.f32 %v95, %v195
  %197 = vmatmul.f32.gmra.mxu0 %v131
  %v198 = vpop.f32.mrf.mxu0
  %v199 = vadd.f32 %v95, %v198
  %200 = vmatmul.f32.gmra.mxu0 %v134
  %v201 = vpop.f32.mrf.mxu0
  %v202 = vadd.f32 %v95, %v201
  %203 = vmatmul.f32.gmra.mxu0 %v137
  %v204 = vpop.f32.mrf.mxu0
  %v205 = vadd.f32 %v95, %v204
  %206 = vmatmul.f32.gmra.mxu0 %v140
  %v207 = vpop.f32.mrf.mxu0
  %v208 = vadd.f32 %v95, %v207
  %209 = vmatmul.f32.gmra.mxu0 %v143
  %v210 = vpop.f32.mrf.mxu0
  %v211 = vadd.f32 %v95, %v210
  %212 = vmatmul.f32.gmra.mxu0 %v146
  %v213 = vpop.f32.mrf.mxu0
  %v214 = vadd.f32 %v95, %v213
  %215 = vmatmul.f32.gmra.mxu0 %v149
  %v216 = vpop.f32.mrf.mxu0
  %v217 = vadd.f32 %v95, %v216
  %218 = vdwg.mxu0
  %219 = vmatpush.msra.mxu0 0.0
  %220 = vmatpush.msra.mxu0 %v92
  %221 = vmatpush.msra.mxu0 %v90
  %222 = vmatpush.msra.mxu0 %v88
  %223 = vmatpush.msra.mxu0 %v86
  %224 = vmatpush.msra.mxu0 %v84
  %225 = vmatpush.msra.mxu0 %v82
  %226 = vmatpush.msra.mxu0 %v80
  %227 = vmatpush.msra.mxu0 %v78
  %228 = vmatpush.msra.mxu0 %v76
  %229 = vmatpush.msra.mxu0 %v74
  %230 = vmatpush.msra.mxu0 %v72
  %231 = vmatpush.msra.mxu0 %v70
  %232 = vmatpush.msra.mxu0 %v68
  %233 = vmatpush.msra.mxu0 %v66
  %234 = vmatpush.msra.mxu0 %v64
  %235 = vmatmul.f32.gmra.mxu0 %v101
  %v236 = vpop.f32.mrf.mxu0
  %v237 = vadd.f32 %v96, %v236
  %238 = vmatmul.f32.gmra.mxu0 %v104
  %v239 = vpop.f32.mrf.mxu0
  %v240 = vadd.f32 %v96, %v239
  %241 = vmatmul.f32.gmra.mxu0 %v107
  %v242 = vpop.f32.mrf.mxu0
  %v243 = vadd.f32 %v96, %v242
  %244 = vmatmul.f32.gmra.mxu0 %v110
  %v245 = vpop.f32.mrf.mxu0
  %v246 = vadd.f32 %v96, %v245
  %247 = vmatmul.f32.gmra.mxu0 %v113
  %v248 = vpop.f32.mrf.mxu0
  %v249 = vadd.f32 %v96, %v248
  %250 = vmatmul.f32.gmra.mxu0 %v116
  %v251 = vpop.f32.mrf.mxu0
  %v252 = vadd.f32 %v96, %v251
  %253 = vmatmul.f32.gmra.mxu0 %v119
  %v254 = vpop.f32.mrf.mxu0
  %v255 = vadd.f32 %v96, %v254
  %256 = vmatmul.f32.gmra.mxu0 %v122
  %v257 = vpop.f32.mrf.mxu0
  %v258 = vadd.f32 %v96, %v257
  %259 = vmatmul.f32.gmra.mxu0 %v125
  %v260 = vpop.f32.mrf.mxu0
  %v261 = vadd.f32 %v96, %v260
  %262 = vmatmul.f32.gmra.mxu0 %v128
  %v263 = vpop.f32.mrf.mxu0
  %v264 = vadd.f32 %v96, %v263
  %265 = vmatmul.f32.gmra.mxu0 %v131
  %v266 = vpop.f32.mrf.mxu0
  %v267 = vadd.f32 %v96, %v266
  %268 = vmatmul.f32.gmra.mxu0 %v134
  %v269 = vpop.f32.mrf.mxu0
  %v270 = vadd.f32 %v96, %v269
  %271 = vmatmul.f32.gmra.mxu0 %v137
  %v272 = vpop.f32.mrf.mxu0
  %v273 = vadd.f32 %v96, %v272
  %274 = vmatmul.f32.gmra.mxu0 %v140
  %v275 = vpop.f32.mrf.mxu0
  %v276 = vadd.f32 %v96, %v275
  %277 = vmatmul.f32.gmra.mxu0 %v143
  %v278 = vpop.f32.mrf.mxu0
  %v279 = vadd.f32 %v96, %v278
  %280 = vmatmul.f32.gmra.mxu0 %v146
  %v281 = vpop.f32.mrf.mxu0
  %v282 = vadd.f32 %v96, %v281
  %283 = vmatmul.f32.gmra.mxu0 %v149
  %v284 = vpop.f32.mrf.mxu0
  %v285 = vadd.f32 %v96, %v284
  %286 = vdwg.mxu0
  %287 = vst [vmem:[#allocation2] sm:$0xff] %v169
  %288 = vst [vmem:[#allocation2 + $0x8] sm:$0xff] %v237
  %289 = vst [vmem:[#allocation2 + $0x40] sm:$0xff] %v172
  %290 = vst [vmem:[#allocation2 + $0x48] sm:$0xff] %v240
  %291 = vst [vmem:[#allocation2 + $0x80] sm:$0xff] %v175
  %292 = vst [vmem:[#allocation2 + $0x88] sm:$0xff] %v243
  %293 = vst [vmem:[#allocation2 + $0xc0] sm:$0xff] %v178
  %294 = vst [vmem:[#allocation2 + $0xc8] sm:$0xff] %v246
  %295 = vst [vmem:[#allocation2 + $0x100] sm:$0xff] %v181
  %296 = vst [vmem:[#allocation2 + $0x108] sm:$0xff] %v249
  %297 = vst [vmem:[#allocation2 + $0x140] sm:$0xff] %v184
  %298 = vst [vmem:[#allocation2 + $0x148] sm:$0xff] %v252
  %299 = vst [vmem:[#allocation2 + $0x180] sm:$0xff] %v187
  %300 = vst [vmem:[#allocation2 + $0x188] sm:$0xff] %v255
  %301 = vst [vmem:[#allocation2 + $0x1c0] sm:$0xff] %v190
  %302 = vst [vmem:[#allocation2 + $0x1c8] sm:$0xff] %v258
  %303 = vst [vmem:[#allocation2 + $0x200] sm:$0xff] %v193
  %304 = vst [vmem:[#allocation2 + $0x208] sm:$0xff] %v261
  %305 = vst [vmem:[#allocation2 + $0x240] sm:$0xff] %v196
  %306 = vst [vmem:[#allocation2 + $0x248] sm:$0xff] %v264
  %307 = vst [vmem:[#allocation2 + $0x280] sm:$0xff] %v199
  %308 = vst [vmem:[#allocation2 + $0x288] sm:$0xff] %v267
  %309 = vst [vmem:[#allocation2 + $0x2c0] sm:$0xff] %v202
  %310 = vst [vmem:[#allocation2 + $0x2c8] sm:$0xff] %v270
  %311 = vst [vmem:[#allocation2 + $0x300] sm:$0xff] %v205
  %312 = vst [vmem:[#allocation2 + $0x308] sm:$0xff] %v273
  %313 = vst [vmem:[#allocation2 + $0x340] sm:$0xff] %v208
  %314 = vst [vmem:[#allocation2 + $0x348] sm:$0xff] %v276
  %315 = vst [vmem:[#allocation2 + $0x380] sm:$0xff] %v211
  %316 = vst [vmem:[#allocation2 + $0x388] sm:$0xff] %v279
  %317 = vst [vmem:[#allocation2 + $0x3c0] sm:$0xff] %v214
  %318 = vst [vmem:[#allocation2 + $0x3c8] sm:$0xff] %v282
  %319 = vst [vmem:[#allocation2 + $0x400] sm:$0xff] %v217
  %320 = vst [vmem:[#allocation2 + $0x408] sm:$0xff] %v285
  %v321 = vld [vmem:[%s1 + $0x10] sm:$0xff]
  %v322 = vld [vmem:[%s1 + $0x18] sm:$0xff]
  %v323 = vld [vmem:[%s1 + $0x50] sm:$0xff]
  %v324 = vld [vmem:[%s1 + $0x58] sm:$0xff]
  %v325 = vld [vmem:[%s1 + $0x90] sm:$0xff]
  %v326 = vld [vmem:[%s1 + $0x98] sm:$0xff]
  %v327 = vld [vmem:[%s1 + $0xd0] sm:$0xff]
  %v328 = vld [vmem:[%s1 + $0xd8] sm:$0xff]
  %v329 = vld [vmem:[%s1 + $0x110] sm:$0xff]
  %v330 = vld [vmem:[%s1 + $0x118] sm:$0xff]
  %v331 = vld [vmem:[%s1 + $0x150] sm:$0xff]
  %v332 = vld [vmem:[%s1 + $0x158] sm:$0xff]
  %v333 = vld [vmem:[%s1 + $0x190] sm:$0xff]
  %v334 = vld [vmem:[%s1 + $0x198] sm:$0xff]
  %v335 = vld [vmem:[%s1 + $0x1d0] sm:$0xff]
  %v336 = vld [vmem:[%s1 + $0x1d8] sm:$0xff]
  %v337 = vld [vmem:[%s1 + $0x210] sm:$0xff]
  %v338 = vld [vmem:[%s1 + $0x218] sm:$0xff]
  %v339 = vld [vmem:[%s1 + $0x250] sm:$0xff]
  %v340 = vld [vmem:[%s1 + $0x258] sm:$0xff]
  %v341 = vld [vmem:[%s1 + $0x290] sm:$0xff]
  %v342 = vld [vmem:[%s1 + $0x298] sm:$0xff]
  %v343 = vld [vmem:[%s1 + $0x2d0] sm:$0xff]
  %v344 = vld [vmem:[%s1 + $0x2d8] sm:$0xff]
  %v345 = vld [vmem:[%s1 + $0x310] sm:$0xff]
  %v346 = vld [vmem:[%s1 + $0x318] sm:$0xff]
  %v347 = vld [vmem:[%s1 + $0x350] sm:$0xff]
  %v348 = vld [vmem:[%s1 + $0x358] sm:$0xff]
  %v349 = vld [vmem:[%s1 + $0x390] sm:$0xff]
  %v350 = vld [vmem:[%s1 + $0x398] sm:$0xff]
  %v351 = vld [vmem:[%s3 + $0x2] sm:$0x3]
  %v353 = vperm.slane %v351, 0
  %v354 = vperm.slane %v351, 1
  %357 = vmatpush.msra.mxu0 0.0
  %358 = vmatpush.msra.mxu0 %v349
  %359 = vmatpush.msra.mxu0 %v347
  %360 = vmatpush.msra.mxu0 %v345
  %361 = vmatpush.msra.mxu0 %v343
  %362 = vmatpush.msra.mxu0 %v341
  %363 = vmatpush.msra.mxu0 %v339
  %364 = vmatpush.msra.mxu0 %v337
  %365 = vmatpush.msra.mxu0 %v335
  %366 = vmatpush.msra.mxu0 %v333
  %367 = vmatpush.msra.mxu0 %v331
  %368 = vmatpush.msra.mxu0 %v329
  %369 = vmatpush.msra.mxu0 %v327
  %370 = vmatpush.msra.mxu0 %v325
  %371 = vmatpush.msra.mxu0 %v323
  %372 = vmatpush.msra.mxu0 %v321
  %373 = vmatmul.f32.gmra.mxu0 %v101
  %v374 = vpop.f32.mrf.mxu0
  %v375 = vadd.f32 %v353, %v374
  %376 = vmatmul.f32.gmra.mxu0 %v104
  %v377 = vpop.f32.mrf.mxu0
  %v378 = vadd.f32 %v353, %v377
  %379 = vmatmul.f32.gmra.mxu0 %v107
  %v380 = vpop.f32.mrf.mxu0
  %v381 = vadd.f32 %v353, %v380
  %382 = vmatmul.f32.gmra.mxu0 %v110
  %v383 = vpop.f32.mrf.mxu0
  %v384 = vadd.f32 %v353, %v383
  %385 = vmatmul.f32.gmra.mxu0 %v113
  %v386 = vpop.f32.mrf.mxu0
  %v387 = vadd.f32 %v353, %v386
  %388 = vmatmul.f32.gmra.mxu0 %v116
  %v389 = vpop.f32.mrf.mxu0
  %v390 = vadd.f32 %v353, %v389
  %391 = vmatmul.f32.gmra.mxu0 %v119
  %v392 = vpop.f32.mrf.mxu0
  %v393 = vadd.f32 %v353, %v392
  %394 = vmatmul.f32.gmra.mxu0 %v122
  %v395 = vpop.f32.mrf.mxu0
  %v396 = vadd.f32 %v353, %v395
  %397 = vmatmul.f32.gmra.mxu0 %v125
  %v398 = vpop.f32.mrf.mxu0
  %v399 = vadd.f32 %v353, %v398
  %400 = vmatmul.f32.gmra.mxu0 %v128
  %v401 = vpop.f32.mrf.mxu0
  %v402 = vadd.f32 %v353, %v401
  %403 = vmatmul.f32.gmra.mxu0 %v131
  %v404 = vpop.f32.mrf.mxu0
  %v405 = vadd.f32 %v353, %v404
  %406 = vmatmul.f32.gmra.mxu0 %v134
  %v407 = vpop.f32.mrf.mxu0
  %v408 = vadd.f32 %v353, %v407
  %409 = vmatmul.f32.gmra.mxu0 %v137
  %v410 = vpop.f32.mrf.mxu0
  %v411 = vadd.f32 %v353, %v410
  %412 = vmatmul.f32.gmra.mxu0 %v140
  %v413 = vpop.f32.mrf.mxu0
  %v414 = vadd.f32 %v353, %v413
  %415 = vmatmul.f32.gmra.mxu0 %v143
  %v416 = vpop.f32.mrf.mxu0
  %v417 = vadd.f32 %v353, %v416
  %418 = vmatmul.f32.gmra.mxu0 %v146
  %v419 = vpop.f32.mrf.mxu0
  %v420 = vadd.f32 %v353, %v419
  %421 = vmatmul.f32.gmra.mxu0 %v149
  %v422 = vpop.f32.mrf.mxu0
  %v423 = vadd.f32 %v353, %v422
  %424 = vdwg.mxu0
  %425 = vmatpush.msra.mxu0 0.0
  %426 = vmatpush.msra.mxu0 %v350
  %427 = vmatpush.msra.mxu0 %v348
  %428 = vmatpush.msra.mxu0 %v346
  %429 = vmatpush.msra.mxu0 %v344
  %430 = vmatpush.msra.mxu0 %v342
  %431 = vmatpush.msra.mxu0 %v340
  %432 = vmatpush.msra.mxu0 %v338
  %433 = vmatpush.msra.mxu0 %v336
  %434 = vmatpush.msra.mxu0 %v334
  %435 = vmatpush.msra.mxu0 %v332
  %436 = vmatpush.msra.mxu0 %v330
  %437 = vmatpush.msra.mxu0 %v328
  %438 = vmatpush.msra.mxu0 %v326
  %439 = vmatpush.msra.mxu0 %v324
  %440 = vmatpush.msra.mxu0 %v322
  %441 = vmatmul.f32.gmra.mxu0 %v101
  %v442 = vpop.f32.mrf.mxu0
  %v443 = vadd.f32 %v354, %v442
  %444 = vmatmul.f32.gmra.mxu0 %v104
  %v445 = vpop.f32.mrf.mxu0
  %v446 = vadd.f32 %v354, %v445
  %447 = vmatmul.f32.gmra.mxu0 %v107
  %v448 = vpop.f32.mrf.mxu0
  %v449 = vadd.f32 %v354, %v448
  %450 = vmatmul.f32.gmra.mxu0 %v110
  %v451 = vpop.f32.mrf.mxu0
  %v452 = vadd.f32 %v354, %v451
  %453 = vmatmul.f32.gmra.mxu0 %v113
  %v454 = vpop.f32.mrf.mxu0
  %v455 = vadd.f32 %v354, %v454
  %456 = vmatmul.f32.gmra.mxu0 %v116
  %v457 = vpop.f32.mrf.mxu0
  %v458 = vadd.f32 %v354, %v457
  %459 = vmatmul.f32.gmra.mxu0 %v119
  %v460 = vpop.f32.mrf.mxu0
  %v461 = vadd.f32 %v354, %v460
  %462 = vmatmul.f32.gmra.mxu0 %v122
  %v463 = vpop.f32.mrf.mxu0
  %v464 = vadd.f32 %v354, %v463
  %465 = vmatmul.f32.gmra.mxu0 %v125
  %v466 = vpop.f32.mrf.mxu0
  %v467 = vadd.f32 %v354, %v466
  %468 = vmatmul.f32.gmra.mxu0 %v128
  %v469 = vpop.f32.mrf.mxu0
  %v470 = vadd.f32 %v354, %v469
  %471 = vmatmul.f32.gmra.mxu0 %v131
  %v472 = vpop.f32.mrf.mxu0
  %v473 = vadd.f32 %v354, %v472
  %474 = vmatmul.f32.gmra.mxu0 %v134
  %v475 = vpop.f32.mrf.mxu0
  %v476 = vadd.f32 %v354, %v475
  %477 = vmatmul.f32.gmra.mxu0 %v137
  %v478 = vpop.f32.mrf.mxu0
  %v479 = vadd.f32 %v354, %v478
  %480 = vmatmul.f32.gmra.mxu0 %v140
  %v481 = vpop.f32.mrf.mxu0
  %v482 = vadd.f32 %v354, %v481
  %483 = vmatmul.f32.gmra.mxu0 %v143
  %v484 = vpop.f32.mrf.mxu0
  %v485 = vadd.f32 %v354, %v484
  %486 = vmatmul.f32.gmra.mxu0 %v146
  %v487 = vpop.f32.mrf.mxu0
  %v488 = vadd.f32 %v354, %v487
  %489 = vmatmul.f32.gmra.mxu0 %v149
  %v490 = vpop.f32.mrf.mxu0
  %v491 = vadd.f32 %v354, %v490
  %492 = vdwg.mxu0
  %493 = vst [vmem:[#allocation2 + $0x10] sm:$0xff] %v375
  %494 = vst [vmem:[#allocation2 + $0x18] sm:$0xff] %v443
  %495 = vst [vmem:[#allocation2 + $0x50] sm:$0xff] %v378
  %496 = vst [vmem:[#allocation2 + $0x58] sm:$0xff] %v446
  %497 = vst [vmem:[#allocation2 + $0x90] sm:$0xff] %v381
  %498 = vst [vmem:[#allocation2 + $0x98] sm:$0xff] %v449
  %499 = vst [vmem:[#allocation2 + $0xd0] sm:$0xff] %v384
  %500 = vst [vmem:[#allocation2 + $0xd8] sm:$0xff] %v452
  %501 = vst [vmem:[#allocation2 + $0x110] sm:$0xff] %v387
  %502 = vst [vmem:[#allocation2 + $0x118] sm:$0xff] %v455
  %503 = vst [vmem:[#allocation2 + $0x150] sm:$0xff] %v390
  %504 = vst [vmem:[#allocation2 + $0x158] sm:$0xff] %v458
  %505 = vst [vmem:[#allocation2 + $0x190] sm:$0xff] %v393
  %506 = vst [vmem:[#allocation2 + $0x198] sm:$0xff] %v461
  %507 = vst [vmem:[#allocation2 + $0x1d0] sm:$0xff] %v396
  %508 = vst [vmem:[#allocation2 + $0x1d8] sm:$0xff] %v464
  %509 = vst [vmem:[#allocation2 + $0x210] sm:$0xff] %v399
  %510 = vst [vmem:[#allocation2 + $0x218] sm:$0xff] %v467
  %511 = vst [vmem:[#allocation2 + $0x250] sm:$0xff] %v402
  %512 = vst [vmem:[#allocation2 + $0x258] sm:$0xff] %v470
  %513 = vst [vmem:[#allocation2 + $0x290] sm:$0xff] %v405
  %514 = vst [vmem:[#allocation2 + $0x298] sm:$0xff] %v473
  %515 = vst [vmem:[#allocation2 + $0x2d0] sm:$0xff] %v408
  %516 = vst [vmem:[#allocation2 + $0x2d8] sm:$0xff] %v476
  %517 = vst [vmem:[#allocation2 + $0x310] sm:$0xff] %v411
  %518 = vst [vmem:[#allocation2 + $0x318] sm:$0xff] %v479
  %519 = vst [vmem:[#allocation2 + $0x350] sm:$0xff] %v414
  %520 = vst [vmem:[#allocation2 + $0x358] sm:$0xff] %v482
  %521 = vst [vmem:[#allocation2 + $0x390] sm:$0xff] %v417
  %522 = vst [vmem:[#allocation2 + $0x398] sm:$0xff] %v485
  %523 = vst [vmem:[#allocation2 + $0x3d0] sm:$0xff] %v420
  %524 = vst [vmem:[#allocation2 + $0x3d8] sm:$0xff] %v488
  %525 = vst [vmem:[#allocation2 + $0x410] sm:$0xff] %v423
  %526 = vst [vmem:[#allocation2 + $0x418] sm:$0xff] %v491
  %v527 = vld [vmem:[%s1 + $0x20] sm:$0xff]
  %v528 = vld [vmem:[%s1 + $0x28] sm:$0xff]
  %v529 = vld [vmem:[%s1 + $0x60] sm:$0xff]
  %v530 = vld [vmem:[%s1 + $0x68] sm:$0xff]
  %v531 = vld [vmem:[%s1 + $0xa0] sm:$0xff]
  %v532 = vld [vmem:[%s1 + $0xa8] sm:$0xff]
  %v533 = vld [vmem:[%s1 + $0xe0] sm:$0xff]
  %v534 = vld [vmem:[%s1 + $0xe8] sm:$0xff]
  %v535 = vld [vmem:[%s1 + $0x120] sm:$0xff]
  %v536 = vld [vmem:[%s1 + $0x128] sm:$0xff]
  %v537 = vld [vmem:[%s1 + $0x160] sm:$0xff]
  %v538 = vld [vmem:[%s1 + $0x168] sm:$0xff]
  %v539 = vld [vmem:[%s1 + $0x1a0] sm:$0xff]
  %v540 = vld [vmem:[%s1 + $0x1a8] sm:$0xff]
  %v541 = vld [vmem:[%s1 + $0x1e0] sm:$0xff]
  %v542 = vld [vmem:[%s1 + $0x1e8] sm:$0xff]
  %v543 = vld [vmem:[%s1 + $0x220] sm:$0xff]
  %v544 = vld [vmem:[%s1 + $0x228] sm:$0xff]
  %v545 = vld [vmem:[%s1 + $0x260] sm:$0xff]
  %v546 = vld [vmem:[%s1 + $0x268] sm:$0xff]
  %v547 = vld [vmem:[%s1 + $0x2a0] sm:$0xff]
  %v548 = vld [vmem:[%s1 + $0x2a8] sm:$0xff]
  %v549 = vld [vmem:[%s1 + $0x2e0] sm:$0xff]
  %v550 = vld [vmem:[%s1 + $0x2e8] sm:$0xff]
  %v551 = vld [vmem:[%s1 + $0x320] sm:$0xff]
  %v552 = vld [vmem:[%s1 + $0x328] sm:$0xff]
  %v553 = vld [vmem:[%s1 + $0x360] sm:$0xff]
  %v554 = vld [vmem:[%s1 + $0x368] sm:$0xff]
  %v555 = vld [vmem:[%s1 + $0x3a0] sm:$0xff]
  %v556 = vld [vmem:[%s1 + $0x3a8] sm:$0xff]
  %v557 = vld [vmem:[%s3 + $0x4] sm:$0x3]
  %v559 = vperm.slane %v557, 0
  %v560 = vperm.slane %v557, 1
  %563 = vmatpush.msra.mxu0 0.0
  %564 = vmatpush.msra.mxu0 %v555
  %565 = vmatpush.msra.mxu0 %v553
  %566 = vmatpush.msra.mxu0 %v551
  %567 = vmatpush.msra.mxu0 %v549
  %568 = vmatpush.msra.mxu0 %v547
  %569 = vmatpush.msra.mxu0 %v545
  %570 = vmatpush.msra.mxu0 %v543
  %571 = vmatpush.msra.mxu0 %v541
  %572 = vmatpush.msra.mxu0 %v539
  %573 = vmatpush.msra.mxu0 %v537
  %574 = vmatpush.msra.mxu0 %v535
  %575 = vmatpush.msra.mxu0 %v533
  %576 = vmatpush.msra.mxu0 %v531
  %577 = vmatpush.msra.mxu0 %v529
  %578 = vmatpush.msra.mxu0 %v527
  %579 = vmatmul.f32.gmra.mxu0 %v101
  %v580 = vpop.f32.mrf.mxu0
  %v581 = vadd.f32 %v559, %v580
  %582 = vmatmul.f32.gmra.mxu0 %v104
  %v583 = vpop.f32.mrf.mxu0
  %v584 = vadd.f32 %v559, %v583
  %585 = vmatmul.f32.gmra.mxu0 %v107
  %v586 = vpop.f32.mrf.mxu0
  %v587 = vadd.f32 %v559, %v586
  %588 = vmatmul.f32.gmra.mxu0 %v110
  %v589 = vpop.f32.mrf.mxu0
  %v590 = vadd.f32 %v559, %v589
  %591 = vmatmul.f32.gmra.mxu0 %v113
  %v592 = vpop.f32.mrf.mxu0
  %v593 = vadd.f32 %v559, %v592
  %594 = vmatmul.f32.gmra.mxu0 %v116
  %v595 = vpop.f32.mrf.mxu0
  %v596 = vadd.f32 %v559, %v595
  %597 = vmatmul.f32.gmra.mxu0 %v119
  %v598 = vpop.f32.mrf.mxu0
  %v599 = vadd.f32 %v559, %v598
  %600 = vmatmul.f32.gmra.mxu0 %v122
  %v601 = vpop.f32.mrf.mxu0
  %v602 = vadd.f32 %v559, %v601
  %603 = vmatmul.f32.gmra.mxu0 %v125
  %v604 = vpop.f32.mrf.mxu0
  %v605 = vadd.f32 %v559, %v604
  %606 = vmatmul.f32.gmra.mxu0 %v128
  %v607 = vpop.f32.mrf.mxu0
  %v608 = vadd.f32 %v559, %v607
  %609 = vmatmul.f32.gmra.mxu0 %v131
  %v610 = vpop.f32.mrf.mxu0
  %v611 = vadd.f32 %v559, %v610
  %612 = vmatmul.f32.gmra.mxu0 %v134
  %v613 = vpop.f32.mrf.mxu0
  %v614 = vadd.f32 %v559, %v613
  %615 = vmatmul.f32.gmra.mxu0 %v137
  %v616 = vpop.f32.mrf.mxu0
  %v617 = vadd.f32 %v559, %v616
  %618 = vmatmul.f32.gmra.mxu0 %v140
  %v619 = vpop.f32.mrf.mxu0
  %v620 = vadd.f32 %v559, %v619
  %621 = vmatmul.f32.gmra.mxu0 %v143
  %v622 = vpop.f32.mrf.mxu0
  %v623 = vadd.f32 %v559, %v622
  %624 = vmatmul.f32.gmra.mxu0 %v146
  %v625 = vpop.f32.mrf.mxu0
  %v626 = vadd.f32 %v559, %v625
  %627 = vmatmul.f32.gmra.mxu0 %v149
  %v628 = vpop.f32.mrf.mxu0
  %v629 = vadd.f32 %v559, %v628
  %630 = vdwg.mxu0
  %631 = vmatpush.msra.mxu0 0.0
  %632 = vmatpush.msra.mxu0 %v556
  %633 = vmatpush.msra.mxu0 %v554
  %634 = vmatpush.msra.mxu0 %v552
  %635 = vmatpush.msra.mxu0 %v550
  %636 = vmatpush.msra.mxu0 %v548
  %637 = vmatpush.msra.mxu0 %v546
  %638 = vmatpush.msra.mxu0 %v544
  %639 = vmatpush.msra.mxu0 %v542
  %640 = vmatpush.msra.mxu0 %v540
  %641 = vmatpush.msra.mxu0 %v538
  %642 = vmatpush.msra.mxu0 %v536
  %643 = vmatpush.msra.mxu0 %v534
  %644 = vmatpush.msra.mxu0 %v532
  %645 = vmatpush.msra.mxu0 %v530
  %646 = vmatpush.msra.mxu0 %v528
  %647 = vmatmul.f32.gmra.mxu0 %v101
  %v648 = vpop.f32.mrf.mxu0
  %v649 = vadd.f32 %v560, %v648
  %650 = vmatmul.f32.gmra.mxu0 %v104
  %v651 = vpop.f32.mrf.mxu0
  %v652 = vadd.f32 %v560, %v651
  %653 = vmatmul.f32.gmra.mxu0 %v107
  %v654 = vpop.f32.mrf.mxu0
  %v655 = vadd.f32 %v560, %v654
  %656 = vmatmul.f32.gmra.mxu0 %v110
  %v657 = vpop.f32.mrf.mxu0
  %v658 = vadd.f32 %v560, %v657
  %659 = vmatmul.f32.gmra.mxu0 %v113
  %v660 = vpop.f32.mrf.mxu0
  %v661 = vadd.f32 %v560, %v660
  %662 = vmatmul.f32.gmra.mxu0 %v116
  %v663 = vpop.f32.mrf.mxu0
  %v664 = vadd.f32 %v560, %v663
  %665 = vmatmul.f32.gmra.mxu0 %v119
  %v666 = vpop.f32.mrf.mxu0
  %v667 = vadd.f32 %v560, %v666
  %668 = vmatmul.f32.gmra.mxu0 %v122
  %v669 = vpop.f32.mrf.mxu0
  %v670 = vadd.f32 %v560, %v669
  %671 = vmatmul.f32.gmra.mxu0 %v125
  %v672 = vpop.f32.mrf.mxu0
  %v673 = vadd.f32 %v560, %v672
  %674 = vmatmul.f32.gmra.mxu0 %v128
  %v675 = vpop.f32.mrf.mxu0
  %v676 = vadd.f32 %v560, %v675
  %677 = vmatmul.f32.gmra.mxu0 %v131
  %v678 = vpop.f32.mrf.mxu0
  %v679 = vadd.f32 %v560, %v678
  %680 = vmatmul.f32.gmra.mxu0 %v134
  %v681 = vpop.f32.mrf.mxu0
  %v682 = vadd.f32 %v560, %v681
  %683 = vmatmul.f32.gmra.mxu0 %v137
  %v684 = vpop.f32.mrf.mxu0
  %v685 = vadd.f32 %v560, %v684
  %686 = vmatmul.f32.gmra.mxu0 %v140
  %v687 = vpop.f32.mrf.mxu0
  %v688 = vadd.f32 %v560, %v687
  %689 = vmatmul.f32.gmra.mxu0 %v143
  %v690 = vpop.f32.mrf.mxu0
  %v691 = vadd.f32 %v560, %v690
  %692 = vmatmul.f32.gmra.mxu0 %v146
  %v693 = vpop.f32.mrf.mxu0
  %v694 = vadd.f32 %v560, %v693
  %695 = vmatmul.f32.gmra.mxu0 %v149
  %v696 = vpop.f32.mrf.mxu0
  %v697 = vadd.f32 %v560, %v696
  %698 = vdwg.mxu0
  %699 = vst [vmem:[#allocation2 + $0x20] sm:$0xff] %v581
  %700 = vst [vmem:[#allocation2 + $0x28] sm:$0xff] %v649
  %701 = vst [vmem:[#allocation2 + $0x60] sm:$0xff] %v584
  %702 = vst [vmem:[#allocation2 + $0x68] sm:$0xff] %v652
  %703 = vst [vmem:[#allocation2 + $0xa0] sm:$0xff] %v587
  %704 = vst [vmem:[#allocation2 + $0xa8] sm:$0xff] %v655
  %705 = vst [vmem:[#allocation2 + $0xe0] sm:$0xff] %v590
  %706 = vst [vmem:[#allocation2 + $0xe8] sm:$0xff] %v658
  %707 = vst [vmem:[#allocation2 + $0x120] sm:$0xff] %v593
  %708 = vst [vmem:[#allocation2 + $0x128] sm:$0xff] %v661
  %709 = vst [vmem:[#allocation2 + $0x160] sm:$0xff] %v596
  %710 = vst [vmem:[#allocation2 + $0x168] sm:$0xff] %v664
  %711 = vst [vmem:[#allocation2 + $0x1a0] sm:$0xff] %v599
  %712 = vst [vmem:[#allocation2 + $0x1a8] sm:$0xff] %v667
  %713 = vst [vmem:[#allocation2 + $0x1e0] sm:$0xff] %v602
  %714 = vst [vmem:[#allocation2 + $0x1e8] sm:$0xff] %v670
  %715 = vst [vmem:[#allocation2 + $0x220] sm:$0xff] %v605
  %716 = vst [vmem:[#allocation2 + $0x228] sm:$0xff] %v673
  %717 = vst [vmem:[#allocation2 + $0x260] sm:$0xff] %v608
  %718 = vst [vmem:[#allocation2 + $0x268] sm:$0xff] %v676
  %719 = vst [vmem:[#allocation2 + $0x2a0] sm:$0xff] %v611
  %720 = vst [vmem:[#allocation2 + $0x2a8] sm:$0xff] %v679
  %721 = vst [vmem:[#allocation2 + $0x2e0] sm:$0xff] %v614
  %722 = vst [vmem:[#allocation2 + $0x2e8] sm:$0xff] %v682
  %723 = vst [vmem:[#allocation2 + $0x320] sm:$0xff] %v617
  %724 = vst [vmem:[#allocation2 + $0x328] sm:$0xff] %v685
  %725 = vst [vmem:[#allocation2 + $0x360] sm:$0xff] %v620
  %726 = vst [vmem:[#allocation2 + $0x368] sm:$0xff] %v688
  %727 = vst [vmem:[#allocation2 + $0x3a0] sm:$0xff] %v623
  %728 = vst [vmem:[#allocation2 + $0x3a8] sm:$0xff] %v691
  %729 = vst [vmem:[#allocation2 + $0x3e0] sm:$0xff] %v626
  %730 = vst [vmem:[#allocation2 + $0x3e8] sm:$0xff] %v694
  %731 = vst [vmem:[#allocation2 + $0x420] sm:$0xff] %v629
  %732 = vst [vmem:[#allocation2 + $0x428] sm:$0xff] %v697
  %v733 = vld [vmem:[%s1 + $0x30] sm:$0xff]
  %v734 = vld [vmem:[%s1 + $0x38] sm:$0xff]
  %v735 = vld [vmem:[%s1 + $0x70] sm:$0xff]
  %v736 = vld [vmem:[%s1 + $0x78] sm:$0xff]
  %v737 = vld [vmem:[%s1 + $0xb0] sm:$0xff]
  %v738 = vld [vmem:[%s1 + $0xb8] sm:$0xff]
  %v739 = vld [vmem:[%s1 + $0xf0] sm:$0xff]
  %v740 = vld [vmem:[%s1 + $0xf8] sm:$0xff]
  %v741 = vld [vmem:[%s1 + $0x130] sm:$0xff]
  %v742 = vld [vmem:[%s1 + $0x138] sm:$0xff]
  %v743 = vld [vmem:[%s1 + $0x170] sm:$0xff]
  %v744 = vld [vmem:[%s1 + $0x178] sm:$0xff]
  %v745 = vld [vmem:[%s1 + $0x1b0] sm:$0xff]
  %v746 = vld [vmem:[%s1 + $0x1b8] sm:$0xff]
  %v747 = vld [vmem:[%s1 + $0x1f0] sm:$0xff]
  %v748 = vld [vmem:[%s1 + $0x1f8] sm:$0xff]
  %v749 = vld [vmem:[%s1 + $0x230] sm:$0xff]
  %v750 = vld [vmem:[%s1 + $0x238] sm:$0xff]
  %v751 = vld [vmem:[%s1 + $0x270] sm:$0xff]
  %v752 = vld [vmem:[%s1 + $0x278] sm:$0xff]
  %v753 = vld [vmem:[%s1 + $0x2b0] sm:$0xff]
  %v754 = vld [vmem:[%s1 + $0x2b8] sm:$0xff]
  %v755 = vld [vmem:[%s1 + $0x2f0] sm:$0xff]
  %v756 = vld [vmem:[%s1 + $0x2f8] sm:$0xff]
  %v757 = vld [vmem:[%s1 + $0x330] sm:$0xff]
  %v758 = vld [vmem:[%s1 + $0x338] sm:$0xff]
  %v759 = vld [vmem:[%s1 + $0x370] sm:$0xff]
  %v760 = vld [vmem:[%s1 + $0x378] sm:$0xff]
  %v761 = vld [vmem:[%s1 + $0x3b0] sm:$0xff]
  %v762 = vld [vmem:[%s1 + $0x3b8] sm:$0xff]
  %v763 = vld [vmem:[%s3 + $0x6] sm:$0x3]
  %v765 = vperm.slane %v763, 0
  %v766 = vperm.slane %v763, 1
  %769 = vmatpush.msra.mxu0 0.0
  %770 = vmatpush.msra.mxu0 %v761
  %771 = vmatpush.msra.mxu0 %v759
  %772 = vmatpush.msra.mxu0 %v757
  %773 = vmatpush.msra.mxu0 %v755
  %774 = vmatpush.msra.mxu0 %v753
  %775 = vmatpush.msra.mxu0 %v751
  %776 = vmatpush.msra.mxu0 %v749
  %777 = vmatpush.msra.mxu0 %v747
  %778 = vmatpush.msra.mxu0 %v745
  %779 = vmatpush.msra.mxu0 %v743
  %780 = vmatpush.msra.mxu0 %v741
  %781 = vmatpush.msra.mxu0 %v739
  %782 = vmatpush.msra.mxu0 %v737
  %783 = vmatpush.msra.mxu0 %v735
  %784 = vmatpush.msra.mxu0 %v733
  %785 = vmatmul.f32.gmra.mxu0 %v101
  %v786 = vpop.f32.mrf.mxu0
  %v787 = vadd.f32 %v765, %v786
  %788 = vmatmul.f32.gmra.mxu0 %v104
  %v789 = vpop.f32.mrf.mxu0
  %v790 = vadd.f32 %v765, %v789
  %791 = vmatmul.f32.gmra.mxu0 %v107
  %v792 = vpop.f32.mrf.mxu0
  %v793 = vadd.f32 %v765, %v792
  %794 = vmatmul.f32.gmra.mxu0 %v110
  %v795 = vpop.f32.mrf.mxu0
  %v796 = vadd.f32 %v765, %v795
  %797 = vmatmul.f32.gmra.mxu0 %v113
  %v798 = vpop.f32.mrf.mxu0
  %v799 = vadd.f32 %v765, %v798
  %800 = vmatmul.f32.gmra.mxu0 %v116
  %v801 = vpop.f32.mrf.mxu0
  %v802 = vadd.f32 %v765, %v801
  %803 = vmatmul.f32.gmra.mxu0 %v119
  %v804 = vpop.f32.mrf.mxu0
  %v805 = vadd.f32 %v765, %v804
  %806 = vmatmul.f32.gmra.mxu0 %v122
  %v807 = vpop.f32.mrf.mxu0
  %v808 = vadd.f32 %v765, %v807
  %809 = vmatmul.f32.gmra.mxu0 %v125
  %v810 = vpop.f32.mrf.mxu0
  %v811 = vadd.f32 %v765, %v810
  %812 = vmatmul.f32.gmra.mxu0 %v128
  %v813 = vpop.f32.mrf.mxu0
  %v814 = vadd.f32 %v765, %v813
  %815 = vmatmul.f32.gmra.mxu0 %v131
  %v816 = vpop.f32.mrf.mxu0
  %v817 = vadd.f32 %v765, %v816
  %818 = vmatmul.f32.gmra.mxu0 %v134
  %v819 = vpop.f32.mrf.mxu0
  %v820 = vadd.f32 %v765, %v819
  %821 = vmatmul.f32.gmra.mxu0 %v137
  %v822 = vpop.f32.mrf.mxu0
  %v823 = vadd.f32 %v765, %v822
  %824 = vmatmul.f32.gmra.mxu0 %v140
  %v825 = vpop.f32.mrf.mxu0
  %v826 = vadd.f32 %v765, %v825
  %827 = vmatmul.f32.gmra.mxu0 %v143
  %v828 = vpop.f32.mrf.mxu0
  %v829 = vadd.f32 %v765, %v828
  %830 = vmatmul.f32.gmra.mxu0 %v146
  %v831 = vpop.f32.mrf.mxu0
  %v832 = vadd.f32 %v765, %v831
  %833 = vmatmul.f32.gmra.mxu0 %v149
  %v834 = vpop.f32.mrf.mxu0
  %v835 = vadd.f32 %v765, %v834
  %836 = vdwg.mxu0
  %837 = vmatpush.msra.mxu0 0.0
  %838 = vmatpush.msra.mxu0 %v762
  %839 = vmatpush.msra.mxu0 %v760
  %840 = vmatpush.msra.mxu0 %v758
  %841 = vmatpush.msra.mxu0 %v756
  %842 = vmatpush.msra.mxu0 %v754
  %843 = vmatpush.msra.mxu0 %v752
  %844 = vmatpush.msra.mxu0 %v750
  %845 = vmatpush.msra.mxu0 %v748
  %846 = vmatpush.msra.mxu0 %v746
  %847 = vmatpush.msra.mxu0 %v744
  %848 = vmatpush.msra.mxu0 %v742
  %849 = vmatpush.msra.mxu0 %v740
  %850 = vmatpush.msra.mxu0 %v738
  %851 = vmatpush.msra.mxu0 %v736
  %852 = vmatpush.msra.mxu0 %v734
  %853 = vmatmul.f32.gmra.mxu0 %v101
  %v854 = vpop.f32.mrf.mxu0
  %v855 = vadd.f32 %v766, %v854
  %856 = vmatmul.f32.gmra.mxu0 %v104
  %v857 = vpop.f32.mrf.mxu0
  %v858 = vadd.f32 %v766, %v857
  %859 = vmatmul.f32.gmra.mxu0 %v107
  %v860 = vpop.f32.mrf.mxu0
  %v861 = vadd.f32 %v766, %v860
  %862 = vmatmul.f32.gmra.mxu0 %v110
  %v863 = vpop.f32.mrf.mxu0
  %v864 = vadd.f32 %v766, %v863
  %865 = vmatmul.f32.gmra.mxu0 %v113
  %v866 = vpop.f32.mrf.mxu0
  %v867 = vadd.f32 %v766, %v866
  %868 = vmatmul.f32.gmra.mxu0 %v116
  %v869 = vpop.f32.mrf.mxu0
  %v870 = vadd.f32 %v766, %v869
  %871 = vmatmul.f32.gmra.mxu0 %v119
  %v872 = vpop.f32.mrf.mxu0
  %v873 = vadd.f32 %v766, %v872
  %874 = vmatmul.f32.gmra.mxu0 %v122
  %v875 = vpop.f32.mrf.mxu0
  %v876 = vadd.f32 %v766, %v875
  %877 = vmatmul.f32.gmra.mxu0 %v125
  %v878 = vpop.f32.mrf.mxu0
  %v879 = vadd.f32 %v766, %v878
  %880 = vmatmul.f32.gmra.mxu0 %v128
  %v881 = vpop.f32.mrf.mxu0
  %v882 = vadd.f32 %v766, %v881
  %883 = vmatmul.f32.gmra.mxu0 %v131
  %v884 = vpop.f32.mrf.mxu0
  %v885 = vadd.f32 %v766, %v884
  %886 = vmatmul.f32.gmra.mxu0 %v134
  %v887 = vpop.f32.mrf.mxu0
  %v888 = vadd.f32 %v766, %v887
  %889 = vmatmul.f32.gmra.mxu0 %v137
  %v890 = vpop.f32.mrf.mxu0
  %v891 = vadd.f32 %v766, %v890
  %892 = vmatmul.f32.gmra.mxu0 %v140
  %v893 = vpop.f32.mrf.mxu0
  %v894 = vadd.f32 %v766, %v893
  %895 = vmatmul.f32.gmra.mxu0 %v143
  %v896 = vpop.f32.mrf.mxu0
  %v897 = vadd.f32 %v766, %v896
  %898 = vmatmul.f32.gmra.mxu0 %v146
  %v899 = vpop.f32.mrf.mxu0
  %v900 = vadd.f32 %v766, %v899
  %901 = vmatmul.f32.gmra.mxu0 %v149
  %v902 = vpop.f32.mrf.mxu0
  %v903 = vadd.f32 %v766, %v902
  %904 = vdwg.mxu0
  %905 = vst [vmem:[#allocation2 + $0x30] sm:$0xff] %v787
  %906 = vst [vmem:[#allocation2 + $0x38] sm:$0xff] %v855
  %907 = vst [vmem:[#allocation2 + $0x70] sm:$0xff] %v790
  %908 = vst [vmem:[#allocation2 + $0x78] sm:$0xff] %v858
  %909 = vst [vmem:[#allocation2 + $0xb0] sm:$0xff] %v793
  %910 = vst [vmem:[#allocation2 + $0xb8] sm:$0xff] %v861
  %911 = vst [vmem:[#allocation2 + $0xf0] sm:$0xff] %v796
  %912 = vst [vmem:[#allocation2 + $0xf8] sm:$0xff] %v864
  %913 = vst [vmem:[#allocation2 + $0x130] sm:$0xff] %v799
  %914 = vst [vmem:[#allocation2 + $0x138] sm:$0xff] %v867
  %915 = vst [vmem:[#allocation2 + $0x170] sm:$0xff] %v802
  %916 = vst [vmem:[#allocation2 + $0x178] sm:$0xff] %v870
  %917 = vst [vmem:[#allocation2 + $0x1b0] sm:$0xff] %v805
  %918 = vst [vmem:[#allocation2 + $0x1b8] sm:$0xff] %v873
  %919 = vst [vmem:[#allocation2 + $0x1f0] sm:$0xff] %v808
  %920 = vst [vmem:[#allocation2 + $0x1f8] sm:$0xff] %v876
  %921 = vst [vmem:[#allocation2 + $0x230] sm:$0xff] %v811
  %922 = vst [vmem:[#allocation2 + $0x238] sm:$0xff] %v879
  %923 = vst [vmem:[#allocation2 + $0x270] sm:$0xff] %v814
  %924 = vst [vmem:[#allocation2 + $0x278] sm:$0xff] %v882
  %925 = vst [vmem:[#allocation2 + $0x2b0] sm:$0xff] %v817
  %926 = vst [vmem:[#allocation2 + $0x2b8] sm:$0xff] %v885
  %927 = vst [vmem:[#allocation2 + $0x2f0] sm:$0xff] %v820
  %928 = vst [vmem:[#allocation2 + $0x2f8] sm:$0xff] %v888
  %929 = vst [vmem:[#allocation2 + $0x330] sm:$0xff] %v823
  %930 = vst [vmem:[#allocation2 + $0x338] sm:$0xff] %v891
  %931 = vst [vmem:[#allocation2 + $0x370] sm:$0xff] %v826
  %932 = vst [vmem:[#allocation2 + $0x378] sm:$0xff] %v894
  %933 = vst [vmem:[#allocation2 + $0x3b0] sm:$0xff] %v829
  %934 = vst [vmem:[#allocation2 + $0x3b8] sm:$0xff] %v897
  %935 = vst [vmem:[#allocation2 + $0x3f0] sm:$0xff] %v832
  %936 = vst [vmem:[#allocation2 + $0x3f8] sm:$0xff] %v900
  %937 = vst [vmem:[#allocation2 + $0x430] sm:$0xff] %v835
  %938 = vst [vmem:[#allocation2 + $0x438] sm:$0xff] %v903
  %v939 = vld [vmem:[%s2] sm:$0xff]
  %v940 = vld [vmem:[%s2 + $0x8] sm:$0xff]
  %v941 = vld [vmem:[%s2 + $0x10] sm:$0xff]
  %v942 = vld [vmem:[%s2 + $0x18] sm:$0xff]
  %v943 = vld [vmem:[%s2 + $0x20] sm:$0xff]
  %v944 = vld [vmem:[%s2 + $0x28] sm:$0xff]
  %v945 = vld [vmem:[%s2 + $0x30] sm:$0xff]
  %v946 = vld [vmem:[%s2 + $0x38] sm:$0xff]
  %v947 = vld [vmem:[%s2 + $0x40] sm:$0xff]
  %v948 = vld [vmem:[%s2 + $0x48] sm:$0xff]
  %v949 = vld [vmem:[%s2 + $0x50] sm:$0xff]
  %v950 = vld [vmem:[%s2 + $0x58] sm:$0xff]
  %v951 = vld [vmem:[%s2 + $0x60] sm:$0xff]
  %v952 = vld [vmem:[%s2 + $0x68] sm:$0xff]
  %v953 = vld [vmem:[%s2 + $0x70] sm:$0xff]
  %v954 = vld [vmem:[%s2 + $0x78] sm:$0xff]
  %v955 = vld [vmem:[%s2 + $0x80] sm:$0xff]
  %v956 = vld [vmem:[%s2 + $0x88] sm:$0xff]
  %v957 = vld [vmem:[%s2 + $0x90] sm:$0xff]
  %v958 = vld [vmem:[%s2 + $0x98] sm:$0xff]
  %v959 = vld [vmem:[%s2 + $0xa0] sm:$0xff]
  %v960 = vld [vmem:[%s2 + $0xa8] sm:$0xff]
  %v961 = vld [vmem:[%s2 + $0xb0] sm:$0xff]
  %v962 = vld [vmem:[%s2 + $0xb8] sm:$0xff]
  %v963 = vld [vmem:[%s2 + $0xc0] sm:$0xff]
  %v964 = vld [vmem:[%s2 + $0xc8] sm:$0xff]
  %v965 = vld [vmem:[%s2 + $0xd0] sm:$0xff]
  %v966 = vld [vmem:[%s2 + $0xd8] sm:$0xff]
  %v967 = vld [vmem:[%s2 + $0xe0] sm:$0xff]
  %v968 = vld [vmem:[%s2 + $0xe8] sm:$0xff]
  %v969 = vld [vmem:[%s2 + $0xf0] sm:$0xff]
  %v970 = vld [vmem:[%s2 + $0xf8] sm:$0xff]
  %v971 = vld [vmem:[%s2 + $0x100] sm:$0xff]
  %v972 = vld [vmem:[%s2 + $0x108] sm:$0xff]
  %v973 = vld [vmem:[%s2 + $0x110] sm:$0xff]
  %v974 = vld [vmem:[%s2 + $0x118] sm:$0xff]
  %v975 = vld [vmem:[%s2 + $0x120] sm:$0xff]
  %v976 = vld [vmem:[%s2 + $0x128] sm:$0xff]
  %v977 = vld [vmem:[%s2 + $0x130] sm:$0xff]
  %v978 = vld [vmem:[%s2 + $0x138] sm:$0xff]
  %v979 = vld [vmem:[%s2 + $0x140] sm:$0xff]
  %v980 = vld [vmem:[%s2 + $0x148] sm:$0xff]
  %v981 = vld [vmem:[%s2 + $0x150] sm:$0xff]
  %v982 = vld [vmem:[%s2 + $0x158] sm:$0xff]
  %v983 = vld [vmem:[%s2 + $0x160] sm:$0xff]
  %v984 = vld [vmem:[%s2 + $0x168] sm:$0xff]
  %v985 = vld [vmem:[%s2 + $0x170] sm:$0xff]
  %v986 = vld [vmem:[%s2 + $0x178] sm:$0xff]
  %v987 = vld [vmem:[%s2 + $0x180] sm:$0xff]
  %v988 = vld [vmem:[%s2 + $0x188] sm:$0xff]
  %v989 = vld [vmem:[%s2 + $0x190] sm:$0xff]
  %v990 = vld [vmem:[%s2 + $0x198] sm:$0xff]
  %v991 = vld [vmem:[%s2 + $0x1a0] sm:$0xff]
  %v992 = vld [vmem:[%s2 + $0x1a8] sm:$0xff]
  %v993 = vld [vmem:[%s2 + $0x1b0] sm:$0xff]
  %v994 = vld [vmem:[%s2 + $0x1b8] sm:$0xff]
  %v995 = vld [vmem:[%s2 + $0x1c0] sm:$0xff]
  %v996 = vld [vmem:[%s2 + $0x1c8] sm:$0xff]
  %v997 = vld [vmem:[%s2 + $0x1d0] sm:$0xff]
  %v998 = vld [vmem:[%s2 + $0x1d8] sm:$0xff]
  %v999 = vld [vmem:[%s2 + $0x1e0] sm:$0xff]
  %v1000 = vld [vmem:[%s2 + $0x1e8] sm:$0xff]
  %v1001 = vld [vmem:[%s2 + $0x1f0] sm:$0xff]
  %v1002 = vld [vmem:[%s2 + $0x1f8] sm:$0xff]
  %v1003 = vld [vmem:[%s2 + $0x200] sm:$0xff]
  %v1004 = vld [vmem:[%s2 + $0x208] sm:$0xff]
  %v1005 = vld [vmem:[%s2 + $0x210] sm:$0xff]
  %v1006 = vld [vmem:[%s2 + $0x218] sm:$0xff]
  %v1007 = vld [vmem:[%s2 + $0x220] sm:$0xff]
  %v1008 = vld [vmem:[%s2 + $0x228] sm:$0xff]
  %v1009 = vld [vmem:[%s2 + $0x230] sm:$0xff]
  %v1010 = vld [vmem:[%s2 + $0x238] sm:$0xff]
  %v1011 = vld [vmem:[%s2 + $0x240] sm:$0xff]
  %v1012 = vld [vmem:[%s2 + $0x248] sm:$0xff]
  %v1013 = vld [vmem:[%s2 + $0x250] sm:$0xff]
  %v1014 = vld [vmem:[%s2 + $0x258] sm:$0xff]
  %v1015 = vld [vmem:[%s2 + $0x260] sm:$0xff]
  %v1016 = vld [vmem:[%s2 + $0x268] sm:$0xff]
  %v1017 = vld [vmem:[%s2 + $0x270] sm:$0xff]
  %v1018 = vld [vmem:[%s2 + $0x278] sm:$0xff]
  %v1019 = vld [vmem:[%s2 + $0x280] sm:$0xff]
  %v1020 = vld [vmem:[%s2 + $0x288] sm:$0xff]
  %v1021 = vld [vmem:[%s2 + $0x290] sm:$0xff]
  %v1022 = vld [vmem:[%s2 + $0x298] sm:$0xff]
  %v1023 = vld [vmem:[%s2 + $0x2a0] sm:$0xff]
  %v1024 = vld [vmem:[%s2 + $0x2a8] sm:$0xff]
  %v1025 = vld [vmem:[%s2 + $0x2b0] sm:$0xff]
  %v1026 = vld [vmem:[%s2 + $0x2b8] sm:$0xff]
  %v1027 = vld [vmem:[%s2 + $0x2c0] sm:$0xff]
  %v1028 = vld [vmem:[%s2 + $0x2c8] sm:$0xff]
  %v1029 = vld [vmem:[%s2 + $0x2d0] sm:$0xff]
  %v1030 = vld [vmem:[%s2 + $0x2d8] sm:$0xff]
  %v1031 = vld [vmem:[%s2 + $0x2e0] sm:$0xff]
  %v1032 = vld [vmem:[%s2 + $0x2e8] sm:$0xff]
  %v1033 = vld [vmem:[%s2 + $0x2f0] sm:$0xff]
  %v1034 = vld [vmem:[%s2 + $0x2f8] sm:$0xff]
  %v1035 = vld [vmem:[%s2 + $0x300] sm:$0xff]
  %v1036 = vld [vmem:[%s2 + $0x308] sm:$0xff]
  %v1037 = vld [vmem:[%s2 + $0x310] sm:$0xff]
  %v1038 = vld [vmem:[%s2 + $0x318] sm:$0xff]
  %v1039 = vld [vmem:[%s2 + $0x320] sm:$0xff]
  %v1040 = vld [vmem:[%s2 + $0x328] sm:$0xff]
  %v1041 = vld [vmem:[%s2 + $0x330] sm:$0xff]
  %v1042 = vld [vmem:[%s2 + $0x338] sm:$0xff]
  %v1043 = vld [vmem:[%s2 + $0x340] sm:$0xff]
  %v1044 = vld [vmem:[%s2 + $0x348] sm:$0xff]
  %v1045 = vld [vmem:[%s2 + $0x350] sm:$0xff]
  %v1046 = vld [vmem:[%s2 + $0x358] sm:$0xff]
  %v1047 = vld [vmem:[%s2 + $0x360] sm:$0xff]
  %v1048 = vld [vmem:[%s2 + $0x368] sm:$0xff]
  %v1049 = vld [vmem:[%s2 + $0x370] sm:$0xff]
  %v1050 = vld [vmem:[%s2 + $0x378] sm:$0xff]
  %v1051 = vld [vmem:[%s2 + $0x380] sm:$0xff]
  %v1052 = vld [vmem:[%s2 + $0x388] sm:$0xff]
  %v1053 = vld [vmem:[%s2 + $0x390] sm:$0xff]
  %v1054 = vld [vmem:[%s2 + $0x398] sm:$0xff]
  %v1055 = vld [vmem:[%s2 + $0x3a0] sm:$0xff]
  %v1056 = vld [vmem:[%s2 + $0x3a8] sm:$0xff]
  %v1057 = vld [vmem:[%s2 + $0x3b0] sm:$0xff]
  %v1058 = vld [vmem:[%s2 + $0x3b8] sm:$0xff]
  %v1059 = vld [vmem:[%s2 + $0x3c0] sm:$0xff]
  %v1060 = vld [vmem:[%s2 + $0x3c8] sm:$0xff]
  %v1061 = vld [vmem:[%s2 + $0x3d0] sm:$0xff]
  %v1062 = vld [vmem:[%s2 + $0x3d8] sm:$0xff]
  %v1063 = vld [vmem:[%s2 + $0x3e0] sm:$0xff]
  %v1064 = vld [vmem:[%s2 + $0x3e8] sm:$0xff]
  %v1065 = vld [vmem:[%s2 + $0x3f0] sm:$0xff]
  %v1066 = vld [vmem:[%s2 + $0x3f8] sm:$0xff]
  %v1067 = vld [vmem:[%s2 + $0x400] sm:$0xff]
  %v1068 = vld [vmem:[%s2 + $0x408] sm:$0xff]
  %v1069 = vld [vmem:[%s2 + $0x410] sm:$0xff]
  %v1070 = vld [vmem:[%s2 + $0x418] sm:$0xff]
  %v1071 = vld [vmem:[%s2 + $0x420] sm:$0xff]
  %v1072 = vld [vmem:[%s2 + $0x428] sm:$0xff]
  %v1073 = vld [vmem:[%s2 + $0x430] sm:$0xff]
  %v1074 = vld [vmem:[%s2 + $0x438] sm:$0xff]
  %v1075 = vld [vmem:[%s2 + $0x440] sm:$0xff]
  %v1076 = vld [vmem:[%s2 + $0x448] sm:$0xff]
  %v1077 = vld [vmem:[%s2 + $0x450] sm:$0xff]
  %v1078 = vld [vmem:[%s2 + $0x458] sm:$0xff]
  %v1079 = vld [vmem:[%s2 + $0x460] sm:$0xff]
  %v1080 = vld [vmem:[%s2 + $0x468] sm:$0xff]
  %v1081 = vld [vmem:[%s2 + $0x470] sm:$0xff]
  %v1082 = vld [vmem:[%s2 + $0x478] sm:$0xff]
  %v1083 = vld [vmem:[#allocation2] sm:$0xff]
  %v1084 = vld [vmem:[#allocation2 + $0x8] sm:$0xff]
  %v1085 = vld [vmem:[#allocation2 + $0x10] sm:$0xff]
  %v1086 = vld [vmem:[#allocation2 + $0x18] sm:$0xff]
  %v1087 = vld [vmem:[#allocation2 + $0x20] sm:$0xff]
  %v1088 = vld [vmem:[#allocation2 + $0x28] sm:$0xff]
  %v1089 = vld [vmem:[#allocation2 + $0x30] sm:$0xff]
  %v1090 = vld [vmem:[#allocation2 + $0x38] sm:$0xff]
  %vm1091 = vcmask 130048
  %v1093 = vsel %vm1091, 0.0, 0
  %1095 = vmatpush.msra.mxu0 %v1059
  %1096 = vmatpush.msra.mxu0 %v1051
  %1097 = vmatpush.msra.mxu0 %v1043
  %1098 = vmatpush.msra.mxu0 %v1035
  %1099 = vmatpush.msra.mxu0 %v1027
  %1100 = vmatpush.msra.mxu0 %v1019
  %1101 = vmatpush.msra.mxu0 %v1011
  %1102 = vmatpush.msra.mxu0 %v1003
  %1103 = vmatpush.msra.mxu0 %v995
  %1104 = vmatpush.msra.mxu0 %v987
  %1105 = vmatpush.msra.mxu0 %v979
  %1106 = vmatpush.msra.mxu0 %v971
  %1107 = vmatpush.msra.mxu0 %v963
  %1108 = vmatpush.msra.mxu0 %v955
  %1109 = vmatpush.msra.mxu0 %v947
  %1110 = vmatpush.msra.mxu0 %v939
  %1111 = vmatmul.f32.gmra.mxu0 0.0
  %v1112 = vpop.f32.mrf.mxu0
  %v1113 = vadd.f32 0.0, %v1112
  %1114 = vdwg.mxu0
  %1115 = vmatpush.msra.mxu0 0.0
  %1116 = vmatpush.msra.mxu0 0.0
  %1117 = vmatpush.msra.mxu0 0.0
  %1118 = vmatpush.msra.mxu0 0.0
  %1119 = vmatpush.msra.mxu0 0.0
  %1120 = vmatpush.msra.mxu0 0.0
  %1121 = vmatpush.msra.mxu0 0.0
  %1122 = vmatpush.msra.mxu0 0.0
  %1123 = vmatpush.msra.mxu0 0.0
  %1124 = vmatpush.msra.mxu0 0.0
  %1125 = vmatpush.msra.mxu0 0.0
  %1126 = vmatpush.msra.mxu0 0.0
  %1127 = vmatpush.msra.mxu0 0.0
  %1128 = vmatpush.msra.mxu0 0.0
  %1129 = vmatpush.msra.mxu0 %v1075
  %1130 = vmatpush.msra.mxu0 %v1067
  %1131 = vmatmul.f32.gmra.mxu0 %v1093
  %v1132 = vpop.f32.mrf.mxu0
  %v1133 = vadd.f32 %v1113, %v1132
  %1134 = vdwg.mxu0
  %1135 = vmatpush.msra.mxu0 %v1060
  %1136 = vmatpush.msra.mxu0 %v1052
  %1137 = vmatpush.msra.mxu0 %v1044
  %1138 = vmatpush.msra.mxu0 %v1036
  %1139 = vmatpush.msra.mxu0 %v1028
  %1140 = vmatpush.msra.mxu0 %v1020
  %1141 = vmatpush.msra.mxu0 %v1012
  %1142 = vmatpush.msra.mxu0 %v1004
  %1143 = vmatpush.msra.mxu0 %v996
  %1144 = vmatpush.msra.mxu0 %v988
  %1145 = vmatpush.msra.mxu0 %v980
  %1146 = vmatpush.msra.mxu0 %v972
  %1147 = vmatpush.msra.mxu0 %v964
  %1148 = vmatpush.msra.mxu0 %v956
  %1149 = vmatpush.msra.mxu0 %v948
  %1150 = vmatpush.msra.mxu0 %v940
  %1151 = vmatmul.f32.gmra.mxu0 0.0
  %v1152 = vpop.f32.mrf.mxu0
  %v1153 = vadd.f32 0.0, %v1152
  %1154 = vdwg.mxu0
  %1155 = vmatpush.msra.mxu0 0.0
  %1156 = vmatpush.msra.mxu0 0.0
  %1157 = vmatpush.msra.mxu0 0.0
  %1158 = vmatpush.msra.mxu0 0.0
  %1159 = vmatpush.msra.mxu0 0.0
  %1160 = vmatpush.msra.mxu0 0.0
  %1161 = vmatpush.msra.mxu0 0.0
  %1162 = vmatpush.msra.mxu0 0.0
  %1163 = vmatpush.msra.mxu0 0.0
  %1164 = vmatpush.msra.mxu0 0.0
  %1165 = vmatpush.msra.mxu0 0.0
  %1166 = vmatpush.msra.mxu0 0.0
  %1167 = vmatpush.msra.mxu0 0.0
  %1168 = vmatpush.msra.mxu0 0.0
  %1169 = vmatpush.msra.mxu0 %v1076
  %1170 = vmatpush.msra.mxu0 %v1068
  %1171 = vmatmul.f32.gmra.mxu0 %v1093
  %v1172 = vpop.f32.mrf.mxu0
  %v1173 = vadd.f32 %v1153, %v1172
  %1174 = vdwg.mxu0
  %1175 = vmatpush.msra.mxu0 %v1061
  %1176 = vmatpush.msra.mxu0 %v1053
  %1177 = vmatpush.msra.mxu0 %v1045
  %1178 = vmatpush.msra.mxu0 %v1037
  %1179 = vmatpush.msra.mxu0 %v1029
  %1180 = vmatpush.msra.mxu0 %v1021
  %1181 = vmatpush.msra.mxu0 %v1013
  %1182 = vmatpush.msra.mxu0 %v1005
  %1183 = vmatpush.msra.mxu0 %v997
  %1184 = vmatpush.msra.mxu0 %v989
  %1185 = vmatpush.msra.mxu0 %v981
  %1186 = vmatpush.msra.mxu0 %v973
  %1187 = vmatpush.msra.mxu0 %v965
  %1188 = vmatpush.msra.mxu0 %v957
  %1189 = vmatpush.msra.mxu0 %v949
  %1190 = vmatpush.msra.mxu0 %v941
  %1191 = vmatmul.f32.gmra.mxu0 0.0
  %v1192 = vpop.f32.mrf.mxu0
  %v1193 = vadd.f32 0.0, %v1192
  %1194 = vdwg.mxu0
  %1195 = vmatpush.msra.mxu0 0.0
  %1196 = vmatpush.msra.mxu0 0.0
  %1197 = vmatpush.msra.mxu0 0.0
  %1198 = vmatpush.msra.mxu0 0.0
  %1199 = vmatpush.msra.mxu0 0.0
  %1200 = vmatpush.msra.mxu0 0.0
  %1201 = vmatpush.msra.mxu0 0.0
  %1202 = vmatpush.msra.mxu0 0.0
  %1203 = vmatpush.msra.mxu0 0.0
  %1204 = vmatpush.msra.mxu0 0.0
  %1205 = vmatpush.msra.mxu0 0.0
  %1206 = vmatpush.msra.mxu0 0.0
  %1207 = vmatpush.msra.mxu0 0.0
  %1208 = vmatpush.msra.mxu0 0.0
  %1209 = vmatpush.msra.mxu0 %v1077
  %1210 = vmatpush.msra.mxu0 %v1069
  %1211 = vmatmul.f32.gmra.mxu0 %v1093
  %v1212 = vpop.f32.mrf.mxu0
  %v1213 = vadd.f32 %v1193, %v1212
  %1214 = vdwg.mxu0
  %1215 = vmatpush.msra.mxu0 %v1062
  %1216 = vmatpush.msra.mxu0 %v1054
  %1217 = vmatpush.msra.mxu0 %v1046
  %1218 = vmatpush.msra.mxu0 %v1038
  %1219 = vmatpush.msra.mxu0 %v1030
  %1220 = vmatpush.msra.mxu0 %v1022
  %1221 = vmatpush.msra.mxu0 %v1014
  %1222 = vmatpush.msra.mxu0 %v1006
  %1223 = vmatpush.msra.mxu0 %v998
  %1224 = vmatpush.msra.mxu0 %v990
  %1225 = vmatpush.msra.mxu0 %v982
  %1226 = vmatpush.msra.mxu0 %v974
  %1227 = vmatpush.msra.mxu0 %v966
  %1228 = vmatpush.msra.mxu0 %v958
  %1229 = vmatpush.msra.mxu0 %v950
  %1230 = vmatpush.msra.mxu0 %v942
  %1231 = vmatmul.f32.gmra.mxu0 0.0
  %v1232 = vpop.f32.mrf.mxu0
  %v1233 = vadd.f32 0.0, %v1232
  %1234 = vdwg.mxu0
  %1235 = vmatpush.msra.mxu0 0.0
  %1236 = vmatpush.msra.mxu0 0.0
  %1237 = vmatpush.msra.mxu0 0.0
  %1238 = vmatpush.msra.mxu0 0.0
  %1239 = vmatpush.msra.mxu0 0.0
  %1240 = vmatpush.msra.mxu0 0.0
  %1241 = vmatpush.msra.mxu0 0.0
  %1242 = vmatpush.msra.mxu0 0.0
  %1243 = vmatpush.msra.mxu0 0.0
  %1244 = vmatpush.msra.mxu0 0.0
  %1245 = vmatpush.msra.mxu0 0.0
  %1246 = vmatpush.msra.mxu0 0.0
  %1247 = vmatpush.msra.mxu0 0.0
  %1248 = vmatpush.msra.mxu0 0.0
  %1249 = vmatpush.msra.mxu0 %v1078
  %1250 = vmatpush.msra.mxu0 %v1070
  %1251 = vmatmul.f32.gmra.mxu0 %v1093
  %v1252 = vpop.f32.mrf.mxu0
  %v1253 = vadd.f32 %v1233, %v1252
  %1254 = vdwg.mxu0
  %1255 = vmatpush.msra.mxu0 %v1063
  %1256 = vmatpush.msra.mxu0 %v1055
  %1257 = vmatpush.msra.mxu0 %v1047
  %1258 = vmatpush.msra.mxu0 %v1039
  %1259 = vmatpush.msra.mxu0 %v1031
  %1260 = vmatpush.msra.mxu0 %v1023
  %1261 = vmatpush.msra.mxu0 %v1015
  %1262 = vmatpush.msra.mxu0 %v1007
  %1263 = vmatpush.msra.mxu0 %v999
  %1264 = vmatpush.msra.mxu0 %v991
  %1265 = vmatpush.msra.mxu0 %v983
  %1266 = vmatpush.msra.mxu0 %v975
  %1267 = vmatpush.msra.mxu0 %v967
  %1268 = vmatpush.msra.mxu0 %v959
  %1269 = vmatpush.msra.mxu0 %v951
  %1270 = vmatpush.msra.mxu0 %v943
  %1271 = vmatmul.f32.gmra.mxu0 0.0
  %v1272 = vpop.f32.mrf.mxu0
  %v1273 = vadd.f32 0.0, %v1272
  %1274 = vdwg.mxu0
  %1275 = vmatpush.msra.mxu0 0.0
  %1276 = vmatpush.msra.mxu0 0.0
  %1277 = vmatpush.msra.mxu0 0.0
  %1278 = vmatpush.msra.mxu0 0.0
  %1279 = vmatpush.msra.mxu0 0.0
  %1280 = vmatpush.msra.mxu0 0.0
  %1281 = vmatpush.msra.mxu0 0.0
  %1282 = vmatpush.msra.mxu0 0.0
  %1283 = vmatpush.msra.mxu0 0.0
  %1284 = vmatpush.msra.mxu0 0.0
  %1285 = vmatpush.msra.mxu0 0.0
  %1286 = vmatpush.msra.mxu0 0.0
  %1287 = vmatpush.msra.mxu0 0.0
  %1288 = vmatpush.msra.mxu0 0.0
  %1289 = vmatpush.msra.mxu0 %v1079
  %1290 = vmatpush.msra.mxu0 %v1071
  %1291 = vmatmul.f32.gmra.mxu0 %v1093
  %v1292 = vpop.f32.mrf.mxu0
  %v1293 = vadd.f32 %v1273, %v1292
  %1294 = vdwg.mxu0
  %1295 = vmatpush.msra.mxu0 %v1064
  %1296 = vmatpush.msra.mxu0 %v1056
  %1297 = vmatpush.msra.mxu0 %v1048
  %1298 = vmatpush.msra.mxu0 %v1040
  %1299 = vmatpush.msra.mxu0 %v1032
  %1300 = vmatpush.msra.mxu0 %v1024
  %1301 = vmatpush.msra.mxu0 %v1016
  %1302 = vmatpush.msra.mxu0 %v1008
  %1303 = vmatpush.msra.mxu0 %v1000
  %1304 = vmatpush.msra.mxu0 %v992
  %1305 = vmatpush.msra.mxu0 %v984
  %1306 = vmatpush.msra.mxu0 %v976
  %1307 = vmatpush.msra.mxu0 %v968
  %1308 = vmatpush.msra.mxu0 %v960
  %1309 = vmatpush.msra.mxu0 %v952
  %1310 = vmatpush.msra.mxu0 %v944
  %1311 = vmatmul.f32.gmra.mxu0 0.0
  %v1312 = vpop.f32.mrf.mxu0
  %v1313 = vadd.f32 0.0, %v1312
  %1314 = vdwg.mxu0
  %1315 = vmatpush.msra.mxu0 0.0
  %1316 = vmatpush.msra.mxu0 0.0
  %1317 = vmatpush.msra.mxu0 0.0
  %1318 = vmatpush.msra.mxu0 0.0
  %1319 = vmatpush.msra.mxu0 0.0
  %1320 = vmatpush.msra.mxu0 0.0
  %1321 = vmatpush.msra.mxu0 0.0
  %1322 = vmatpush.msra.mxu0 0.0
  %1323 = vmatpush.msra.mxu0 0.0
  %1324 = vmatpush.msra.mxu0 0.0
  %1325 = vmatpush.msra.mxu0 0.0
  %1326 = vmatpush.msra.mxu0 0.0
  %1327 = vmatpush.msra.mxu0 0.0
  %1328 = vmatpush.msra.mxu0 0.0
  %1329 = vmatpush.msra.mxu0 %v1080
  %1330 = vmatpush.msra.mxu0 %v1072
  %1331 = vmatmul.f32.gmra.mxu0 %v1093
  %v1332 = vpop.f32.mrf.mxu0
  %v1333 = vadd.f32 %v1313, %v1332
  %1334 = vdwg.mxu0
  %1335 = vmatpush.msra.mxu0 %v1065
  %1336 = vmatpush.msra.mxu0 %v1057
  %1337 = vmatpush.msra.mxu0 %v1049
  %1338 = vmatpush.msra.mxu0 %v1041
  %1339 = vmatpush.msra.mxu0 %v1033
  %1340 = vmatpush.msra.mxu0 %v1025
  %1341 = vmatpush.msra.mxu0 %v1017
  %1342 = vmatpush.msra.mxu0 %v1009
  %1343 = vmatpush.msra.mxu0 %v1001
  %1344 = vmatpush.msra.mxu0 %v993
  %1345 = vmatpush.msra.mxu0 %v985
  %1346 = vmatpush.msra.mxu0 %v977
  %1347 = vmatpush.msra.mxu0 %v969
  %1348 = vmatpush.msra.mxu0 %v961
  %1349 = vmatpush.msra.mxu0 %v953
  %1350 = vmatpush.msra.mxu0 %v945
  %1351 = vmatmul.f32.gmra.mxu0 0.0
  %v1352 = vpop.f32.mrf.mxu0
  %v1353 = vadd.f32 0.0, %v1352
  %1354 = vdwg.mxu0
  %1355 = vmatpush.msra.mxu0 0.0
  %1356 = vmatpush.msra.mxu0 0.0
  %1357 = vmatpush.msra.mxu0 0.0
  %1358 = vmatpush.msra.mxu0 0.0
  %1359 = vmatpush.msra.mxu0 0.0
  %1360 = vmatpush.msra.mxu0 0.0
  %1361 = vmatpush.msra.mxu0 0.0
  %1362 = vmatpush.msra.mxu0 0.0
  %1363 = vmatpush.msra.mxu0 0.0
  %1364 = vmatpush.msra.mxu0 0.0
  %1365 = vmatpush.msra.mxu0 0.0
  %1366 = vmatpush.msra.mxu0 0.0
  %1367 = vmatpush.msra.mxu0 0.0
  %1368 = vmatpush.msra.mxu0 0.0
  %1369 = vmatpush.msra.mxu0 %v1081
  %1370 = vmatpush.msra.mxu0 %v1073
  %1371 = vmatmul.f32.gmra.mxu0 %v1093
  %v1372 = vpop.f32.mrf.mxu0
  %v1373 = vadd.f32 %v1353, %v1372
  %1374 = vdwg.mxu0
  %1375 = vmatpush.msra.mxu0 %v1066
  %1376 = vmatpush.msra.mxu0 %v1058
  %1377 = vmatpush.msra.mxu0 %v1050
  %1378 = vmatpush.msra.mxu0 %v1042
  %1379 = vmatpush.msra.mxu0 %v1034
  %1380 = vmatpush.msra.mxu0 %v1026
  %1381 = vmatpush.msra.mxu0 %v1018
  %1382 = vmatpush.msra.mxu0 %v1010
  %1383 = vmatpush.msra.mxu0 %v1002
  %1384 = vmatpush.msra.mxu0 %v994
  %1385 = vmatpush.msra.mxu0 %v986
  %1386 = vmatpush.msra.mxu0 %v978
  %1387 = vmatpush.msra.mxu0 %v970
  %1388 = vmatpush.msra.mxu0 %v962
  %1389 = vmatpush.msra.mxu0 %v954
  %1390 = vmatpush.msra.mxu0 %v946
  %1391 = vmatmul.f32.gmra.mxu0 0.0
  %v1392 = vpop.f32.mrf.mxu0
  %v1393 = vadd.f32 0.0, %v1392
  %1394 = vdwg.mxu0
  %1395 = vmatpush.msra.mxu0 0.0
  %1396 = vmatpush.msra.mxu0 0.0
  %1397 = vmatpush.msra.mxu0 0.0
  %1398 = vmatpush.msra.mxu0 0.0
  %1399 = vmatpush.msra.mxu0 0.0
  %1400 = vmatpush.msra.mxu0 0.0
  %1401 = vmatpush.msra.mxu0 0.0
  %1402 = vmatpush.msra.mxu0 0.0
  %1403 = vmatpush.msra.mxu0 0.0
  %1404 = vmatpush.msra.mxu0 0.0
  %1405 = vmatpush.msra.mxu0 0.0
  %1406 = vmatpush.msra.mxu0 0.0
  %1407 = vmatpush.msra.mxu0 0.0
  %1408 = vmatpush.msra.mxu0 0.0
  %1409 = vmatpush.msra.mxu0 %v1082
  %1410 = vmatpush.msra.mxu0 %v1074
  %1411 = vmatmul.f32.gmra.mxu0 %v1093
  %v1412 = vpop.f32.mrf.mxu0
  %v1413 = vadd.f32 %v1393, %v1412
  %1414 = vdwg.mxu0
  %v1415 = vadd.f32 %v1083, %v1133
  %v1416 = vadd.f32 %v1084, %v1173
  %v1417 = vadd.f32 %v1085, %v1213
  %v1418 = vadd.f32 %v1086, %v1253
  %v1419 = vadd.f32 %v1087, %v1293
  %v1420 = vadd.f32 %v1088, %v1333
  %v1421 = vadd.f32 %v1089, %v1373
  %v1422 = vadd.f32 %v1090, %v1413
  %v1423 = vsub.f32 0.0, %v1415
  %v1424 = vsub.f32 0.0, %v1416
  %v1425 = vmul.f32 %v1423, 1.442695
  %v1426 = vpow.pop %v1425
  %v1427 = vmul.f32 %v1424, 1.442695
  %v1428 = vpow.pop %v1427
  %v1429 = vadd.f32 %v1426, 1.0
  %v1430 = vadd.f32 %v1428, 1.0
  %v1431 = vrcp.pop %v1429
  %v1432 = vrcp.pop %v1430
  %v1433 = vsub.f32 0.0, %v1417
  %v1434 = vsub.f32 0.0, %v1418
  %v1435 = vmul.f32 %v1433, 1.442695
  %v1436 = vpow.pop %v1435
  %v1437 = vmul.f32 %v1434, 1.442695
  %v1438 = vpow.pop %v1437
  %v1439 = vadd.f32 %v1436, 1.0
  %v1440 = vadd.f32 %v1438, 1.0
  %v1441 = vrcp.pop %v1439
  %v1442 = vrcp.pop %v1440
  %v1443 = vtanh.pop %v1419
  %v1444 = vtanh.pop %v1420
  %v1445 = vsub.f32 0.0, %v1421
  %v1446 = vsub.f32 0.0, %v1422
  %v1447 = vmul.f32 %v1445, 1.442695
  %v1448 = vpow.pop %v1447
  %v1449 = vmul.f32 %v1446, 1.442695
  %v1450 = vpow.pop %v1449
  %v1451 = vadd.f32 %v1448, 1.0
  %v1452 = vadd.f32 %v1450, 1.0
  %v1453 = vrcp.pop %v1451
  %v1454 = vrcp.pop %v1452
  %v1455 = vmul.f32 %v1441, 0.0
  %v1456 = vmul.f32 %v1442, 0.0
  %v1457 = vmul.f32 %v1431, %v1443
  %v1458 = vmul.f32 %v1432, %v1444
  %v1459 = vadd.f32 %v1455, %v1457
  %v1460 = vadd.f32 %v1456, %v1458
  %v1461 = vtanh.pop %v1459
  %v1462 = vtanh.pop %v1460
  %v1463 = vmul.f32 %v1453, %v1461
  %v1464 = vmul.f32 %v1454, %v1462
  %1465 = vst [vmem:[#allocation3] sm:$0xff] %v1463
  %1466 = vst.msk [vmem:[#allocation3 + $0x8] sm:$0xff] %vm1091, %v1464
  %v1467 = vld [vmem:[#allocation2 + $0x40] sm:$0xff]
  %v1468 = vld [vmem:[#allocation2 + $0x48] sm:$0xff]
  %v1469 = vld [vmem:[#allocation2 + $0x50] sm:$0xff]
  %v1470 = vld [vmem:[#allocation2 + $0x58] sm:$0xff]
  %v1471 = vld [vmem:[#allocation2 + $0x60] sm:$0xff]
  %v1472 = vld [vmem:[#allocation2 + $0x68] sm:$0xff]
  %v1473 = vld [vmem:[#allocation2 + $0x70] sm:$0xff]
  %v1474 = vld [vmem:[#allocation2 + $0x78] sm:$0xff]
  %v1476 = vsel %vm1091, %v1464, 0
  %1478 = vmatpush.msra.mxu0 %v1059
  %1479 = vmatpush.msra.mxu0 %v1051
  %1480 = vmatpush.msra.mxu0 %v1043
  %1481 = vmatpush.msra.mxu0 %v1035
  %1482 = vmatpush.msra.mxu0 %v1027
  %1483 = vmatpush.msra.mxu0 %v1019
  %1484 = vmatpush.msra.mxu0 %v1011
  %1485 = vmatpush.msra.mxu0 %v1003
  %1486 = vmatpush.msra.mxu0 %v995
  %1487 = vmatpush.msra.mxu0 %v987
  %1488 = vmatpush.msra.mxu0 %v979
  %1489 = vmatpush.msra.mxu0 %v971
  %1490 = vmatpush.msra.mxu0 %v963
  %1491 = vmatpush.msra.mxu0 %v955
  %1492 = vmatpush.msra.mxu0 %v947
  %1493 = vmatpush.msra.mxu0 %v939
  %1494 = vmatmul.f32.gmra.mxu0 %v1463
  %v1495 = vpop.f32.mrf.mxu0
  %v1496 = vadd.f32 0.0, %v1495
  %1497 = vdwg.mxu0
  %1498 = vmatpush.msra.mxu0 0.0
  %1499 = vmatpush.msra.mxu0 0.0
  %1500 = vmatpush.msra.mxu0 0.0
  %1501 = vmatpush.msra.mxu0 0.0
  %1502 = vmatpush.msra.mxu0 0.0
  %1503 = vmatpush.msra.mxu0 0.0
  %1504 = vmatpush.msra.mxu0 0.0
  %1505 = vmatpush.msra.mxu0 0.0
  %1506 = vmatpush.msra.mxu0 0.0
  %1507 = vmatpush.msra.mxu0 0.0
  %1508 = vmatpush.msra.mxu0 0.0
  %1509 = vmatpush.msra.mxu0 0.0
  %1510 = vmatpush.msra.mxu0 0.0
  %1511 = vmatpush.msra.mxu0 0.0
  %1512 = vmatpush.msra.mxu0 %v1075
  %1513 = vmatpush.msra.mxu0 %v1067
  %1514 = vmatmul.f32.gmra.mxu0 %v1476
  %v1515 = vpop.f32.mrf.mxu0
  %v1516 = vadd.f32 %v1496, %v1515
  %1517 = vdwg.mxu0
  %1518 = vmatpush.msra.mxu0 %v1060
  %1519 = vmatpush.msra.mxu0 %v1052
  %1520 = vmatpush.msra.mxu0 %v1044
  %1521 = vmatpush.msra.mxu0 %v1036
  %1522 = vmatpush.msra.mxu0 %v1028
  %1523 = vmatpush.msra.mxu0 %v1020
  %1524 = vmatpush.msra.mxu0 %v1012
  %1525 = vmatpush.msra.mxu0 %v1004
  %1526 = vmatpush.msra.mxu0 %v996
  %1527 = vmatpush.msra.mxu0 %v988
  %1528 = vmatpush.msra.mxu0 %v980
  %1529 = vmatpush.msra.mxu0 %v972
  %1530 = vmatpush.msra.mxu0 %v964
  %1531 = vmatpush.msra.mxu0 %v956
  %1532 = vmatpush.msra.mxu0 %v948
  %1533 = vmatpush.msra.mxu0 %v940
  %1534 = vmatmul.f32.gmra.mxu0 %v1463
  %v1535 = vpop.f32.mrf.mxu0
  %v1536 = vadd.f32 0.0, %v1535
  %1537 = vdwg.mxu0
  %1538 = vmatpush.msra.mxu0 0.0
  %1539 = vmatpush.msra.mxu0 0.0
  %1540 = vmatpush.msra.mxu0 0.0
  %1541 = vmatpush.msra.mxu0 0.0
  %1542 = vmatpush.msra.mxu0 0.0
  %1543 = vmatpush.msra.mxu0 0.0
  %1544 = vmatpush.msra.mxu0 0.0
  %1545 = vmatpush.msra.mxu0 0.0
  %1546 = vmatpush.msra.mxu0 0.0
  %1547 = vmatpush.msra.mxu0 0.0
  %1548 = vmatpush.msra.mxu0 0.0
  %1549 = vmatpush.msra.mxu0 0.0
  %1550 = vmatpush.msra.mxu0 0.0
  %1551 = vmatpush.msra.mxu0 0.0
  %1552 = vmatpush.msra.mxu0 %v1076
  %1553 = vmatpush.msra.mxu0 %v1068
  %1554 = vmatmul.f32.gmra.mxu0 %v1476
  %v1555 = vpop.f32.mrf.mxu0
  %v1556 = vadd.f32 %v1536, %v1555
  %1557 = vdwg.mxu0
  %1558 = vmatpush.msra.mxu0 %v1061
  %1559 = vmatpush.msra.mxu0 %v1053
  %1560 = vmatpush.msra.mxu0 %v1045
  %1561 = vmatpush.msra.mxu0 %v1037
  %1562 = vmatpush.msra.mxu0 %v1029
  %1563 = vmatpush.msra.mxu0 %v1021
  %1564 = vmatpush.msra.mxu0 %v1013
  %1565 = vmatpush.msra.mxu0 %v1005
  %1566 = vmatpush.msra.mxu0 %v997
  %1567 = vmatpush.msra.mxu0 %v989
  %1568 = vmatpush.msra.mxu0 %v981
  %1569 = vmatpush.msra.mxu0 %v973
  %1570 = vmatpush.msra.mxu0 %v965
  %1571 = vmatpush.msra.mxu0 %v957
  %1572 = vmatpush.msra.mxu0 %v949
  %1573 = vmatpush.msra.mxu0 %v941
  %1574 = vmatmul.f32.gmra.mxu0 %v1463
  %v1575 = vpop.f32.mrf.mxu0
  %v1576 = vadd.f32 0.0, %v1575
  %1577 = vdwg.mxu0
  %1578 = vmatpush.msra.mxu0 0.0
  %1579 = vmatpush.msra.mxu0 0.0
  %1580 = vmatpush.msra.mxu0 0.0
  %1581 = vmatpush.msra.mxu0 0.0
  %1582 = vmatpush.msra.mxu0 0.0
  %1583 = vmatpush.msra.mxu0 0.0
  %1584 = vmatpush.msra.mxu0 0.0
  %1585 = vmatpush.msra.mxu0 0.0
  %1586 = vmatpush.msra.mxu0 0.0
  %1587 = vmatpush.msra.mxu0 0.0
  %1588 = vmatpush.msra.mxu0 0.0
  %1589 = vmatpush.msra.mxu0 0.0
  %1590 = vmatpush.msra.mxu0 0.0
  %1591 = vmatpush.msra.mxu0 0.0
  %1592 = vmatpush.msra.mxu0 %v1077
  %1593 = vmatpush.msra.mxu0 %v1069
  %1594 = vmatmul.f32.gmra.mxu0 %v1476
  %v1595 = vpop.f32.mrf.mxu0
  %v1596 = vadd.f32 %v1576, %v1595
  %1597 = vdwg.mxu0
  %1598 = vmatpush.msra.mxu0 %v1062
  %1599 = vmatpush.msra.mxu0 %v1054
  %1600 = vmatpush.msra.mxu0 %v1046
  %1601 = vmatpush.msra.mxu0 %v1038
  %1602 = vmatpush.msra.mxu0 %v1030
  %1603 = vmatpush.msra.mxu0 %v1022
  %1604 = vmatpush.msra.mxu0 %v1014
  %1605 = vmatpush.msra.mxu0 %v1006
  %1606 = vmatpush.msra.mxu0 %v998
  %1607 = vmatpush.msra.mxu0 %v990
  %1608 = vmatpush.msra.mxu0 %v982
  %1609 = vmatpush.msra.mxu0 %v974
  %1610 = vmatpush.msra.mxu0 %v966
  %1611 = vmatpush.msra.mxu0 %v958
  %1612 = vmatpush.msra.mxu0 %v950
  %1613 = vmatpush.msra.mxu0 %v942
  %1614 = vmatmul.f32.gmra.mxu0 %v1463
  %v1615 = vpop.f32.mrf.mxu0
  %v1616 = vadd.f32 0.0, %v1615
  %1617 = vdwg.mxu0
  %1618 = vmatpush.msra.mxu0 0.0
  %1619 = vmatpush.msra.mxu0 0.0
  %1620 = vmatpush.msra.mxu0 0.0
  %1621 = vmatpush.msra.mxu0 0.0
  %1622 = vmatpush.msra.mxu0 0.0
  %1623 = vmatpush.msra.mxu0 0.0
  %1624 = vmatpush.msra.mxu0 0.0
  %1625 = vmatpush.msra.mxu0 0.0
  %1626 = vmatpush.msra.mxu0 0.0
  %1627 = vmatpush.msra.mxu0 0.0
  %1628 = vmatpush.msra.mxu0 0.0
  %1629 = vmatpush.msra.mxu0 0.0
  %1630 = vmatpush.msra.mxu0 0.0
  %1631 = vmatpush.msra.mxu0 0.0
  %1632 = vmatpush.msra.mxu0 %v1078
  %1633 = vmatpush.msra.mxu0 %v1070
  %1634 = vmatmul.f32.gmra.mxu0 %v1476
  %v1635 = vpop.f32.mrf.mxu0
  %v1636 = vadd.f32 %v1616, %v1635
  %1637 = vdwg.mxu0
  %1638 = vmatpush.msra.mxu0 %v1063
  %1639 = vmatpush.msra.mxu0 %v1055
  %1640 = vmatpush.msra.mxu0 %v1047
  %1641 = vmatpush.msra.mxu0 %v1039
  %1642 = vmatpush.msra.mxu0 %v1031
  %1643 = vmatpush.msra.mxu0 %v1023
  %1644 = vmatpush.msra.mxu0 %v1015
  %1645 = vmatpush.msra.mxu0 %v1007
  %1646 = vmatpush.msra.mxu0 %v999
  %1647 = vmatpush.msra.mxu0 %v991
  %1648 = vmatpush.msra.mxu0 %v983
  %1649 = vmatpush.msra.mxu0 %v975
  %1650 = vmatpush.msra.mxu0 %v967
  %1651 = vmatpush.msra.mxu0 %v959
  %1652 = vmatpush.msra.mxu0 %v951
  %1653 = vmatpush.msra.mxu0 %v943
  %1654 = vmatmul.f32.gmra.mxu0 %v1463
  %v1655 = vpop.f32.mrf.mxu0
  %v1656 = vadd.f32 0.0, %v1655
  %1657 = vdwg.mxu0
  %1658 = vmatpush.msra.mxu0 0.0
  %1659 = vmatpush.msra.mxu0 0.0
  %1660 = vmatpush.msra.mxu0 0.0
  %1661 = vmatpush.msra.mxu0 0.0
  %1662 = vmatpush.msra.mxu0 0.0
  %1663 = vmatpush.msra.mxu0 0.0
  %1664 = vmatpush.msra.mxu0 0.0
  %1665 = vmatpush.msra.mxu0 0.0
  %1666 = vmatpush.msra.mxu0 0.0
  %1667 = vmatpush.msra.mxu0 0.0
  %1668 = vmatpush.msra.mxu0 0.0
  %1669 = vmatpush.msra.mxu0 0.0
  %1670 = vmatpush.msra.mxu0 0.0
  %1671 = vmatpush.msra.mxu0 0.0
  %1672 = vmatpush.msra.mxu0 %v1079
  %1673 = vmatpush.msra.mxu0 %v1071
  %1674 = vmatmul.f32.gmra.mxu0 %v1476
  %v1675 = vpop.f32.mrf.mxu0
  %v1676 = vadd.f32 %v1656, %v1675
  %1677 = vdwg.mxu0
  %1678 = vmatpush.msra.mxu0 %v1064
  %1679 = vmatpush.msra.mxu0 %v1056
  %1680 = vmatpush.msra.mxu0 %v1048
  %1681 = vmatpush.msra.mxu0 %v1040
  %1682 = vmatpush.msra.mxu0 %v1032
  %1683 = vmatpush.msra.mxu0 %v1024
  %1684 = vmatpush.msra.mxu0 %v1016
  %1685 = vmatpush.msra.mxu0 %v1008
  %1686 = vmatpush.msra.mxu0 %v1000
  %1687 = vmatpush.msra.mxu0 %v992
  %1688 = vmatpush.msra.mxu0 %v984
  %1689 = vmatpush.msra.mxu0 %v976
  %1690 = vmatpush.msra.mxu0 %v968
  %1691 = vmatpush.msra.mxu0 %v960
  %1692 = vmatpush.msra.mxu0 %v952
  %1693 = vmatpush.msra.mxu0 %v944
  %1694 = vmatmul.f32.gmra.mxu0 %v1463
  %v1695 = vpop.f32.mrf.mxu0
  %v1696 = vadd.f32 0.0, %v1695
  %1697 = vdwg.mxu0
  %1698 = vmatpush.msra.mxu0 0.0
  %1699 = vmatpush.msra.mxu0 0.0
  %1700 = vmatpush.msra.mxu0 0.0
  %1701 = vmatpush.msra.mxu0 0.0
  %1702 = vmatpush.msra.mxu0 0.0
  %1703 = vmatpush.msra.mxu0 0.0
  %1704 = vmatpush.msra.mxu0 0.0
  %1705 = vmatpush.msra.mxu0 0.0
  %1706 = vmatpush.msra.mxu0 0.0
  %1707 = vmatpush.msra.mxu0 0.0
  %1708 = vmatpush.msra.mxu0 0.0
  %1709 = vmatpush.msra.mxu0 0.0
  %1710 = vmatpush.msra.mxu0 0.0
  %1711 = vmatpush.msra.mxu0 0.0
  %1712 = vmatpush.msra.mxu0 %v1080
  %1713 = vmatpush.msra.mxu0 %v1072
  %1714 = vmatmul.f32.gmra.mxu0 %v1476
  %v1715 = vpop.f32.mrf.mxu0
  %v1716 = vadd.f32 %v1696, %v1715
  %1717 = vdwg.mxu0
  %1718 = vmatpush.msra.mxu0 %v1065
  %1719 = vmatpush.msra.mxu0 %v1057
  %1720 = vmatpush.msra.mxu0 %v1049
  %1721 = vmatpush.msra.mxu0 %v1041
  %1722 = vmatpush.msra.mxu0 %v1033
  %1723 = vmatpush.msra.mxu0 %v1025
  %1724 = vmatpush.msra.mxu0 %v1017
  %1725 = vmatpush.msra.mxu0 %v1009
  %1726 = vmatpush.msra.mxu0 %v1001
  %1727 = vmatpush.msra.mxu0 %v993
  %1728 = vmatpush.msra.mxu0 %v985
  %1729 = vmatpush.msra.mxu0 %v977
  %1730 = vmatpush.msra.mxu0 %v969
  %1731 = vmatpush.msra.mxu0 %v961
  %1732 = vmatpush.msra.mxu0 %v953
  %1733 = vmatpush.msra.mxu0 %v945
  %1734 = vmatmul.f32.gmra.mxu0 %v1463
  %v1735 = vpop.f32.mrf.mxu0
  %v1736 = vadd.f32 0.0, %v1735
  %1737 = vdwg.mxu0
  %1738 = vmatpush.msra.mxu0 0.0
  %1739 = vmatpush.msra.mxu0 0.0
  %1740 = vmatpush.msra.mxu0 0.0
  %1741 = vmatpush.msra.mxu0 0.0
  %1742 = vmatpush.msra.mxu0 0.0
  %1743 = vmatpush.msra.mxu0 0.0
  %1744 = vmatpush.msra.mxu0 0.0
  %1745 = vmatpush.msra.mxu0 0.0
  %1746 = vmatpush.msra.mxu0 0.0
  %1747 = vmatpush.msra.mxu0 0.0
  %1748 = vmatpush.msra.mxu0 0.0
  %1749 = vmatpush.msra.mxu0 0.0
  %1750 = vmatpush.msra.mxu0 0.0
  %1751 = vmatpush.msra.mxu0 0.0
  %1752 = vmatpush.msra.mxu0 %v1081
  %1753 = vmatpush.msra.mxu0 %v1073
  %1754 = vmatmul.f32.gmra.mxu0 %v1476
  %v1755 = vpop.f32.mrf.mxu0
  %v1756 = vadd.f32 %v1736, %v1755
  %1757 = vdwg.mxu0
  %1758 = vmatpush.msra.mxu0 %v1066
  %1759 = vmatpush.msra.mxu0 %v1058
  %1760 = vmatpush.msra.mxu0 %v1050
  %1761 = vmatpush.msra.mxu0 %v1042
  %1762 = vmatpush.msra.mxu0 %v1034
  %1763 = vmatpush.msra.mxu0 %v1026
  %1764 = vmatpush.msra.mxu0 %v1018
  %1765 = vmatpush.msra.mxu0 %v1010
  %1766 = vmatpush.msra.mxu0 %v1002
  %1767 = vmatpush.msra.mxu0 %v994
  %1768 = vmatpush.msra.mxu0 %v986
  %1769 = vmatpush.msra.mxu0 %v978
  %1770 = vmatpush.msra.mxu0 %v970
  %1771 = vmatpush.msra.mxu0 %v962
  %1772 = vmatpush.msra.mxu0 %v954
  %1773 = vmatpush.msra.mxu0 %v946
  %1774 = vmatmul.f32.gmra.mxu0 %v1463
  %v1775 = vpop.f32.mrf.mxu0
  %v1776 = vadd.f32 0.0, %v1775
  %1777 = vdwg.mxu0
  %1778 = vmatpush.msra.mxu0 0.0
  %1779 = vmatpush.msra.mxu0 0.0
  %1780 = vmatpush.msra.mxu0 0.0
  %1781 = vmatpush.msra.mxu0 0.0
  %1782 = vmatpush.msra.mxu0 0.0
  %1783 = vmatpush.msra.mxu0 0.0
  %1784 = vmatpush.msra.mxu0 0.0
  %1785 = vmatpush.msra.mxu0 0.0
  %1786 = vmatpush.msra.mxu0 0.0
  %1787 = vmatpush.msra.mxu0 0.0
  %1788 = vmatpush.msra.mxu0 0.0
  %1789 = vmatpush.msra.mxu0 0.0
  %1790 = vmatpush.msra.mxu0 0.0
  %1791 = vmatpush.msra.mxu0 0.0
  %1792 = vmatpush.msra.mxu0 %v1082
  %1793 = vmatpush.msra.mxu0 %v1074
  %1794 = vmatmul.f32.gmra.mxu0 %v1476
  %v1795 = vpop.f32.mrf.mxu0
  %v1796 = vadd.f32 %v1776, %v1795
  %1797 = vdwg.mxu0
  %v1798 = vadd.f32 %v1467, %v1516
  %v1799 = vadd.f32 %v1468, %v1556
  %v1800 = vadd.f32 %v1469, %v1596
  %v1801 = vadd.f32 %v1470, %v1636
  %v1802 = vadd.f32 %v1471, %v1676
  %v1803 = vadd.f32 %v1472, %v1716
  %v1804 = vadd.f32 %v1473, %v1756
  %v1805 = vadd.f32 %v1474, %v1796
  %v1806 = vsub.f32 0.0, %v1798
  %v1807 = vsub.f32 0.0, %v1799
  %v1808 = vmul.f32 %v1806, 1.442695
  %v1809 = vpow.pop %v1808
  %v1810 = vmul.f32 %v1807, 1.442695
  %v1811 = vpow.pop %v1810
  %v1812 = vadd.f32 %v1809, 1.0
  %v1813 = vadd.f32 %v1811, 1.0
  %v1814 = vrcp.pop %v1812
  %v1815 = vrcp.pop %v1813
  %v1816 = vsub.f32 0.0, %v1800
  %v1817 = vsub.f32 0.0, %v1801
  %v1818 = vmul.f32 %v1816, 1.442695
  %v1819 = vpow.pop %v1818
  %v1820 = vmul.f32 %v1817, 1.442695
  %v1821 = vpow.pop %v1820
  %v1822 = vadd.f32 %v1819, 1.0
  %v1823 = vadd.f32 %v1821, 1.0
  %v1824 = vrcp.pop %v1822
  %v1825 = vrcp.pop %v1823
  %v1826 = vtanh.pop %v1802
  %v1827 = vtanh.pop %v1803
  %v1828 = vsub.f32 0.0, %v1804
  %v1829 = vsub.f32 0.0, %v1805
  %v1830 = vmul.f32 %v1828, 1.442695
  %v1831 = vpow.pop %v1830
  %v1832 = vmul.f32 %v1829, 1.442695
  %v1833 = vpow.pop %v1832
  %v1834 = vadd.f32 %v1831, 1.0
  %v1835 = vadd.f32 %v1833, 1.0
  %v1836 = vrcp.pop %v1834
  %v1837 = vrcp.pop %v1835
  %v1838 = vmul.f32 %v1824, %v1459
  %v1839 = vmul.f32 %v1825, %v1460
  %v1840 = vmul.f32 %v1814, %v1826
  %v1841 = vmul.f32 %v1815, %v1827
  %v1842 = vadd.f32 %v1838, %v1840
  %v1843 = vadd.f32 %v1839, %v1841
  %v1844 = vtanh.pop %v1842
  %v1845 = vtanh.pop %v1843
  %v1846 = vmul.f32 %v1836, %v1844
  %v1847 = vmul.f32 %v1837, %v1845
  %1848 = vst [vmem:[#allocation3 + $0x10] sm:$0xff] %v1846
  %1849 = vst.msk [vmem:[#allocation3 + $0x18] sm:$0xff] %vm1091, %v1847
  %v1850 = vld [vmem:[#allocation2 + $0x80] sm:$0xff]
  %v1851 = vld [vmem:[#allocation2 + $0x88] sm:$0xff]
  %v1852 = vld [vmem:[#allocation2 + $0x90] sm:$0xff]
  %v1853 = vld [vmem:[#allocation2 + $0x98] sm:$0xff]
  %v1854 = vld [vmem:[#allocation2 + $0xa0] sm:$0xff]
  %v1855 = vld [vmem:[#allocation2 + $0xa8] sm:$0xff]
  %v1856 = vld [vmem:[#allocation2 + $0xb0] sm:$0xff]
  %v1857 = vld [vmem:[#allocation2 + $0xb8] sm:$0xff]
  %v1859 = vsel %vm1091, %v1847, 0
  %1861 = vmatpush.msra.mxu0 %v1059
  %1862 = vmatpush.msra.mxu0 %v1051
  %1863 = vmatpush.msra.mxu0 %v1043
  %1864 = vmatpush.msra.mxu0 %v1035
  %1865 = vmatpush.msra.mxu0 %v1027
  %1866 = vmatpush.msra.mxu0 %v1019
  %1867 = vmatpush.msra.mxu0 %v1011
  %1868 = vmatpush.msra.mxu0 %v1003
  %1869 = vmatpush.msra.mxu0 %v995
  %1870 = vmatpush.msra.mxu0 %v987
  %1871 = vmatpush.msra.mxu0 %v979
  %1872 = vmatpush.msra.mxu0 %v971
  %1873 = vmatpush.msra.mxu0 %v963
  %1874 = vmatpush.msra.mxu0 %v955
  %1875 = vmatpush.msra.mxu0 %v947
  %1876 = vmatpush.msra.mxu0 %v939
  %1877 = vmatmul.f32.gmra.mxu0 %v1846
  %v1878 = vpop.f32.mrf.mxu0
  %v1879 = vadd.f32 0.0, %v1878
  %1880 = vdwg.mxu0
  %1881 = vmatpush.msra.mxu0 0.0
  %1882 = vmatpush.msra.mxu0 0.0
  %1883 = vmatpush.msra.mxu0 0.0
  %1884 = vmatpush.msra.mxu0 0.0
  %1885 = vmatpush.msra.mxu0 0.0
  %1886 = vmatpush.msra.mxu0 0.0
  %1887 = vmatpush.msra.mxu0 0.0
  %1888 = vmatpush.msra.mxu0 0.0
  %1889 = vmatpush.msra.mxu0 0.0
  %1890 = vmatpush.msra.mxu0 0.0
  %1891 = vmatpush.msra.mxu0 0.0
  %1892 = vmatpush.msra.mxu0 0.0
  %1893 = vmatpush.msra.mxu0 0.0
  %1894 = vmatpush.msra.mxu0 0.0
  %1895 = vmatpush.msra.mxu0 %v1075
  %1896 = vmatpush.msra.mxu0 %v1067
  %1897 = vmatmul.f32.gmra.mxu0 %v1859
  %v1898 = vpop.f32.mrf.mxu0
  %v1899 = vadd.f32 %v1879, %v1898
  %1900 = vdwg.mxu0
  %1901 = vmatpush.msra.mxu0 %v1060
  %1902 = vmatpush.msra.mxu0 %v1052
  %1903 = vmatpush.msra.mxu0 %v1044
  %1904 = vmatpush.msra.mxu0 %v1036
  %1905 = vmatpush.msra.mxu0 %v1028
  %1906 = vmatpush.msra.mxu0 %v1020
  %1907 = vmatpush.msra.mxu0 %v1012
  %1908 = vmatpush.msra.mxu0 %v1004
  %1909 = vmatpush.msra.mxu0 %v996
  %1910 = vmatpush.msra.mxu0 %v988
  %1911 = vmatpush.msra.mxu0 %v980
  %1912 = vmatpush.msra.mxu0 %v972
  %1913 = vmatpush.msra.mxu0 %v964
  %1914 = vmatpush.msra.mxu0 %v956
  %1915 = vmatpush.msra.mxu0 %v948
  %1916 = vmatpush.msra.mxu0 %v940
  %1917 = vmatmul.f32.gmra.mxu0 %v1846
  %v1918 = vpop.f32.mrf.mxu0
  %v1919 = vadd.f32 0.0, %v1918
  %1920 = vdwg.mxu0
  %1921 = vmatpush.msra.mxu0 0.0
  %1922 = vmatpush.msra.mxu0 0.0
  %1923 = vmatpush.msra.mxu0 0.0
  %1924 = vmatpush.msra.mxu0 0.0
  %1925 = vmatpush.msra.mxu0 0.0
  %1926 = vmatpush.msra.mxu0 0.0
  %1927 = vmatpush.msra.mxu0 0.0
  %1928 = vmatpush.msra.mxu0 0.0
  %1929 = vmatpush.msra.mxu0 0.0
  %1930 = vmatpush.msra.mxu0 0.0
  %1931 = vmatpush.msra.mxu0 0.0
  %1932 = vmatpush.msra.mxu0 0.0
  %1933 = vmatpush.msra.mxu0 0.0
  %1934 = vmatpush.msra.mxu0 0.0
  %1935 = vmatpush.msra.mxu0 %v1076
  %1936 = vmatpush.msra.mxu0 %v1068
  %1937 = vmatmul.f32.gmra.mxu0 %v1859
  %v1938 = vpop.f32.mrf.mxu0
  %v1939 = vadd.f32 %v1919, %v1938
  %1940 = vdwg.mxu0
  %1941 = vmatpush.msra.mxu0 %v1061
  %1942 = vmatpush.msra.mxu0 %v1053
  %1943 = vmatpush.msra.mxu0 %v1045
  %1944 = vmatpush.msra.mxu0 %v1037
  %1945 = vmatpush.msra.mxu0 %v1029
  %1946 = vmatpush.msra.mxu0 %v1021
  %1947 = vmatpush.msra.mxu0 %v1013
  %1948 = vmatpush.msra.mxu0 %v1005
  %1949 = vmatpush.msra.mxu0 %v997
  %1950 = vmatpush.msra.mxu0 %v989
  %1951 = vmatpush.msra.mxu0 %v981
  %1952 = vmatpush.msra.mxu0 %v973
  %1953 = vmatpush.msra.mxu0 %v965
  %1954 = vmatpush.msra.mxu0 %v957
  %1955 = vmatpush.msra.mxu0 %v949
  %1956 = vmatpush.msra.mxu0 %v941
  %1957 = vmatmul.f32.gmra.mxu0 %v1846
  %v1958 = vpop.f32.mrf.mxu0
  %v1959 = vadd.f32 0.0, %v1958
  %1960 = vdwg.mxu0
  %1961 = vmatpush.msra.mxu0 0.0
  %1962 = vmatpush.msra.mxu0 0.0
  %1963 = vmatpush.msra.mxu0 0.0
  %1964 = vmatpush.msra.mxu0 0.0
  %1965 = vmatpush.msra.mxu0 0.0
  %1966 = vmatpush.msra.mxu0 0.0
  %1967 = vmatpush.msra.mxu0 0.0
  %1968 = vmatpush.msra.mxu0 0.0
  %1969 = vmatpush.msra.mxu0 0.0
  %1970 = vmatpush.msra.mxu0 0.0
  %1971 = vmatpush.msra.mxu0 0.0
  %1972 = vmatpush.msra.mxu0 0.0
  %1973 = vmatpush.msra.mxu0 0.0
  %1974 = vmatpush.msra.mxu0 0.0
  %1975 = vmatpush.msra.mxu0 %v1077
  %1976 = vmatpush.msra.mxu0 %v1069
  %1977 = vmatmul.f32.gmra.mxu0 %v1859
  %v1978 = vpop.f32.mrf.mxu0
  %v1979 = vadd.f32 %v1959, %v1978
  %1980 = vdwg.mxu0
  %1981 = vmatpush.msra.mxu0 %v1062
  %1982 = vmatpush.msra.mxu0 %v1054
  %1983 = vmatpush.msra.mxu0 %v1046
  %1984 = vmatpush.msra.mxu0 %v1038
  %1985 = vmatpush.msra.mxu0 %v1030
  %1986 = vmatpush.msra.mxu0 %v1022
  %1987 = vmatpush.msra.mxu0 %v1014
  %1988 = vmatpush.msra.mxu0 %v1006
  %1989 = vmatpush.msra.mxu0 %v998
  %1990 = vmatpush.msra.mxu0 %v990
  %1991 = vmatpush.msra.mxu0 %v982
  %1992 = vmatpush.msra.mxu0 %v974
  %1993 = vmatpush.msra.mxu0 %v966
  %1994 = vmatpush.msra.mxu0 %v958
  %1995 = vmatpush.msra.mxu0 %v950
  %1996 = vmatpush.msra.mxu0 %v942
  %1997 = vmatmul.f32.gmra.mxu0 %v1846
  %v1998 = vpop.f32.mrf.mxu0
  %v1999 = vadd.f32 0.0, %v1998
  %2000 = vdwg.mxu0
  %2001 = vmatpush.msra.mxu0 0.0
  %2002 = vmatpush.msra.mxu0 0.0
  %2003 = vmatpush.msra.mxu0 0.0
  %2004 = vmatpush.msra.mxu0 0.0
  %2005 = vmatpush.msra.mxu0 0.0
  %2006 = vmatpush.msra.mxu0 0.0
  %2007 = vmatpush.msra.mxu0 0.0
  %2008 = vmatpush.msra.mxu0 0.0
  %2009 = vmatpush.msra.mxu0 0.0
  %2010 = vmatpush.msra.mxu0 0.0
  %2011 = vmatpush.msra.mxu0 0.0
  %2012 = vmatpush.msra.mxu0 0.0
  %2013 = vmatpush.msra.mxu0 0.0
  %2014 = vmatpush.msra.mxu0 0.0
  %2015 = vmatpush.msra.mxu0 %v1078
  %2016 = vmatpush.msra.mxu0 %v1070
  %2017 = vmatmul.f32.gmra.mxu0 %v1859
  %v2018 = vpop.f32.mrf.mxu0
  %v2019 = vadd.f32 %v1999, %v2018
  %2020 = vdwg.mxu0
  %2021 = vmatpush.msra.mxu0 %v1063
  %2022 = vmatpush.msra.mxu0 %v1055
  %2023 = vmatpush.msra.mxu0 %v1047
  %2024 = vmatpush.msra.mxu0 %v1039
  %2025 = vmatpush.msra.mxu0 %v1031
  %2026 = vmatpush.msra.mxu0 %v1023
  %2027 = vmatpush.msra.mxu0 %v1015
  %2028 = vmatpush.msra.mxu0 %v1007
  %2029 = vmatpush.msra.mxu0 %v999
  %2030 = vmatpush.msra.mxu0 %v991
  %2031 = vmatpush.msra.mxu0 %v983
  %2032 = vmatpush.msra.mxu0 %v975
  %2033 = vmatpush.msra.mxu0 %v967
  %2034 = vmatpush.msra.mxu0 %v959
  %2035 = vmatpush.msra.mxu0 %v951
  %2036 = vmatpush.msra.mxu0 %v943
  %2037 = vmatmul.f32.gmra.mxu0 %v1846
  %v2038 = vpop.f32.mrf.mxu0
  %v2039 = vadd.f32 0.0, %v2038
  %2040 = vdwg.mxu0
  %2041 = vmatpush.msra.mxu0 0.0
  %2042 = vmatpush.msra.mxu0 0.0
  %2043 = vmatpush.msra.mxu0 0.0
  %2044 = vmatpush.msra.mxu0 0.0
  %2045 = vmatpush.msra.mxu0 0.0
  %2046 = vmatpush.msra.mxu0 0.0
  %2047 = vmatpush.msra.mxu0 0.0
  %2048 = vmatpush.msra.mxu0 0.0
  %2049 = vmatpush.msra.mxu0 0.0
  %2050 = vmatpush.msra.mxu0 0.0
  %2051 = vmatpush.msra.mxu0 0.0
  %2052 = vmatpush.msra.mxu0 0.0
  %2053 = vmatpush.msra.mxu0 0.0
  %2054 = vmatpush.msra.mxu0 0.0
  %2055 = vmatpush.msra.mxu0 %v1079
  %2056 = vmatpush.msra.mxu0 %v1071
  %2057 = vmatmul.f32.gmra.mxu0 %v1859
  %v2058 = vpop.f32.mrf.mxu0
  %v2059 = vadd.f32 %v2039, %v2058
  %2060 = vdwg.mxu0
  %2061 = vmatpush.msra.mxu0 %v1064
  %2062 = vmatpush.msra.mxu0 %v1056
  %2063 = vmatpush.msra.mxu0 %v1048
  %2064 = vmatpush.msra.mxu0 %v1040
  %2065 = vmatpush.msra.mxu0 %v1032
  %2066 = vmatpush.msra.mxu0 %v1024
  %2067 = vmatpush.msra.mxu0 %v1016
  %2068 = vmatpush.msra.mxu0 %v1008
  %2069 = vmatpush.msra.mxu0 %v1000
  %2070 = vmatpush.msra.mxu0 %v992
  %2071 = vmatpush.msra.mxu0 %v984
  %2072 = vmatpush.msra.mxu0 %v976
  %2073 = vmatpush.msra.mxu0 %v968
  %2074 = vmatpush.msra.mxu0 %v960
  %2075 = vmatpush.msra.mxu0 %v952
  %2076 = vmatpush.msra.mxu0 %v944
  %2077 = vmatmul.f32.gmra.mxu0 %v1846
  %v2078 = vpop.f32.mrf.mxu0
  %v2079 = vadd.f32 0.0, %v2078
  %2080 = vdwg.mxu0
  %2081 = vmatpush.msra.mxu0 0.0
  %2082 = vmatpush.msra.mxu0 0.0
  %2083 = vmatpush.msra.mxu0 0.0
  %2084 = vmatpush.msra.mxu0 0.0
  %2085 = vmatpush.msra.mxu0 0.0
  %2086 = vmatpush.msra.mxu0 0.0
  %2087 = vmatpush.msra.mxu0 0.0
  %2088 = vmatpush.msra.mxu0 0.0
  %2089 = vmatpush.msra.mxu0 0.0
  %2090 = vmatpush.msra.mxu0 0.0
  %2091 = vmatpush.msra.mxu0 0.0
  %2092 = vmatpush.msra.mxu0 0.0
  %2093 = vmatpush.msra.mxu0 0.0
  %2094 = vmatpush.msra.mxu0 0.0
  %2095 = vmatpush.msra.mxu0 %v1080
  %2096 = vmatpush.msra.mxu0 %v1072
  %2097 = vmatmul.f32.gmra.mxu0 %v1859
  %v2098 = vpop.f32.mrf.mxu0
  %v2099 = vadd.f32 %v2079, %v2098
  %2100 = vdwg.mxu0
  %2101 = vmatpush.msra.mxu0 %v1065
  %2102 = vmatpush.msra.mxu0 %v1057
  %2103 = vmatpush.msra.mxu0 %v1049
  %2104 = vmatpush.msra.mxu0 %v1041
  %2105 = vmatpush.msra.mxu0 %v1033
  %2106 = vmatpush.msra.mxu0 %v1025
  %2107 = vmatpush.msra.mxu0 %v1017
  %2108 = vmatpush.msra.mxu0 %v1009
  %2109 = vmatpush.msra.mxu0 %v1001
  %2110 = vmatpush.msra.mxu0 %v993
  %2111 = vmatpush.msra.mxu0 %v985
  %2112 = vmatpush.msra.mxu0 %v977
  %2113 = vmatpush.msra.mxu0 %v969
  %2114 = vmatpush.msra.mxu0 %v961
  %2115 = vmatpush.msra.mxu0 %v953
  %2116 = vmatpush.msra.mxu0 %v945
  %2117 = vmatmul.f32.gmra.mxu0 %v1846
  %v2118 = vpop.f32.mrf.mxu0
  %v2119 = vadd.f32 0.0, %v2118
  %2120 = vdwg.mxu0
  %2121 = vmatpush.msra.mxu0 0.0
  %2122 = vmatpush.msra.mxu0 0.0
  %2123 = vmatpush.msra.mxu0 0.0
  %2124 = vmatpush.msra.mxu0 0.0
  %2125 = vmatpush.msra.mxu0 0.0
  %2126 = vmatpush.msra.mxu0 0.0
  %2127 = vmatpush.msra.mxu0 0.0
  %2128 = vmatpush.msra.mxu0 0.0
  %2129 = vmatpush.msra.mxu0 0.0
  %2130 = vmatpush.msra.mxu0 0.0
  %2131 = vmatpush.msra.mxu0 0.0
  %2132 = vmatpush.msra.mxu0 0.0
  %2133 = vmatpush.msra.mxu0 0.0
  %2134 = vmatpush.msra.mxu0 0.0
  %2135 = vmatpush.msra.mxu0 %v1081
  %2136 = vmatpush.msra.mxu0 %v1073
  %2137 = vmatmul.f32.gmra.mxu0 %v1859
  %v2138 = vpop.f32.mrf.mxu0
  %v2139 = vadd.f32 %v2119, %v2138
  %2140 = vdwg.mxu0
  %2141 = vmatpush.msra.mxu0 %v1066
  %2142 = vmatpush.msra.mxu0 %v1058
  %2143 = vmatpush.msra.mxu0 %v1050
  %2144 = vmatpush.msra.mxu0 %v1042
  %2145 = vmatpush.msra.mxu0 %v1034
  %2146 = vmatpush.msra.mxu0 %v1026
  %2147 = vmatpush.msra.mxu0 %v1018
  %2148 = vmatpush.msra.mxu0 %v1010
  %2149 = vmatpush.msra.mxu0 %v1002
  %2150 = vmatpush.msra.mxu0 %v994
  %2151 = vmatpush.msra.mxu0 %v986
  %2152 = vmatpush.msra.mxu0 %v978
  %2153 = vmatpush.msra.mxu0 %v970
  %2154 = vmatpush.msra.mxu0 %v962
  %2155 = vmatpush.msra.mxu0 %v954
  %2156 = vmatpush.msra.mxu0 %v946
  %2157 = vmatmul.f32.gmra.mxu0 %v1846
  %v2158 = vpop.f32.mrf.mxu0
  %v2159 = vadd.f32 0.0, %v2158
  %2160 = vdwg.mxu0
  %2161 = vmatpush.msra.mxu0 0.0
  %2162 = vmatpush.msra.mxu0 0.0
  %2163 = vmatpush.msra.mxu0 0.0
  %2164 = vmatpush.msra.mxu0 0.0
  %2165 = vmatpush.msra.mxu0 0.0
  %2166 = vmatpush.msra.mxu0 0.0
  %2167 = vmatpush.msra.mxu0 0.0
  %2168 = vmatpush.msra.mxu0 0.0
  %2169 = vmatpush.msra.mxu0 0.0
  %2170 = vmatpush.msra.mxu0 0.0
  %2171 = vmatpush.msra.mxu0 0.0
  %2172 = vmatpush.msra.mxu0 0.0
  %2173 = vmatpush.msra.mxu0 0.0
  %2174 = vmatpush.msra.mxu0 0.0
  %2175 = vmatpush.msra.mxu0 %v1082
  %2176 = vmatpush.msra.mxu0 %v1074
  %2177 = vmatmul.f32.gmra.mxu0 %v1859
  %v2178 = vpop.f32.mrf.mxu0
  %v2179 = vadd.f32 %v2159, %v2178
  %2180 = vdwg.mxu0
  %v2181 = vadd.f32 %v1850, %v1899
  %v2182 = vadd.f32 %v1851, %v1939
  %v2183 = vadd.f32 %v1852, %v1979
  %v2184 = vadd.f32 %v1853, %v2019
  %v2185 = vadd.f32 %v1854, %v2059
  %v2186 = vadd.f32 %v1855, %v2099
  %v2187 = vadd.f32 %v1856, %v2139
  %v2188 = vadd.f32 %v1857, %v2179
  %v2189 = vsub.f32 0.0, %v2181
  %v2190 = vsub.f32 0.0, %v2182
  %v2191 = vmul.f32 %v2189, 1.442695
  %v2192 = vpow.pop %v2191
  %v2193 = vmul.f32 %v2190, 1.442695
  %v2194 = vpow.pop %v2193
  %v2195 = vadd.f32 %v2192, 1.0
  %v2196 = vadd.f32 %v2194, 1.0
  %v2197 = vrcp.pop %v2195
  %v2198 = vrcp.pop %v2196
  %v2199 = vsub.f32 0.0, %v2183
  %v2200 = vsub.f32 0.0, %v2184
  %v2201 = vmul.f32 %v2199, 1.442695
  %v2202 = vpow.pop %v2201
  %v2203 = vmul.f32 %v2200, 1.442695
  %v2204 = vpow.pop %v2203
  %v2205 = vadd.f32 %v2202, 1.0
  %v2206 = vadd.f32 %v2204, 1.0
  %v2207 = vrcp.pop %v2205
  %v2208 = vrcp.pop %v2206
  %v2209 = vtanh.pop %v2185
  %v2210 = vtanh.pop %v2186
  %v2211 = vsub.f32 0.0, %v2187
  %v2212 = vsub.f32 0.0, %v2188
  %v2213 = vmul.f32 %v2211, 1.442695
  %v2214 = vpow.pop %v2213
  %v2215 = vmul.f32 %v2212, 1.442695
  %v2216 = vpow.pop %v2215
  %v2217 = vadd.f32 %v2214, 1.0
  %v2218 = vadd.f32 %v2216, 1.0
  %v2219 = vrcp.pop %v2217
  %v2220 = vrcp.pop %v2218
  %v2221 = vmul.f32 %v2207, %v1842
  %v2222 = vmul.f32 %v2208, %v1843
  %v2223 = vmul.f32 %v2197, %v2209
  %v2224 = vmul.f32 %v2198, %v2210
  %v2225 = vadd.f32 %v2221, %v2223
  %v2226 = vadd.f32 %v2222, %v2224
  %v2227 = vtanh.pop %v2225
  %v2228 = vtanh.pop %v2226
  %v2229 = vmul.f32 %v2219, %v2227
  %v2230 = vmul.f32 %v2220, %v2228
  %2231 = vst [vmem:[#allocation3 + $0x20] sm:$0xff] %v2229
  %2232 = vst.msk [vmem:[#allocation3 + $0x28] sm:$0xff] %vm1091, %v2230
  %v2233 = vld [vmem:[#allocation2 + $0xc0] sm:$0xff]
  %v2234 = vld [vmem:[#allocation2 + $0xc8] sm:$0xff]
  %v2235 = vld [vmem:[#allocation2 + $0xd0] sm:$0xff]
  %v2236 = vld [vmem:[#allocation2 + $0xd8] sm:$0xff]
  %v2237 = vld [vmem:[#allocation2 + $0xe0] sm:$0xff]
  %v2238 = vld [vmem:[#allocation2 + $0xe8] sm:$0xff]
  %v2239 = vld [vmem:[#allocation2 + $0xf0] sm:$0xff]
  %v2240 = vld [vmem:[#allocation2 + $0xf8] sm:$0xff]
  %v2242 = vsel %vm1091, %v2230, 0
  %2244 = vmatpush.msra.mxu0 %v1059
  %2245 = vmatpush.msra.mxu0 %v1051
  %2246 = vmatpush.msra.mxu0 %v1043
  %2247 = vmatpush.msra.mxu0 %v1035
  %2248 = vmatpush.msra.mxu0 %v1027
  %2249 = vmatpush.msra.mxu0 %v1019
  %2250 = vmatpush.msra.mxu0 %v1011
  %2251 = vmatpush.msra.mxu0 %v1003
  %2252 = vmatpush.msra.mxu0 %v995
  %2253 = vmatpush.msra.mxu0 %v987
  %2254 = vmatpush.msra.mxu0 %v979
  %2255 = vmatpush.msra.mxu0 %v971
  %2256 = vmatpush.msra.mxu0 %v963
  %2257 = vmatpush.msra.mxu0 %v955
  %2258 = vmatpush.msra.mxu0 %v947
  %2259 = vmatpush.msra.mxu0 %v939
  %2260 = vmatmul.f32.gmra.mxu0 %v2229
  %v2261 = vpop.f32.mrf.mxu0
  %v2262 = vadd.f32 0.0, %v2261
  %2263 = vdwg.mxu0
  %2264 = vmatpush.msra.mxu0 0.0
  %2265 = vmatpush.msra.mxu0 0.0
  %2266 = vmatpush.msra.mxu0 0.0
  %2267 = vmatpush.msra.mxu0 0.0
  %2268 = vmatpush.msra.mxu0 0.0
  %2269 = vmatpush.msra.mxu0 0.0
  %2270 = vmatpush.msra.mxu0 0.0
  %2271 = vmatpush.msra.mxu0 0.0
  %2272 = vmatpush.msra.mxu0 0.0
  %2273 = vmatpush.msra.mxu0 0.0
  %2274 = vmatpush.msra.mxu0 0.0
  %2275 = vmatpush.msra.mxu0 0.0
  %2276 = vmatpush.msra.mxu0 0.0
  %2277 = vmatpush.msra.mxu0 0.0
  %2278 = vmatpush.msra.mxu0 %v1075
  %2279 = vmatpush.msra.mxu0 %v1067
  %2280 = vmatmul.f32.gmra.mxu0 %v2242
  %v2281 = vpop.f32.mrf.mxu0
  %v2282 = vadd.f32 %v2262, %v2281
  %2283 = vdwg.mxu0
  %2284 = vmatpush.msra.mxu0 %v1060
  %2285 = vmatpush.msra.mxu0 %v1052
  %2286 = vmatpush.msra.mxu0 %v1044
  %2287 = vmatpush.msra.mxu0 %v1036
  %2288 = vmatpush.msra.mxu0 %v1028
  %2289 = vmatpush.msra.mxu0 %v1020
  %2290 = vmatpush.msra.mxu0 %v1012
  %2291 = vmatpush.msra.mxu0 %v1004
  %2292 = vmatpush.msra.mxu0 %v996
  %2293 = vmatpush.msra.mxu0 %v988
  %2294 = vmatpush.msra.mxu0 %v980
  %2295 = vmatpush.msra.mxu0 %v972
  %2296 = vmatpush.msra.mxu0 %v964
  %2297 = vmatpush.msra.mxu0 %v956
  %2298 = vmatpush.msra.mxu0 %v948
  %2299 = vmatpush.msra.mxu0 %v940
  %2300 = vmatmul.f32.gmra.mxu0 %v2229
  %v2301 = vpop.f32.mrf.mxu0
  %v2302 = vadd.f32 0.0, %v2301
  %2303 = vdwg.mxu0
  %2304 = vmatpush.msra.mxu0 0.0
  %2305 = vmatpush.msra.mxu0 0.0
  %2306 = vmatpush.msra.mxu0 0.0
  %2307 = vmatpush.msra.mxu0 0.0
  %2308 = vmatpush.msra.mxu0 0.0
  %2309 = vmatpush.msra.mxu0 0.0
  %2310 = vmatpush.msra.mxu0 0.0
  %2311 = vmatpush.msra.mxu0 0.0
  %2312 = vmatpush.msra.mxu0 0.0
  %2313 = vmatpush.msra.mxu0 0.0
  %2314 = vmatpush.msra.mxu0 0.0
  %2315 = vmatpush.msra.mxu0 0.0
  %2316 = vmatpush.msra.mxu0 0.0
  %2317 = vmatpush.msra.mxu0 0.0
  %2318 = vmatpush.msra.mxu0 %v1076
  %2319 = vmatpush.msra.mxu0 %v1068
  %2320 = vmatmul.f32.gmra.mxu0 %v2242
  %v2321 = vpop.f32.mrf.mxu0
  %v2322 = vadd.f32 %v2302, %v2321
  %2323 = vdwg.mxu0
  %2324 = vmatpush.msra.mxu0 %v1061
  %2325 = vmatpush.msra.mxu0 %v1053
  %2326 = vmatpush.msra.mxu0 %v1045
  %2327 = vmatpush.msra.mxu0 %v1037
  %2328 = vmatpush.msra.mxu0 %v1029
  %2329 = vmatpush.msra.mxu0 %v1021
  %2330 = vmatpush.msra.mxu0 %v1013
  %2331 = vmatpush.msra.mxu0 %v1005
  %2332 = vmatpush.msra.mxu0 %v997
  %2333 = vmatpush.msra.mxu0 %v989
  %2334 = vmatpush.msra.mxu0 %v981
  %2335 = vmatpush.msra.mxu0 %v973
  %2336 = vmatpush.msra.mxu0 %v965
  %2337 = vmatpush.msra.mxu0 %v957
  %2338 = vmatpush.msra.mxu0 %v949
  %2339 = vmatpush.msra.mxu0 %v941
  %2340 = vmatmul.f32.gmra.mxu0 %v2229
  %v2341 = vpop.f32.mrf.mxu0
  %v2342 = vadd.f32 0.0, %v2341
  %2343 = vdwg.mxu0
  %2344 = vmatpush.msra.mxu0 0.0
  %2345 = vmatpush.msra.mxu0 0.0
  %2346 = vmatpush.msra.mxu0 0.0
  %2347 = vmatpush.msra.mxu0 0.0
  %2348 = vmatpush.msra.mxu0 0.0
  %2349 = vmatpush.msra.mxu0 0.0
  %2350 = vmatpush.msra.mxu0 0.0
  %2351 = vmatpush.msra.mxu0 0.0
  %2352 = vmatpush.msra.mxu0 0.0
  %2353 = vmatpush.msra.mxu0 0.0
  %2354 = vmatpush.msra.mxu0 0.0
  %2355 = vmatpush.msra.mxu0 0.0
  %2356 = vmatpush.msra.mxu0 0.0
  %2357 = vmatpush.msra.mxu0 0.0
  %2358 = vmatpush.msra.mxu0 %v1077
  %2359 = vmatpush.msra.mxu0 %v1069
  %2360 = vmatmul.f32.gmra.mxu0 %v2242
  %v2361 = vpop.f32.mrf.mxu0
  %v2362 = vadd.f32 %v2342, %v2361
  %2363 = vdwg.mxu0
  %2364 = vmatpush.msra.mxu0 %v1062
  %2365 = vmatpush.msra.mxu0 %v1054
  %2366 = vmatpush.msra.mxu0 %v1046
  %2367 = vmatpush.msra.mxu0 %v1038
  %2368 = vmatpush.msra.mxu0 %v1030
  %2369 = vmatpush.msra.mxu0 %v1022
  %2370 = vmatpush.msra.mxu0 %v1014
  %2371 = vmatpush.msra.mxu0 %v1006
  %2372 = vmatpush.msra.mxu0 %v998
  %2373 = vmatpush.msra.mxu0 %v990
  %2374 = vmatpush.msra.mxu0 %v982
  %2375 = vmatpush.msra.mxu0 %v974
  %2376 = vmatpush.msra.mxu0 %v966
  %2377 = vmatpush.msra.mxu0 %v958
  %2378 = vmatpush.msra.mxu0 %v950
  %2379 = vmatpush.msra.mxu0 %v942
  %2380 = vmatmul.f32.gmra.mxu0 %v2229
  %v2381 = vpop.f32.mrf.mxu0
  %v2382 = vadd.f32 0.0, %v2381
  %2383 = vdwg.mxu0
  %2384 = vmatpush.msra.mxu0 0.0
  %2385 = vmatpush.msra.mxu0 0.0
  %2386 = vmatpush.msra.mxu0 0.0
  %2387 = vmatpush.msra.mxu0 0.0
  %2388 = vmatpush.msra.mxu0 0.0
  %2389 = vmatpush.msra.mxu0 0.0
  %2390 = vmatpush.msra.mxu0 0.0
  %2391 = vmatpush.msra.mxu0 0.0
  %2392 = vmatpush.msra.mxu0 0.0
  %2393 = vmatpush.msra.mxu0 0.0
  %2394 = vmatpush.msra.mxu0 0.0
  %2395 = vmatpush.msra.mxu0 0.0
  %2396 = vmatpush.msra.mxu0 0.0
  %2397 = vmatpush.msra.mxu0 0.0
  %2398 = vmatpush.msra.mxu0 %v1078
  %2399 = vmatpush.msra.mxu0 %v1070
  %2400 = vmatmul.f32.gmra.mxu0 %v2242
  %v2401 = vpop.f32.mrf.mxu0
  %v2402 = vadd.f32 %v2382, %v2401
  %2403 = vdwg.mxu0
  %2404 = vmatpush.msra.mxu0 %v1063
  %2405 = vmatpush.msra.mxu0 %v1055
  %2406 = vmatpush.msra.mxu0 %v1047
  %2407 = vmatpush.msra.mxu0 %v1039
  %2408 = vmatpush.msra.mxu0 %v1031
  %2409 = vmatpush.msra.mxu0 %v1023
  %2410 = vmatpush.msra.mxu0 %v1015
  %2411 = vmatpush.msra.mxu0 %v1007
  %2412 = vmatpush.msra.mxu0 %v999
  %2413 = vmatpush.msra.mxu0 %v991
  %2414 = vmatpush.msra.mxu0 %v983
  %2415 = vmatpush.msra.mxu0 %v975
  %2416 = vmatpush.msra.mxu0 %v967
  %2417 = vmatpush.msra.mxu0 %v959
  %2418 = vmatpush.msra.mxu0 %v951
  %2419 = vmatpush.msra.mxu0 %v943
  %2420 = vmatmul.f32.gmra.mxu0 %v2229
  %v2421 = vpop.f32.mrf.mxu0
  %v2422 = vadd.f32 0.0, %v2421
  %2423 = vdwg.mxu0
  %2424 = vmatpush.msra.mxu0 0.0
  %2425 = vmatpush.msra.mxu0 0.0
  %2426 = vmatpush.msra.mxu0 0.0
  %2427 = vmatpush.msra.mxu0 0.0
  %2428 = vmatpush.msra.mxu0 0.0
  %2429 = vmatpush.msra.mxu0 0.0
  %2430 = vmatpush.msra.mxu0 0.0
  %2431 = vmatpush.msra.mxu0 0.0
  %2432 = vmatpush.msra.mxu0 0.0
  %2433 = vmatpush.msra.mxu0 0.0
  %2434 = vmatpush.msra.mxu0 0.0
  %2435 = vmatpush.msra.mxu0 0.0
  %2436 = vmatpush.msra.mxu0 0.0
  %2437 = vmatpush.msra.mxu0 0.0
  %2438 = vmatpush.msra.mxu0 %v1079
  %2439 = vmatpush.msra.mxu0 %v1071
  %2440 = vmatmul.f32.gmra.mxu0 %v2242
  %v2441 = vpop.f32.mrf.mxu0
  %v2442 = vadd.f32 %v2422, %v2441
  %2443 = vdwg.mxu0
  %2444 = vmatpush.msra.mxu0 %v1064
  %2445 = vmatpush.msra.mxu0 %v1056
  %2446 = vmatpush.msra.mxu0 %v1048
  %2447 = vmatpush.msra.mxu0 %v1040
  %2448 = vmatpush.msra.mxu0 %v1032
  %2449 = vmatpush.msra.mxu0 %v1024
  %2450 = vmatpush.msra.mxu0 %v1016
  %2451 = vmatpush.msra.mxu0 %v1008
  %2452 = vmatpush.msra.mxu0 %v1000
  %2453 = vmatpush.msra.mxu0 %v992
  %2454 = vmatpush.msra.mxu0 %v984
  %2455 = vmatpush.msra.mxu0 %v976
  %2456 = vmatpush.msra.mxu0 %v968
  %2457 = vmatpush.msra.mxu0 %v960
  %2458 = vmatpush.msra.mxu0 %v952
  %2459 = vmatpush.msra.mxu0 %v944
  %2460 = vmatmul.f32.gmra.mxu0 %v2229
  %v2461 = vpop.f32.mrf.mxu0
  %v2462 = vadd.f32 0.0, %v2461
  %2463 = vdwg.mxu0
  %2464 = vmatpush.msra.mxu0 0.0
  %2465 = vmatpush.msra.mxu0 0.0
  %2466 = vmatpush.msra.mxu0 0.0
  %2467 = vmatpush.msra.mxu0 0.0
  %2468 = vmatpush.msra.mxu0 0.0
  %2469 = vmatpush.msra.mxu0 0.0
  %2470 = vmatpush.msra.mxu0 0.0
  %2471 = vmatpush.msra.mxu0 0.0
  %2472 = vmatpush.msra.mxu0 0.0
  %2473 = vmatpush.msra.mxu0 0.0
  %2474 = vmatpush.msra.mxu0 0.0
  %2475 = vmatpush.msra.mxu0 0.0
  %2476 = vmatpush.msra.mxu0 0.0
  %2477 = vmatpush.msra.mxu0 0.0
  %2478 = vmatpush.msra.mxu0 %v1080
  %2479 = vmatpush.msra.mxu0 %v1072
  %2480 = vmatmul.f32.gmra.mxu0 %v2242
  %v2481 = vpop.f32.mrf.mxu0
  %v2482 = vadd.f32 %v2462, %v2481
  %2483 = vdwg.mxu0
  %2484 = vmatpush.msra.mxu0 %v1065
  %2485 = vmatpush.msra.mxu0 %v1057
  %2486 = vmatpush.msra.mxu0 %v1049
  %2487 = vmatpush.msra.mxu0 %v1041
  %2488 = vmatpush.msra.mxu0 %v1033
  %2489 = vmatpush.msra.mxu0 %v1025
  %2490 = vmatpush.msra.mxu0 %v1017
  %2491 = vmatpush.msra.mxu0 %v1009
  %2492 = vmatpush.msra.mxu0 %v1001
  %2493 = vmatpush.msra.mxu0 %v993
  %2494 = vmatpush.msra.mxu0 %v985
  %2495 = vmatpush.msra.mxu0 %v977
  %2496 = vmatpush.msra.mxu0 %v969
  %2497 = vmatpush.msra.mxu0 %v961
  %2498 = vmatpush.msra.mxu0 %v953
  %2499 = vmatpush.msra.mxu0 %v945
  %2500 = vmatmul.f32.gmra.mxu0 %v2229
  %v2501 = vpop.f32.mrf.mxu0
  %v2502 = vadd.f32 0.0, %v2501
  %2503 = vdwg.mxu0
  %2504 = vmatpush.msra.mxu0 0.0
  %2505 = vmatpush.msra.mxu0 0.0
  %2506 = vmatpush.msra.mxu0 0.0
  %2507 = vmatpush.msra.mxu0 0.0
  %2508 = vmatpush.msra.mxu0 0.0
  %2509 = vmatpush.msra.mxu0 0.0
  %2510 = vmatpush.msra.mxu0 0.0
  %2511 = vmatpush.msra.mxu0 0.0
  %2512 = vmatpush.msra.mxu0 0.0
  %2513 = vmatpush.msra.mxu0 0.0
  %2514 = vmatpush.msra.mxu0 0.0
  %2515 = vmatpush.msra.mxu0 0.0
  %2516 = vmatpush.msra.mxu0 0.0
  %2517 = vmatpush.msra.mxu0 0.0
  %2518 = vmatpush.msra.mxu0 %v1081
  %2519 = vmatpush.msra.mxu0 %v1073
  %2520 = vmatmul.f32.gmra.mxu0 %v2242
  %v2521 = vpop.f32.mrf.mxu0
  %v2522 = vadd.f32 %v2502, %v2521
  %2523 = vdwg.mxu0
  %2524 = vmatpush.msra.mxu0 %v1066
  %2525 = vmatpush.msra.mxu0 %v1058
  %2526 = vmatpush.msra.mxu0 %v1050
  %2527 = vmatpush.msra.mxu0 %v1042
  %2528 = vmatpush.msra.mxu0 %v1034
  %2529 = vmatpush.msra.mxu0 %v1026
  %2530 = vmatpush.msra.mxu0 %v1018
  %2531 = vmatpush.msra.mxu0 %v1010
  %2532 = vmatpush.msra.mxu0 %v1002
  %2533 = vmatpush.msra.mxu0 %v994
  %2534 = vmatpush.msra.mxu0 %v986
  %2535 = vmatpush.msra.mxu0 %v978
  %2536 = vmatpush.msra.mxu0 %v970
  %2537 = vmatpush.msra.mxu0 %v962
  %2538 = vmatpush.msra.mxu0 %v954
  %2539 = vmatpush.msra.mxu0 %v946
  %2540 = vmatmul.f32.gmra.mxu0 %v2229
  %v2541 = vpop.f32.mrf.mxu0
  %v2542 = vadd.f32 0.0, %v2541
  %2543 = vdwg.mxu0
  %2544 = vmatpush.msra.mxu0 0.0
  %2545 = vmatpush.msra.mxu0 0.0
  %2546 = vmatpush.msra.mxu0 0.0
  %2547 = vmatpush.msra.mxu0 0.0
  %2548 = vmatpush.msra.mxu0 0.0
  %2549 = vmatpush.msra.mxu0 0.0
  %2550 = vmatpush.msra.mxu0 0.0
  %2551 = vmatpush.msra.mxu0 0.0
  %2552 = vmatpush.msra.mxu0 0.0
  %2553 = vmatpush.msra.mxu0 0.0
  %2554 = vmatpush.msra.mxu0 0.0
  %2555 = vmatpush.msra.mxu0 0.0
  %2556 = vmatpush.msra.mxu0 0.0
  %2557 = vmatpush.msra.mxu0 0.0
  %2558 = vmatpush.msra.mxu0 %v1082
  %2559 = vmatpush.msra.mxu0 %v1074
  %2560 = vmatmul.f32.gmra.mxu0 %v2242
  %v2561 = vpop.f32.mrf.mxu0
  %v2562 = vadd.f32 %v2542, %v2561
  %2563 = vdwg.mxu0
  %v2564 = vadd.f32 %v2233, %v2282
  %v2565 = vadd.f32 %v2234, %v2322
  %v2566 = vadd.f32 %v2235, %v2362
  %v2567 = vadd.f32 %v2236, %v2402
  %v2568 = vadd.f32 %v2237, %v2442
  %v2569 = vadd.f32 %v2238, %v2482
  %v2570 = vadd.f32 %v2239, %v2522
  %v2571 = vadd.f32 %v2240, %v2562
  %v2572 = vsub.f32 0.0, %v2564
  %v2573 = vsub.f32 0.0, %v2565
  %v2574 = vmul.f32 %v2572, 1.442695
  %v2575 = vpow.pop %v2574
  %v2576 = vmul.f32 %v2573, 1.442695
  %v2577 = vpow.pop %v2576
  %v2578 = vadd.f32 %v2575, 1.0
  %v2579 = vadd.f32 %v2577, 1.0
  %v2580 = vrcp.pop %v2578
  %v2581 = vrcp.pop %v2579
  %v2582 = vsub.f32 0.0, %v2566
  %v2583 = vsub.f32 0.0, %v2567
  %v2584 = vmul.f32 %v2582, 1.442695
  %v2585 = vpow.pop %v2584
  %v2586 = vmul.f32 %v2583, 1.442695
  %v2587 = vpow.pop %v2586
  %v2588 = vadd.f32 %v2585, 1.0
  %v2589 = vadd.f32 %v2587, 1.0
  %v2590 = vrcp.pop %v2588
  %v2591 = vrcp.pop %v2589
  %v2592 = vtanh.pop %v2568
  %v2593 = vtanh.pop %v2569
  %v2594 = vsub.f32 0.0, %v2570
  %v2595 = vsub.f32 0.0, %v2571
  %v2596 = vmul.f32 %v2594, 1.442695
  %v2597 = vpow.pop %v2596
  %v2598 = vmul.f32 %v2595, 1.442695
  %v2599 = vpow.pop %v2598
  %v2600 = vadd.f32 %v2597, 1.0
  %v2601 = vadd.f32 %v2599, 1.0
  %v2602 = vrcp.pop %v2600
  %v2603 = vrcp.pop %v2601
  %v2604 = vmul.f32 %v2590, %v2225
  %v2605 = vmul.f32 %v2591, %v2226
  %v2606 = vmul.f32 %v2580, %v2592
  %v2607 = vmul.f32 %v2581, %v2593
  %v2608 = vadd.f32 %v2604, %v2606
  %v2609 = vadd.f32 %v2605, %v2607
  %v2610 = vtanh.pop %v2608
  %v2611 = vtanh.pop %v2609
  %v2612 = vmul.f32 %v2602, %v2610
  %v2613 = vmul.f32 %v2603, %v2611
  %2614 = vst [vmem:[#allocation3 + $0x30] sm:$0xff] %v2612
  %2615 = vst.msk [vmem:[#allocation3 + $0x38] sm:$0xff] %vm1091, %v2613
  %v2616 = vld [vmem:[#allocation2 + $0x100] sm:$0xff]
  %v2617 = vld [vmem:[#allocation2 + $0x108] sm:$0xff]
  %v2618 = vld [vmem:[#allocation2 + $0x110] sm:$0xff]
  %v2619 = vld [vmem:[#allocation2 + $0x118] sm:$0xff]
  %v2620 = vld [vmem:[#allocation2 + $0x120] sm:$0xff]
  %v2621 = vld [vmem:[#allocation2 + $0x128] sm:$0xff]
  %v2622 = vld [vmem:[#allocation2 + $0x130] sm:$0xff]
  %v2623 = vld [vmem:[#allocation2 + $0x138] sm:$0xff]
  %v2625 = vsel %vm1091, %v2613, 0
  %2627 = vmatpush.msra.mxu0 %v1059
  %2628 = vmatpush.msra.mxu0 %v1051
  %2629 = vmatpush.msra.mxu0 %v1043
  %2630 = vmatpush.msra.mxu0 %v1035
  %2631 = vmatpush.msra.mxu0 %v1027
  %2632 = vmatpush.msra.mxu0 %v1019
  %2633 = vmatpush.msra.mxu0 %v1011
  %2634 = vmatpush.msra.mxu0 %v1003
  %2635 = vmatpush.msra.mxu0 %v995
  %2636 = vmatpush.msra.mxu0 %v987
  %2637 = vmatpush.msra.mxu0 %v979
  %2638 = vmatpush.msra.mxu0 %v971
  %2639 = vmatpush.msra.mxu0 %v963
  %2640 = vmatpush.msra.mxu0 %v955
  %2641 = vmatpush.msra.mxu0 %v947
  %2642 = vmatpush.msra.mxu0 %v939
  %2643 = vmatmul.f32.gmra.mxu0 %v2612
  %v2644 = vpop.f32.mrf.mxu0
  %v2645 = vadd.f32 0.0, %v2644
  %2646 = vdwg.mxu0
  %2647 = vmatpush.msra.mxu0 0.0
  %2648 = vmatpush.msra.mxu0 0.0
  %2649 = vmatpush.msra.mxu0 0.0
  %2650 = vmatpush.msra.mxu0 0.0
  %2651 = vmatpush.msra.mxu0 0.0
  %2652 = vmatpush.msra.mxu0 0.0
  %2653 = vmatpush.msra.mxu0 0.0
  %2654 = vmatpush.msra.mxu0 0.0
  %2655 = vmatpush.msra.mxu0 0.0
  %2656 = vmatpush.msra.mxu0 0.0
  %2657 = vmatpush.msra.mxu0 0.0
  %2658 = vmatpush.msra.mxu0 0.0
  %2659 = vmatpush.msra.mxu0 0.0
  %2660 = vmatpush.msra.mxu0 0.0
  %2661 = vmatpush.msra.mxu0 %v1075
  %2662 = vmatpush.msra.mxu0 %v1067
  %2663 = vmatmul.f32.gmra.mxu0 %v2625
  %v2664 = vpop.f32.mrf.mxu0
  %v2665 = vadd.f32 %v2645, %v2664
  %2666 = vdwg.mxu0
  %2667 = vmatpush.msra.mxu0 %v1060
  %2668 = vmatpush.msra.mxu0 %v1052
  %2669 = vmatpush.msra.mxu0 %v1044
  %2670 = vmatpush.msra.mxu0 %v1036
  %2671 = vmatpush.msra.mxu0 %v1028
  %2672 = vmatpush.msra.mxu0 %v1020
  %2673 = vmatpush.msra.mxu0 %v1012
  %2674 = vmatpush.msra.mxu0 %v1004
  %2675 = vmatpush.msra.mxu0 %v996
  %2676 = vmatpush.msra.mxu0 %v988
  %2677 = vmatpush.msra.mxu0 %v980
  %2678 = vmatpush.msra.mxu0 %v972
  %2679 = vmatpush.msra.mxu0 %v964
  %2680 = vmatpush.msra.mxu0 %v956
  %2681 = vmatpush.msra.mxu0 %v948
  %2682 = vmatpush.msra.mxu0 %v940
  %2683 = vmatmul.f32.gmra.mxu0 %v2612
  %v2684 = vpop.f32.mrf.mxu0
  %v2685 = vadd.f32 0.0, %v2684
  %2686 = vdwg.mxu0
  %2687 = vmatpush.msra.mxu0 0.0
  %2688 = vmatpush.msra.mxu0 0.0
  %2689 = vmatpush.msra.mxu0 0.0
  %2690 = vmatpush.msra.mxu0 0.0
  %2691 = vmatpush.msra.mxu0 0.0
  %2692 = vmatpush.msra.mxu0 0.0
  %2693 = vmatpush.msra.mxu0 0.0
  %2694 = vmatpush.msra.mxu0 0.0
  %2695 = vmatpush.msra.mxu0 0.0
  %2696 = vmatpush.msra.mxu0 0.0
  %2697 = vmatpush.msra.mxu0 0.0
  %2698 = vmatpush.msra.mxu0 0.0
  %2699 = vmatpush.msra.mxu0 0.0
  %2700 = vmatpush.msra.mxu0 0.0
  %2701 = vmatpush.msra.mxu0 %v1076
  %2702 = vmatpush.msra.mxu0 %v1068
  %2703 = vmatmul.f32.gmra.mxu0 %v2625
  %v2704 = vpop.f32.mrf.mxu0
  %v2705 = vadd.f32 %v2685, %v2704
  %2706 = vdwg.mxu0
  %2707 = vmatpush.msra.mxu0 %v1061
  %2708 = vmatpush.msra.mxu0 %v1053
  %2709 = vmatpush.msra.mxu0 %v1045
  %2710 = vmatpush.msra.mxu0 %v1037
  %2711 = vmatpush.msra.mxu0 %v1029
  %2712 = vmatpush.msra.mxu0 %v1021
  %2713 = vmatpush.msra.mxu0 %v1013
  %2714 = vmatpush.msra.mxu0 %v1005
  %2715 = vmatpush.msra.mxu0 %v997
  %2716 = vmatpush.msra.mxu0 %v989
  %2717 = vmatpush.msra.mxu0 %v981
  %2718 = vmatpush.msra.mxu0 %v973
  %2719 = vmatpush.msra.mxu0 %v965
  %2720 = vmatpush.msra.mxu0 %v957
  %2721 = vmatpush.msra.mxu0 %v949
  %2722 = vmatpush.msra.mxu0 %v941
  %2723 = vmatmul.f32.gmra.mxu0 %v2612
  %v2724 = vpop.f32.mrf.mxu0
  %v2725 = vadd.f32 0.0, %v2724
  %2726 = vdwg.mxu0
  %2727 = vmatpush.msra.mxu0 0.0
  %2728 = vmatpush.msra.mxu0 0.0
  %2729 = vmatpush.msra.mxu0 0.0
  %2730 = vmatpush.msra.mxu0 0.0
  %2731 = vmatpush.msra.mxu0 0.0
  %2732 = vmatpush.msra.mxu0 0.0
  %2733 = vmatpush.msra.mxu0 0.0
  %2734 = vmatpush.msra.mxu0 0.0
  %2735 = vmatpush.msra.mxu0 0.0
  %2736 = vmatpush.msra.mxu0 0.0
  %2737 = vmatpush.msra.mxu0 0.0
  %2738 = vmatpush.msra.mxu0 0.0
  %2739 = vmatpush.msra.mxu0 0.0
  %2740 = vmatpush.msra.mxu0 0.0
  %2741 = vmatpush.msra.mxu0 %v1077
  %2742 = vmatpush.msra.mxu0 %v1069
  %2743 = vmatmul.f32.gmra.mxu0 %v2625
  %v2744 = vpop.f32.mrf.mxu0
  %v2745 = vadd.f32 %v2725, %v2744
  %2746 = vdwg.mxu0
  %2747 = vmatpush.msra.mxu0 %v1062
  %2748 = vmatpush.msra.mxu0 %v1054
  %2749 = vmatpush.msra.mxu0 %v1046
  %2750 = vmatpush.msra.mxu0 %v1038
  %2751 = vmatpush.msra.mxu0 %v1030
  %2752 = vmatpush.msra.mxu0 %v1022
  %2753 = vmatpush.msra.mxu0 %v1014
  %2754 = vmatpush.msra.mxu0 %v1006
  %2755 = vmatpush.msra.mxu0 %v998
  %2756 = vmatpush.msra.mxu0 %v990
  %2757 = vmatpush.msra.mxu0 %v982
  %2758 = vmatpush.msra.mxu0 %v974
  %2759 = vmatpush.msra.mxu0 %v966
  %2760 = vmatpush.msra.mxu0 %v958
  %2761 = vmatpush.msra.mxu0 %v950
  %2762 = vmatpush.msra.mxu0 %v942
  %2763 = vmatmul.f32.gmra.mxu0 %v2612
  %v2764 = vpop.f32.mrf.mxu0
  %v2765 = vadd.f32 0.0, %v2764
  %2766 = vdwg.mxu0
  %2767 = vmatpush.msra.mxu0 0.0
  %2768 = vmatpush.msra.mxu0 0.0
  %2769 = vmatpush.msra.mxu0 0.0
  %2770 = vmatpush.msra.mxu0 0.0
  %2771 = vmatpush.msra.mxu0 0.0
  %2772 = vmatpush.msra.mxu0 0.0
  %2773 = vmatpush.msra.mxu0 0.0
  %2774 = vmatpush.msra.mxu0 0.0
  %2775 = vmatpush.msra.mxu0 0.0
  %2776 = vmatpush.msra.mxu0 0.0
  %2777 = vmatpush.msra.mxu0 0.0
  %2778 = vmatpush.msra.mxu0 0.0
  %2779 = vmatpush.msra.mxu0 0.0
  %2780 = vmatpush.msra.mxu0 0.0
  %2781 = vmatpush.msra.mxu0 %v1078
  %2782 = vmatpush.msra.mxu0 %v1070
  %2783 = vmatmul.f32.gmra.mxu0 %v2625
  %v2784 = vpop.f32.mrf.mxu0
  %v2785 = vadd.f32 %v2765, %v2784
  %2786 = vdwg.mxu0
  %2787 = vmatpush.msra.mxu0 %v1063
  %2788 = vmatpush.msra.mxu0 %v1055
  %2789 = vmatpush.msra.mxu0 %v1047
  %2790 = vmatpush.msra.mxu0 %v1039
  %2791 = vmatpush.msra.mxu0 %v1031
  %2792 = vmatpush.msra.mxu0 %v1023
  %2793 = vmatpush.msra.mxu0 %v1015
  %2794 = vmatpush.msra.mxu0 %v1007
  %2795 = vmatpush.msra.mxu0 %v999
  %2796 = vmatpush.msra.mxu0 %v991
  %2797 = vmatpush.msra.mxu0 %v983
  %2798 = vmatpush.msra.mxu0 %v975
  %2799 = vmatpush.msra.mxu0 %v967
  %2800 = vmatpush.msra.mxu0 %v959
  %2801 = vmatpush.msra.mxu0 %v951
  %2802 = vmatpush.msra.mxu0 %v943
  %2803 = vmatmul.f32.gmra.mxu0 %v2612
  %v2804 = vpop.f32.mrf.mxu0
  %v2805 = vadd.f32 0.0, %v2804
  %2806 = vdwg.mxu0
  %2807 = vmatpush.msra.mxu0 0.0
  %2808 = vmatpush.msra.mxu0 0.0
  %2809 = vmatpush.msra.mxu0 0.0
  %2810 = vmatpush.msra.mxu0 0.0
  %2811 = vmatpush.msra.mxu0 0.0
  %2812 = vmatpush.msra.mxu0 0.0
  %2813 = vmatpush.msra.mxu0 0.0
  %2814 = vmatpush.msra.mxu0 0.0
  %2815 = vmatpush.msra.mxu0 0.0
  %2816 = vmatpush.msra.mxu0 0.0
  %2817 = vmatpush.msra.mxu0 0.0
  %2818 = vmatpush.msra.mxu0 0.0
  %2819 = vmatpush.msra.mxu0 0.0
  %2820 = vmatpush.msra.mxu0 0.0
  %2821 = vmatpush.msra.mxu0 %v1079
  %2822 = vmatpush.msra.mxu0 %v1071
  %2823 = vmatmul.f32.gmra.mxu0 %v2625
  %v2824 = vpop.f32.mrf.mxu0
  %v2825 = vadd.f32 %v2805, %v2824
  %2826 = vdwg.mxu0
  %2827 = vmatpush.msra.mxu0 %v1064
  %2828 = vmatpush.msra.mxu0 %v1056
  %2829 = vmatpush.msra.mxu0 %v1048
  %2830 = vmatpush.msra.mxu0 %v1040
  %2831 = vmatpush.msra.mxu0 %v1032
  %2832 = vmatpush.msra.mxu0 %v1024
  %2833 = vmatpush.msra.mxu0 %v1016
  %2834 = vmatpush.msra.mxu0 %v1008
  %2835 = vmatpush.msra.mxu0 %v1000
  %2836 = vmatpush.msra.mxu0 %v992
  %2837 = vmatpush.msra.mxu0 %v984
  %2838 = vmatpush.msra.mxu0 %v976
  %2839 = vmatpush.msra.mxu0 %v968
  %2840 = vmatpush.msra.mxu0 %v960
  %2841 = vmatpush.msra.mxu0 %v952
  %2842 = vmatpush.msra.mxu0 %v944
  %2843 = vmatmul.f32.gmra.mxu0 %v2612
  %v2844 = vpop.f32.mrf.mxu0
  %v2845 = vadd.f32 0.0, %v2844
  %2846 = vdwg.mxu0
  %2847 = vmatpush.msra.mxu0 0.0
  %2848 = vmatpush.msra.mxu0 0.0
  %2849 = vmatpush.msra.mxu0 0.0
  %2850 = vmatpush.msra.mxu0 0.0
  %2851 = vmatpush.msra.mxu0 0.0
  %2852 = vmatpush.msra.mxu0 0.0
  %2853 = vmatpush.msra.mxu0 0.0
  %2854 = vmatpush.msra.mxu0 0.0
  %2855 = vmatpush.msra.mxu0 0.0
  %2856 = vmatpush.msra.mxu0 0.0
  %2857 = vmatpush.msra.mxu0 0.0
  %2858 = vmatpush.msra.mxu0 0.0
  %2859 = vmatpush.msra.mxu0 0.0
  %2860 = vmatpush.msra.mxu0 0.0
  %2861 = vmatpush.msra.mxu0 %v1080
  %2862 = vmatpush.msra.mxu0 %v1072
  %2863 = vmatmul.f32.gmra.mxu0 %v2625
  %v2864 = vpop.f32.mrf.mxu0
  %v2865 = vadd.f32 %v2845, %v2864
  %2866 = vdwg.mxu0
  %2867 = vmatpush.msra.mxu0 %v1065
  %2868 = vmatpush.msra.mxu0 %v1057
  %2869 = vmatpush.msra.mxu0 %v1049
  %2870 = vmatpush.msra.mxu0 %v1041
  %2871 = vmatpush.msra.mxu0 %v1033
  %2872 = vmatpush.msra.mxu0 %v1025
  %2873 = vmatpush.msra.mxu0 %v1017
  %2874 = vmatpush.msra.mxu0 %v1009
  %2875 = vmatpush.msra.mxu0 %v1001
  %2876 = vmatpush.msra.mxu0 %v993
  %2877 = vmatpush.msra.mxu0 %v985
  %2878 = vmatpush.msra.mxu0 %v977
  %2879 = vmatpush.msra.mxu0 %v969
  %2880 = vmatpush.msra.mxu0 %v961
  %2881 = vmatpush.msra.mxu0 %v953
  %2882 = vmatpush.msra.mxu0 %v945
  %2883 = vmatmul.f32.gmra.mxu0 %v2612
  %v2884 = vpop.f32.mrf.mxu0
  %v2885 = vadd.f32 0.0, %v2884
  %2886 = vdwg.mxu0
  %2887 = vmatpush.msra.mxu0 0.0
  %2888 = vmatpush.msra.mxu0 0.0
  %2889 = vmatpush.msra.mxu0 0.0
  %2890 = vmatpush.msra.mxu0 0.0
  %2891 = vmatpush.msra.mxu0 0.0
  %2892 = vmatpush.msra.mxu0 0.0
  %2893 = vmatpush.msra.mxu0 0.0
  %2894 = vmatpush.msra.mxu0 0.0
  %2895 = vmatpush.msra.mxu0 0.0
  %2896 = vmatpush.msra.mxu0 0.0
  %2897 = vmatpush.msra.mxu0 0.0
  %2898 = vmatpush.msra.mxu0 0.0
  %2899 = vmatpush.msra.mxu0 0.0
  %2900 = vmatpush.msra.mxu0 0.0
  %2901 = vmatpush.msra.mxu0 %v1081
  %2902 = vmatpush.msra.mxu0 %v1073
  %2903 = vmatmul.f32.gmra.mxu0 %v2625
  %v2904 = vpop.f32.mrf.mxu0
  %v2905 = vadd.f32 %v2885, %v2904
  %2906 = vdwg.mxu0
  %2907 = vmatpush.msra.mxu0 %v1066
  %2908 = vmatpush.msra.mxu0 %v1058
  %2909 = vmatpush.msra.mxu0 %v1050
  %2910 = vmatpush.msra.mxu0 %v1042
  %2911 = vmatpush.msra.mxu0 %v1034
  %2912 = vmatpush.msra.mxu0 %v1026
  %2913 = vmatpush.msra.mxu0 %v1018
  %2914 = vmatpush.msra.mxu0 %v1010
  %2915 = vmatpush.msra.mxu0 %v1002
  %2916 = vmatpush.msra.mxu0 %v994
  %2917 = vmatpush.msra.mxu0 %v986
  %2918 = vmatpush.msra.mxu0 %v978
  %2919 = vmatpush.msra.mxu0 %v970
  %2920 = vmatpush.msra.mxu0 %v962
  %2921 = vmatpush.msra.mxu0 %v954
  %2922 = vmatpush.msra.mxu0 %v946
  %2923 = vmatmul.f32.gmra.mxu0 %v2612
  %v2924 = vpop.f32.mrf.mxu0
  %v2925 = vadd.f32 0.0, %v2924
  %2926 = vdwg.mxu0
  %2927 = vmatpush.msra.mxu0 0.0
  %2928 = vmatpush.msra.mxu0 0.0
  %2929 = vmatpush.msra.mxu0 0.0
  %2930 = vmatpush.msra.mxu0 0.0
  %2931 = vmatpush.msra.mxu0 0.0
  %2932 = vmatpush.msra.mxu0 0.0
  %2933 = vmatpush.msra.mxu0 0.0
  %2934 = vmatpush.msra.mxu0 0.0
  %2935 = vmatpush.msra.mxu0 0.0
  %2936 = vmatpush.msra.mxu0 0.0
  %2937 = vmatpush.msra.mxu0 0.0
  %2938 = vmatpush.msra.mxu0 0.0
  %2939 = vmatpush.msra.mxu0 0.0
  %2940 = vmatpush.msra.mxu0 0.0
  %2941 = vmatpush.msra.mxu0 %v1082
  %2942 = vmatpush.msra.mxu0 %v1074
  %2943 = vmatmul.f32.gmra.mxu0 %v2625
  %v2944 = vpop.f32.mrf.mxu0
  %v2945 = vadd.f32 %v2925, %v2944
  %2946 = vdwg.mxu0
  %v2947 = vadd.f32 %v2616, %v2665
  %v2948 = vadd.f32 %v2617, %v2705
  %v2949 = vadd.f32 %v2618, %v2745
  %v2950 = vadd.f32 %v2619, %v2785
  %v2951 = vadd.f32 %v2620, %v2825
  %v2952 = vadd.f32 %v2621, %v2865
  %v2953 = vadd.f32 %v2622, %v2905
  %v2954 = vadd.f32 %v2623, %v2945
  %v2955 = vsub.f32 0.0, %v2947
  %v2956 = vsub.f32 0.0, %v2948
  %v2957 = vmul.f32 %v2955, 1.442695
  %v2958 = vpow.pop %v2957
  %v2959 = vmul.f32 %v2956, 1.442695
  %v2960 = vpow.pop %v2959
  %v2961 = vadd.f32 %v2958, 1.0
  %v2962 = vadd.f32 %v2960, 1.0
  %v2963 = vrcp.pop %v2961
  %v2964 = vrcp.pop %v2962
  %v2965 = vsub.f32 0.0, %v2949
  %v2966 = vsub.f32 0.0, %v2950
  %v2967 = vmul.f32 %v2965, 1.442695
  %v2968 = vpow.pop %v2967
  %v2969 = vmul.f32 %v2966, 1.442695
  %v2970 = vpow.pop %v2969
  %v2971 = vadd.f32 %v2968, 1.0
  %v2972 = vadd.f32 %v2970, 1.0
  %v2973 = vrcp.pop %v2971
  %v2974 = vrcp.pop %v2972
  %v2975 = vtanh.pop %v2951
  %v2976 = vtanh.pop %v2952
  %v2977 = vsub.f32 0.0, %v2953
  %v2978 = vsub.f32 0.0, %v2954
  %v2979 = vmul.f32 %v2977, 1.442695
  %v2980 = vpow.pop %v2979
  %v2981 = vmul.f32 %v2978, 1.442695
  %v2982 = vpow.pop %v2981
  %v2983 = vadd.f32 %v2980, 1.0
  %v2984 = vadd.f32 %v2982, 1.0
  %v2985 = vrcp.pop %v2983
  %v2986 = vrcp.pop %v2984
  %v2987 = vmul.f32 %v2973, %v2608
  %v2988 = vmul.f32 %v2974, %v2609
  %v2989 = vmul.f32 %v2963, %v2975
  %v2990 = vmul.f32 %v2964, %v2976
  %v2991 = vadd.f32 %v2987, %v2989
  %v2992 = vadd.f32 %v2988, %v2990
  %v2993 = vtanh.pop %v2991
  %v2994 = vtanh.pop %v2992
  %v2995 = vmul.f32 %v2985, %v2993
  %v2996 = vmul.f32 %v2986, %v2994
  %2997 = vst [vmem:[#allocation3 + $0x40] sm:$0xff] %v2995
  %2998 = vst.msk [vmem:[#allocation3 + $0x48] sm:$0xff] %vm1091, %v2996
  %v2999 = vld [vmem:[#allocation2 + $0x140] sm:$0xff]
  %v3000 = vld [vmem:[#allocation2 + $0x148] sm:$0xff]
  %v3001 = vld [vmem:[#allocation2 + $0x150] sm:$0xff]
  %v3002 = vld [vmem:[#allocation2 + $0x158] sm:$0xff]
  %v3003 = vld [vmem:[#allocation2 + $0x160] sm:$0xff]
  %v3004 = vld [vmem:[#allocation2 + $0x168] sm:$0xff]
  %v3005 = vld [vmem:[#allocation2 + $0x170] sm:$0xff]
  %v3006 = vld [vmem:[#allocation2 + $0x178] sm:$0xff]
  %v3008 = vsel %vm1091, %v2996, 0
  %3010 = vmatpush.msra.mxu0 %v1059
  %3011 = vmatpush.msra.mxu0 %v1051
  %3012 = vmatpush.msra.mxu0 %v1043
  %3013 = vmatpush.msra.mxu0 %v1035
  %3014 = vmatpush.msra.mxu0 %v1027
  %3015 = vmatpush.msra.mxu0 %v1019
  %3016 = vmatpush.msra.mxu0 %v1011
  %3017 = vmatpush.msra.mxu0 %v1003
  %3018 = vmatpush.msra.mxu0 %v995
  %3019 = vmatpush.msra.mxu0 %v987
  %3020 = vmatpush.msra.mxu0 %v979
  %3021 = vmatpush.msra.mxu0 %v971
  %3022 = vmatpush.msra.mxu0 %v963
  %3023 = vmatpush.msra.mxu0 %v955
  %3024 = vmatpush.msra.mxu0 %v947
  %3025 = vmatpush.msra.mxu0 %v939
  %3026 = vmatmul.f32.gmra.mxu0 %v2995
  %v3027 = vpop.f32.mrf.mxu0
  %v3028 = vadd.f32 0.0, %v3027
  %3029 = vdwg.mxu0
  %3030 = vmatpush.msra.mxu0 0.0
  %3031 = vmatpush.msra.mxu0 0.0
  %3032 = vmatpush.msra.mxu0 0.0
  %3033 = vmatpush.msra.mxu0 0.0
  %3034 = vmatpush.msra.mxu0 0.0
  %3035 = vmatpush.msra.mxu0 0.0
  %3036 = vmatpush.msra.mxu0 0.0
  %3037 = vmatpush.msra.mxu0 0.0
  %3038 = vmatpush.msra.mxu0 0.0
  %3039 = vmatpush.msra.mxu0 0.0
  %3040 = vmatpush.msra.mxu0 0.0
  %3041 = vmatpush.msra.mxu0 0.0
  %3042 = vmatpush.msra.mxu0 0.0
  %3043 = vmatpush.msra.mxu0 0.0
  %3044 = vmatpush.msra.mxu0 %v1075
  %3045 = vmatpush.msra.mxu0 %v1067
  %3046 = vmatmul.f32.gmra.mxu0 %v3008
  %v3047 = vpop.f32.mrf.mxu0
  %v3048 = vadd.f32 %v3028, %v3047
  %3049 = vdwg.mxu0
  %3050 = vmatpush.msra.mxu0 %v1060
  %3051 = vmatpush.msra.mxu0 %v1052
  %3052 = vmatpush.msra.mxu0 %v1044
  %3053 = vmatpush.msra.mxu0 %v1036
  %3054 = vmatpush.msra.mxu0 %v1028
  %3055 = vmatpush.msra.mxu0 %v1020
  %3056 = vmatpush.msra.mxu0 %v1012
  %3057 = vmatpush.msra.mxu0 %v1004
  %3058 = vmatpush.msra.mxu0 %v996
  %3059 = vmatpush.msra.mxu0 %v988
  %3060 = vmatpush.msra.mxu0 %v980
  %3061 = vmatpush.msra.mxu0 %v972
  %3062 = vmatpush.msra.mxu0 %v964
  %3063 = vmatpush.msra.mxu0 %v956
  %3064 = vmatpush.msra.mxu0 %v948
  %3065 = vmatpush.msra.mxu0 %v940
  %3066 = vmatmul.f32.gmra.mxu0 %v2995
  %v3067 = vpop.f32.mrf.mxu0
  %v3068 = vadd.f32 0.0, %v3067
  %3069 = vdwg.mxu0
  %3070 = vmatpush.msra.mxu0 0.0
  %3071 = vmatpush.msra.mxu0 0.0
  %3072 = vmatpush.msra.mxu0 0.0
  %3073 = vmatpush.msra.mxu0 0.0
  %3074 = vmatpush.msra.mxu0 0.0
  %3075 = vmatpush.msra.mxu0 0.0
  %3076 = vmatpush.msra.mxu0 0.0
  %3077 = vmatpush.msra.mxu0 0.0
  %3078 = vmatpush.msra.mxu0 0.0
  %3079 = vmatpush.msra.mxu0 0.0
  %3080 = vmatpush.msra.mxu0 0.0
  %3081 = vmatpush.msra.mxu0 0.0
  %3082 = vmatpush.msra.mxu0 0.0
  %3083 = vmatpush.msra.mxu0 0.0
  %3084 = vmatpush.msra.mxu0 %v1076
  %3085 = vmatpush.msra.mxu0 %v1068
  %3086 = vmatmul.f32.gmra.mxu0 %v3008
  %v3087 = vpop.f32.mrf.mxu0
  %v3088 = vadd.f32 %v3068, %v3087
  %3089 = vdwg.mxu0
  %3090 = vmatpush.msra.mxu0 %v1061
  %3091 = vmatpush.msra.mxu0 %v1053
  %3092 = vmatpush.msra.mxu0 %v1045
  %3093 = vmatpush.msra.mxu0 %v1037
  %3094 = vmatpush.msra.mxu0 %v1029
  %3095 = vmatpush.msra.mxu0 %v1021
  %3096 = vmatpush.msra.mxu0 %v1013
  %3097 = vmatpush.msra.mxu0 %v1005
  %3098 = vmatpush.msra.mxu0 %v997
  %3099 = vmatpush.msra.mxu0 %v989
  %3100 = vmatpush.msra.mxu0 %v981
  %3101 = vmatpush.msra.mxu0 %v973
  %3102 = vmatpush.msra.mxu0 %v965
  %3103 = vmatpush.msra.mxu0 %v957
  %3104 = vmatpush.msra.mxu0 %v949
  %3105 = vmatpush.msra.mxu0 %v941
  %3106 = vmatmul.f32.gmra.mxu0 %v2995
  %v3107 = vpop.f32.mrf.mxu0
  %v3108 = vadd.f32 0.0, %v3107
  %3109 = vdwg.mxu0
  %3110 = vmatpush.msra.mxu0 0.0
  %3111 = vmatpush.msra.mxu0 0.0
  %3112 = vmatpush.msra.mxu0 0.0
  %3113 = vmatpush.msra.mxu0 0.0
  %3114 = vmatpush.msra.mxu0 0.0
  %3115 = vmatpush.msra.mxu0 0.0
  %3116 = vmatpush.msra.mxu0 0.0
  %3117 = vmatpush.msra.mxu0 0.0
  %3118 = vmatpush.msra.mxu0 0.0
  %3119 = vmatpush.msra.mxu0 0.0
  %3120 = vmatpush.msra.mxu0 0.0
  %3121 = vmatpush.msra.mxu0 0.0
  %3122 = vmatpush.msra.mxu0 0.0
  %3123 = vmatpush.msra.mxu0 0.0
  %3124 = vmatpush.msra.mxu0 %v1077
  %3125 = vmatpush.msra.mxu0 %v1069
  %3126 = vmatmul.f32.gmra.mxu0 %v3008
  %v3127 = vpop.f32.mrf.mxu0
  %v3128 = vadd.f32 %v3108, %v3127
  %3129 = vdwg.mxu0
  %3130 = vmatpush.msra.mxu0 %v1062
  %3131 = vmatpush.msra.mxu0 %v1054
  %3132 = vmatpush.msra.mxu0 %v1046
  %3133 = vmatpush.msra.mxu0 %v1038
  %3134 = vmatpush.msra.mxu0 %v1030
  %3135 = vmatpush.msra.mxu0 %v1022
  %3136 = vmatpush.msra.mxu0 %v1014
  %3137 = vmatpush.msra.mxu0 %v1006
  %3138 = vmatpush.msra.mxu0 %v998
  %3139 = vmatpush.msra.mxu0 %v990
  %3140 = vmatpush.msra.mxu0 %v982
  %3141 = vmatpush.msra.mxu0 %v974
  %3142 = vmatpush.msra.mxu0 %v966
  %3143 = vmatpush.msra.mxu0 %v958
  %3144 = vmatpush.msra.mxu0 %v950
  %3145 = vmatpush.msra.mxu0 %v942
  %3146 = vmatmul.f32.gmra.mxu0 %v2995
  %v3147 = vpop.f32.mrf.mxu0
  %v3148 = vadd.f32 0.0, %v3147
  %3149 = vdwg.mxu0
  %3150 = vmatpush.msra.mxu0 0.0
  %3151 = vmatpush.msra.mxu0 0.0
  %3152 = vmatpush.msra.mxu0 0.0
  %3153 = vmatpush.msra.mxu0 0.0
  %3154 = vmatpush.msra.mxu0 0.0
  %3155 = vmatpush.msra.mxu0 0.0
  %3156 = vmatpush.msra.mxu0 0.0
  %3157 = vmatpush.msra.mxu0 0.0
  %3158 = vmatpush.msra.mxu0 0.0
  %3159 = vmatpush.msra.mxu0 0.0
  %3160 = vmatpush.msra.mxu0 0.0
  %3161 = vmatpush.msra.mxu0 0.0
  %3162 = vmatpush.msra.mxu0 0.0
  %3163 = vmatpush.msra.mxu0 0.0
  %3164 = vmatpush.msra.mxu0 %v1078
  %3165 = vmatpush.msra.mxu0 %v1070
  %3166 = vmatmul.f32.gmra.mxu0 %v3008
  %v3167 = vpop.f32.mrf.mxu0
  %v3168 = vadd.f32 %v3148, %v3167
  %3169 = vdwg.mxu0
  %3170 = vmatpush.msra.mxu0 %v1063
  %3171 = vmatpush.msra.mxu0 %v1055
  %3172 = vmatpush.msra.mxu0 %v1047
  %3173 = vmatpush.msra.mxu0 %v1039
  %3174 = vmatpush.msra.mxu0 %v1031
  %3175 = vmatpush.msra.mxu0 %v1023
  %3176 = vmatpush.msra.mxu0 %v1015
  %3177 = vmatpush.msra.mxu0 %v1007
  %3178 = vmatpush.msra.mxu0 %v999
  %3179 = vmatpush.msra.mxu0 %v991
  %3180 = vmatpush.msra.mxu0 %v983
  %3181 = vmatpush.msra.mxu0 %v975
  %3182 = vmatpush.msra.mxu0 %v967
  %3183 = vmatpush.msra.mxu0 %v959
  %3184 = vmatpush.msra.mxu0 %v951
  %3185 = vmatpush.msra.mxu0 %v943
  %3186 = vmatmul.f32.gmra.mxu0 %v2995
  %v3187 = vpop.f32.mrf.mxu0
  %v3188 = vadd.f32 0.0, %v3187
  %3189 = vdwg.mxu0
  %3190 = vmatpush.msra.mxu0 0.0
  %3191 = vmatpush.msra.mxu0 0.0
  %3192 = vmatpush.msra.mxu0 0.0
  %3193 = vmatpush.msra.mxu0 0.0
  %3194 = vmatpush.msra.mxu0 0.0
  %3195 = vmatpush.msra.mxu0 0.0
  %3196 = vmatpush.msra.mxu0 0.0
  %3197 = vmatpush.msra.mxu0 0.0
  %3198 = vmatpush.msra.mxu0 0.0
  %3199 = vmatpush.msra.mxu0 0.0
  %3200 = vmatpush.msra.mxu0 0.0
  %3201 = vmatpush.msra.mxu0 0.0
  %3202 = vmatpush.msra.mxu0 0.0
  %3203 = vmatpush.msra.mxu0 0.0
  %3204 = vmatpush.msra.mxu0 %v1079
  %3205 = vmatpush.msra.mxu0 %v1071
  %3206 = vmatmul.f32.gmra.mxu0 %v3008
  %v3207 = vpop.f32.mrf.mxu0
  %v3208 = vadd.f32 %v3188, %v3207
  %3209 = vdwg.mxu0
  %3210 = vmatpush.msra.mxu0 %v1064
  %3211 = vmatpush.msra.mxu0 %v1056
  %3212 = vmatpush.msra.mxu0 %v1048
  %3213 = vmatpush.msra.mxu0 %v1040
  %3214 = vmatpush.msra.mxu0 %v1032
  %3215 = vmatpush.msra.mxu0 %v1024
  %3216 = vmatpush.msra.mxu0 %v1016
  %3217 = vmatpush.msra.mxu0 %v1008
  %3218 = vmatpush.msra.mxu0 %v1000
  %3219 = vmatpush.msra.mxu0 %v992
  %3220 = vmatpush.msra.mxu0 %v984
  %3221 = vmatpush.msra.mxu0 %v976
  %3222 = vmatpush.msra.mxu0 %v968
  %3223 = vmatpush.msra.mxu0 %v960
  %3224 = vmatpush.msra.mxu0 %v952
  %3225 = vmatpush.msra.mxu0 %v944
  %3226 = vmatmul.f32.gmra.mxu0 %v2995
  %v3227 = vpop.f32.mrf.mxu0
  %v3228 = vadd.f32 0.0, %v3227
  %3229 = vdwg.mxu0
  %3230 = vmatpush.msra.mxu0 0.0
  %3231 = vmatpush.msra.mxu0 0.0
  %3232 = vmatpush.msra.mxu0 0.0
  %3233 = vmatpush.msra.mxu0 0.0
  %3234 = vmatpush.msra.mxu0 0.0
  %3235 = vmatpush.msra.mxu0 0.0
  %3236 = vmatpush.msra.mxu0 0.0
  %3237 = vmatpush.msra.mxu0 0.0
  %3238 = vmatpush.msra.mxu0 0.0
  %3239 = vmatpush.msra.mxu0 0.0
  %3240 = vmatpush.msra.mxu0 0.0
  %3241 = vmatpush.msra.mxu0 0.0
  %3242 = vmatpush.msra.mxu0 0.0
  %3243 = vmatpush.msra.mxu0 0.0
  %3244 = vmatpush.msra.mxu0 %v1080
  %3245 = vmatpush.msra.mxu0 %v1072
  %3246 = vmatmul.f32.gmra.mxu0 %v3008
  %v3247 = vpop.f32.mrf.mxu0
  %v3248 = vadd.f32 %v3228, %v3247
  %3249 = vdwg.mxu0
  %3250 = vmatpush.msra.mxu0 %v1065
  %3251 = vmatpush.msra.mxu0 %v1057
  %3252 = vmatpush.msra.mxu0 %v1049
  %3253 = vmatpush.msra.mxu0 %v1041
  %3254 = vmatpush.msra.mxu0 %v1033
  %3255 = vmatpush.msra.mxu0 %v1025
  %3256 = vmatpush.msra.mxu0 %v1017
  %3257 = vmatpush.msra.mxu0 %v1009
  %3258 = vmatpush.msra.mxu0 %v1001
  %3259 = vmatpush.msra.mxu0 %v993
  %3260 = vmatpush.msra.mxu0 %v985
  %3261 = vmatpush.msra.mxu0 %v977
  %3262 = vmatpush.msra.mxu0 %v969
  %3263 = vmatpush.msra.mxu0 %v961
  %3264 = vmatpush.msra.mxu0 %v953
  %3265 = vmatpush.msra.mxu0 %v945
  %3266 = vmatmul.f32.gmra.mxu0 %v2995
  %v3267 = vpop.f32.mrf.mxu0
  %v3268 = vadd.f32 0.0, %v3267
  %3269 = vdwg.mxu0
  %3270 = vmatpush.msra.mxu0 0.0
  %3271 = vmatpush.msra.mxu0 0.0
  %3272 = vmatpush.msra.mxu0 0.0
  %3273 = vmatpush.msra.mxu0 0.0
  %3274 = vmatpush.msra.mxu0 0.0
  %3275 = vmatpush.msra.mxu0 0.0
  %3276 = vmatpush.msra.mxu0 0.0
  %3277 = vmatpush.msra.mxu0 0.0
  %3278 = vmatpush.msra.mxu0 0.0
  %3279 = vmatpush.msra.mxu0 0.0
  %3280 = vmatpush.msra.mxu0 0.0
  %3281 = vmatpush.msra.mxu0 0.0
  %3282 = vmatpush.msra.mxu0 0.0
  %3283 = vmatpush.msra.mxu0 0.0
  %3284 = vmatpush.msra.mxu0 %v1081
  %3285 = vmatpush.msra.mxu0 %v1073
  %3286 = vmatmul.f32.gmra.mxu0 %v3008
  %v3287 = vpop.f32.mrf.mxu0
  %v3288 = vadd.f32 %v3268, %v3287
  %3289 = vdwg.mxu0
  %3290 = vmatpush.msra.mxu0 %v1066
  %3291 = vmatpush.msra.mxu0 %v1058
  %3292 = vmatpush.msra.mxu0 %v1050
  %3293 = vmatpush.msra.mxu0 %v1042
  %3294 = vmatpush.msra.mxu0 %v1034
  %3295 = vmatpush.msra.mxu0 %v1026
  %3296 = vmatpush.msra.mxu0 %v1018
  %3297 = vmatpush.msra.mxu0 %v1010
  %3298 = vmatpush.msra.mxu0 %v1002
  %3299 = vmatpush.msra.mxu0 %v994
  %3300 = vmatpush.msra.mxu0 %v986
  %3301 = vmatpush.msra.mxu0 %v978
  %3302 = vmatpush.msra.mxu0 %v970
  %3303 = vmatpush.msra.mxu0 %v962
  %3304 = vmatpush.msra.mxu0 %v954
  %3305 = vmatpush.msra.mxu0 %v946
  %3306 = vmatmul.f32.gmra.mxu0 %v2995
  %v3307 = vpop.f32.mrf.mxu0
  %v3308 = vadd.f32 0.0, %v3307
  %3309 = vdwg.mxu0
  %3310 = vmatpush.msra.mxu0 0.0
  %3311 = vmatpush.msra.mxu0 0.0
  %3312 = vmatpush.msra.mxu0 0.0
  %3313 = vmatpush.msra.mxu0 0.0
  %3314 = vmatpush.msra.mxu0 0.0
  %3315 = vmatpush.msra.mxu0 0.0
  %3316 = vmatpush.msra.mxu0 0.0
  %3317 = vmatpush.msra.mxu0 0.0
  %3318 = vmatpush.msra.mxu0 0.0
  %3319 = vmatpush.msra.mxu0 0.0
  %3320 = vmatpush.msra.mxu0 0.0
  %3321 = vmatpush.msra.mxu0 0.0
  %3322 = vmatpush.msra.mxu0 0.0
  %3323 = vmatpush.msra.mxu0 0.0
  %3324 = vmatpush.msra.mxu0 %v1082
  %3325 = vmatpush.msra.mxu0 %v1074
  %3326 = vmatmul.f32.gmra.mxu0 %v3008
  %v3327 = vpop.f32.mrf.mxu0
  %v3328 = vadd.f32 %v3308, %v3327
  %3329 = vdwg.mxu0
  %v3330 = vadd.f32 %v2999, %v3048
  %v3331 = vadd.f32 %v3000, %v3088
  %v3332 = vadd.f32 %v3001, %v3128
  %v3333 = vadd.f32 %v3002, %v3168
  %v3334 = vadd.f32 %v3003, %v3208
  %v3335 = vadd.f32 %v3004, %v3248
  %v3336 = vadd.f32 %v3005, %v3288
  %v3337 = vadd.f32 %v3006, %v3328
  %v3338 = vsub.f32 0.0, %v3330
  %v3339 = vsub.f32 0.0, %v3331
  %v3340 = vmul.f32 %v3338, 1.442695
  %v3341 = vpow.pop %v3340
  %v3342 = vmul.f32 %v3339, 1.442695
  %v3343 = vpow.pop %v3342
  %v3344 = vadd.f32 %v3341, 1.0
  %v3345 = vadd.f32 %v3343, 1.0
  %v3346 = vrcp.pop %v3344
  %v3347 = vrcp.pop %v3345
  %v3348 = vsub.f32 0.0, %v3332
  %v3349 = vsub.f32 0.0, %v3333
  %v3350 = vmul.f32 %v3348, 1.442695
  %v3351 = vpow.pop %v3350
  %v3352 = vmul.f32 %v3349, 1.442695
  %v3353 = vpow.pop %v3352
  %v3354 = vadd.f32 %v3351, 1.0
  %v3355 = vadd.f32 %v3353, 1.0
  %v3356 = vrcp.pop %v3354
  %v3357 = vrcp.pop %v3355
  %v3358 = vtanh.pop %v3334
  %v3359 = vtanh.pop %v3335
  %v3360 = vsub.f32 0.0, %v3336
  %v3361 = vsub.f32 0.0, %v3337
  %v3362 = vmul.f32 %v3360, 1.442695
  %v3363 = vpow.pop %v3362
  %v3364 = vmul.f32 %v3361, 1.442695
  %v3365 = vpow.pop %v3364
  %v3366 = vadd.f32 %v3363, 1.0
  %v3367 = vadd.f32 %v3365, 1.0
  %v3368 = vrcp.pop %v3366
  %v3369 = vrcp.pop %v3367
  %v3370 = vmul.f32 %v3356, %v2991
  %v3371 = vmul.f32 %v3357, %v2992
  %v3372 = vmul.f32 %v3346, %v3358
  %v3373 = vmul.f32 %v3347, %v3359
  %v3374 = vadd.f32 %v3370, %v3372
  %v3375 = vadd.f32 %v3371, %v3373
  %v3376 = vtanh.pop %v3374
  %v3377 = vtanh.pop %v3375
  %v3378 = vmul.f32 %v3368, %v3376
  %v3379 = vmul.f32 %v3369, %v3377
  %3380 = vst [vmem:[#allocation3 + $0x50] sm:$0xff] %v3378
  %3381 = vst.msk [vmem:[#allocation3 + $0x58] sm:$0xff] %vm1091, %v3379
  %v3382 = vld [vmem:[#allocation2 + $0x180] sm:$0xff]
  %v3383 = vld [vmem:[#allocation2 + $0x188] sm:$0xff]
  %v3384 = vld [vmem:[#allocation2 + $0x190] sm:$0xff]
  %v3385 = vld [vmem:[#allocation2 + $0x198] sm:$0xff]
  %v3386 = vld [vmem:[#allocation2 + $0x1a0] sm:$0xff]
  %v3387 = vld [vmem:[#allocation2 + $0x1a8] sm:$0xff]
  %v3388 = vld [vmem:[#allocation2 + $0x1b0] sm:$0xff]
  %v3389 = vld [vmem:[#allocation2 + $0x1b8] sm:$0xff]
  %v3391 = vsel %vm1091, %v3379, 0
  %3393 = vmatpush.msra.mxu0 %v1059
  %3394 = vmatpush.msra.mxu0 %v1051
  %3395 = vmatpush.msra.mxu0 %v1043
  %3396 = vmatpush.msra.mxu0 %v1035
  %3397 = vmatpush.msra.mxu0 %v1027
  %3398 = vmatpush.msra.mxu0 %v1019
  %3399 = vmatpush.msra.mxu0 %v1011
  %3400 = vmatpush.msra.mxu0 %v1003
  %3401 = vmatpush.msra.mxu0 %v995
  %3402 = vmatpush.msra.mxu0 %v987
  %3403 = vmatpush.msra.mxu0 %v979
  %3404 = vmatpush.msra.mxu0 %v971
  %3405 = vmatpush.msra.mxu0 %v963
  %3406 = vmatpush.msra.mxu0 %v955
  %3407 = vmatpush.msra.mxu0 %v947
  %3408 = vmatpush.msra.mxu0 %v939
  %3409 = vmatmul.f32.gmra.mxu0 %v3378
  %v3410 = vpop.f32.mrf.mxu0
  %v3411 = vadd.f32 0.0, %v3410
  %3412 = vdwg.mxu0
  %3413 = vmatpush.msra.mxu0 0.0
  %3414 = vmatpush.msra.mxu0 0.0
  %3415 = vmatpush.msra.mxu0 0.0
  %3416 = vmatpush.msra.mxu0 0.0
  %3417 = vmatpush.msra.mxu0 0.0
  %3418 = vmatpush.msra.mxu0 0.0
  %3419 = vmatpush.msra.mxu0 0.0
  %3420 = vmatpush.msra.mxu0 0.0
  %3421 = vmatpush.msra.mxu0 0.0
  %3422 = vmatpush.msra.mxu0 0.0
  %3423 = vmatpush.msra.mxu0 0.0
  %3424 = vmatpush.msra.mxu0 0.0
  %3425 = vmatpush.msra.mxu0 0.0
  %3426 = vmatpush.msra.mxu0 0.0
  %3427 = vmatpush.msra.mxu0 %v1075
  %3428 = vmatpush.msra.mxu0 %v1067
  %3429 = vmatmul.f32.gmra.mxu0 %v3391
  %v3430 = vpop.f32.mrf.mxu0
  %v3431 = vadd.f32 %v3411, %v3430
  %3432 = vdwg.mxu0
  %3433 = vmatpush.msra.mxu0 %v1060
  %3434 = vmatpush.msra.mxu0 %v1052
  %3435 = vmatpush.msra.mxu0 %v1044
  %3436 = vmatpush.msra.mxu0 %v1036
  %3437 = vmatpush.msra.mxu0 %v1028
  %3438 = vmatpush.msra.mxu0 %v1020
  %3439 = vmatpush.msra.mxu0 %v1012
  %3440 = vmatpush.msra.mxu0 %v1004
  %3441 = vmatpush.msra.mxu0 %v996
  %3442 = vmatpush.msra.mxu0 %v988
  %3443 = vmatpush.msra.mxu0 %v980
  %3444 = vmatpush.msra.mxu0 %v972
  %3445 = vmatpush.msra.mxu0 %v964
  %3446 = vmatpush.msra.mxu0 %v956
  %3447 = vmatpush.msra.mxu0 %v948
  %3448 = vmatpush.msra.mxu0 %v940
  %3449 = vmatmul.f32.gmra.mxu0 %v3378
  %v3450 = vpop.f32.mrf.mxu0
  %v3451 = vadd.f32 0.0, %v3450
  %3452 = vdwg.mxu0
  %3453 = vmatpush.msra.mxu0 0.0
  %3454 = vmatpush.msra.mxu0 0.0
  %3455 = vmatpush.msra.mxu0 0.0
  %3456 = vmatpush.msra.mxu0 0.0
  %3457 = vmatpush.msra.mxu0 0.0
  %3458 = vmatpush.msra.mxu0 0.0
  %3459 = vmatpush.msra.mxu0 0.0
  %3460 = vmatpush.msra.mxu0 0.0
  %3461 = vmatpush.msra.mxu0 0.0
  %3462 = vmatpush.msra.mxu0 0.0
  %3463 = vmatpush.msra.mxu0 0.0
  %3464 = vmatpush.msra.mxu0 0.0
  %3465 = vmatpush.msra.mxu0 0.0
  %3466 = vmatpush.msra.mxu0 0.0
  %3467 = vmatpush.msra.mxu0 %v1076
  %3468 = vmatpush.msra.mxu0 %v1068
  %3469 = vmatmul.f32.gmra.mxu0 %v3391
  %v3470 = vpop.f32.mrf.mxu0
  %v3471 = vadd.f32 %v3451, %v3470
  %3472 = vdwg.mxu0
  %3473 = vmatpush.msra.mxu0 %v1061
  %3474 = vmatpush.msra.mxu0 %v1053
  %3475 = vmatpush.msra.mxu0 %v1045
  %3476 = vmatpush.msra.mxu0 %v1037
  %3477 = vmatpush.msra.mxu0 %v1029
  %3478 = vmatpush.msra.mxu0 %v1021
  %3479 = vmatpush.msra.mxu0 %v1013
  %3480 = vmatpush.msra.mxu0 %v1005
  %3481 = vmatpush.msra.mxu0 %v997
  %3482 = vmatpush.msra.mxu0 %v989
  %3483 = vmatpush.msra.mxu0 %v981
  %3484 = vmatpush.msra.mxu0 %v973
  %3485 = vmatpush.msra.mxu0 %v965
  %3486 = vmatpush.msra.mxu0 %v957
  %3487 = vmatpush.msra.mxu0 %v949
  %3488 = vmatpush.msra.mxu0 %v941
  %3489 = vmatmul.f32.gmra.mxu0 %v3378
  %v3490 = vpop.f32.mrf.mxu0
  %v3491 = vadd.f32 0.0, %v3490
  %3492 = vdwg.mxu0
  %3493 = vmatpush.msra.mxu0 0.0
  %3494 = vmatpush.msra.mxu0 0.0
  %3495 = vmatpush.msra.mxu0 0.0
  %3496 = vmatpush.msra.mxu0 0.0
  %3497 = vmatpush.msra.mxu0 0.0
  %3498 = vmatpush.msra.mxu0 0.0
  %3499 = vmatpush.msra.mxu0 0.0
  %3500 = vmatpush.msra.mxu0 0.0
  %3501 = vmatpush.msra.mxu0 0.0
  %3502 = vmatpush.msra.mxu0 0.0
  %3503 = vmatpush.msra.mxu0 0.0
  %3504 = vmatpush.msra.mxu0 0.0
  %3505 = vmatpush.msra.mxu0 0.0
  %3506 = vmatpush.msra.mxu0 0.0
  %3507 = vmatpush.msra.mxu0 %v1077
  %3508 = vmatpush.msra.mxu0 %v1069
  %3509 = vmatmul.f32.gmra.mxu0 %v3391
  %v3510 = vpop.f32.mrf.mxu0
  %v3511 = vadd.f32 %v3491, %v3510
  %3512 = vdwg.mxu0
  %3513 = vmatpush.msra.mxu0 %v1062
  %3514 = vmatpush.msra.mxu0 %v1054
  %3515 = vmatpush.msra.mxu0 %v1046
  %3516 = vmatpush.msra.mxu0 %v1038
  %3517 = vmatpush.msra.mxu0 %v1030
  %3518 = vmatpush.msra.mxu0 %v1022
  %3519 = vmatpush.msra.mxu0 %v1014
  %3520 = vmatpush.msra.mxu0 %v1006
  %3521 = vmatpush.msra.mxu0 %v998
  %3522 = vmatpush.msra.mxu0 %v990
  %3523 = vmatpush.msra.mxu0 %v982
  %3524 = vmatpush.msra.mxu0 %v974
  %3525 = vmatpush.msra.mxu0 %v966
  %3526 = vmatpush.msra.mxu0 %v958
  %3527 = vmatpush.msra.mxu0 %v950
  %3528 = vmatpush.msra.mxu0 %v942
  %3529 = vmatmul.f32.gmra.mxu0 %v3378
  %v3530 = vpop.f32.mrf.mxu0
  %v3531 = vadd.f32 0.0, %v3530
  %3532 = vdwg.mxu0
  %3533 = vmatpush.msra.mxu0 0.0
  %3534 = vmatpush.msra.mxu0 0.0
  %3535 = vmatpush.msra.mxu0 0.0
  %3536 = vmatpush.msra.mxu0 0.0
  %3537 = vmatpush.msra.mxu0 0.0
  %3538 = vmatpush.msra.mxu0 0.0
  %3539 = vmatpush.msra.mxu0 0.0
  %3540 = vmatpush.msra.mxu0 0.0
  %3541 = vmatpush.msra.mxu0 0.0
  %3542 = vmatpush.msra.mxu0 0.0
  %3543 = vmatpush.msra.mxu0 0.0
  %3544 = vmatpush.msra.mxu0 0.0
  %3545 = vmatpush.msra.mxu0 0.0
  %3546 = vmatpush.msra.mxu0 0.0
  %3547 = vmatpush.msra.mxu0 %v1078
  %3548 = vmatpush.msra.mxu0 %v1070
  %3549 = vmatmul.f32.gmra.mxu0 %v3391
  %v3550 = vpop.f32.mrf.mxu0
  %v3551 = vadd.f32 %v3531, %v3550
  %3552 = vdwg.mxu0
  %3553 = vmatpush.msra.mxu0 %v1063
  %3554 = vmatpush.msra.mxu0 %v1055
  %3555 = vmatpush.msra.mxu0 %v1047
  %3556 = vmatpush.msra.mxu0 %v1039
  %3557 = vmatpush.msra.mxu0 %v1031
  %3558 = vmatpush.msra.mxu0 %v1023
  %3559 = vmatpush.msra.mxu0 %v1015
  %3560 = vmatpush.msra.mxu0 %v1007
  %3561 = vmatpush.msra.mxu0 %v999
  %3562 = vmatpush.msra.mxu0 %v991
  %3563 = vmatpush.msra.mxu0 %v983
  %3564 = vmatpush.msra.mxu0 %v975
  %3565 = vmatpush.msra.mxu0 %v967
  %3566 = vmatpush.msra.mxu0 %v959
  %3567 = vmatpush.msra.mxu0 %v951
  %3568 = vmatpush.msra.mxu0 %v943
  %3569 = vmatmul.f32.gmra.mxu0 %v3378
  %v3570 = vpop.f32.mrf.mxu0
  %v3571 = vadd.f32 0.0, %v3570
  %3572 = vdwg.mxu0
  %3573 = vmatpush.msra.mxu0 0.0
  %3574 = vmatpush.msra.mxu0 0.0
  %3575 = vmatpush.msra.mxu0 0.0
  %3576 = vmatpush.msra.mxu0 0.0
  %3577 = vmatpush.msra.mxu0 0.0
  %3578 = vmatpush.msra.mxu0 0.0
  %3579 = vmatpush.msra.mxu0 0.0
  %3580 = vmatpush.msra.mxu0 0.0
  %3581 = vmatpush.msra.mxu0 0.0
  %3582 = vmatpush.msra.mxu0 0.0
  %3583 = vmatpush.msra.mxu0 0.0
  %3584 = vmatpush.msra.mxu0 0.0
  %3585 = vmatpush.msra.mxu0 0.0
  %3586 = vmatpush.msra.mxu0 0.0
  %3587 = vmatpush.msra.mxu0 %v1079
  %3588 = vmatpush.msra.mxu0 %v1071
  %3589 = vmatmul.f32.gmra.mxu0 %v3391
  %v3590 = vpop.f32.mrf.mxu0
  %v3591 = vadd.f32 %v3571, %v3590
  %3592 = vdwg.mxu0
  %3593 = vmatpush.msra.mxu0 %v1064
  %3594 = vmatpush.msra.mxu0 %v1056
  %3595 = vmatpush.msra.mxu0 %v1048
  %3596 = vmatpush.msra.mxu0 %v1040
  %3597 = vmatpush.msra.mxu0 %v1032
  %3598 = vmatpush.msra.mxu0 %v1024
  %3599 = vmatpush.msra.mxu0 %v1016
  %3600 = vmatpush.msra.mxu0 %v1008
  %3601 = vmatpush.msra.mxu0 %v1000
  %3602 = vmatpush.msra.mxu0 %v992
  %3603 = vmatpush.msra.mxu0 %v984
  %3604 = vmatpush.msra.mxu0 %v976
  %3605 = vmatpush.msra.mxu0 %v968
  %3606 = vmatpush.msra.mxu0 %v960
  %3607 = vmatpush.msra.mxu0 %v952
  %3608 = vmatpush.msra.mxu0 %v944
  %3609 = vmatmul.f32.gmra.mxu0 %v3378
  %v3610 = vpop.f32.mrf.mxu0
  %v3611 = vadd.f32 0.0, %v3610
  %3612 = vdwg.mxu0
  %3613 = vmatpush.msra.mxu0 0.0
  %3614 = vmatpush.msra.mxu0 0.0
  %3615 = vmatpush.msra.mxu0 0.0
  %3616 = vmatpush.msra.mxu0 0.0
  %3617 = vmatpush.msra.mxu0 0.0
  %3618 = vmatpush.msra.mxu0 0.0
  %3619 = vmatpush.msra.mxu0 0.0
  %3620 = vmatpush.msra.mxu0 0.0
  %3621 = vmatpush.msra.mxu0 0.0
  %3622 = vmatpush.msra.mxu0 0.0
  %3623 = vmatpush.msra.mxu0 0.0
  %3624 = vmatpush.msra.mxu0 0.0
  %3625 = vmatpush.msra.mxu0 0.0
  %3626 = vmatpush.msra.mxu0 0.0
  %3627 = vmatpush.msra.mxu0 %v1080
  %3628 = vmatpush.msra.mxu0 %v1072
  %3629 = vmatmul.f32.gmra.mxu0 %v3391
  %v3630 = vpop.f32.mrf.mxu0
  %v3631 = vadd.f32 %v3611, %v3630
  %3632 = vdwg.mxu0
  %3633 = vmatpush.msra.mxu0 %v1065
  %3634 = vmatpush.msra.mxu0 %v1057
  %3635 = vmatpush.msra.mxu0 %v1049
  %3636 = vmatpush.msra.mxu0 %v1041
  %3637 = vmatpush.msra.mxu0 %v1033
  %3638 = vmatpush.msra.mxu0 %v1025
  %3639 = vmatpush.msra.mxu0 %v1017
  %3640 = vmatpush.msra.mxu0 %v1009
  %3641 = vmatpush.msra.mxu0 %v1001
  %3642 = vmatpush.msra.mxu0 %v993
  %3643 = vmatpush.msra.mxu0 %v985
  %3644 = vmatpush.msra.mxu0 %v977
  %3645 = vmatpush.msra.mxu0 %v969
  %3646 = vmatpush.msra.mxu0 %v961
  %3647 = vmatpush.msra.mxu0 %v953
  %3648 = vmatpush.msra.mxu0 %v945
  %3649 = vmatmul.f32.gmra.mxu0 %v3378
  %v3650 = vpop.f32.mrf.mxu0
  %v3651 = vadd.f32 0.0, %v3650
  %3652 = vdwg.mxu0
  %3653 = vmatpush.msra.mxu0 0.0
  %3654 = vmatpush.msra.mxu0 0.0
  %3655 = vmatpush.msra.mxu0 0.0
  %3656 = vmatpush.msra.mxu0 0.0
  %3657 = vmatpush.msra.mxu0 0.0
  %3658 = vmatpush.msra.mxu0 0.0
  %3659 = vmatpush.msra.mxu0 0.0
  %3660 = vmatpush.msra.mxu0 0.0
  %3661 = vmatpush.msra.mxu0 0.0
  %3662 = vmatpush.msra.mxu0 0.0
  %3663 = vmatpush.msra.mxu0 0.0
  %3664 = vmatpush.msra.mxu0 0.0
  %3665 = vmatpush.msra.mxu0 0.0
  %3666 = vmatpush.msra.mxu0 0.0
  %3667 = vmatpush.msra.mxu0 %v1081
  %3668 = vmatpush.msra.mxu0 %v1073
  %3669 = vmatmul.f32.gmra.mxu0 %v3391
  %v3670 = vpop.f32.mrf.mxu0
  %v3671 = vadd.f32 %v3651, %v3670
  %3672 = vdwg.mxu0
  %3673 = vmatpush.msra.mxu0 %v1066
  %3674 = vmatpush.msra.mxu0 %v1058
  %3675 = vmatpush.msra.mxu0 %v1050
  %3676 = vmatpush.msra.mxu0 %v1042
  %3677 = vmatpush.msra.mxu0 %v1034
  %3678 = vmatpush.msra.mxu0 %v1026
  %3679 = vmatpush.msra.mxu0 %v1018
  %3680 = vmatpush.msra.mxu0 %v1010
  %3681 = vmatpush.msra.mxu0 %v1002
  %3682 = vmatpush.msra.mxu0 %v994
  %3683 = vmatpush.msra.mxu0 %v986
  %3684 = vmatpush.msra.mxu0 %v978
  %3685 = vmatpush.msra.mxu0 %v970
  %3686 = vmatpush.msra.mxu0 %v962
  %3687 = vmatpush.msra.mxu0 %v954
  %3688 = vmatpush.msra.mxu0 %v946
  %3689 = vmatmul.f32.gmra.mxu0 %v3378
  %v3690 = vpop.f32.mrf.mxu0
  %v3691 = vadd.f32 0.0, %v3690
  %3692 = vdwg.mxu0
  %3693 = vmatpush.msra.mxu0 0.0
  %3694 = vmatpush.msra.mxu0 0.0
  %3695 = vmatpush.msra.mxu0 0.0
  %3696 = vmatpush.msra.mxu0 0.0
  %3697 = vmatpush.msra.mxu0 0.0
  %3698 = vmatpush.msra.mxu0 0.0
  %3699 = vmatpush.msra.mxu0 0.0
  %3700 = vmatpush.msra.mxu0 0.0
  %3701 = vmatpush.msra.mxu0 0.0
  %3702 = vmatpush.msra.mxu0 0.0
  %3703 = vmatpush.msra.mxu0 0.0
  %3704 = vmatpush.msra.mxu0 0.0
  %3705 = vmatpush.msra.mxu0 0.0
  %3706 = vmatpush.msra.mxu0 0.0
  %3707 = vmatpush.msra.mxu0 %v1082
  %3708 = vmatpush.msra.mxu0 %v1074
  %3709 = vmatmul.f32.gmra.mxu0 %v3391
  %v3710 = vpop.f32.mrf.mxu0
  %v3711 = vadd.f32 %v3691, %v3710
  %3712 = vdwg.mxu0
  %v3713 = vadd.f32 %v3382, %v3431
  %v3714 = vadd.f32 %v3383, %v3471
  %v3715 = vadd.f32 %v3384, %v3511
  %v3716 = vadd.f32 %v3385, %v3551
  %v3717 = vadd.f32 %v3386, %v3591
  %v3718 = vadd.f32 %v3387, %v3631
  %v3719 = vadd.f32 %v3388, %v3671
  %v3720 = vadd.f32 %v3389, %v3711
  %v3721 = vsub.f32 0.0, %v3713
  %v3722 = vsub.f32 0.0, %v3714
  %v3723 = vmul.f32 %v3721, 1.442695
  %v3724 = vpow.pop %v3723
  %v3725 = vmul.f32 %v3722, 1.442695
  %v3726 = vpow.pop %v3725
  %v3727 = vadd.f32 %v3724, 1.0
  %v3728 = vadd.f32 %v3726, 1.0
  %v3729 = vrcp.pop %v3727
  %v3730 = vrcp.pop %v3728
  %v3731 = vsub.f32 0.0, %v3715
  %v3732 = vsub.f32 0.0, %v3716
  %v3733 = vmul.f32 %v3731, 1.442695
  %v3734 = vpow.pop %v3733
  %v3735 = vmul.f32 %v3732, 1.442695
  %v3736 = vpow.pop %v3735
  %v3737 = vadd.f32 %v3734, 1.0
  %v3738 = vadd.f32 %v3736, 1.0
  %v3739 = vrcp.pop %v3737
  %v3740 = vrcp.pop %v3738
  %v3741 = vtanh.pop %v3717
  %v3742 = vtanh.pop %v3718
  %v3743 = vsub.f32 0.0, %v3719
  %v3744 = vsub.f32 0.0, %v3720
  %v3745 = vmul.f32 %v3743, 1.442695
  %v3746 = vpow.pop %v3745
  %v3747 = vmul.f32 %v3744, 1.442695
  %v3748 = vpow.pop %v3747
  %v3749 = vadd.f32 %v3746, 1.0
  %v3750 = vadd.f32 %v3748, 1.0
  %v3751 = vrcp.pop %v3749
  %v3752 = vrcp.pop %v3750
  %v3753 = vmul.f32 %v3739, %v3374
  %v3754 = vmul.f32 %v3740, %v3375
  %v3755 = vmul.f32 %v3729, %v3741
  %v3756 = vmul.f32 %v3730, %v3742
  %v3757 = vadd.f32 %v3753, %v3755
  %v3758 = vadd.f32 %v3754, %v3756
  %v3759 = vtanh.pop %v3757
  %v3760 = vtanh.pop %v3758
  %v3761 = vmul.f32 %v3751, %v3759
  %v3762 = vmul.f32 %v3752, %v3760
  %3763 = vst [vmem:[#allocation3 + $0x60] sm:$0xff] %v3761
  %3764 = vst.msk [vmem:[#allocation3 + $0x68] sm:$0xff] %vm1091, %v3762
  %v3765 = vld [vmem:[#allocation2 + $0x1c0] sm:$0xff]
  %v3766 = vld [vmem:[#allocation2 + $0x1c8] sm:$0xff]
  %v3767 = vld [vmem:[#allocation2 + $0x1d0] sm:$0xff]
  %v3768 = vld [vmem:[#allocation2 + $0x1d8] sm:$0xff]
  %v3769 = vld [vmem:[#allocation2 + $0x1e0] sm:$0xff]
  %v3770 = vld [vmem:[#allocation2 + $0x1e8] sm:$0xff]
  %v3771 = vld [vmem:[#allocation2 + $0x1f0] sm:$0xff]
  %v3772 = vld [vmem:[#allocation2 + $0x1f8] sm:$0xff]
  %v3774 = vsel %vm1091, %v3762, 0
  %3776 = vmatpush.msra.mxu0 %v1059
  %3777 = vmatpush.msra.mxu0 %v1051
  %3778 = vmatpush.msra.mxu0 %v1043
  %3779 = vmatpush.msra.mxu0 %v1035
  %3780 = vmatpush.msra.mxu0 %v1027
  %3781 = vmatpush.msra.mxu0 %v1019
  %3782 = vmatpush.msra.mxu0 %v1011
  %3783 = vmatpush.msra.mxu0 %v1003
  %3784 = vmatpush.msra.mxu0 %v995
  %3785 = vmatpush.msra.mxu0 %v987
  %3786 = vmatpush.msra.mxu0 %v979
  %3787 = vmatpush.msra.mxu0 %v971
  %3788 = vmatpush.msra.mxu0 %v963
  %3789 = vmatpush.msra.mxu0 %v955
  %3790 = vmatpush.msra.mxu0 %v947
  %3791 = vmatpush.msra.mxu0 %v939
  %3792 = vmatmul.f32.gmra.mxu0 %v3761
  %v3793 = vpop.f32.mrf.mxu0
  %v3794 = vadd.f32 0.0, %v3793
  %3795 = vdwg.mxu0
  %3796 = vmatpush.msra.mxu0 0.0
  %3797 = vmatpush.msra.mxu0 0.0
  %3798 = vmatpush.msra.mxu0 0.0
  %3799 = vmatpush.msra.mxu0 0.0
  %3800 = vmatpush.msra.mxu0 0.0
  %3801 = vmatpush.msra.mxu0 0.0
  %3802 = vmatpush.msra.mxu0 0.0
  %3803 = vmatpush.msra.mxu0 0.0
  %3804 = vmatpush.msra.mxu0 0.0
  %3805 = vmatpush.msra.mxu0 0.0
  %3806 = vmatpush.msra.mxu0 0.0
  %3807 = vmatpush.msra.mxu0 0.0
  %3808 = vmatpush.msra.mxu0 0.0
  %3809 = vmatpush.msra.mxu0 0.0
  %3810 = vmatpush.msra.mxu0 %v1075
  %3811 = vmatpush.msra.mxu0 %v1067
  %3812 = vmatmul.f32.gmra.mxu0 %v3774
  %v3813 = vpop.f32.mrf.mxu0
  %v3814 = vadd.f32 %v3794, %v3813
  %3815 = vdwg.mxu0
  %3816 = vmatpush.msra.mxu0 %v1060
  %3817 = vmatpush.msra.mxu0 %v1052
  %3818 = vmatpush.msra.mxu0 %v1044
  %3819 = vmatpush.msra.mxu0 %v1036
  %3820 = vmatpush.msra.mxu0 %v1028
  %3821 = vmatpush.msra.mxu0 %v1020
  %3822 = vmatpush.msra.mxu0 %v1012
  %3823 = vmatpush.msra.mxu0 %v1004
  %3824 = vmatpush.msra.mxu0 %v996
  %3825 = vmatpush.msra.mxu0 %v988
  %3826 = vmatpush.msra.mxu0 %v980
  %3827 = vmatpush.msra.mxu0 %v972
  %3828 = vmatpush.msra.mxu0 %v964
  %3829 = vmatpush.msra.mxu0 %v956
  %3830 = vmatpush.msra.mxu0 %v948
  %3831 = vmatpush.msra.mxu0 %v940
  %3832 = vmatmul.f32.gmra.mxu0 %v3761
  %v3833 = vpop.f32.mrf.mxu0
  %v3834 = vadd.f32 0.0, %v3833
  %3835 = vdwg.mxu0
  %3836 = vmatpush.msra.mxu0 0.0
  %3837 = vmatpush.msra.mxu0 0.0
  %3838 = vmatpush.msra.mxu0 0.0
  %3839 = vmatpush.msra.mxu0 0.0
  %3840 = vmatpush.msra.mxu0 0.0
  %3841 = vmatpush.msra.mxu0 0.0
  %3842 = vmatpush.msra.mxu0 0.0
  %3843 = vmatpush.msra.mxu0 0.0
  %3844 = vmatpush.msra.mxu0 0.0
  %3845 = vmatpush.msra.mxu0 0.0
  %3846 = vmatpush.msra.mxu0 0.0
  %3847 = vmatpush.msra.mxu0 0.0
  %3848 = vmatpush.msra.mxu0 0.0
  %3849 = vmatpush.msra.mxu0 0.0
  %3850 = vmatpush.msra.mxu0 %v1076
  %3851 = vmatpush.msra.mxu0 %v1068
  %3852 = vmatmul.f32.gmra.mxu0 %v3774
  %v3853 = vpop.f32.mrf.mxu0
  %v3854 = vadd.f32 %v3834, %v3853
  %3855 = vdwg.mxu0
  %3856 = vmatpush.msra.mxu0 %v1061
  %3857 = vmatpush.msra.mxu0 %v1053
  %3858 = vmatpush.msra.mxu0 %v1045
  %3859 = vmatpush.msra.mxu0 %v1037
  %3860 = vmatpush.msra.mxu0 %v1029
  %3861 = vmatpush.msra.mxu0 %v1021
  %3862 = vmatpush.msra.mxu0 %v1013
  %3863 = vmatpush.msra.mxu0 %v1005
  %3864 = vmatpush.msra.mxu0 %v997
  %3865 = vmatpush.msra.mxu0 %v989
  %3866 = vmatpush.msra.mxu0 %v981
  %3867 = vmatpush.msra.mxu0 %v973
  %3868 = vmatpush.msra.mxu0 %v965
  %3869 = vmatpush.msra.mxu0 %v957
  %3870 = vmatpush.msra.mxu0 %v949
  %3871 = vmatpush.msra.mxu0 %v941
  %3872 = vmatmul.f32.gmra.mxu0 %v3761
  %v3873 = vpop.f32.mrf.mxu0
  %v3874 = vadd.f32 0.0, %v3873
  %3875 = vdwg.mxu0
  %3876 = vmatpush.msra.mxu0 0.0
  %3877 = vmatpush.msra.mxu0 0.0
  %3878 = vmatpush.msra.mxu0 0.0
  %3879 = vmatpush.msra.mxu0 0.0
  %3880 = vmatpush.msra.mxu0 0.0
  %3881 = vmatpush.msra.mxu0 0.0
  %3882 = vmatpush.msra.mxu0 0.0
  %3883 = vmatpush.msra.mxu0 0.0
  %3884 = vmatpush.msra.mxu0 0.0
  %3885 = vmatpush.msra.mxu0 0.0
  %3886 = vmatpush.msra.mxu0 0.0
  %3887 = vmatpush.msra.mxu0 0.0
  %3888 = vmatpush.msra.mxu0 0.0
  %3889 = vmatpush.msra.mxu0 0.0
  %3890 = vmatpush.msra.mxu0 %v1077
  %3891 = vmatpush.msra.mxu0 %v1069
  %3892 = vmatmul.f32.gmra.mxu0 %v3774
  %v3893 = vpop.f32.mrf.mxu0
  %v3894 = vadd.f32 %v3874, %v3893
  %3895 = vdwg.mxu0
  %3896 = vmatpush.msra.mxu0 %v1062
  %3897 = vmatpush.msra.mxu0 %v1054
  %3898 = vmatpush.msra.mxu0 %v1046
  %3899 = vmatpush.msra.mxu0 %v1038
  %3900 = vmatpush.msra.mxu0 %v1030
  %3901 = vmatpush.msra.mxu0 %v1022
  %3902 = vmatpush.msra.mxu0 %v1014
  %3903 = vmatpush.msra.mxu0 %v1006
  %3904 = vmatpush.msra.mxu0 %v998
  %3905 = vmatpush.msra.mxu0 %v990
  %3906 = vmatpush.msra.mxu0 %v982
  %3907 = vmatpush.msra.mxu0 %v974
  %3908 = vmatpush.msra.mxu0 %v966
  %3909 = vmatpush.msra.mxu0 %v958
  %3910 = vmatpush.msra.mxu0 %v950
  %3911 = vmatpush.msra.mxu0 %v942
  %3912 = vmatmul.f32.gmra.mxu0 %v3761
  %v3913 = vpop.f32.mrf.mxu0
  %v3914 = vadd.f32 0.0, %v3913
  %3915 = vdwg.mxu0
  %3916 = vmatpush.msra.mxu0 0.0
  %3917 = vmatpush.msra.mxu0 0.0
  %3918 = vmatpush.msra.mxu0 0.0
  %3919 = vmatpush.msra.mxu0 0.0
  %3920 = vmatpush.msra.mxu0 0.0
  %3921 = vmatpush.msra.mxu0 0.0
  %3922 = vmatpush.msra.mxu0 0.0
  %3923 = vmatpush.msra.mxu0 0.0
  %3924 = vmatpush.msra.mxu0 0.0
  %3925 = vmatpush.msra.mxu0 0.0
  %3926 = vmatpush.msra.mxu0 0.0
  %3927 = vmatpush.msra.mxu0 0.0
  %3928 = vmatpush.msra.mxu0 0.0
  %3929 = vmatpush.msra.mxu0 0.0
  %3930 = vmatpush.msra.mxu0 %v1078
  %3931 = vmatpush.msra.mxu0 %v1070
  %3932 = vmatmul.f32.gmra.mxu0 %v3774
  %v3933 = vpop.f32.mrf.mxu0
  %v3934 = vadd.f32 %v3914, %v3933
  %3935 = vdwg.mxu0
  %3936 = vmatpush.msra.mxu0 %v1063
  %3937 = vmatpush.msra.mxu0 %v1055
  %3938 = vmatpush.msra.mxu0 %v1047
  %3939 = vmatpush.msra.mxu0 %v1039
  %3940 = vmatpush.msra.mxu0 %v1031
  %3941 = vmatpush.msra.mxu0 %v1023
  %3942 = vmatpush.msra.mxu0 %v1015
  %3943 = vmatpush.msra.mxu0 %v1007
  %3944 = vmatpush.msra.mxu0 %v999
  %3945 = vmatpush.msra.mxu0 %v991
  %3946 = vmatpush.msra.mxu0 %v983
  %3947 = vmatpush.msra.mxu0 %v975
  %3948 = vmatpush.msra.mxu0 %v967
  %3949 = vmatpush.msra.mxu0 %v959
  %3950 = vmatpush.msra.mxu0 %v951
  %3951 = vmatpush.msra.mxu0 %v943
  %3952 = vmatmul.f32.gmra.mxu0 %v3761
  %v3953 = vpop.f32.mrf.mxu0
  %v3954 = vadd.f32 0.0, %v3953
  %3955 = vdwg.mxu0
  %3956 = vmatpush.msra.mxu0 0.0
  %3957 = vmatpush.msra.mxu0 0.0
  %3958 = vmatpush.msra.mxu0 0.0
  %3959 = vmatpush.msra.mxu0 0.0
  %3960 = vmatpush.msra.mxu0 0.0
  %3961 = vmatpush.msra.mxu0 0.0
  %3962 = vmatpush.msra.mxu0 0.0
  %3963 = vmatpush.msra.mxu0 0.0
  %3964 = vmatpush.msra.mxu0 0.0
  %3965 = vmatpush.msra.mxu0 0.0
  %3966 = vmatpush.msra.mxu0 0.0
  %3967 = vmatpush.msra.mxu0 0.0
  %3968 = vmatpush.msra.mxu0 0.0
  %3969 = vmatpush.msra.mxu0 0.0
  %3970 = vmatpush.msra.mxu0 %v1079
  %3971 = vmatpush.msra.mxu0 %v1071
  %3972 = vmatmul.f32.gmra.mxu0 %v3774
  %v3973 = vpop.f32.mrf.mxu0
  %v3974 = vadd.f32 %v3954, %v3973
  %3975 = vdwg.mxu0
  %3976 = vmatpush.msra.mxu0 %v1064
  %3977 = vmatpush.msra.mxu0 %v1056
  %3978 = vmatpush.msra.mxu0 %v1048
  %3979 = vmatpush.msra.mxu0 %v1040
  %3980 = vmatpush.msra.mxu0 %v1032
  %3981 = vmatpush.msra.mxu0 %v1024
  %3982 = vmatpush.msra.mxu0 %v1016
  %3983 = vmatpush.msra.mxu0 %v1008
  %3984 = vmatpush.msra.mxu0 %v1000
  %3985 = vmatpush.msra.mxu0 %v992
  %3986 = vmatpush.msra.mxu0 %v984
  %3987 = vmatpush.msra.mxu0 %v976
  %3988 = vmatpush.msra.mxu0 %v968
  %3989 = vmatpush.msra.mxu0 %v960
  %3990 = vmatpush.msra.mxu0 %v952
  %3991 = vmatpush.msra.mxu0 %v944
  %3992 = vmatmul.f32.gmra.mxu0 %v3761
  %v3993 = vpop.f32.mrf.mxu0
  %v3994 = vadd.f32 0.0, %v3993
  %3995 = vdwg.mxu0
  %3996 = vmatpush.msra.mxu0 0.0
  %3997 = vmatpush.msra.mxu0 0.0
  %3998 = vmatpush.msra.mxu0 0.0
  %3999 = vmatpush.msra.mxu0 0.0
  %4000 = vmatpush.msra.mxu0 0.0
  %4001 = vmatpush.msra.mxu0 0.0
  %4002 = vmatpush.msra.mxu0 0.0
  %4003 = vmatpush.msra.mxu0 0.0
  %4004 = vmatpush.msra.mxu0 0.0
  %4005 = vmatpush.msra.mxu0 0.0
  %4006 = vmatpush.msra.mxu0 0.0
  %4007 = vmatpush.msra.mxu0 0.0
  %4008 = vmatpush.msra.mxu0 0.0
  %4009 = vmatpush.msra.mxu0 0.0
  %4010 = vmatpush.msra.mxu0 %v1080
  %4011 = vmatpush.msra.mxu0 %v1072
  %4012 = vmatmul.f32.gmra.mxu0 %v3774
  %v4013 = vpop.f32.mrf.mxu0
  %v4014 = vadd.f32 %v3994, %v4013
  %4015 = vdwg.mxu0
  %4016 = vmatpush.msra.mxu0 %v1065
  %4017 = vmatpush.msra.mxu0 %v1057
  %4018 = vmatpush.msra.mxu0 %v1049
  %4019 = vmatpush.msra.mxu0 %v1041
  %4020 = vmatpush.msra.mxu0 %v1033
  %4021 = vmatpush.msra.mxu0 %v1025
  %4022 = vmatpush.msra.mxu0 %v1017
  %4023 = vmatpush.msra.mxu0 %v1009
  %4024 = vmatpush.msra.mxu0 %v1001
  %4025 = vmatpush.msra.mxu0 %v993
  %4026 = vmatpush.msra.mxu0 %v985
  %4027 = vmatpush.msra.mxu0 %v977
  %4028 = vmatpush.msra.mxu0 %v969
  %4029 = vmatpush.msra.mxu0 %v961
  %4030 = vmatpush.msra.mxu0 %v953
  %4031 = vmatpush.msra.mxu0 %v945
  %4032 = vmatmul.f32.gmra.mxu0 %v3761
  %v4033 = vpop.f32.mrf.mxu0
  %v4034 = vadd.f32 0.0, %v4033
  %4035 = vdwg.mxu0
  %4036 = vmatpush.msra.mxu0 0.0
  %4037 = vmatpush.msra.mxu0 0.0
  %4038 = vmatpush.msra.mxu0 0.0
  %4039 = vmatpush.msra.mxu0 0.0
  %4040 = vmatpush.msra.mxu0 0.0
  %4041 = vmatpush.msra.mxu0 0.0
  %4042 = vmatpush.msra.mxu0 0.0
  %4043 = vmatpush.msra.mxu0 0.0
  %4044 = vmatpush.msra.mxu0 0.0
  %4045 = vmatpush.msra.mxu0 0.0
  %4046 = vmatpush.msra.mxu0 0.0
  %4047 = vmatpush.msra.mxu0 0.0
  %4048 = vmatpush.msra.mxu0 0.0
  %4049 = vmatpush.msra.mxu0 0.0
  %4050 = vmatpush.msra.mxu0 %v1081
  %4051 = vmatpush.msra.mxu0 %v1073
  %4052 = vmatmul.f32.gmra.mxu0 %v3774
  %v4053 = vpop.f32.mrf.mxu0
  %v4054 = vadd.f32 %v4034, %v4053
  %4055 = vdwg.mxu0
  %4056 = vmatpush.msra.mxu0 %v1066
  %4057 = vmatpush.msra.mxu0 %v1058
  %4058 = vmatpush.msra.mxu0 %v1050
  %4059 = vmatpush.msra.mxu0 %v1042
  %4060 = vmatpush.msra.mxu0 %v1034
  %4061 = vmatpush.msra.mxu0 %v1026
  %4062 = vmatpush.msra.mxu0 %v1018
  %4063 = vmatpush.msra.mxu0 %v1010
  %4064 = vmatpush.msra.mxu0 %v1002
  %4065 = vmatpush.msra.mxu0 %v994
  %4066 = vmatpush.msra.mxu0 %v986
  %4067 = vmatpush.msra.mxu0 %v978
  %4068 = vmatpush.msra.mxu0 %v970
  %4069 = vmatpush.msra.mxu0 %v962
  %4070 = vmatpush.msra.mxu0 %v954
  %4071 = vmatpush.msra.mxu0 %v946
  %4072 = vmatmul.f32.gmra.mxu0 %v3761
  %v4073 = vpop.f32.mrf.mxu0
  %v4074 = vadd.f32 0.0, %v4073
  %4075 = vdwg.mxu0
  %4076 = vmatpush.msra.mxu0 0.0
  %4077 = vmatpush.msra.mxu0 0.0
  %4078 = vmatpush.msra.mxu0 0.0
  %4079 = vmatpush.msra.mxu0 0.0
  %4080 = vmatpush.msra.mxu0 0.0
  %4081 = vmatpush.msra.mxu0 0.0
  %4082 = vmatpush.msra.mxu0 0.0
  %4083 = vmatpush.msra.mxu0 0.0
  %4084 = vmatpush.msra.mxu0 0.0
  %4085 = vmatpush.msra.mxu0 0.0
  %4086 = vmatpush.msra.mxu0 0.0
  %4087 = vmatpush.msra.mxu0 0.0
  %4088 = vmatpush.msra.mxu0 0.0
  %4089 = vmatpush.msra.mxu0 0.0
  %4090 = vmatpush.msra.mxu0 %v1082
  %4091 = vmatpush.msra.mxu0 %v1074
  %4092 = vmatmul.f32.gmra.mxu0 %v3774
  %v4093 = vpop.f32.mrf.mxu0
  %v4094 = vadd.f32 %v4074, %v4093
  %4095 = vdwg.mxu0
  %v4096 = vadd.f32 %v3765, %v3814
  %v4097 = vadd.f32 %v3766, %v3854
  %v4098 = vadd.f32 %v3767, %v3894
  %v4099 = vadd.f32 %v3768, %v3934
  %v4100 = vadd.f32 %v3769, %v3974
  %v4101 = vadd.f32 %v3770, %v4014
  %v4102 = vadd.f32 %v3771, %v4054
  %v4103 = vadd.f32 %v3772, %v4094
  %v4104 = vsub.f32 0.0, %v4096
  %v4105 = vsub.f32 0.0, %v4097
  %v4106 = vmul.f32 %v4104, 1.442695
  %v4107 = vpow.pop %v4106
  %v4108 = vmul.f32 %v4105, 1.442695
  %v4109 = vpow.pop %v4108
  %v4110 = vadd.f32 %v4107, 1.0
  %v4111 = vadd.f32 %v4109, 1.0
  %v4112 = vrcp.pop %v4110
  %v4113 = vrcp.pop %v4111
  %v4114 = vsub.f32 0.0, %v4098
  %v4115 = vsub.f32 0.0, %v4099
  %v4116 = vmul.f32 %v4114, 1.442695
  %v4117 = vpow.pop %v4116
  %v4118 = vmul.f32 %v4115, 1.442695
  %v4119 = vpow.pop %v4118
  %v4120 = vadd.f32 %v4117, 1.0
  %v4121 = vadd.f32 %v4119, 1.0
  %v4122 = vrcp.pop %v4120
  %v4123 = vrcp.pop %v4121
  %v4124 = vtanh.pop %v4100
  %v4125 = vtanh.pop %v4101
  %v4126 = vsub.f32 0.0, %v4102
  %v4127 = vsub.f32 0.0, %v4103
  %v4128 = vmul.f32 %v4126, 1.442695
  %v4129 = vpow.pop %v4128
  %v4130 = vmul.f32 %v4127, 1.442695
  %v4131 = vpow.pop %v4130
  %v4132 = vadd.f32 %v4129, 1.0
  %v4133 = vadd.f32 %v4131, 1.0
  %v4134 = vrcp.pop %v4132
  %v4135 = vrcp.pop %v4133
  %v4136 = vmul.f32 %v4122, %v3757
  %v4137 = vmul.f32 %v4123, %v3758
  %v4138 = vmul.f32 %v4112, %v4124
  %v4139 = vmul.f32 %v4113, %v4125
  %v4140 = vadd.f32 %v4136, %v4138
  %v4141 = vadd.f32 %v4137, %v4139
  %v4142 = vtanh.pop %v4140
  %v4143 = vtanh.pop %v4141
  %v4144 = vmul.f32 %v4134, %v4142
  %v4145 = vmul.f32 %v4135, %v4143
  %4146 = vst [vmem:[#allocation3 + $0x70] sm:$0xff] %v4144
  %4147 = vst.msk [vmem:[#allocation3 + $0x78] sm:$0xff] %vm1091, %v4145
  %v4148 = vld [vmem:[#allocation2 + $0x200] sm:$0xff]
  %v4149 = vld [vmem:[#allocation2 + $0x208] sm:$0xff]
  %v4150 = vld [vmem:[#allocation2 + $0x210] sm:$0xff]
  %v4151 = vld [vmem:[#allocation2 + $0x218] sm:$0xff]
  %v4152 = vld [vmem:[#allocation2 + $0x220] sm:$0xff]
  %v4153 = vld [vmem:[#allocation2 + $0x228] sm:$0xff]
  %v4154 = vld [vmem:[#allocation2 + $0x230] sm:$0xff]
  %v4155 = vld [vmem:[#allocation2 + $0x238] sm:$0xff]
  %v4157 = vsel %vm1091, %v4145, 0
  %4159 = vmatpush.msra.mxu0 %v1059
  %4160 = vmatpush.msra.mxu0 %v1051
  %4161 = vmatpush.msra.mxu0 %v1043
  %4162 = vmatpush.msra.mxu0 %v1035
  %4163 = vmatpush.msra.mxu0 %v1027
  %4164 = vmatpush.msra.mxu0 %v1019
  %4165 = vmatpush.msra.mxu0 %v1011
  %4166 = vmatpush.msra.mxu0 %v1003
  %4167 = vmatpush.msra.mxu0 %v995
  %4168 = vmatpush.msra.mxu0 %v987
  %4169 = vmatpush.msra.mxu0 %v979
  %4170 = vmatpush.msra.mxu0 %v971
  %4171 = vmatpush.msra.mxu0 %v963
  %4172 = vmatpush.msra.mxu0 %v955
  %4173 = vmatpush.msra.mxu0 %v947
  %4174 = vmatpush.msra.mxu0 %v939
  %4175 = vmatmul.f32.gmra.mxu0 %v4144
  %v4176 = vpop.f32.mrf.mxu0
  %v4177 = vadd.f32 0.0, %v4176
  %4178 = vdwg.mxu0
  %4179 = vmatpush.msra.mxu0 0.0
  %4180 = vmatpush.msra.mxu0 0.0
  %4181 = vmatpush.msra.mxu0 0.0
  %4182 = vmatpush.msra.mxu0 0.0
  %4183 = vmatpush.msra.mxu0 0.0
  %4184 = vmatpush.msra.mxu0 0.0
  %4185 = vmatpush.msra.mxu0 0.0
  %4186 = vmatpush.msra.mxu0 0.0
  %4187 = vmatpush.msra.mxu0 0.0
  %4188 = vmatpush.msra.mxu0 0.0
  %4189 = vmatpush.msra.mxu0 0.0
  %4190 = vmatpush.msra.mxu0 0.0
  %4191 = vmatpush.msra.mxu0 0.0
  %4192 = vmatpush.msra.mxu0 0.0
  %4193 = vmatpush.msra.mxu0 %v1075
  %4194 = vmatpush.msra.mxu0 %v1067
  %4195 = vmatmul.f32.gmra.mxu0 %v4157
  %v4196 = vpop.f32.mrf.mxu0
  %v4197 = vadd.f32 %v4177, %v4196
  %4198 = vdwg.mxu0
  %4199 = vmatpush.msra.mxu0 %v1060
  %4200 = vmatpush.msra.mxu0 %v1052
  %4201 = vmatpush.msra.mxu0 %v1044
  %4202 = vmatpush.msra.mxu0 %v1036
  %4203 = vmatpush.msra.mxu0 %v1028
  %4204 = vmatpush.msra.mxu0 %v1020
  %4205 = vmatpush.msra.mxu0 %v1012
  %4206 = vmatpush.msra.mxu0 %v1004
  %4207 = vmatpush.msra.mxu0 %v996
  %4208 = vmatpush.msra.mxu0 %v988
  %4209 = vmatpush.msra.mxu0 %v980
  %4210 = vmatpush.msra.mxu0 %v972
  %4211 = vmatpush.msra.mxu0 %v964
  %4212 = vmatpush.msra.mxu0 %v956
  %4213 = vmatpush.msra.mxu0 %v948
  %4214 = vmatpush.msra.mxu0 %v940
  %4215 = vmatmul.f32.gmra.mxu0 %v4144
  %v4216 = vpop.f32.mrf.mxu0
  %v4217 = vadd.f32 0.0, %v4216
  %4218 = vdwg.mxu0
  %4219 = vmatpush.msra.mxu0 0.0
  %4220 = vmatpush.msra.mxu0 0.0
  %4221 = vmatpush.msra.mxu0 0.0
  %4222 = vmatpush.msra.mxu0 0.0
  %4223 = vmatpush.msra.mxu0 0.0
  %4224 = vmatpush.msra.mxu0 0.0
  %4225 = vmatpush.msra.mxu0 0.0
  %4226 = vmatpush.msra.mxu0 0.0
  %4227 = vmatpush.msra.mxu0 0.0
  %4228 = vmatpush.msra.mxu0 0.0
  %4229 = vmatpush.msra.mxu0 0.0
  %4230 = vmatpush.msra.mxu0 0.0
  %4231 = vmatpush.msra.mxu0 0.0
  %4232 = vmatpush.msra.mxu0 0.0
  %4233 = vmatpush.msra.mxu0 %v1076
  %4234 = vmatpush.msra.mxu0 %v1068
  %4235 = vmatmul.f32.gmra.mxu0 %v4157
  %v4236 = vpop.f32.mrf.mxu0
  %v4237 = vadd.f32 %v4217, %v4236
  %4238 = vdwg.mxu0
  %4239 = vmatpush.msra.mxu0 %v1061
  %4240 = vmatpush.msra.mxu0 %v1053
  %4241 = vmatpush.msra.mxu0 %v1045
  %4242 = vmatpush.msra.mxu0 %v1037
  %4243 = vmatpush.msra.mxu0 %v1029
  %4244 = vmatpush.msra.mxu0 %v1021
  %4245 = vmatpush.msra.mxu0 %v1013
  %4246 = vmatpush.msra.mxu0 %v1005
  %4247 = vmatpush.msra.mxu0 %v997
  %4248 = vmatpush.msra.mxu0 %v989
  %4249 = vmatpush.msra.mxu0 %v981
  %4250 = vmatpush.msra.mxu0 %v973
  %4251 = vmatpush.msra.mxu0 %v965
  %4252 = vmatpush.msra.mxu0 %v957
  %4253 = vmatpush.msra.mxu0 %v949
  %4254 = vmatpush.msra.mxu0 %v941
  %4255 = vmatmul.f32.gmra.mxu0 %v4144
  %v4256 = vpop.f32.mrf.mxu0
  %v4257 = vadd.f32 0.0, %v4256
  %4258 = vdwg.mxu0
  %4259 = vmatpush.msra.mxu0 0.0
  %4260 = vmatpush.msra.mxu0 0.0
  %4261 = vmatpush.msra.mxu0 0.0
  %4262 = vmatpush.msra.mxu0 0.0
  %4263 = vmatpush.msra.mxu0 0.0
  %4264 = vmatpush.msra.mxu0 0.0
  %4265 = vmatpush.msra.mxu0 0.0
  %4266 = vmatpush.msra.mxu0 0.0
  %4267 = vmatpush.msra.mxu0 0.0
  %4268 = vmatpush.msra.mxu0 0.0
  %4269 = vmatpush.msra.mxu0 0.0
  %4270 = vmatpush.msra.mxu0 0.0
  %4271 = vmatpush.msra.mxu0 0.0
  %4272 = vmatpush.msra.mxu0 0.0
  %4273 = vmatpush.msra.mxu0 %v1077
  %4274 = vmatpush.msra.mxu0 %v1069
  %4275 = vmatmul.f32.gmra.mxu0 %v4157
  %v4276 = vpop.f32.mrf.mxu0
  %v4277 = vadd.f32 %v4257, %v4276
  %4278 = vdwg.mxu0
  %4279 = vmatpush.msra.mxu0 %v1062
  %4280 = vmatpush.msra.mxu0 %v1054
  %4281 = vmatpush.msra.mxu0 %v1046
  %4282 = vmatpush.msra.mxu0 %v1038
  %4283 = vmatpush.msra.mxu0 %v1030
  %4284 = vmatpush.msra.mxu0 %v1022
  %4285 = vmatpush.msra.mxu0 %v1014
  %4286 = vmatpush.msra.mxu0 %v1006
  %4287 = vmatpush.msra.mxu0 %v998
  %4288 = vmatpush.msra.mxu0 %v990
  %4289 = vmatpush.msra.mxu0 %v982
  %4290 = vmatpush.msra.mxu0 %v974
  %4291 = vmatpush.msra.mxu0 %v966
  %4292 = vmatpush.msra.mxu0 %v958
  %4293 = vmatpush.msra.mxu0 %v950
  %4294 = vmatpush.msra.mxu0 %v942
  %4295 = vmatmul.f32.gmra.mxu0 %v4144
  %v4296 = vpop.f32.mrf.mxu0
  %v4297 = vadd.f32 0.0, %v4296
  %4298 = vdwg.mxu0
  %4299 = vmatpush.msra.mxu0 0.0
  %4300 = vmatpush.msra.mxu0 0.0
  %4301 = vmatpush.msra.mxu0 0.0
  %4302 = vmatpush.msra.mxu0 0.0
  %4303 = vmatpush.msra.mxu0 0.0
  %4304 = vmatpush.msra.mxu0 0.0
  %4305 = vmatpush.msra.mxu0 0.0
  %4306 = vmatpush.msra.mxu0 0.0
  %4307 = vmatpush.msra.mxu0 0.0
  %4308 = vmatpush.msra.mxu0 0.0
  %4309 = vmatpush.msra.mxu0 0.0
  %4310 = vmatpush.msra.mxu0 0.0
  %4311 = vmatpush.msra.mxu0 0.0
  %4312 = vmatpush.msra.mxu0 0.0
  %4313 = vmatpush.msra.mxu0 %v1078
  %4314 = vmatpush.msra.mxu0 %v1070
  %4315 = vmatmul.f32.gmra.mxu0 %v4157
  %v4316 = vpop.f32.mrf.mxu0
  %v4317 = vadd.f32 %v4297, %v4316
  %4318 = vdwg.mxu0
  %4319 = vmatpush.msra.mxu0 %v1063
  %4320 = vmatpush.msra.mxu0 %v1055
  %4321 = vmatpush.msra.mxu0 %v1047
  %4322 = vmatpush.msra.mxu0 %v1039
  %4323 = vmatpush.msra.mxu0 %v1031
  %4324 = vmatpush.msra.mxu0 %v1023
  %4325 = vmatpush.msra.mxu0 %v1015
  %4326 = vmatpush.msra.mxu0 %v1007
  %4327 = vmatpush.msra.mxu0 %v999
  %4328 = vmatpush.msra.mxu0 %v991
  %4329 = vmatpush.msra.mxu0 %v983
  %4330 = vmatpush.msra.mxu0 %v975
  %4331 = vmatpush.msra.mxu0 %v967
  %4332 = vmatpush.msra.mxu0 %v959
  %4333 = vmatpush.msra.mxu0 %v951
  %4334 = vmatpush.msra.mxu0 %v943
  %4335 = vmatmul.f32.gmra.mxu0 %v4144
  %v4336 = vpop.f32.mrf.mxu0
  %v4337 = vadd.f32 0.0, %v4336
  %4338 = vdwg.mxu0
  %4339 = vmatpush.msra.mxu0 0.0
  %4340 = vmatpush.msra.mxu0 0.0
  %4341 = vmatpush.msra.mxu0 0.0
  %4342 = vmatpush.msra.mxu0 0.0
  %4343 = vmatpush.msra.mxu0 0.0
  %4344 = vmatpush.msra.mxu0 0.0
  %4345 = vmatpush.msra.mxu0 0.0
  %4346 = vmatpush.msra.mxu0 0.0
  %4347 = vmatpush.msra.mxu0 0.0
  %4348 = vmatpush.msra.mxu0 0.0
  %4349 = vmatpush.msra.mxu0 0.0
  %4350 = vmatpush.msra.mxu0 0.0
  %4351 = vmatpush.msra.mxu0 0.0
  %4352 = vmatpush.msra.mxu0 0.0
  %4353 = vmatpush.msra.mxu0 %v1079
  %4354 = vmatpush.msra.mxu0 %v1071
  %4355 = vmatmul.f32.gmra.mxu0 %v4157
  %v4356 = vpop.f32.mrf.mxu0
  %v4357 = vadd.f32 %v4337, %v4356
  %4358 = vdwg.mxu0
  %4359 = vmatpush.msra.mxu0 %v1064
  %4360 = vmatpush.msra.mxu0 %v1056
  %4361 = vmatpush.msra.mxu0 %v1048
  %4362 = vmatpush.msra.mxu0 %v1040
  %4363 = vmatpush.msra.mxu0 %v1032
  %4364 = vmatpush.msra.mxu0 %v1024
  %4365 = vmatpush.msra.mxu0 %v1016
  %4366 = vmatpush.msra.mxu0 %v1008
  %4367 = vmatpush.msra.mxu0 %v1000
  %4368 = vmatpush.msra.mxu0 %v992
  %4369 = vmatpush.msra.mxu0 %v984
  %4370 = vmatpush.msra.mxu0 %v976
  %4371 = vmatpush.msra.mxu0 %v968
  %4372 = vmatpush.msra.mxu0 %v960
  %4373 = vmatpush.msra.mxu0 %v952
  %4374 = vmatpush.msra.mxu0 %v944
  %4375 = vmatmul.f32.gmra.mxu0 %v4144
  %v4376 = vpop.f32.mrf.mxu0
  %v4377 = vadd.f32 0.0, %v4376
  %4378 = vdwg.mxu0
  %4379 = vmatpush.msra.mxu0 0.0
  %4380 = vmatpush.msra.mxu0 0.0
  %4381 = vmatpush.msra.mxu0 0.0
  %4382 = vmatpush.msra.mxu0 0.0
  %4383 = vmatpush.msra.mxu0 0.0
  %4384 = vmatpush.msra.mxu0 0.0
  %4385 = vmatpush.msra.mxu0 0.0
  %4386 = vmatpush.msra.mxu0 0.0
  %4387 = vmatpush.msra.mxu0 0.0
  %4388 = vmatpush.msra.mxu0 0.0
  %4389 = vmatpush.msra.mxu0 0.0
  %4390 = vmatpush.msra.mxu0 0.0
  %4391 = vmatpush.msra.mxu0 0.0
  %4392 = vmatpush.msra.mxu0 0.0
  %4393 = vmatpush.msra.mxu0 %v1080
  %4394 = vmatpush.msra.mxu0 %v1072
  %4395 = vmatmul.f32.gmra.mxu0 %v4157
  %v4396 = vpop.f32.mrf.mxu0
  %v4397 = vadd.f32 %v4377, %v4396
  %4398 = vdwg.mxu0
  %4399 = vmatpush.msra.mxu0 %v1065
  %4400 = vmatpush.msra.mxu0 %v1057
  %4401 = vmatpush.msra.mxu0 %v1049
  %4402 = vmatpush.msra.mxu0 %v1041
  %4403 = vmatpush.msra.mxu0 %v1033
  %4404 = vmatpush.msra.mxu0 %v1025
  %4405 = vmatpush.msra.mxu0 %v1017
  %4406 = vmatpush.msra.mxu0 %v1009
  %4407 = vmatpush.msra.mxu0 %v1001
  %4408 = vmatpush.msra.mxu0 %v993
  %4409 = vmatpush.msra.mxu0 %v985
  %4410 = vmatpush.msra.mxu0 %v977
  %4411 = vmatpush.msra.mxu0 %v969
  %4412 = vmatpush.msra.mxu0 %v961
  %4413 = vmatpush.msra.mxu0 %v953
  %4414 = vmatpush.msra.mxu0 %v945
  %4415 = vmatmul.f32.gmra.mxu0 %v4144
  %v4416 = vpop.f32.mrf.mxu0
  %v4417 = vadd.f32 0.0, %v4416
  %4418 = vdwg.mxu0
  %4419 = vmatpush.msra.mxu0 0.0
  %4420 = vmatpush.msra.mxu0 0.0
  %4421 = vmatpush.msra.mxu0 0.0
  %4422 = vmatpush.msra.mxu0 0.0
  %4423 = vmatpush.msra.mxu0 0.0
  %4424 = vmatpush.msra.mxu0 0.0
  %4425 = vmatpush.msra.mxu0 0.0
  %4426 = vmatpush.msra.mxu0 0.0
  %4427 = vmatpush.msra.mxu0 0.0
  %4428 = vmatpush.msra.mxu0 0.0
  %4429 = vmatpush.msra.mxu0 0.0
  %4430 = vmatpush.msra.mxu0 0.0
  %4431 = vmatpush.msra.mxu0 0.0
  %4432 = vmatpush.msra.mxu0 0.0
  %4433 = vmatpush.msra.mxu0 %v1081
  %4434 = vmatpush.msra.mxu0 %v1073
  %4435 = vmatmul.f32.gmra.mxu0 %v4157
  %v4436 = vpop.f32.mrf.mxu0
  %v4437 = vadd.f32 %v4417, %v4436
  %4438 = vdwg.mxu0
  %4439 = vmatpush.msra.mxu0 %v1066
  %4440 = vmatpush.msra.mxu0 %v1058
  %4441 = vmatpush.msra.mxu0 %v1050
  %4442 = vmatpush.msra.mxu0 %v1042
  %4443 = vmatpush.msra.mxu0 %v1034
  %4444 = vmatpush.msra.mxu0 %v1026
  %4445 = vmatpush.msra.mxu0 %v1018
  %4446 = vmatpush.msra.mxu0 %v1010
  %4447 = vmatpush.msra.mxu0 %v1002
  %4448 = vmatpush.msra.mxu0 %v994
  %4449 = vmatpush.msra.mxu0 %v986
  %4450 = vmatpush.msra.mxu0 %v978
  %4451 = vmatpush.msra.mxu0 %v970
  %4452 = vmatpush.msra.mxu0 %v962
  %4453 = vmatpush.msra.mxu0 %v954
  %4454 = vmatpush.msra.mxu0 %v946
  %4455 = vmatmul.f32.gmra.mxu0 %v4144
  %v4456 = vpop.f32.mrf.mxu0
  %v4457 = vadd.f32 0.0, %v4456
  %4458 = vdwg.mxu0
  %4459 = vmatpush.msra.mxu0 0.0
  %4460 = vmatpush.msra.mxu0 0.0
  %4461 = vmatpush.msra.mxu0 0.0
  %4462 = vmatpush.msra.mxu0 0.0
  %4463 = vmatpush.msra.mxu0 0.0
  %4464 = vmatpush.msra.mxu0 0.0
  %4465 = vmatpush.msra.mxu0 0.0
  %4466 = vmatpush.msra.mxu0 0.0
  %4467 = vmatpush.msra.mxu0 0.0
  %4468 = vmatpush.msra.mxu0 0.0
  %4469 = vmatpush.msra.mxu0 0.0
  %4470 = vmatpush.msra.mxu0 0.0
  %4471 = vmatpush.msra.mxu0 0.0
  %4472 = vmatpush.msra.mxu0 0.0
  %4473 = vmatpush.msra.mxu0 %v1082
  %4474 = vmatpush.msra.mxu0 %v1074
  %4475 = vmatmul.f32.gmra.mxu0 %v4157
  %v4476 = vpop.f32.mrf.mxu0
  %v4477 = vadd.f32 %v4457, %v4476
  %4478 = vdwg.mxu0
  %v4479 = vadd.f32 %v4148, %v4197
  %v4480 = vadd.f32 %v4149, %v4237
  %v4481 = vadd.f32 %v4150, %v4277
  %v4482 = vadd.f32 %v4151, %v4317
  %v4483 = vadd.f32 %v4152, %v4357
  %v4484 = vadd.f32 %v4153, %v4397
  %v4485 = vadd.f32 %v4154, %v4437
  %v4486 = vadd.f32 %v4155, %v4477
  %v4487 = vsub.f32 0.0, %v4479
  %v4488 = vsub.f32 0.0, %v4480
  %v4489 = vmul.f32 %v4487, 1.442695
  %v4490 = vpow.pop %v4489
  %v4491 = vmul.f32 %v4488, 1.442695
  %v4492 = vpow.pop %v4491
  %v4493 = vadd.f32 %v4490, 1.0
  %v4494 = vadd.f32 %v4492, 1.0
  %v4495 = vrcp.pop %v4493
  %v4496 = vrcp.pop %v4494
  %v4497 = vsub.f32 0.0, %v4481
  %v4498 = vsub.f32 0.0, %v4482
  %v4499 = vmul.f32 %v4497, 1.442695
  %v4500 = vpow.pop %v4499
  %v4501 = vmul.f32 %v4498, 1.442695
  %v4502 = vpow.pop %v4501
  %v4503 = vadd.f32 %v4500, 1.0
  %v4504 = vadd.f32 %v4502, 1.0
  %v4505 = vrcp.pop %v4503
  %v4506 = vrcp.pop %v4504
  %v4507 = vtanh.pop %v4483
  %v4508 = vtanh.pop %v4484
  %v4509 = vsub.f32 0.0, %v4485
  %v4510 = vsub.f32 0.0, %v4486
  %v4511 = vmul.f32 %v4509, 1.442695
  %v4512 = vpow.pop %v4511
  %v4513 = vmul.f32 %v4510, 1.442695
  %v4514 = vpow.pop %v4513
  %v4515 = vadd.f32 %v4512, 1.0
  %v4516 = vadd.f32 %v4514, 1.0
  %v4517 = vrcp.pop %v4515
  %v4518 = vrcp.pop %v4516
  %v4519 = vmul.f32 %v4505, %v4140
  %v4520 = vmul.f32 %v4506, %v4141
  %v4521 = vmul.f32 %v4495, %v4507
  %v4522 = vmul.f32 %v4496, %v4508
  %v4523 = vadd.f32 %v4519, %v4521
  %v4524 = vadd.f32 %v4520, %v4522
  %v4525 = vtanh.pop %v4523
  %v4526 = vtanh.pop %v4524
  %v4527 = vmul.f32 %v4517, %v4525
  %v4528 = vmul.f32 %v4518, %v4526
  %4529 = vst [vmem:[#allocation3 + $0x80] sm:$0xff] %v4527
  %4530 = vst.msk [vmem:[#allocation3 + $0x88] sm:$0xff] %vm1091, %v4528
  %v4531 = vld [vmem:[#allocation2 + $0x240] sm:$0xff]
  %v4532 = vld [vmem:[#allocation2 + $0x248] sm:$0xff]
  %v4533 = vld [vmem:[#allocation2 + $0x250] sm:$0xff]
  %v4534 = vld [vmem:[#allocation2 + $0x258] sm:$0xff]
  %v4535 = vld [vmem:[#allocation2 + $0x260] sm:$0xff]
  %v4536 = vld [vmem:[#allocation2 + $0x268] sm:$0xff]
  %v4537 = vld [vmem:[#allocation2 + $0x270] sm:$0xff]
  %v4538 = vld [vmem:[#allocation2 + $0x278] sm:$0xff]
  %v4540 = vsel %vm1091, %v4528, 0
  %4542 = vmatpush.msra.mxu0 %v1059
  %4543 = vmatpush.msra.mxu0 %v1051
  %4544 = vmatpush.msra.mxu0 %v1043
  %4545 = vmatpush.msra.mxu0 %v1035
  %4546 = vmatpush.msra.mxu0 %v1027
  %4547 = vmatpush.msra.mxu0 %v1019
  %4548 = vmatpush.msra.mxu0 %v1011
  %4549 = vmatpush.msra.mxu0 %v1003
  %4550 = vmatpush.msra.mxu0 %v995
  %4551 = vmatpush.msra.mxu0 %v987
  %4552 = vmatpush.msra.mxu0 %v979
  %4553 = vmatpush.msra.mxu0 %v971
  %4554 = vmatpush.msra.mxu0 %v963
  %4555 = vmatpush.msra.mxu0 %v955
  %4556 = vmatpush.msra.mxu0 %v947
  %4557 = vmatpush.msra.mxu0 %v939
  %4558 = vmatmul.f32.gmra.mxu0 %v4527
  %v4559 = vpop.f32.mrf.mxu0
  %v4560 = vadd.f32 0.0, %v4559
  %4561 = vdwg.mxu0
  %4562 = vmatpush.msra.mxu0 0.0
  %4563 = vmatpush.msra.mxu0 0.0
  %4564 = vmatpush.msra.mxu0 0.0
  %4565 = vmatpush.msra.mxu0 0.0
  %4566 = vmatpush.msra.mxu0 0.0
  %4567 = vmatpush.msra.mxu0 0.0
  %4568 = vmatpush.msra.mxu0 0.0
  %4569 = vmatpush.msra.mxu0 0.0
  %4570 = vmatpush.msra.mxu0 0.0
  %4571 = vmatpush.msra.mxu0 0.0
  %4572 = vmatpush.msra.mxu0 0.0
  %4573 = vmatpush.msra.mxu0 0.0
  %4574 = vmatpush.msra.mxu0 0.0
  %4575 = vmatpush.msra.mxu0 0.0
  %4576 = vmatpush.msra.mxu0 %v1075
  %4577 = vmatpush.msra.mxu0 %v1067
  %4578 = vmatmul.f32.gmra.mxu0 %v4540
  %v4579 = vpop.f32.mrf.mxu0
  %v4580 = vadd.f32 %v4560, %v4579
  %4581 = vdwg.mxu0
  %4582 = vmatpush.msra.mxu0 %v1060
  %4583 = vmatpush.msra.mxu0 %v1052
  %4584 = vmatpush.msra.mxu0 %v1044
  %4585 = vmatpush.msra.mxu0 %v1036
  %4586 = vmatpush.msra.mxu0 %v1028
  %4587 = vmatpush.msra.mxu0 %v1020
  %4588 = vmatpush.msra.mxu0 %v1012
  %4589 = vmatpush.msra.mxu0 %v1004
  %4590 = vmatpush.msra.mxu0 %v996
  %4591 = vmatpush.msra.mxu0 %v988
  %4592 = vmatpush.msra.mxu0 %v980
  %4593 = vmatpush.msra.mxu0 %v972
  %4594 = vmatpush.msra.mxu0 %v964
  %4595 = vmatpush.msra.mxu0 %v956
  %4596 = vmatpush.msra.mxu0 %v948
  %4597 = vmatpush.msra.mxu0 %v940
  %4598 = vmatmul.f32.gmra.mxu0 %v4527
  %v4599 = vpop.f32.mrf.mxu0
  %v4600 = vadd.f32 0.0, %v4599
  %4601 = vdwg.mxu0
  %4602 = vmatpush.msra.mxu0 0.0
  %4603 = vmatpush.msra.mxu0 0.0
  %4604 = vmatpush.msra.mxu0 0.0
  %4605 = vmatpush.msra.mxu0 0.0
  %4606 = vmatpush.msra.mxu0 0.0
  %4607 = vmatpush.msra.mxu0 0.0
  %4608 = vmatpush.msra.mxu0 0.0
  %4609 = vmatpush.msra.mxu0 0.0
  %4610 = vmatpush.msra.mxu0 0.0
  %4611 = vmatpush.msra.mxu0 0.0
  %4612 = vmatpush.msra.mxu0 0.0
  %4613 = vmatpush.msra.mxu0 0.0
  %4614 = vmatpush.msra.mxu0 0.0
  %4615 = vmatpush.msra.mxu0 0.0
  %4616 = vmatpush.msra.mxu0 %v1076
  %4617 = vmatpush.msra.mxu0 %v1068
  %4618 = vmatmul.f32.gmra.mxu0 %v4540
  %v4619 = vpop.f32.mrf.mxu0
  %v4620 = vadd.f32 %v4600, %v4619
  %4621 = vdwg.mxu0
  %4622 = vmatpush.msra.mxu0 %v1061
  %4623 = vmatpush.msra.mxu0 %v1053
  %4624 = vmatpush.msra.mxu0 %v1045
  %4625 = vmatpush.msra.mxu0 %v1037
  %4626 = vmatpush.msra.mxu0 %v1029
  %4627 = vmatpush.msra.mxu0 %v1021
  %4628 = vmatpush.msra.mxu0 %v1013
  %4629 = vmatpush.msra.mxu0 %v1005
  %4630 = vmatpush.msra.mxu0 %v997
  %4631 = vmatpush.msra.mxu0 %v989
  %4632 = vmatpush.msra.mxu0 %v981
  %4633 = vmatpush.msra.mxu0 %v973
  %4634 = vmatpush.msra.mxu0 %v965
  %4635 = vmatpush.msra.mxu0 %v957
  %4636 = vmatpush.msra.mxu0 %v949
  %4637 = vmatpush.msra.mxu0 %v941
  %4638 = vmatmul.f32.gmra.mxu0 %v4527
  %v4639 = vpop.f32.mrf.mxu0
  %v4640 = vadd.f32 0.0, %v4639
  %4641 = vdwg.mxu0
  %4642 = vmatpush.msra.mxu0 0.0
  %4643 = vmatpush.msra.mxu0 0.0
  %4644 = vmatpush.msra.mxu0 0.0
  %4645 = vmatpush.msra.mxu0 0.0
  %4646 = vmatpush.msra.mxu0 0.0
  %4647 = vmatpush.msra.mxu0 0.0
  %4648 = vmatpush.msra.mxu0 0.0
  %4649 = vmatpush.msra.mxu0 0.0
  %4650 = vmatpush.msra.mxu0 0.0
  %4651 = vmatpush.msra.mxu0 0.0
  %4652 = vmatpush.msra.mxu0 0.0
  %4653 = vmatpush.msra.mxu0 0.0
  %4654 = vmatpush.msra.mxu0 0.0
  %4655 = vmatpush.msra.mxu0 0.0
  %4656 = vmatpush.msra.mxu0 %v1077
  %4657 = vmatpush.msra.mxu0 %v1069
  %4658 = vmatmul.f32.gmra.mxu0 %v4540
  %v4659 = vpop.f32.mrf.mxu0
  %v4660 = vadd.f32 %v4640, %v4659
  %4661 = vdwg.mxu0
  %4662 = vmatpush.msra.mxu0 %v1062
  %4663 = vmatpush.msra.mxu0 %v1054
  %4664 = vmatpush.msra.mxu0 %v1046
  %4665 = vmatpush.msra.mxu0 %v1038
  %4666 = vmatpush.msra.mxu0 %v1030
  %4667 = vmatpush.msra.mxu0 %v1022
  %4668 = vmatpush.msra.mxu0 %v1014
  %4669 = vmatpush.msra.mxu0 %v1006
  %4670 = vmatpush.msra.mxu0 %v998
  %4671 = vmatpush.msra.mxu0 %v990
  %4672 = vmatpush.msra.mxu0 %v982
  %4673 = vmatpush.msra.mxu0 %v974
  %4674 = vmatpush.msra.mxu0 %v966
  %4675 = vmatpush.msra.mxu0 %v958
  %4676 = vmatpush.msra.mxu0 %v950
  %4677 = vmatpush.msra.mxu0 %v942
  %4678 = vmatmul.f32.gmra.mxu0 %v4527
  %v4679 = vpop.f32.mrf.mxu0
  %v4680 = vadd.f32 0.0, %v4679
  %4681 = vdwg.mxu0
  %4682 = vmatpush.msra.mxu0 0.0
  %4683 = vmatpush.msra.mxu0 0.0
  %4684 = vmatpush.msra.mxu0 0.0
  %4685 = vmatpush.msra.mxu0 0.0
  %4686 = vmatpush.msra.mxu0 0.0
  %4687 = vmatpush.msra.mxu0 0.0
  %4688 = vmatpush.msra.mxu0 0.0
  %4689 = vmatpush.msra.mxu0 0.0
  %4690 = vmatpush.msra.mxu0 0.0
  %4691 = vmatpush.msra.mxu0 0.0
  %4692 = vmatpush.msra.mxu0 0.0
  %4693 = vmatpush.msra.mxu0 0.0
  %4694 = vmatpush.msra.mxu0 0.0
  %4695 = vmatpush.msra.mxu0 0.0
  %4696 = vmatpush.msra.mxu0 %v1078
  %4697 = vmatpush.msra.mxu0 %v1070
  %4698 = vmatmul.f32.gmra.mxu0 %v4540
  %v4699 = vpop.f32.mrf.mxu0
  %v4700 = vadd.f32 %v4680, %v4699
  %4701 = vdwg.mxu0
  %4702 = vmatpush.msra.mxu0 %v1063
  %4703 = vmatpush.msra.mxu0 %v1055
  %4704 = vmatpush.msra.mxu0 %v1047
  %4705 = vmatpush.msra.mxu0 %v1039
  %4706 = vmatpush.msra.mxu0 %v1031
  %4707 = vmatpush.msra.mxu0 %v1023
  %4708 = vmatpush.msra.mxu0 %v1015
  %4709 = vmatpush.msra.mxu0 %v1007
  %4710 = vmatpush.msra.mxu0 %v999
  %4711 = vmatpush.msra.mxu0 %v991
  %4712 = vmatpush.msra.mxu0 %v983
  %4713 = vmatpush.msra.mxu0 %v975
  %4714 = vmatpush.msra.mxu0 %v967
  %4715 = vmatpush.msra.mxu0 %v959
  %4716 = vmatpush.msra.mxu0 %v951
  %4717 = vmatpush.msra.mxu0 %v943
  %4718 = vmatmul.f32.gmra.mxu0 %v4527
  %v4719 = vpop.f32.mrf.mxu0
  %v4720 = vadd.f32 0.0, %v4719
  %4721 = vdwg.mxu0
  %4722 = vmatpush.msra.mxu0 0.0
  %4723 = vmatpush.msra.mxu0 0.0
  %4724 = vmatpush.msra.mxu0 0.0
  %4725 = vmatpush.msra.mxu0 0.0
  %4726 = vmatpush.msra.mxu0 0.0
  %4727 = vmatpush.msra.mxu0 0.0
  %4728 = vmatpush.msra.mxu0 0.0
  %4729 = vmatpush.msra.mxu0 0.0
  %4730 = vmatpush.msra.mxu0 0.0
  %4731 = vmatpush.msra.mxu0 0.0
  %4732 = vmatpush.msra.mxu0 0.0
  %4733 = vmatpush.msra.mxu0 0.0
  %4734 = vmatpush.msra.mxu0 0.0
  %4735 = vmatpush.msra.mxu0 0.0
  %4736 = vmatpush.msra.mxu0 %v1079
  %4737 = vmatpush.msra.mxu0 %v1071
  %4738 = vmatmul.f32.gmra.mxu0 %v4540
  %v4739 = vpop.f32.mrf.mxu0
  %v4740 = vadd.f32 %v4720, %v4739
  %4741 = vdwg.mxu0
  %4742 = vmatpush.msra.mxu0 %v1064
  %4743 = vmatpush.msra.mxu0 %v1056
  %4744 = vmatpush.msra.mxu0 %v1048
  %4745 = vmatpush.msra.mxu0 %v1040
  %4746 = vmatpush.msra.mxu0 %v1032
  %4747 = vmatpush.msra.mxu0 %v1024
  %4748 = vmatpush.msra.mxu0 %v1016
  %4749 = vmatpush.msra.mxu0 %v1008
  %4750 = vmatpush.msra.mxu0 %v1000
  %4751 = vmatpush.msra.mxu0 %v992
  %4752 = vmatpush.msra.mxu0 %v984
  %4753 = vmatpush.msra.mxu0 %v976
  %4754 = vmatpush.msra.mxu0 %v968
  %4755 = vmatpush.msra.mxu0 %v960
  %4756 = vmatpush.msra.mxu0 %v952
  %4757 = vmatpush.msra.mxu0 %v944
  %4758 = vmatmul.f32.gmra.mxu0 %v4527
  %v4759 = vpop.f32.mrf.mxu0
  %v4760 = vadd.f32 0.0, %v4759
  %4761 = vdwg.mxu0
  %4762 = vmatpush.msra.mxu0 0.0
  %4763 = vmatpush.msra.mxu0 0.0
  %4764 = vmatpush.msra.mxu0 0.0
  %4765 = vmatpush.msra.mxu0 0.0
  %4766 = vmatpush.msra.mxu0 0.0
  %4767 = vmatpush.msra.mxu0 0.0
  %4768 = vmatpush.msra.mxu0 0.0
  %4769 = vmatpush.msra.mxu0 0.0
  %4770 = vmatpush.msra.mxu0 0.0
  %4771 = vmatpush.msra.mxu0 0.0
  %4772 = vmatpush.msra.mxu0 0.0
  %4773 = vmatpush.msra.mxu0 0.0
  %4774 = vmatpush.msra.mxu0 0.0
  %4775 = vmatpush.msra.mxu0 0.0
  %4776 = vmatpush.msra.mxu0 %v1080
  %4777 = vmatpush.msra.mxu0 %v1072
  %4778 = vmatmul.f32.gmra.mxu0 %v4540
  %v4779 = vpop.f32.mrf.mxu0
  %v4780 = vadd.f32 %v4760, %v4779
  %4781 = vdwg.mxu0
  %4782 = vmatpush.msra.mxu0 %v1065
  %4783 = vmatpush.msra.mxu0 %v1057
  %4784 = vmatpush.msra.mxu0 %v1049
  %4785 = vmatpush.msra.mxu0 %v1041
  %4786 = vmatpush.msra.mxu0 %v1033
  %4787 = vmatpush.msra.mxu0 %v1025
  %4788 = vmatpush.msra.mxu0 %v1017
  %4789 = vmatpush.msra.mxu0 %v1009
  %4790 = vmatpush.msra.mxu0 %v1001
  %4791 = vmatpush.msra.mxu0 %v993
  %4792 = vmatpush.msra.mxu0 %v985
  %4793 = vmatpush.msra.mxu0 %v977
  %4794 = vmatpush.msra.mxu0 %v969
  %4795 = vmatpush.msra.mxu0 %v961
  %4796 = vmatpush.msra.mxu0 %v953
  %4797 = vmatpush.msra.mxu0 %v945
  %4798 = vmatmul.f32.gmra.mxu0 %v4527
  %v4799 = vpop.f32.mrf.mxu0
  %v4800 = vadd.f32 0.0, %v4799
  %4801 = vdwg.mxu0
  %4802 = vmatpush.msra.mxu0 0.0
  %4803 = vmatpush.msra.mxu0 0.0
  %4804 = vmatpush.msra.mxu0 0.0
  %4805 = vmatpush.msra.mxu0 0.0
  %4806 = vmatpush.msra.mxu0 0.0
  %4807 = vmatpush.msra.mxu0 0.0
  %4808 = vmatpush.msra.mxu0 0.0
  %4809 = vmatpush.msra.mxu0 0.0
  %4810 = vmatpush.msra.mxu0 0.0
  %4811 = vmatpush.msra.mxu0 0.0
  %4812 = vmatpush.msra.mxu0 0.0
  %4813 = vmatpush.msra.mxu0 0.0
  %4814 = vmatpush.msra.mxu0 0.0
  %4815 = vmatpush.msra.mxu0 0.0
  %4816 = vmatpush.msra.mxu0 %v1081
  %4817 = vmatpush.msra.mxu0 %v1073
  %4818 = vmatmul.f32.gmra.mxu0 %v4540
  %v4819 = vpop.f32.mrf.mxu0
  %v4820 = vadd.f32 %v4800, %v4819
  %4821 = vdwg.mxu0
  %4822 = vmatpush.msra.mxu0 %v1066
  %4823 = vmatpush.msra.mxu0 %v1058
  %4824 = vmatpush.msra.mxu0 %v1050
  %4825 = vmatpush.msra.mxu0 %v1042
  %4826 = vmatpush.msra.mxu0 %v1034
  %4827 = vmatpush.msra.mxu0 %v1026
  %4828 = vmatpush.msra.mxu0 %v1018
  %4829 = vmatpush.msra.mxu0 %v1010
  %4830 = vmatpush.msra.mxu0 %v1002
  %4831 = vmatpush.msra.mxu0 %v994
  %4832 = vmatpush.msra.mxu0 %v986
  %4833 = vmatpush.msra.mxu0 %v978
  %4834 = vmatpush.msra.mxu0 %v970
  %4835 = vmatpush.msra.mxu0 %v962
  %4836 = vmatpush.msra.mxu0 %v954
  %4837 = vmatpush.msra.mxu0 %v946
  %4838 = vmatmul.f32.gmra.mxu0 %v4527
  %v4839 = vpop.f32.mrf.mxu0
  %v4840 = vadd.f32 0.0, %v4839
  %4841 = vdwg.mxu0
  %4842 = vmatpush.msra.mxu0 0.0
  %4843 = vmatpush.msra.mxu0 0.0
  %4844 = vmatpush.msra.mxu0 0.0
  %4845 = vmatpush.msra.mxu0 0.0
  %4846 = vmatpush.msra.mxu0 0.0
  %4847 = vmatpush.msra.mxu0 0.0
  %4848 = vmatpush.msra.mxu0 0.0
  %4849 = vmatpush.msra.mxu0 0.0
  %4850 = vmatpush.msra.mxu0 0.0
  %4851 = vmatpush.msra.mxu0 0.0
  %4852 = vmatpush.msra.mxu0 0.0
  %4853 = vmatpush.msra.mxu0 0.0
  %4854 = vmatpush.msra.mxu0 0.0
  %4855 = vmatpush.msra.mxu0 0.0
  %4856 = vmatpush.msra.mxu0 %v1082
  %4857 = vmatpush.msra.mxu0 %v1074
  %4858 = vmatmul.f32.gmra.mxu0 %v4540
  %v4859 = vpop.f32.mrf.mxu0
  %v4860 = vadd.f32 %v4840, %v4859
  %4861 = vdwg.mxu0
  %v4862 = vadd.f32 %v4531, %v4580
  %v4863 = vadd.f32 %v4532, %v4620
  %v4864 = vadd.f32 %v4533, %v4660
  %v4865 = vadd.f32 %v4534, %v4700
  %v4866 = vadd.f32 %v4535, %v4740
  %v4867 = vadd.f32 %v4536, %v4780
  %v4868 = vadd.f32 %v4537, %v4820
  %v4869 = vadd.f32 %v4538, %v4860
  %v4870 = vsub.f32 0.0, %v4862
  %v4871 = vsub.f32 0.0, %v4863
  %v4872 = vmul.f32 %v4870, 1.442695
  %v4873 = vpow.pop %v4872
  %v4874 = vmul.f32 %v4871, 1.442695
  %v4875 = vpow.pop %v4874
  %v4876 = vadd.f32 %v4873, 1.0
  %v4877 = vadd.f32 %v4875, 1.0
  %v4878 = vrcp.pop %v4876
  %v4879 = vrcp.pop %v4877
  %v4880 = vsub.f32 0.0, %v4864
  %v4881 = vsub.f32 0.0, %v4865
  %v4882 = vmul.f32 %v4880, 1.442695
  %v4883 = vpow.pop %v4882
  %v4884 = vmul.f32 %v4881, 1.442695
  %v4885 = vpow.pop %v4884
  %v4886 = vadd.f32 %v4883, 1.0
  %v4887 = vadd.f32 %v4885, 1.0
  %v4888 = vrcp.pop %v4886
  %v4889 = vrcp.pop %v4887
  %v4890 = vtanh.pop %v4866
  %v4891 = vtanh.pop %v4867
  %v4892 = vsub.f32 0.0, %v4868
  %v4893 = vsub.f32 0.0, %v4869
  %v4894 = vmul.f32 %v4892, 1.442695
  %v4895 = vpow.pop %v4894
  %v4896 = vmul.f32 %v4893, 1.442695
  %v4897 = vpow.pop %v4896
  %v4898 = vadd.f32 %v4895, 1.0
  %v4899 = vadd.f32 %v4897, 1.0
  %v4900 = vrcp.pop %v4898
  %v4901 = vrcp.pop %v4899
  %v4902 = vmul.f32 %v4888, %v4523
  %v4903 = vmul.f32 %v4889, %v4524
  %v4904 = vmul.f32 %v4878, %v4890
  %v4905 = vmul.f32 %v4879, %v4891
  %v4906 = vadd.f32 %v4902, %v4904
  %v4907 = vadd.f32 %v4903, %v4905
  %v4908 = vtanh.pop %v4906
  %v4909 = vtanh.pop %v4907
  %v4910 = vmul.f32 %v4900, %v4908
  %v4911 = vmul.f32 %v4901, %v4909
  %4912 = vst [vmem:[#allocation3 + $0x90] sm:$0xff] %v4910
  %4913 = vst.msk [vmem:[#allocation3 + $0x98] sm:$0xff] %vm1091, %v4911
  %v4914 = vld [vmem:[#allocation2 + $0x280] sm:$0xff]
  %v4915 = vld [vmem:[#allocation2 + $0x288] sm:$0xff]
  %v4916 = vld [vmem:[#allocation2 + $0x290] sm:$0xff]
  %v4917 = vld [vmem:[#allocation2 + $0x298] sm:$0xff]
  %v4918 = vld [vmem:[#allocation2 + $0x2a0] sm:$0xff]
  %v4919 = vld [vmem:[#allocation2 + $0x2a8] sm:$0xff]
  %v4920 = vld [vmem:[#allocation2 + $0x2b0] sm:$0xff]
  %v4921 = vld [vmem:[#allocation2 + $0x2b8] sm:$0xff]
  %v4923 = vsel %vm1091, %v4911, 0
  %4925 = vmatpush.msra.mxu0 %v1059
  %4926 = vmatpush.msra.mxu0 %v1051
  %4927 = vmatpush.msra.mxu0 %v1043
  %4928 = vmatpush.msra.mxu0 %v1035
  %4929 = vmatpush.msra.mxu0 %v1027
  %4930 = vmatpush.msra.mxu0 %v1019
  %4931 = vmatpush.msra.mxu0 %v1011
  %4932 = vmatpush.msra.mxu0 %v1003
  %4933 = vmatpush.msra.mxu0 %v995
  %4934 = vmatpush.msra.mxu0 %v987
  %4935 = vmatpush.msra.mxu0 %v979
  %4936 = vmatpush.msra.mxu0 %v971
  %4937 = vmatpush.msra.mxu0 %v963
  %4938 = vmatpush.msra.mxu0 %v955
  %4939 = vmatpush.msra.mxu0 %v947
  %4940 = vmatpush.msra.mxu0 %v939
  %4941 = vmatmul.f32.gmra.mxu0 %v4910
  %v4942 = vpop.f32.mrf.mxu0
  %v4943 = vadd.f32 0.0, %v4942
  %4944 = vdwg.mxu0
  %4945 = vmatpush.msra.mxu0 0.0
  %4946 = vmatpush.msra.mxu0 0.0
  %4947 = vmatpush.msra.mxu0 0.0
  %4948 = vmatpush.msra.mxu0 0.0
  %4949 = vmatpush.msra.mxu0 0.0
  %4950 = vmatpush.msra.mxu0 0.0
  %4951 = vmatpush.msra.mxu0 0.0
  %4952 = vmatpush.msra.mxu0 0.0
  %4953 = vmatpush.msra.mxu0 0.0
  %4954 = vmatpush.msra.mxu0 0.0
  %4955 = vmatpush.msra.mxu0 0.0
  %4956 = vmatpush.msra.mxu0 0.0
  %4957 = vmatpush.msra.mxu0 0.0
  %4958 = vmatpush.msra.mxu0 0.0
  %4959 = vmatpush.msra.mxu0 %v1075
  %4960 = vmatpush.msra.mxu0 %v1067
  %4961 = vmatmul.f32.gmra.mxu0 %v4923
  %v4962 = vpop.f32.mrf.mxu0
  %v4963 = vadd.f32 %v4943, %v4962
  %4964 = vdwg.mxu0
  %4965 = vmatpush.msra.mxu0 %v1060
  %4966 = vmatpush.msra.mxu0 %v1052
  %4967 = vmatpush.msra.mxu0 %v1044
  %4968 = vmatpush.msra.mxu0 %v1036
  %4969 = vmatpush.msra.mxu0 %v1028
  %4970 = vmatpush.msra.mxu0 %v1020
  %4971 = vmatpush.msra.mxu0 %v1012
  %4972 = vmatpush.msra.mxu0 %v1004
  %4973 = vmatpush.msra.mxu0 %v996
  %4974 = vmatpush.msra.mxu0 %v988
  %4975 = vmatpush.msra.mxu0 %v980
  %4976 = vmatpush.msra.mxu0 %v972
  %4977 = vmatpush.msra.mxu0 %v964
  %4978 = vmatpush.msra.mxu0 %v956
  %4979 = vmatpush.msra.mxu0 %v948
  %4980 = vmatpush.msra.mxu0 %v940
  %4981 = vmatmul.f32.gmra.mxu0 %v4910
  %v4982 = vpop.f32.mrf.mxu0
  %v4983 = vadd.f32 0.0, %v4982
  %4984 = vdwg.mxu0
  %4985 = vmatpush.msra.mxu0 0.0
  %4986 = vmatpush.msra.mxu0 0.0
  %4987 = vmatpush.msra.mxu0 0.0
  %4988 = vmatpush.msra.mxu0 0.0
  %4989 = vmatpush.msra.mxu0 0.0
  %4990 = vmatpush.msra.mxu0 0.0
  %4991 = vmatpush.msra.mxu0 0.0
  %4992 = vmatpush.msra.mxu0 0.0
  %4993 = vmatpush.msra.mxu0 0.0
  %4994 = vmatpush.msra.mxu0 0.0
  %4995 = vmatpush.msra.mxu0 0.0
  %4996 = vmatpush.msra.mxu0 0.0
  %4997 = vmatpush.msra.mxu0 0.0
  %4998 = vmatpush.msra.mxu0 0.0
  %4999 = vmatpush.msra.mxu0 %v1076
  %5000 = vmatpush.msra.mxu0 %v1068
  %5001 = vmatmul.f32.gmra.mxu0 %v4923
  %v5002 = vpop.f32.mrf.mxu0
  %v5003 = vadd.f32 %v4983, %v5002
  %5004 = vdwg.mxu0
  %5005 = vmatpush.msra.mxu0 %v1061
  %5006 = vmatpush.msra.mxu0 %v1053
  %5007 = vmatpush.msra.mxu0 %v1045
  %5008 = vmatpush.msra.mxu0 %v1037
  %5009 = vmatpush.msra.mxu0 %v1029
  %5010 = vmatpush.msra.mxu0 %v1021
  %5011 = vmatpush.msra.mxu0 %v1013
  %5012 = vmatpush.msra.mxu0 %v1005
  %5013 = vmatpush.msra.mxu0 %v997
  %5014 = vmatpush.msra.mxu0 %v989
  %5015 = vmatpush.msra.mxu0 %v981
  %5016 = vmatpush.msra.mxu0 %v973
  %5017 = vmatpush.msra.mxu0 %v965
  %5018 = vmatpush.msra.mxu0 %v957
  %5019 = vmatpush.msra.mxu0 %v949
  %5020 = vmatpush.msra.mxu0 %v941
  %5021 = vmatmul.f32.gmra.mxu0 %v4910
  %v5022 = vpop.f32.mrf.mxu0
  %v5023 = vadd.f32 0.0, %v5022
  %5024 = vdwg.mxu0
  %5025 = vmatpush.msra.mxu0 0.0
  %5026 = vmatpush.msra.mxu0 0.0
  %5027 = vmatpush.msra.mxu0 0.0
  %5028 = vmatpush.msra.mxu0 0.0
  %5029 = vmatpush.msra.mxu0 0.0
  %5030 = vmatpush.msra.mxu0 0.0
  %5031 = vmatpush.msra.mxu0 0.0
  %5032 = vmatpush.msra.mxu0 0.0
  %5033 = vmatpush.msra.mxu0 0.0
  %5034 = vmatpush.msra.mxu0 0.0
  %5035 = vmatpush.msra.mxu0 0.0
  %5036 = vmatpush.msra.mxu0 0.0
  %5037 = vmatpush.msra.mxu0 0.0
  %5038 = vmatpush.msra.mxu0 0.0
  %5039 = vmatpush.msra.mxu0 %v1077
  %5040 = vmatpush.msra.mxu0 %v1069
  %5041 = vmatmul.f32.gmra.mxu0 %v4923
  %v5042 = vpop.f32.mrf.mxu0
  %v5043 = vadd.f32 %v5023, %v5042
  %5044 = vdwg.mxu0
  %5045 = vmatpush.msra.mxu0 %v1062
  %5046 = vmatpush.msra.mxu0 %v1054
  %5047 = vmatpush.msra.mxu0 %v1046
  %5048 = vmatpush.msra.mxu0 %v1038
  %5049 = vmatpush.msra.mxu0 %v1030
  %5050 = vmatpush.msra.mxu0 %v1022
  %5051 = vmatpush.msra.mxu0 %v1014
  %5052 = vmatpush.msra.mxu0 %v1006
  %5053 = vmatpush.msra.mxu0 %v998
  %5054 = vmatpush.msra.mxu0 %v990
  %5055 = vmatpush.msra.mxu0 %v982
  %5056 = vmatpush.msra.mxu0 %v974
  %5057 = vmatpush.msra.mxu0 %v966
  %5058 = vmatpush.msra.mxu0 %v958
  %5059 = vmatpush.msra.mxu0 %v950
  %5060 = vmatpush.msra.mxu0 %v942
  %5061 = vmatmul.f32.gmra.mxu0 %v4910
  %v5062 = vpop.f32.mrf.mxu0
  %v5063 = vadd.f32 0.0, %v5062
  %5064 = vdwg.mxu0
  %5065 = vmatpush.msra.mxu0 0.0
  %5066 = vmatpush.msra.mxu0 0.0
  %5067 = vmatpush.msra.mxu0 0.0
  %5068 = vmatpush.msra.mxu0 0.0
  %5069 = vmatpush.msra.mxu0 0.0
  %5070 = vmatpush.msra.mxu0 0.0
  %5071 = vmatpush.msra.mxu0 0.0
  %5072 = vmatpush.msra.mxu0 0.0
  %5073 = vmatpush.msra.mxu0 0.0
  %5074 = vmatpush.msra.mxu0 0.0
  %5075 = vmatpush.msra.mxu0 0.0
  %5076 = vmatpush.msra.mxu0 0.0
  %5077 = vmatpush.msra.mxu0 0.0
  %5078 = vmatpush.msra.mxu0 0.0
  %5079 = vmatpush.msra.mxu0 %v1078
  %5080 = vmatpush.msra.mxu0 %v1070
  %5081 = vmatmul.f32.gmra.mxu0 %v4923
  %v5082 = vpop.f32.mrf.mxu0
  %v5083 = vadd.f32 %v5063, %v5082
  %5084 = vdwg.mxu0
  %5085 = vmatpush.msra.mxu0 %v1063
  %5086 = vmatpush.msra.mxu0 %v1055
  %5087 = vmatpush.msra.mxu0 %v1047
  %5088 = vmatpush.msra.mxu0 %v1039
  %5089 = vmatpush.msra.mxu0 %v1031
  %5090 = vmatpush.msra.mxu0 %v1023
  %5091 = vmatpush.msra.mxu0 %v1015
  %5092 = vmatpush.msra.mxu0 %v1007
  %5093 = vmatpush.msra.mxu0 %v999
  %5094 = vmatpush.msra.mxu0 %v991
  %5095 = vmatpush.msra.mxu0 %v983
  %5096 = vmatpush.msra.mxu0 %v975
  %5097 = vmatpush.msra.mxu0 %v967
  %5098 = vmatpush.msra.mxu0 %v959
  %5099 = vmatpush.msra.mxu0 %v951
  %5100 = vmatpush.msra.mxu0 %v943
  %5101 = vmatmul.f32.gmra.mxu0 %v4910
  %v5102 = vpop.f32.mrf.mxu0
  %v5103 = vadd.f32 0.0, %v5102
  %5104 = vdwg.mxu0
  %5105 = vmatpush.msra.mxu0 0.0
  %5106 = vmatpush.msra.mxu0 0.0
  %5107 = vmatpush.msra.mxu0 0.0
  %5108 = vmatpush.msra.mxu0 0.0
  %5109 = vmatpush.msra.mxu0 0.0
  %5110 = vmatpush.msra.mxu0 0.0
  %5111 = vmatpush.msra.mxu0 0.0
  %5112 = vmatpush.msra.mxu0 0.0
  %5113 = vmatpush.msra.mxu0 0.0
  %5114 = vmatpush.msra.mxu0 0.0
  %5115 = vmatpush.msra.mxu0 0.0
  %5116 = vmatpush.msra.mxu0 0.0
  %5117 = vmatpush.msra.mxu0 0.0
  %5118 = vmatpush.msra.mxu0 0.0
  %5119 = vmatpush.msra.mxu0 %v1079
  %5120 = vmatpush.msra.mxu0 %v1071
  %5121 = vmatmul.f32.gmra.mxu0 %v4923
  %v5122 = vpop.f32.mrf.mxu0
  %v5123 = vadd.f32 %v5103, %v5122
  %5124 = vdwg.mxu0
  %5125 = vmatpush.msra.mxu0 %v1064
  %5126 = vmatpush.msra.mxu0 %v1056
  %5127 = vmatpush.msra.mxu0 %v1048
  %5128 = vmatpush.msra.mxu0 %v1040
  %5129 = vmatpush.msra.mxu0 %v1032
  %5130 = vmatpush.msra.mxu0 %v1024
  %5131 = vmatpush.msra.mxu0 %v1016
  %5132 = vmatpush.msra.mxu0 %v1008
  %5133 = vmatpush.msra.mxu0 %v1000
  %5134 = vmatpush.msra.mxu0 %v992
  %5135 = vmatpush.msra.mxu0 %v984
  %5136 = vmatpush.msra.mxu0 %v976
  %5137 = vmatpush.msra.mxu0 %v968
  %5138 = vmatpush.msra.mxu0 %v960
  %5139 = vmatpush.msra.mxu0 %v952
  %5140 = vmatpush.msra.mxu0 %v944
  %5141 = vmatmul.f32.gmra.mxu0 %v4910
  %v5142 = vpop.f32.mrf.mxu0
  %v5143 = vadd.f32 0.0, %v5142
  %5144 = vdwg.mxu0
  %5145 = vmatpush.msra.mxu0 0.0
  %5146 = vmatpush.msra.mxu0 0.0
  %5147 = vmatpush.msra.mxu0 0.0
  %5148 = vmatpush.msra.mxu0 0.0
  %5149 = vmatpush.msra.mxu0 0.0
  %5150 = vmatpush.msra.mxu0 0.0
  %5151 = vmatpush.msra.mxu0 0.0
  %5152 = vmatpush.msra.mxu0 0.0
  %5153 = vmatpush.msra.mxu0 0.0
  %5154 = vmatpush.msra.mxu0 0.0
  %5155 = vmatpush.msra.mxu0 0.0
  %5156 = vmatpush.msra.mxu0 0.0
  %5157 = vmatpush.msra.mxu0 0.0
  %5158 = vmatpush.msra.mxu0 0.0
  %5159 = vmatpush.msra.mxu0 %v1080
  %5160 = vmatpush.msra.mxu0 %v1072
  %5161 = vmatmul.f32.gmra.mxu0 %v4923
  %v5162 = vpop.f32.mrf.mxu0
  %v5163 = vadd.f32 %v5143, %v5162
  %5164 = vdwg.mxu0
  %5165 = vmatpush.msra.mxu0 %v1065
  %5166 = vmatpush.msra.mxu0 %v1057
  %5167 = vmatpush.msra.mxu0 %v1049
  %5168 = vmatpush.msra.mxu0 %v1041
  %5169 = vmatpush.msra.mxu0 %v1033
  %5170 = vmatpush.msra.mxu0 %v1025
  %5171 = vmatpush.msra.mxu0 %v1017
  %5172 = vmatpush.msra.mxu0 %v1009
  %5173 = vmatpush.msra.mxu0 %v1001
  %5174 = vmatpush.msra.mxu0 %v993
  %5175 = vmatpush.msra.mxu0 %v985
  %5176 = vmatpush.msra.mxu0 %v977
  %5177 = vmatpush.msra.mxu0 %v969
  %5178 = vmatpush.msra.mxu0 %v961
  %5179 = vmatpush.msra.mxu0 %v953
  %5180 = vmatpush.msra.mxu0 %v945
  %5181 = vmatmul.f32.gmra.mxu0 %v4910
  %v5182 = vpop.f32.mrf.mxu0
  %v5183 = vadd.f32 0.0, %v5182
  %5184 = vdwg.mxu0
  %5185 = vmatpush.msra.mxu0 0.0
  %5186 = vmatpush.msra.mxu0 0.0
  %5187 = vmatpush.msra.mxu0 0.0
  %5188 = vmatpush.msra.mxu0 0.0
  %5189 = vmatpush.msra.mxu0 0.0
  %5190 = vmatpush.msra.mxu0 0.0
  %5191 = vmatpush.msra.mxu0 0.0
  %5192 = vmatpush.msra.mxu0 0.0
  %5193 = vmatpush.msra.mxu0 0.0
  %5194 = vmatpush.msra.mxu0 0.0
  %5195 = vmatpush.msra.mxu0 0.0
  %5196 = vmatpush.msra.mxu0 0.0
  %5197 = vmatpush.msra.mxu0 0.0
  %5198 = vmatpush.msra.mxu0 0.0
  %5199 = vmatpush.msra.mxu0 %v1081
  %5200 = vmatpush.msra.mxu0 %v1073
  %5201 = vmatmul.f32.gmra.mxu0 %v4923
  %v5202 = vpop.f32.mrf.mxu0
  %v5203 = vadd.f32 %v5183, %v5202
  %5204 = vdwg.mxu0
  %5205 = vmatpush.msra.mxu0 %v1066
  %5206 = vmatpush.msra.mxu0 %v1058
  %5207 = vmatpush.msra.mxu0 %v1050
  %5208 = vmatpush.msra.mxu0 %v1042
  %5209 = vmatpush.msra.mxu0 %v1034
  %5210 = vmatpush.msra.mxu0 %v1026
  %5211 = vmatpush.msra.mxu0 %v1018
  %5212 = vmatpush.msra.mxu0 %v1010
  %5213 = vmatpush.msra.mxu0 %v1002
  %5214 = vmatpush.msra.mxu0 %v994
  %5215 = vmatpush.msra.mxu0 %v986
  %5216 = vmatpush.msra.mxu0 %v978
  %5217 = vmatpush.msra.mxu0 %v970
  %5218 = vmatpush.msra.mxu0 %v962
  %5219 = vmatpush.msra.mxu0 %v954
  %5220 = vmatpush.msra.mxu0 %v946
  %5221 = vmatmul.f32.gmra.mxu0 %v4910
  %v5222 = vpop.f32.mrf.mxu0
  %v5223 = vadd.f32 0.0, %v5222
  %5224 = vdwg.mxu0
  %5225 = vmatpush.msra.mxu0 0.0
  %5226 = vmatpush.msra.mxu0 0.0
  %5227 = vmatpush.msra.mxu0 0.0
  %5228 = vmatpush.msra.mxu0 0.0
  %5229 = vmatpush.msra.mxu0 0.0
  %5230 = vmatpush.msra.mxu0 0.0
  %5231 = vmatpush.msra.mxu0 0.0
  %5232 = vmatpush.msra.mxu0 0.0
  %5233 = vmatpush.msra.mxu0 0.0
  %5234 = vmatpush.msra.mxu0 0.0
  %5235 = vmatpush.msra.mxu0 0.0
  %5236 = vmatpush.msra.mxu0 0.0
  %5237 = vmatpush.msra.mxu0 0.0
  %5238 = vmatpush.msra.mxu0 0.0
  %5239 = vmatpush.msra.mxu0 %v1082
  %5240 = vmatpush.msra.mxu0 %v1074
  %5241 = vmatmul.f32.gmra.mxu0 %v4923
  %v5242 = vpop.f32.mrf.mxu0
  %v5243 = vadd.f32 %v5223, %v5242
  %5244 = vdwg.mxu0
  %v5245 = vadd.f32 %v4914, %v4963
  %v5246 = vadd.f32 %v4915, %v5003
  %v5247 = vadd.f32 %v4916, %v5043
  %v5248 = vadd.f32 %v4917, %v5083
  %v5249 = vadd.f32 %v4918, %v5123
  %v5250 = vadd.f32 %v4919, %v5163
  %v5251 = vadd.f32 %v4920, %v5203
  %v5252 = vadd.f32 %v4921, %v5243
  %v5253 = vsub.f32 0.0, %v5245
  %v5254 = vsub.f32 0.0, %v5246
  %v5255 = vmul.f32 %v5253, 1.442695
  %v5256 = vpow.pop %v5255
  %v5257 = vmul.f32 %v5254, 1.442695
  %v5258 = vpow.pop %v5257
  %v5259 = vadd.f32 %v5256, 1.0
  %v5260 = vadd.f32 %v5258, 1.0
  %v5261 = vrcp.pop %v5259
  %v5262 = vrcp.pop %v5260
  %v5263 = vsub.f32 0.0, %v5247
  %v5264 = vsub.f32 0.0, %v5248
  %v5265 = vmul.f32 %v5263, 1.442695
  %v5266 = vpow.pop %v5265
  %v5267 = vmul.f32 %v5264, 1.442695
  %v5268 = vpow.pop %v5267
  %v5269 = vadd.f32 %v5266, 1.0
  %v5270 = vadd.f32 %v5268, 1.0
  %v5271 = vrcp.pop %v5269
  %v5272 = vrcp.pop %v5270
  %v5273 = vtanh.pop %v5249
  %v5274 = vtanh.pop %v5250
  %v5275 = vsub.f32 0.0, %v5251
  %v5276 = vsub.f32 0.0, %v5252
  %v5277 = vmul.f32 %v5275, 1.442695
  %v5278 = vpow.pop %v5277
  %v5279 = vmul.f32 %v5276, 1.442695
  %v5280 = vpow.pop %v5279
  %v5281 = vadd.f32 %v5278, 1.0
  %v5282 = vadd.f32 %v5280, 1.0
  %v5283 = vrcp.pop %v5281
  %v5284 = vrcp.pop %v5282
  %v5285 = vmul.f32 %v5271, %v4906
  %v5286 = vmul.f32 %v5272, %v4907
  %v5287 = vmul.f32 %v5261, %v5273
  %v5288 = vmul.f32 %v5262, %v5274
  %v5289 = vadd.f32 %v5285, %v5287
  %v5290 = vadd.f32 %v5286, %v5288
  %v5291 = vtanh.pop %v5289
  %v5292 = vtanh.pop %v5290
  %v5293 = vmul.f32 %v5283, %v5291
  %v5294 = vmul.f32 %v5284, %v5292
  %5295 = vst [vmem:[#allocation3 + $0xa0] sm:$0xff] %v5293
  %5296 = vst.msk [vmem:[#allocation3 + $0xa8] sm:$0xff] %vm1091, %v5294
  %v5297 = vld [vmem:[#allocation2 + $0x2c0] sm:$0xff]
  %v5298 = vld [vmem:[#allocation2 + $0x2c8] sm:$0xff]
  %v5299 = vld [vmem:[#allocation2 + $0x2d0] sm:$0xff]
  %v5300 = vld [vmem:[#allocation2 + $0x2d8] sm:$0xff]
  %v5301 = vld [vmem:[#allocation2 + $0x2e0] sm:$0xff]
  %v5302 = vld [vmem:[#allocation2 + $0x2e8] sm:$0xff]
  %v5303 = vld [vmem:[#allocation2 + $0x2f0] sm:$0xff]
  %v5304 = vld [vmem:[#allocation2 + $0x2f8] sm:$0xff]
  %v5306 = vsel %vm1091, %v5294, 0
  %5308 = vmatpush.msra.mxu0 %v1059
  %5309 = vmatpush.msra.mxu0 %v1051
  %5310 = vmatpush.msra.mxu0 %v1043
  %5311 = vmatpush.msra.mxu0 %v1035
  %5312 = vmatpush.msra.mxu0 %v1027
  %5313 = vmatpush.msra.mxu0 %v1019
  %5314 = vmatpush.msra.mxu0 %v1011
  %5315 = vmatpush.msra.mxu0 %v1003
  %5316 = vmatpush.msra.mxu0 %v995
  %5317 = vmatpush.msra.mxu0 %v987
  %5318 = vmatpush.msra.mxu0 %v979
  %5319 = vmatpush.msra.mxu0 %v971
  %5320 = vmatpush.msra.mxu0 %v963
  %5321 = vmatpush.msra.mxu0 %v955
  %5322 = vmatpush.msra.mxu0 %v947
  %5323 = vmatpush.msra.mxu0 %v939
  %5324 = vmatmul.f32.gmra.mxu0 %v5293
  %v5325 = vpop.f32.mrf.mxu0
  %v5326 = vadd.f32 0.0, %v5325
  %5327 = vdwg.mxu0
  %5328 = vmatpush.msra.mxu0 0.0
  %5329 = vmatpush.msra.mxu0 0.0
  %5330 = vmatpush.msra.mxu0 0.0
  %5331 = vmatpush.msra.mxu0 0.0
  %5332 = vmatpush.msra.mxu0 0.0
  %5333 = vmatpush.msra.mxu0 0.0
  %5334 = vmatpush.msra.mxu0 0.0
  %5335 = vmatpush.msra.mxu0 0.0
  %5336 = vmatpush.msra.mxu0 0.0
  %5337 = vmatpush.msra.mxu0 0.0
  %5338 = vmatpush.msra.mxu0 0.0
  %5339 = vmatpush.msra.mxu0 0.0
  %5340 = vmatpush.msra.mxu0 0.0
  %5341 = vmatpush.msra.mxu0 0.0
  %5342 = vmatpush.msra.mxu0 %v1075
  %5343 = vmatpush.msra.mxu0 %v1067
  %5344 = vmatmul.f32.gmra.mxu0 %v5306
  %v5345 = vpop.f32.mrf.mxu0
  %v5346 = vadd.f32 %v5326, %v5345
  %5347 = vdwg.mxu0
  %5348 = vmatpush.msra.mxu0 %v1060
  %5349 = vmatpush.msra.mxu0 %v1052
  %5350 = vmatpush.msra.mxu0 %v1044
  %5351 = vmatpush.msra.mxu0 %v1036
  %5352 = vmatpush.msra.mxu0 %v1028
  %5353 = vmatpush.msra.mxu0 %v1020
  %5354 = vmatpush.msra.mxu0 %v1012
  %5355 = vmatpush.msra.mxu0 %v1004
  %5356 = vmatpush.msra.mxu0 %v996
  %5357 = vmatpush.msra.mxu0 %v988
  %5358 = vmatpush.msra.mxu0 %v980
  %5359 = vmatpush.msra.mxu0 %v972
  %5360 = vmatpush.msra.mxu0 %v964
  %5361 = vmatpush.msra.mxu0 %v956
  %5362 = vmatpush.msra.mxu0 %v948
  %5363 = vmatpush.msra.mxu0 %v940
  %5364 = vmatmul.f32.gmra.mxu0 %v5293
  %v5365 = vpop.f32.mrf.mxu0
  %v5366 = vadd.f32 0.0, %v5365
  %5367 = vdwg.mxu0
  %5368 = vmatpush.msra.mxu0 0.0
  %5369 = vmatpush.msra.mxu0 0.0
  %5370 = vmatpush.msra.mxu0 0.0
  %5371 = vmatpush.msra.mxu0 0.0
  %5372 = vmatpush.msra.mxu0 0.0
  %5373 = vmatpush.msra.mxu0 0.0
  %5374 = vmatpush.msra.mxu0 0.0
  %5375 = vmatpush.msra.mxu0 0.0
  %5376 = vmatpush.msra.mxu0 0.0
  %5377 = vmatpush.msra.mxu0 0.0
  %5378 = vmatpush.msra.mxu0 0.0
  %5379 = vmatpush.msra.mxu0 0.0
  %5380 = vmatpush.msra.mxu0 0.0
  %5381 = vmatpush.msra.mxu0 0.0
  %5382 = vmatpush.msra.mxu0 %v1076
  %5383 = vmatpush.msra.mxu0 %v1068
  %5384 = vmatmul.f32.gmra.mxu0 %v5306
  %v5385 = vpop.f32.mrf.mxu0
  %v5386 = vadd.f32 %v5366, %v5385
  %5387 = vdwg.mxu0
  %5388 = vmatpush.msra.mxu0 %v1061
  %5389 = vmatpush.msra.mxu0 %v1053
  %5390 = vmatpush.msra.mxu0 %v1045
  %5391 = vmatpush.msra.mxu0 %v1037
  %5392 = vmatpush.msra.mxu0 %v1029
  %5393 = vmatpush.msra.mxu0 %v1021
  %5394 = vmatpush.msra.mxu0 %v1013
  %5395 = vmatpush.msra.mxu0 %v1005
  %5396 = vmatpush.msra.mxu0 %v997
  %5397 = vmatpush.msra.mxu0 %v989
  %5398 = vmatpush.msra.mxu0 %v981
  %5399 = vmatpush.msra.mxu0 %v973
  %5400 = vmatpush.msra.mxu0 %v965
  %5401 = vmatpush.msra.mxu0 %v957
  %5402 = vmatpush.msra.mxu0 %v949
  %5403 = vmatpush.msra.mxu0 %v941
  %5404 = vmatmul.f32.gmra.mxu0 %v5293
  %v5405 = vpop.f32.mrf.mxu0
  %v5406 = vadd.f32 0.0, %v5405
  %5407 = vdwg.mxu0
  %5408 = vmatpush.msra.mxu0 0.0
  %5409 = vmatpush.msra.mxu0 0.0
  %5410 = vmatpush.msra.mxu0 0.0
  %5411 = vmatpush.msra.mxu0 0.0
  %5412 = vmatpush.msra.mxu0 0.0
  %5413 = vmatpush.msra.mxu0 0.0
  %5414 = vmatpush.msra.mxu0 0.0
  %5415 = vmatpush.msra.mxu0 0.0
  %5416 = vmatpush.msra.mxu0 0.0
  %5417 = vmatpush.msra.mxu0 0.0
  %5418 = vmatpush.msra.mxu0 0.0
  %5419 = vmatpush.msra.mxu0 0.0
  %5420 = vmatpush.msra.mxu0 0.0
  %5421 = vmatpush.msra.mxu0 0.0
  %5422 = vmatpush.msra.mxu0 %v1077
  %5423 = vmatpush.msra.mxu0 %v1069
  %5424 = vmatmul.f32.gmra.mxu0 %v5306
  %v5425 = vpop.f32.mrf.mxu0
  %v5426 = vadd.f32 %v5406, %v5425
  %5427 = vdwg.mxu0
  %5428 = vmatpush.msra.mxu0 %v1062
  %5429 = vmatpush.msra.mxu0 %v1054
  %5430 = vmatpush.msra.mxu0 %v1046
  %5431 = vmatpush.msra.mxu0 %v1038
  %5432 = vmatpush.msra.mxu0 %v1030
  %5433 = vmatpush.msra.mxu0 %v1022
  %5434 = vmatpush.msra.mxu0 %v1014
  %5435 = vmatpush.msra.mxu0 %v1006
  %5436 = vmatpush.msra.mxu0 %v998
  %5437 = vmatpush.msra.mxu0 %v990
  %5438 = vmatpush.msra.mxu0 %v982
  %5439 = vmatpush.msra.mxu0 %v974
  %5440 = vmatpush.msra.mxu0 %v966
  %5441 = vmatpush.msra.mxu0 %v958
  %5442 = vmatpush.msra.mxu0 %v950
  %5443 = vmatpush.msra.mxu0 %v942
  %5444 = vmatmul.f32.gmra.mxu0 %v5293
  %v5445 = vpop.f32.mrf.mxu0
  %v5446 = vadd.f32 0.0, %v5445
  %5447 = vdwg.mxu0
  %5448 = vmatpush.msra.mxu0 0.0
  %5449 = vmatpush.msra.mxu0 0.0
  %5450 = vmatpush.msra.mxu0 0.0
  %5451 = vmatpush.msra.mxu0 0.0
  %5452 = vmatpush.msra.mxu0 0.0
  %5453 = vmatpush.msra.mxu0 0.0
  %5454 = vmatpush.msra.mxu0 0.0
  %5455 = vmatpush.msra.mxu0 0.0
  %5456 = vmatpush.msra.mxu0 0.0
  %5457 = vmatpush.msra.mxu0 0.0
  %5458 = vmatpush.msra.mxu0 0.0
  %5459 = vmatpush.msra.mxu0 0.0
  %5460 = vmatpush.msra.mxu0 0.0
  %5461 = vmatpush.msra.mxu0 0.0
  %5462 = vmatpush.msra.mxu0 %v1078
  %5463 = vmatpush.msra.mxu0 %v1070
  %5464 = vmatmul.f32.gmra.mxu0 %v5306
  %v5465 = vpop.f32.mrf.mxu0
  %v5466 = vadd.f32 %v5446, %v5465
  %5467 = vdwg.mxu0
  %5468 = vmatpush.msra.mxu0 %v1063
  %5469 = vmatpush.msra.mxu0 %v1055
  %5470 = vmatpush.msra.mxu0 %v1047
  %5471 = vmatpush.msra.mxu0 %v1039
  %5472 = vmatpush.msra.mxu0 %v1031
  %5473 = vmatpush.msra.mxu0 %v1023
  %5474 = vmatpush.msra.mxu0 %v1015
  %5475 = vmatpush.msra.mxu0 %v1007
  %5476 = vmatpush.msra.mxu0 %v999
  %5477 = vmatpush.msra.mxu0 %v991
  %5478 = vmatpush.msra.mxu0 %v983
  %5479 = vmatpush.msra.mxu0 %v975
  %5480 = vmatpush.msra.mxu0 %v967
  %5481 = vmatpush.msra.mxu0 %v959
  %5482 = vmatpush.msra.mxu0 %v951
  %5483 = vmatpush.msra.mxu0 %v943
  %5484 = vmatmul.f32.gmra.mxu0 %v5293
  %v5485 = vpop.f32.mrf.mxu0
  %v5486 = vadd.f32 0.0, %v5485
  %5487 = vdwg.mxu0
  %5488 = vmatpush.msra.mxu0 0.0
  %5489 = vmatpush.msra.mxu0 0.0
  %5490 = vmatpush.msra.mxu0 0.0
  %5491 = vmatpush.msra.mxu0 0.0
  %5492 = vmatpush.msra.mxu0 0.0
  %5493 = vmatpush.msra.mxu0 0.0
  %5494 = vmatpush.msra.mxu0 0.0
  %5495 = vmatpush.msra.mxu0 0.0
  %5496 = vmatpush.msra.mxu0 0.0
  %5497 = vmatpush.msra.mxu0 0.0
  %5498 = vmatpush.msra.mxu0 0.0
  %5499 = vmatpush.msra.mxu0 0.0
  %5500 = vmatpush.msra.mxu0 0.0
  %5501 = vmatpush.msra.mxu0 0.0
  %5502 = vmatpush.msra.mxu0 %v1079
  %5503 = vmatpush.msra.mxu0 %v1071
  %5504 = vmatmul.f32.gmra.mxu0 %v5306
  %v5505 = vpop.f32.mrf.mxu0
  %v5506 = vadd.f32 %v5486, %v5505
  %5507 = vdwg.mxu0
  %5508 = vmatpush.msra.mxu0 %v1064
  %5509 = vmatpush.msra.mxu0 %v1056
  %5510 = vmatpush.msra.mxu0 %v1048
  %5511 = vmatpush.msra.mxu0 %v1040
  %5512 = vmatpush.msra.mxu0 %v1032
  %5513 = vmatpush.msra.mxu0 %v1024
  %5514 = vmatpush.msra.mxu0 %v1016
  %5515 = vmatpush.msra.mxu0 %v1008
  %5516 = vmatpush.msra.mxu0 %v1000
  %5517 = vmatpush.msra.mxu0 %v992
  %5518 = vmatpush.msra.mxu0 %v984
  %5519 = vmatpush.msra.mxu0 %v976
  %5520 = vmatpush.msra.mxu0 %v968
  %5521 = vmatpush.msra.mxu0 %v960
  %5522 = vmatpush.msra.mxu0 %v952
  %5523 = vmatpush.msra.mxu0 %v944
  %5524 = vmatmul.f32.gmra.mxu0 %v5293
  %v5525 = vpop.f32.mrf.mxu0
  %v5526 = vadd.f32 0.0, %v5525
  %5527 = vdwg.mxu0
  %5528 = vmatpush.msra.mxu0 0.0
  %5529 = vmatpush.msra.mxu0 0.0
  %5530 = vmatpush.msra.mxu0 0.0
  %5531 = vmatpush.msra.mxu0 0.0
  %5532 = vmatpush.msra.mxu0 0.0
  %5533 = vmatpush.msra.mxu0 0.0
  %5534 = vmatpush.msra.mxu0 0.0
  %5535 = vmatpush.msra.mxu0 0.0
  %5536 = vmatpush.msra.mxu0 0.0
  %5537 = vmatpush.msra.mxu0 0.0
  %5538 = vmatpush.msra.mxu0 0.0
  %5539 = vmatpush.msra.mxu0 0.0
  %5540 = vmatpush.msra.mxu0 0.0
  %5541 = vmatpush.msra.mxu0 0.0
  %5542 = vmatpush.msra.mxu0 %v1080
  %5543 = vmatpush.msra.mxu0 %v1072
  %5544 = vmatmul.f32.gmra.mxu0 %v5306
  %v5545 = vpop.f32.mrf.mxu0
  %v5546 = vadd.f32 %v5526, %v5545
  %5547 = vdwg.mxu0
  %5548 = vmatpush.msra.mxu0 %v1065
  %5549 = vmatpush.msra.mxu0 %v1057
  %5550 = vmatpush.msra.mxu0 %v1049
  %5551 = vmatpush.msra.mxu0 %v1041
  %5552 = vmatpush.msra.mxu0 %v1033
  %5553 = vmatpush.msra.mxu0 %v1025
  %5554 = vmatpush.msra.mxu0 %v1017
  %5555 = vmatpush.msra.mxu0 %v1009
  %5556 = vmatpush.msra.mxu0 %v1001
  %5557 = vmatpush.msra.mxu0 %v993
  %5558 = vmatpush.msra.mxu0 %v985
  %5559 = vmatpush.msra.mxu0 %v977
  %5560 = vmatpush.msra.mxu0 %v969
  %5561 = vmatpush.msra.mxu0 %v961
  %5562 = vmatpush.msra.mxu0 %v953
  %5563 = vmatpush.msra.mxu0 %v945
  %5564 = vmatmul.f32.gmra.mxu0 %v5293
  %v5565 = vpop.f32.mrf.mxu0
  %v5566 = vadd.f32 0.0, %v5565
  %5567 = vdwg.mxu0
  %5568 = vmatpush.msra.mxu0 0.0
  %5569 = vmatpush.msra.mxu0 0.0
  %5570 = vmatpush.msra.mxu0 0.0
  %5571 = vmatpush.msra.mxu0 0.0
  %5572 = vmatpush.msra.mxu0 0.0
  %5573 = vmatpush.msra.mxu0 0.0
  %5574 = vmatpush.msra.mxu0 0.0
  %5575 = vmatpush.msra.mxu0 0.0
  %5576 = vmatpush.msra.mxu0 0.0
  %5577 = vmatpush.msra.mxu0 0.0
  %5578 = vmatpush.msra.mxu0 0.0
  %5579 = vmatpush.msra.mxu0 0.0
  %5580 = vmatpush.msra.mxu0 0.0
  %5581 = vmatpush.msra.mxu0 0.0
  %5582 = vmatpush.msra.mxu0 %v1081
  %5583 = vmatpush.msra.mxu0 %v1073
  %5584 = vmatmul.f32.gmra.mxu0 %v5306
  %v5585 = vpop.f32.mrf.mxu0
  %v5586 = vadd.f32 %v5566, %v5585
  %5587 = vdwg.mxu0
  %5588 = vmatpush.msra.mxu0 %v1066
  %5589 = vmatpush.msra.mxu0 %v1058
  %5590 = vmatpush.msra.mxu0 %v1050
  %5591 = vmatpush.msra.mxu0 %v1042
  %5592 = vmatpush.msra.mxu0 %v1034
  %5593 = vmatpush.msra.mxu0 %v1026
  %5594 = vmatpush.msra.mxu0 %v1018
  %5595 = vmatpush.msra.mxu0 %v1010
  %5596 = vmatpush.msra.mxu0 %v1002
  %5597 = vmatpush.msra.mxu0 %v994
  %5598 = vmatpush.msra.mxu0 %v986
  %5599 = vmatpush.msra.mxu0 %v978
  %5600 = vmatpush.msra.mxu0 %v970
  %5601 = vmatpush.msra.mxu0 %v962
  %5602 = vmatpush.msra.mxu0 %v954
  %5603 = vmatpush.msra.mxu0 %v946
  %5604 = vmatmul.f32.gmra.mxu0 %v5293
  %v5605 = vpop.f32.mrf.mxu0
  %v5606 = vadd.f32 0.0, %v5605
  %5607 = vdwg.mxu0
  %5608 = vmatpush.msra.mxu0 0.0
  %5609 = vmatpush.msra.mxu0 0.0
  %5610 = vmatpush.msra.mxu0 0.0
  %5611 = vmatpush.msra.mxu0 0.0
  %5612 = vmatpush.msra.mxu0 0.0
  %5613 = vmatpush.msra.mxu0 0.0
  %5614 = vmatpush.msra.mxu0 0.0
  %5615 = vmatpush.msra.mxu0 0.0
  %5616 = vmatpush.msra.mxu0 0.0
  %5617 = vmatpush.msra.mxu0 0.0
  %5618 = vmatpush.msra.mxu0 0.0
  %5619 = vmatpush.msra.mxu0 0.0
  %5620 = vmatpush.msra.mxu0 0.0
  %5621 = vmatpush.msra.mxu0 0.0
  %5622 = vmatpush.msra.mxu0 %v1082
  %5623 = vmatpush.msra.mxu0 %v1074
  %5624 = vmatmul.f32.gmra.mxu0 %v5306
  %v5625 = vpop.f32.mrf.mxu0
  %v5626 = vadd.f32 %v5606, %v5625
  %5627 = vdwg.mxu0
  %v5628 = vadd.f32 %v5297, %v5346
  %v5629 = vadd.f32 %v5298, %v5386
  %v5630 = vadd.f32 %v5299, %v5426
  %v5631 = vadd.f32 %v5300, %v5466
  %v5632 = vadd.f32 %v5301, %v5506
  %v5633 = vadd.f32 %v5302, %v5546
  %v5634 = vadd.f32 %v5303, %v5586
  %v5635 = vadd.f32 %v5304, %v5626
  %v5636 = vsub.f32 0.0, %v5628
  %v5637 = vsub.f32 0.0, %v5629
  %v5638 = vmul.f32 %v5636, 1.442695
  %v5639 = vpow.pop %v5638
  %v5640 = vmul.f32 %v5637, 1.442695
  %v5641 = vpow.pop %v5640
  %v5642 = vadd.f32 %v5639, 1.0
  %v5643 = vadd.f32 %v5641, 1.0
  %v5644 = vrcp.pop %v5642
  %v5645 = vrcp.pop %v5643
  %v5646 = vsub.f32 0.0, %v5630
  %v5647 = vsub.f32 0.0, %v5631
  %v5648 = vmul.f32 %v5646, 1.442695
  %v5649 = vpow.pop %v5648
  %v5650 = vmul.f32 %v5647, 1.442695
  %v5651 = vpow.pop %v5650
  %v5652 = vadd.f32 %v5649, 1.0
  %v5653 = vadd.f32 %v5651, 1.0
  %v5654 = vrcp.pop %v5652
  %v5655 = vrcp.pop %v5653
  %v5656 = vtanh.pop %v5632
  %v5657 = vtanh.pop %v5633
  %v5658 = vsub.f32 0.0, %v5634
  %v5659 = vsub.f32 0.0, %v5635
  %v5660 = vmul.f32 %v5658, 1.442695
  %v5661 = vpow.pop %v5660
  %v5662 = vmul.f32 %v5659, 1.442695
  %v5663 = vpow.pop %v5662
  %v5664 = vadd.f32 %v5661, 1.0
  %v5665 = vadd.f32 %v5663, 1.0
  %v5666 = vrcp.pop %v5664
  %v5667 = vrcp.pop %v5665
  %v5668 = vmul.f32 %v5654, %v5289
  %v5669 = vmul.f32 %v5655, %v5290
  %v5670 = vmul.f32 %v5644, %v5656
  %v5671 = vmul.f32 %v5645, %v5657
  %v5672 = vadd.f32 %v5668, %v5670
  %v5673 = vadd.f32 %v5669, %v5671
  %v5674 = vtanh.pop %v5672
  %v5675 = vtanh.pop %v5673
  %v5676 = vmul.f32 %v5666, %v5674
  %v5677 = vmul.f32 %v5667, %v5675
  %5678 = vst [vmem:[#allocation3 + $0xb0] sm:$0xff] %v5676
  %5679 = vst.msk [vmem:[#allocation3 + $0xb8] sm:$0xff] %vm1091, %v5677
  %v5680 = vld [vmem:[#allocation2 + $0x300] sm:$0xff]
  %v5681 = vld [vmem:[#allocation2 + $0x308] sm:$0xff]
  %v5682 = vld [vmem:[#allocation2 + $0x310] sm:$0xff]
  %v5683 = vld [vmem:[#allocation2 + $0x318] sm:$0xff]
  %v5684 = vld [vmem:[#allocation2 + $0x320] sm:$0xff]
  %v5685 = vld [vmem:[#allocation2 + $0x328] sm:$0xff]
  %v5686 = vld [vmem:[#allocation2 + $0x330] sm:$0xff]
  %v5687 = vld [vmem:[#allocation2 + $0x338] sm:$0xff]
  %v5689 = vsel %vm1091, %v5677, 0
  %5691 = vmatpush.msra.mxu0 %v1059
  %5692 = vmatpush.msra.mxu0 %v1051
  %5693 = vmatpush.msra.mxu0 %v1043
  %5694 = vmatpush.msra.mxu0 %v1035
  %5695 = vmatpush.msra.mxu0 %v1027
  %5696 = vmatpush.msra.mxu0 %v1019
  %5697 = vmatpush.msra.mxu0 %v1011
  %5698 = vmatpush.msra.mxu0 %v1003
  %5699 = vmatpush.msra.mxu0 %v995
  %5700 = vmatpush.msra.mxu0 %v987
  %5701 = vmatpush.msra.mxu0 %v979
  %5702 = vmatpush.msra.mxu0 %v971
  %5703 = vmatpush.msra.mxu0 %v963
  %5704 = vmatpush.msra.mxu0 %v955
  %5705 = vmatpush.msra.mxu0 %v947
  %5706 = vmatpush.msra.mxu0 %v939
  %5707 = vmatmul.f32.gmra.mxu0 %v5676
  %v5708 = vpop.f32.mrf.mxu0
  %v5709 = vadd.f32 0.0, %v5708
  %5710 = vdwg.mxu0
  %5711 = vmatpush.msra.mxu0 0.0
  %5712 = vmatpush.msra.mxu0 0.0
  %5713 = vmatpush.msra.mxu0 0.0
  %5714 = vmatpush.msra.mxu0 0.0
  %5715 = vmatpush.msra.mxu0 0.0
  %5716 = vmatpush.msra.mxu0 0.0
  %5717 = vmatpush.msra.mxu0 0.0
  %5718 = vmatpush.msra.mxu0 0.0
  %5719 = vmatpush.msra.mxu0 0.0
  %5720 = vmatpush.msra.mxu0 0.0
  %5721 = vmatpush.msra.mxu0 0.0
  %5722 = vmatpush.msra.mxu0 0.0
  %5723 = vmatpush.msra.mxu0 0.0
  %5724 = vmatpush.msra.mxu0 0.0
  %5725 = vmatpush.msra.mxu0 %v1075
  %5726 = vmatpush.msra.mxu0 %v1067
  %5727 = vmatmul.f32.gmra.mxu0 %v5689
  %v5728 = vpop.f32.mrf.mxu0
  %v5729 = vadd.f32 %v5709, %v5728
  %5730 = vdwg.mxu0
  %5731 = vmatpush.msra.mxu0 %v1060
  %5732 = vmatpush.msra.mxu0 %v1052
  %5733 = vmatpush.msra.mxu0 %v1044
  %5734 = vmatpush.msra.mxu0 %v1036
  %5735 = vmatpush.msra.mxu0 %v1028
  %5736 = vmatpush.msra.mxu0 %v1020
  %5737 = vmatpush.msra.mxu0 %v1012
  %5738 = vmatpush.msra.mxu0 %v1004
  %5739 = vmatpush.msra.mxu0 %v996
  %5740 = vmatpush.msra.mxu0 %v988
  %5741 = vmatpush.msra.mxu0 %v980
  %5742 = vmatpush.msra.mxu0 %v972
  %5743 = vmatpush.msra.mxu0 %v964
  %5744 = vmatpush.msra.mxu0 %v956
  %5745 = vmatpush.msra.mxu0 %v948
  %5746 = vmatpush.msra.mxu0 %v940
  %5747 = vmatmul.f32.gmra.mxu0 %v5676
  %v5748 = vpop.f32.mrf.mxu0
  %v5749 = vadd.f32 0.0, %v5748
  %5750 = vdwg.mxu0
  %5751 = vmatpush.msra.mxu0 0.0
  %5752 = vmatpush.msra.mxu0 0.0
  %5753 = vmatpush.msra.mxu0 0.0
  %5754 = vmatpush.msra.mxu0 0.0
  %5755 = vmatpush.msra.mxu0 0.0
  %5756 = vmatpush.msra.mxu0 0.0
  %5757 = vmatpush.msra.mxu0 0.0
  %5758 = vmatpush.msra.mxu0 0.0
  %5759 = vmatpush.msra.mxu0 0.0
  %5760 = vmatpush.msra.mxu0 0.0
  %5761 = vmatpush.msra.mxu0 0.0
  %5762 = vmatpush.msra.mxu0 0.0
  %5763 = vmatpush.msra.mxu0 0.0
  %5764 = vmatpush.msra.mxu0 0.0
  %5765 = vmatpush.msra.mxu0 %v1076
  %5766 = vmatpush.msra.mxu0 %v1068
  %5767 = vmatmul.f32.gmra.mxu0 %v5689
  %v5768 = vpop.f32.mrf.mxu0
  %v5769 = vadd.f32 %v5749, %v5768
  %5770 = vdwg.mxu0
  %5771 = vmatpush.msra.mxu0 %v1061
  %5772 = vmatpush.msra.mxu0 %v1053
  %5773 = vmatpush.msra.mxu0 %v1045
  %5774 = vmatpush.msra.mxu0 %v1037
  %5775 = vmatpush.msra.mxu0 %v1029
  %5776 = vmatpush.msra.mxu0 %v1021
  %5777 = vmatpush.msra.mxu0 %v1013
  %5778 = vmatpush.msra.mxu0 %v1005
  %5779 = vmatpush.msra.mxu0 %v997
  %5780 = vmatpush.msra.mxu0 %v989
  %5781 = vmatpush.msra.mxu0 %v981
  %5782 = vmatpush.msra.mxu0 %v973
  %5783 = vmatpush.msra.mxu0 %v965
  %5784 = vmatpush.msra.mxu0 %v957
  %5785 = vmatpush.msra.mxu0 %v949
  %5786 = vmatpush.msra.mxu0 %v941
  %5787 = vmatmul.f32.gmra.mxu0 %v5676
  %v5788 = vpop.f32.mrf.mxu0
  %v5789 = vadd.f32 0.0, %v5788
  %5790 = vdwg.mxu0
  %5791 = vmatpush.msra.mxu0 0.0
  %5792 = vmatpush.msra.mxu0 0.0
  %5793 = vmatpush.msra.mxu0 0.0
  %5794 = vmatpush.msra.mxu0 0.0
  %5795 = vmatpush.msra.mxu0 0.0
  %5796 = vmatpush.msra.mxu0 0.0
  %5797 = vmatpush.msra.mxu0 0.0
  %5798 = vmatpush.msra.mxu0 0.0
  %5799 = vmatpush.msra.mxu0 0.0
  %5800 = vmatpush.msra.mxu0 0.0
  %5801 = vmatpush.msra.mxu0 0.0
  %5802 = vmatpush.msra.mxu0 0.0
  %5803 = vmatpush.msra.mxu0 0.0
  %5804 = vmatpush.msra.mxu0 0.0
  %5805 = vmatpush.msra.mxu0 %v1077
  %5806 = vmatpush.msra.mxu0 %v1069
  %5807 = vmatmul.f32.gmra.mxu0 %v5689
  %v5808 = vpop.f32.mrf.mxu0
  %v5809 = vadd.f32 %v5789, %v5808
  %5810 = vdwg.mxu0
  %5811 = vmatpush.msra.mxu0 %v1062
  %5812 = vmatpush.msra.mxu0 %v1054
  %5813 = vmatpush.msra.mxu0 %v1046
  %5814 = vmatpush.msra.mxu0 %v1038
  %5815 = vmatpush.msra.mxu0 %v1030
  %5816 = vmatpush.msra.mxu0 %v1022
  %5817 = vmatpush.msra.mxu0 %v1014
  %5818 = vmatpush.msra.mxu0 %v1006
  %5819 = vmatpush.msra.mxu0 %v998
  %5820 = vmatpush.msra.mxu0 %v990
  %5821 = vmatpush.msra.mxu0 %v982
  %5822 = vmatpush.msra.mxu0 %v974
  %5823 = vmatpush.msra.mxu0 %v966
  %5824 = vmatpush.msra.mxu0 %v958
  %5825 = vmatpush.msra.mxu0 %v950
  %5826 = vmatpush.msra.mxu0 %v942
  %5827 = vmatmul.f32.gmra.mxu0 %v5676
  %v5828 = vpop.f32.mrf.mxu0
  %v5829 = vadd.f32 0.0, %v5828
  %5830 = vdwg.mxu0
  %5831 = vmatpush.msra.mxu0 0.0
  %5832 = vmatpush.msra.mxu0 0.0
  %5833 = vmatpush.msra.mxu0 0.0
  %5834 = vmatpush.msra.mxu0 0.0
  %5835 = vmatpush.msra.mxu0 0.0
  %5836 = vmatpush.msra.mxu0 0.0
  %5837 = vmatpush.msra.mxu0 0.0
  %5838 = vmatpush.msra.mxu0 0.0
  %5839 = vmatpush.msra.mxu0 0.0
  %5840 = vmatpush.msra.mxu0 0.0
  %5841 = vmatpush.msra.mxu0 0.0
  %5842 = vmatpush.msra.mxu0 0.0
  %5843 = vmatpush.msra.mxu0 0.0
  %5844 = vmatpush.msra.mxu0 0.0
  %5845 = vmatpush.msra.mxu0 %v1078
  %5846 = vmatpush.msra.mxu0 %v1070
  %5847 = vmatmul.f32.gmra.mxu0 %v5689
  %v5848 = vpop.f32.mrf.mxu0
  %v5849 = vadd.f32 %v5829, %v5848
  %5850 = vdwg.mxu0
  %5851 = vmatpush.msra.mxu0 %v1063
  %5852 = vmatpush.msra.mxu0 %v1055
  %5853 = vmatpush.msra.mxu0 %v1047
  %5854 = vmatpush.msra.mxu0 %v1039
  %5855 = vmatpush.msra.mxu0 %v1031
  %5856 = vmatpush.msra.mxu0 %v1023
  %5857 = vmatpush.msra.mxu0 %v1015
  %5858 = vmatpush.msra.mxu0 %v1007
  %5859 = vmatpush.msra.mxu0 %v999
  %5860 = vmatpush.msra.mxu0 %v991
  %5861 = vmatpush.msra.mxu0 %v983
  %5862 = vmatpush.msra.mxu0 %v975
  %5863 = vmatpush.msra.mxu0 %v967
  %5864 = vmatpush.msra.mxu0 %v959
  %5865 = vmatpush.msra.mxu0 %v951
  %5866 = vmatpush.msra.mxu0 %v943
  %5867 = vmatmul.f32.gmra.mxu0 %v5676
  %v5868 = vpop.f32.mrf.mxu0
  %v5869 = vadd.f32 0.0, %v5868
  %5870 = vdwg.mxu0
  %5871 = vmatpush.msra.mxu0 0.0
  %5872 = vmatpush.msra.mxu0 0.0
  %5873 = vmatpush.msra.mxu0 0.0
  %5874 = vmatpush.msra.mxu0 0.0
  %5875 = vmatpush.msra.mxu0 0.0
  %5876 = vmatpush.msra.mxu0 0.0
  %5877 = vmatpush.msra.mxu0 0.0
  %5878 = vmatpush.msra.mxu0 0.0
  %5879 = vmatpush.msra.mxu0 0.0
  %5880 = vmatpush.msra.mxu0 0.0
  %5881 = vmatpush.msra.mxu0 0.0
  %5882 = vmatpush.msra.mxu0 0.0
  %5883 = vmatpush.msra.mxu0 0.0
  %5884 = vmatpush.msra.mxu0 0.0
  %5885 = vmatpush.msra.mxu0 %v1079
  %5886 = vmatpush.msra.mxu0 %v1071
  %5887 = vmatmul.f32.gmra.mxu0 %v5689
  %v5888 = vpop.f32.mrf.mxu0
  %v5889 = vadd.f32 %v5869, %v5888
  %5890 = vdwg.mxu0
  %5891 = vmatpush.msra.mxu0 %v1064
  %5892 = vmatpush.msra.mxu0 %v1056
  %5893 = vmatpush.msra.mxu0 %v1048
  %5894 = vmatpush.msra.mxu0 %v1040
  %5895 = vmatpush.msra.mxu0 %v1032
  %5896 = vmatpush.msra.mxu0 %v1024
  %5897 = vmatpush.msra.mxu0 %v1016
  %5898 = vmatpush.msra.mxu0 %v1008
  %5899 = vmatpush.msra.mxu0 %v1000
  %5900 = vmatpush.msra.mxu0 %v992
  %5901 = vmatpush.msra.mxu0 %v984
  %5902 = vmatpush.msra.mxu0 %v976
  %5903 = vmatpush.msra.mxu0 %v968
  %5904 = vmatpush.msra.mxu0 %v960
  %5905 = vmatpush.msra.mxu0 %v952
  %5906 = vmatpush.msra.mxu0 %v944
  %5907 = vmatmul.f32.gmra.mxu0 %v5676
  %v5908 = vpop.f32.mrf.mxu0
  %v5909 = vadd.f32 0.0, %v5908
  %5910 = vdwg.mxu0
  %5911 = vmatpush.msra.mxu0 0.0
  %5912 = vmatpush.msra.mxu0 0.0
  %5913 = vmatpush.msra.mxu0 0.0
  %5914 = vmatpush.msra.mxu0 0.0
  %5915 = vmatpush.msra.mxu0 0.0
  %5916 = vmatpush.msra.mxu0 0.0
  %5917 = vmatpush.msra.mxu0 0.0
  %5918 = vmatpush.msra.mxu0 0.0
  %5919 = vmatpush.msra.mxu0 0.0
  %5920 = vmatpush.msra.mxu0 0.0
  %5921 = vmatpush.msra.mxu0 0.0
  %5922 = vmatpush.msra.mxu0 0.0
  %5923 = vmatpush.msra.mxu0 0.0
  %5924 = vmatpush.msra.mxu0 0.0
  %5925 = vmatpush.msra.mxu0 %v1080
  %5926 = vmatpush.msra.mxu0 %v1072
  %5927 = vmatmul.f32.gmra.mxu0 %v5689
  %v5928 = vpop.f32.mrf.mxu0
  %v5929 = vadd.f32 %v5909, %v5928
  %5930 = vdwg.mxu0
  %5931 = vmatpush.msra.mxu0 %v1065
  %5932 = vmatpush.msra.mxu0 %v1057
  %5933 = vmatpush.msra.mxu0 %v1049
  %5934 = vmatpush.msra.mxu0 %v1041
  %5935 = vmatpush.msra.mxu0 %v1033
  %5936 = vmatpush.msra.mxu0 %v1025
  %5937 = vmatpush.msra.mxu0 %v1017
  %5938 = vmatpush.msra.mxu0 %v1009
  %5939 = vmatpush.msra.mxu0 %v1001
  %5940 = vmatpush.msra.mxu0 %v993
  %5941 = vmatpush.msra.mxu0 %v985
  %5942 = vmatpush.msra.mxu0 %v977
  %5943 = vmatpush.msra.mxu0 %v969
  %5944 = vmatpush.msra.mxu0 %v961
  %5945 = vmatpush.msra.mxu0 %v953
  %5946 = vmatpush.msra.mxu0 %v945
  %5947 = vmatmul.f32.gmra.mxu0 %v5676
  %v5948 = vpop.f32.mrf.mxu0
  %v5949 = vadd.f32 0.0, %v5948
  %5950 = vdwg.mxu0
  %5951 = vmatpush.msra.mxu0 0.0
  %5952 = vmatpush.msra.mxu0 0.0
  %5953 = vmatpush.msra.mxu0 0.0
  %5954 = vmatpush.msra.mxu0 0.0
  %5955 = vmatpush.msra.mxu0 0.0
  %5956 = vmatpush.msra.mxu0 0.0
  %5957 = vmatpush.msra.mxu0 0.0
  %5958 = vmatpush.msra.mxu0 0.0
  %5959 = vmatpush.msra.mxu0 0.0
  %5960 = vmatpush.msra.mxu0 0.0
  %5961 = vmatpush.msra.mxu0 0.0
  %5962 = vmatpush.msra.mxu0 0.0
  %5963 = vmatpush.msra.mxu0 0.0
  %5964 = vmatpush.msra.mxu0 0.0
  %5965 = vmatpush.msra.mxu0 %v1081
  %5966 = vmatpush.msra.mxu0 %v1073
  %5967 = vmatmul.f32.gmra.mxu0 %v5689
  %v5968 = vpop.f32.mrf.mxu0
  %v5969 = vadd.f32 %v5949, %v5968
  %5970 = vdwg.mxu0
  %5971 = vmatpush.msra.mxu0 %v1066
  %5972 = vmatpush.msra.mxu0 %v1058
  %5973 = vmatpush.msra.mxu0 %v1050
  %5974 = vmatpush.msra.mxu0 %v1042
  %5975 = vmatpush.msra.mxu0 %v1034
  %5976 = vmatpush.msra.mxu0 %v1026
  %5977 = vmatpush.msra.mxu0 %v1018
  %5978 = vmatpush.msra.mxu0 %v1010
  %5979 = vmatpush.msra.mxu0 %v1002
  %5980 = vmatpush.msra.mxu0 %v994
  %5981 = vmatpush.msra.mxu0 %v986
  %5982 = vmatpush.msra.mxu0 %v978
  %5983 = vmatpush.msra.mxu0 %v970
  %5984 = vmatpush.msra.mxu0 %v962
  %5985 = vmatpush.msra.mxu0 %v954
  %5986 = vmatpush.msra.mxu0 %v946
  %5987 = vmatmul.f32.gmra.mxu0 %v5676
  %v5988 = vpop.f32.mrf.mxu0
  %v5989 = vadd.f32 0.0, %v5988
  %5990 = vdwg.mxu0
  %5991 = vmatpush.msra.mxu0 0.0
  %5992 = vmatpush.msra.mxu0 0.0
  %5993 = vmatpush.msra.mxu0 0.0
  %5994 = vmatpush.msra.mxu0 0.0
  %5995 = vmatpush.msra.mxu0 0.0
  %5996 = vmatpush.msra.mxu0 0.0
  %5997 = vmatpush.msra.mxu0 0.0
  %5998 = vmatpush.msra.mxu0 0.0
  %5999 = vmatpush.msra.mxu0 0.0
  %6000 = vmatpush.msra.mxu0 0.0
  %6001 = vmatpush.msra.mxu0 0.0
  %6002 = vmatpush.msra.mxu0 0.0
  %6003 = vmatpush.msra.mxu0 0.0
  %6004 = vmatpush.msra.mxu0 0.0
  %6005 = vmatpush.msra.mxu0 %v1082
  %6006 = vmatpush.msra.mxu0 %v1074
  %6007 = vmatmul.f32.gmra.mxu0 %v5689
  %v6008 = vpop.f32.mrf.mxu0
  %v6009 = vadd.f32 %v5989, %v6008
  %6010 = vdwg.mxu0
  %v6011 = vadd.f32 %v5680, %v5729
  %v6012 = vadd.f32 %v5681, %v5769
  %v6013 = vadd.f32 %v5682, %v5809
  %v6014 = vadd.f32 %v5683, %v5849
  %v6015 = vadd.f32 %v5684, %v5889
  %v6016 = vadd.f32 %v5685, %v5929
  %v6017 = vadd.f32 %v5686, %v5969
  %v6018 = vadd.f32 %v5687, %v6009
  %v6019 = vsub.f32 0.0, %v6011
  %v6020 = vsub.f32 0.0, %v6012
  %v6021 = vmul.f32 %v6019, 1.442695
  %v6022 = vpow.pop %v6021
  %v6023 = vmul.f32 %v6020, 1.442695
  %v6024 = vpow.pop %v6023
  %v6025 = vadd.f32 %v6022, 1.0
  %v6026 = vadd.f32 %v6024, 1.0
  %v6027 = vrcp.pop %v6025
  %v6028 = vrcp.pop %v6026
  %v6029 = vsub.f32 0.0, %v6013
  %v6030 = vsub.f32 0.0, %v6014
  %v6031 = vmul.f32 %v6029, 1.442695
  %v6032 = vpow.pop %v6031
  %v6033 = vmul.f32 %v6030, 1.442695
  %v6034 = vpow.pop %v6033
  %v6035 = vadd.f32 %v6032, 1.0
  %v6036 = vadd.f32 %v6034, 1.0
  %v6037 = vrcp.pop %v6035
  %v6038 = vrcp.pop %v6036
  %v6039 = vtanh.pop %v6015
  %v6040 = vtanh.pop %v6016
  %v6041 = vsub.f32 0.0, %v6017
  %v6042 = vsub.f32 0.0, %v6018
  %v6043 = vmul.f32 %v6041, 1.442695
  %v6044 = vpow.pop %v6043
  %v6045 = vmul.f32 %v6042, 1.442695
  %v6046 = vpow.pop %v6045
  %v6047 = vadd.f32 %v6044, 1.0
  %v6048 = vadd.f32 %v6046, 1.0
  %v6049 = vrcp.pop %v6047
  %v6050 = vrcp.pop %v6048
  %v6051 = vmul.f32 %v6037, %v5672
  %v6052 = vmul.f32 %v6038, %v5673
  %v6053 = vmul.f32 %v6027, %v6039
  %v6054 = vmul.f32 %v6028, %v6040
  %v6055 = vadd.f32 %v6051, %v6053
  %v6056 = vadd.f32 %v6052, %v6054
  %v6057 = vtanh.pop %v6055
  %v6058 = vtanh.pop %v6056
  %v6059 = vmul.f32 %v6049, %v6057
  %v6060 = vmul.f32 %v6050, %v6058
  %6061 = vst [vmem:[#allocation3 + $0xc0] sm:$0xff] %v6059
  %6062 = vst.msk [vmem:[#allocation3 + $0xc8] sm:$0xff] %vm1091, %v6060
  %v6063 = vld [vmem:[#allocation2 + $0x340] sm:$0xff]
  %v6064 = vld [vmem:[#allocation2 + $0x348] sm:$0xff]
  %v6065 = vld [vmem:[#allocation2 + $0x350] sm:$0xff]
  %v6066 = vld [vmem:[#allocation2 + $0x358] sm:$0xff]
  %v6067 = vld [vmem:[#allocation2 + $0x360] sm:$0xff]
  %v6068 = vld [vmem:[#allocation2 + $0x368] sm:$0xff]
  %v6069 = vld [vmem:[#allocation2 + $0x370] sm:$0xff]
  %v6070 = vld [vmem:[#allocation2 + $0x378] sm:$0xff]
  %v6072 = vsel %vm1091, %v6060, 0
  %6074 = vmatpush.msra.mxu0 %v1059
  %6075 = vmatpush.msra.mxu0 %v1051
  %6076 = vmatpush.msra.mxu0 %v1043
  %6077 = vmatpush.msra.mxu0 %v1035
  %6078 = vmatpush.msra.mxu0 %v1027
  %6079 = vmatpush.msra.mxu0 %v1019
  %6080 = vmatpush.msra.mxu0 %v1011
  %6081 = vmatpush.msra.mxu0 %v1003
  %6082 = vmatpush.msra.mxu0 %v995
  %6083 = vmatpush.msra.mxu0 %v987
  %6084 = vmatpush.msra.mxu0 %v979
  %6085 = vmatpush.msra.mxu0 %v971
  %6086 = vmatpush.msra.mxu0 %v963
  %6087 = vmatpush.msra.mxu0 %v955
  %6088 = vmatpush.msra.mxu0 %v947
  %6089 = vmatpush.msra.mxu0 %v939
  %6090 = vmatmul.f32.gmra.mxu0 %v6059
  %v6091 = vpop.f32.mrf.mxu0
  %v6092 = vadd.f32 0.0, %v6091
  %6093 = vdwg.mxu0
  %6094 = vmatpush.msra.mxu0 0.0
  %6095 = vmatpush.msra.mxu0 0.0
  %6096 = vmatpush.msra.mxu0 0.0
  %6097 = vmatpush.msra.mxu0 0.0
  %6098 = vmatpush.msra.mxu0 0.0
  %6099 = vmatpush.msra.mxu0 0.0
  %6100 = vmatpush.msra.mxu0 0.0
  %6101 = vmatpush.msra.mxu0 0.0
  %6102 = vmatpush.msra.mxu0 0.0
  %6103 = vmatpush.msra.mxu0 0.0
  %6104 = vmatpush.msra.mxu0 0.0
  %6105 = vmatpush.msra.mxu0 0.0
  %6106 = vmatpush.msra.mxu0 0.0
  %6107 = vmatpush.msra.mxu0 0.0
  %6108 = vmatpush.msra.mxu0 %v1075
  %6109 = vmatpush.msra.mxu0 %v1067
  %6110 = vmatmul.f32.gmra.mxu0 %v6072
  %v6111 = vpop.f32.mrf.mxu0
  %v6112 = vadd.f32 %v6092, %v6111
  %6113 = vdwg.mxu0
  %6114 = vmatpush.msra.mxu0 %v1060
  %6115 = vmatpush.msra.mxu0 %v1052
  %6116 = vmatpush.msra.mxu0 %v1044
  %6117 = vmatpush.msra.mxu0 %v1036
  %6118 = vmatpush.msra.mxu0 %v1028
  %6119 = vmatpush.msra.mxu0 %v1020
  %6120 = vmatpush.msra.mxu0 %v1012
  %6121 = vmatpush.msra.mxu0 %v1004
  %6122 = vmatpush.msra.mxu0 %v996
  %6123 = vmatpush.msra.mxu0 %v988
  %6124 = vmatpush.msra.mxu0 %v980
  %6125 = vmatpush.msra.mxu0 %v972
  %6126 = vmatpush.msra.mxu0 %v964
  %6127 = vmatpush.msra.mxu0 %v956
  %6128 = vmatpush.msra.mxu0 %v948
  %6129 = vmatpush.msra.mxu0 %v940
  %6130 = vmatmul.f32.gmra.mxu0 %v6059
  %v6131 = vpop.f32.mrf.mxu0
  %v6132 = vadd.f32 0.0, %v6131
  %6133 = vdwg.mxu0
  %6134 = vmatpush.msra.mxu0 0.0
  %6135 = vmatpush.msra.mxu0 0.0
  %6136 = vmatpush.msra.mxu0 0.0
  %6137 = vmatpush.msra.mxu0 0.0
  %6138 = vmatpush.msra.mxu0 0.0
  %6139 = vmatpush.msra.mxu0 0.0
  %6140 = vmatpush.msra.mxu0 0.0
  %6141 = vmatpush.msra.mxu0 0.0
  %6142 = vmatpush.msra.mxu0 0.0
  %6143 = vmatpush.msra.mxu0 0.0
  %6144 = vmatpush.msra.mxu0 0.0
  %6145 = vmatpush.msra.mxu0 0.0
  %6146 = vmatpush.msra.mxu0 0.0
  %6147 = vmatpush.msra.mxu0 0.0
  %6148 = vmatpush.msra.mxu0 %v1076
  %6149 = vmatpush.msra.mxu0 %v1068
  %6150 = vmatmul.f32.gmra.mxu0 %v6072
  %v6151 = vpop.f32.mrf.mxu0
  %v6152 = vadd.f32 %v6132, %v6151
  %6153 = vdwg.mxu0
  %6154 = vmatpush.msra.mxu0 %v1061
  %6155 = vmatpush.msra.mxu0 %v1053
  %6156 = vmatpush.msra.mxu0 %v1045
  %6157 = vmatpush.msra.mxu0 %v1037
  %6158 = vmatpush.msra.mxu0 %v1029
  %6159 = vmatpush.msra.mxu0 %v1021
  %6160 = vmatpush.msra.mxu0 %v1013
  %6161 = vmatpush.msra.mxu0 %v1005
  %6162 = vmatpush.msra.mxu0 %v997
  %6163 = vmatpush.msra.mxu0 %v989
  %6164 = vmatpush.msra.mxu0 %v981
  %6165 = vmatpush.msra.mxu0 %v973
  %6166 = vmatpush.msra.mxu0 %v965
  %6167 = vmatpush.msra.mxu0 %v957
  %6168 = vmatpush.msra.mxu0 %v949
  %6169 = vmatpush.msra.mxu0 %v941
  %6170 = vmatmul.f32.gmra.mxu0 %v6059
  %v6171 = vpop.f32.mrf.mxu0
  %v6172 = vadd.f32 0.0, %v6171
  %6173 = vdwg.mxu0
  %6174 = vmatpush.msra.mxu0 0.0
  %6175 = vmatpush.msra.mxu0 0.0
  %6176 = vmatpush.msra.mxu0 0.0
  %6177 = vmatpush.msra.mxu0 0.0
  %6178 = vmatpush.msra.mxu0 0.0
  %6179 = vmatpush.msra.mxu0 0.0
  %6180 = vmatpush.msra.mxu0 0.0
  %6181 = vmatpush.msra.mxu0 0.0
  %6182 = vmatpush.msra.mxu0 0.0
  %6183 = vmatpush.msra.mxu0 0.0
  %6184 = vmatpush.msra.mxu0 0.0
  %6185 = vmatpush.msra.mxu0 0.0
  %6186 = vmatpush.msra.mxu0 0.0
  %6187 = vmatpush.msra.mxu0 0.0
  %6188 = vmatpush.msra.mxu0 %v1077
  %6189 = vmatpush.msra.mxu0 %v1069
  %6190 = vmatmul.f32.gmra.mxu0 %v6072
  %v6191 = vpop.f32.mrf.mxu0
  %v6192 = vadd.f32 %v6172, %v6191
  %6193 = vdwg.mxu0
  %6194 = vmatpush.msra.mxu0 %v1062
  %6195 = vmatpush.msra.mxu0 %v1054
  %6196 = vmatpush.msra.mxu0 %v1046
  %6197 = vmatpush.msra.mxu0 %v1038
  %6198 = vmatpush.msra.mxu0 %v1030
  %6199 = vmatpush.msra.mxu0 %v1022
  %6200 = vmatpush.msra.mxu0 %v1014
  %6201 = vmatpush.msra.mxu0 %v1006
  %6202 = vmatpush.msra.mxu0 %v998
  %6203 = vmatpush.msra.mxu0 %v990
  %6204 = vmatpush.msra.mxu0 %v982
  %6205 = vmatpush.msra.mxu0 %v974
  %6206 = vmatpush.msra.mxu0 %v966
  %6207 = vmatpush.msra.mxu0 %v958
  %6208 = vmatpush.msra.mxu0 %v950
  %6209 = vmatpush.msra.mxu0 %v942
  %6210 = vmatmul.f32.gmra.mxu0 %v6059
  %v6211 = vpop.f32.mrf.mxu0
  %v6212 = vadd.f32 0.0, %v6211
  %6213 = vdwg.mxu0
  %6214 = vmatpush.msra.mxu0 0.0
  %6215 = vmatpush.msra.mxu0 0.0
  %6216 = vmatpush.msra.mxu0 0.0
  %6217 = vmatpush.msra.mxu0 0.0
  %6218 = vmatpush.msra.mxu0 0.0
  %6219 = vmatpush.msra.mxu0 0.0
  %6220 = vmatpush.msra.mxu0 0.0
  %6221 = vmatpush.msra.mxu0 0.0
  %6222 = vmatpush.msra.mxu0 0.0
  %6223 = vmatpush.msra.mxu0 0.0
  %6224 = vmatpush.msra.mxu0 0.0
  %6225 = vmatpush.msra.mxu0 0.0
  %6226 = vmatpush.msra.mxu0 0.0
  %6227 = vmatpush.msra.mxu0 0.0
  %6228 = vmatpush.msra.mxu0 %v1078
  %6229 = vmatpush.msra.mxu0 %v1070
  %6230 = vmatmul.f32.gmra.mxu0 %v6072
  %v6231 = vpop.f32.mrf.mxu0
  %v6232 = vadd.f32 %v6212, %v6231
  %6233 = vdwg.mxu0
  %6234 = vmatpush.msra.mxu0 %v1063
  %6235 = vmatpush.msra.mxu0 %v1055
  %6236 = vmatpush.msra.mxu0 %v1047
  %6237 = vmatpush.msra.mxu0 %v1039
  %6238 = vmatpush.msra.mxu0 %v1031
  %6239 = vmatpush.msra.mxu0 %v1023
  %6240 = vmatpush.msra.mxu0 %v1015
  %6241 = vmatpush.msra.mxu0 %v1007
  %6242 = vmatpush.msra.mxu0 %v999
  %6243 = vmatpush.msra.mxu0 %v991
  %6244 = vmatpush.msra.mxu0 %v983
  %6245 = vmatpush.msra.mxu0 %v975
  %6246 = vmatpush.msra.mxu0 %v967
  %6247 = vmatpush.msra.mxu0 %v959
  %6248 = vmatpush.msra.mxu0 %v951
  %6249 = vmatpush.msra.mxu0 %v943
  %6250 = vmatmul.f32.gmra.mxu0 %v6059
  %v6251 = vpop.f32.mrf.mxu0
  %v6252 = vadd.f32 0.0, %v6251
  %6253 = vdwg.mxu0
  %6254 = vmatpush.msra.mxu0 0.0
  %6255 = vmatpush.msra.mxu0 0.0
  %6256 = vmatpush.msra.mxu0 0.0
  %6257 = vmatpush.msra.mxu0 0.0
  %6258 = vmatpush.msra.mxu0 0.0
  %6259 = vmatpush.msra.mxu0 0.0
  %6260 = vmatpush.msra.mxu0 0.0
  %6261 = vmatpush.msra.mxu0 0.0
  %6262 = vmatpush.msra.mxu0 0.0
  %6263 = vmatpush.msra.mxu0 0.0
  %6264 = vmatpush.msra.mxu0 0.0
  %6265 = vmatpush.msra.mxu0 0.0
  %6266 = vmatpush.msra.mxu0 0.0
  %6267 = vmatpush.msra.mxu0 0.0
  %6268 = vmatpush.msra.mxu0 %v1079
  %6269 = vmatpush.msra.mxu0 %v1071
  %6270 = vmatmul.f32.gmra.mxu0 %v6072
  %v6271 = vpop.f32.mrf.mxu0
  %v6272 = vadd.f32 %v6252, %v6271
  %6273 = vdwg.mxu0
  %6274 = vmatpush.msra.mxu0 %v1064
  %6275 = vmatpush.msra.mxu0 %v1056
  %6276 = vmatpush.msra.mxu0 %v1048
  %6277 = vmatpush.msra.mxu0 %v1040
  %6278 = vmatpush.msra.mxu0 %v1032
  %6279 = vmatpush.msra.mxu0 %v1024
  %6280 = vmatpush.msra.mxu0 %v1016
  %6281 = vmatpush.msra.mxu0 %v1008
  %6282 = vmatpush.msra.mxu0 %v1000
  %6283 = vmatpush.msra.mxu0 %v992
  %6284 = vmatpush.msra.mxu0 %v984
  %6285 = vmatpush.msra.mxu0 %v976
  %6286 = vmatpush.msra.mxu0 %v968
  %6287 = vmatpush.msra.mxu0 %v960
  %6288 = vmatpush.msra.mxu0 %v952
  %6289 = vmatpush.msra.mxu0 %v944
  %6290 = vmatmul.f32.gmra.mxu0 %v6059
  %v6291 = vpop.f32.mrf.mxu0
  %v6292 = vadd.f32 0.0, %v6291
  %6293 = vdwg.mxu0
  %6294 = vmatpush.msra.mxu0 0.0
  %6295 = vmatpush.msra.mxu0 0.0
  %6296 = vmatpush.msra.mxu0 0.0
  %6297 = vmatpush.msra.mxu0 0.0
  %6298 = vmatpush.msra.mxu0 0.0
  %6299 = vmatpush.msra.mxu0 0.0
  %6300 = vmatpush.msra.mxu0 0.0
  %6301 = vmatpush.msra.mxu0 0.0
  %6302 = vmatpush.msra.mxu0 0.0
  %6303 = vmatpush.msra.mxu0 0.0
  %6304 = vmatpush.msra.mxu0 0.0
  %6305 = vmatpush.msra.mxu0 0.0
  %6306 = vmatpush.msra.mxu0 0.0
  %6307 = vmatpush.msra.mxu0 0.0
  %6308 = vmatpush.msra.mxu0 %v1080
  %6309 = vmatpush.msra.mxu0 %v1072
  %6310 = vmatmul.f32.gmra.mxu0 %v6072
  %v6311 = vpop.f32.mrf.mxu0
  %v6312 = vadd.f32 %v6292, %v6311
  %6313 = vdwg.mxu0
  %6314 = vmatpush.msra.mxu0 %v1065
  %6315 = vmatpush.msra.mxu0 %v1057
  %6316 = vmatpush.msra.mxu0 %v1049
  %6317 = vmatpush.msra.mxu0 %v1041
  %6318 = vmatpush.msra.mxu0 %v1033
  %6319 = vmatpush.msra.mxu0 %v1025
  %6320 = vmatpush.msra.mxu0 %v1017
  %6321 = vmatpush.msra.mxu0 %v1009
  %6322 = vmatpush.msra.mxu0 %v1001
  %6323 = vmatpush.msra.mxu0 %v993
  %6324 = vmatpush.msra.mxu0 %v985
  %6325 = vmatpush.msra.mxu0 %v977
  %6326 = vmatpush.msra.mxu0 %v969
  %6327 = vmatpush.msra.mxu0 %v961
  %6328 = vmatpush.msra.mxu0 %v953
  %6329 = vmatpush.msra.mxu0 %v945
  %6330 = vmatmul.f32.gmra.mxu0 %v6059
  %v6331 = vpop.f32.mrf.mxu0
  %v6332 = vadd.f32 0.0, %v6331
  %6333 = vdwg.mxu0
  %6334 = vmatpush.msra.mxu0 0.0
  %6335 = vmatpush.msra.mxu0 0.0
  %6336 = vmatpush.msra.mxu0 0.0
  %6337 = vmatpush.msra.mxu0 0.0
  %6338 = vmatpush.msra.mxu0 0.0
  %6339 = vmatpush.msra.mxu0 0.0
  %6340 = vmatpush.msra.mxu0 0.0
  %6341 = vmatpush.msra.mxu0 0.0
  %6342 = vmatpush.msra.mxu0 0.0
  %6343 = vmatpush.msra.mxu0 0.0
  %6344 = vmatpush.msra.mxu0 0.0
  %6345 = vmatpush.msra.mxu0 0.0
  %6346 = vmatpush.msra.mxu0 0.0
  %6347 = vmatpush.msra.mxu0 0.0
  %6348 = vmatpush.msra.mxu0 %v1081
  %6349 = vmatpush.msra.mxu0 %v1073
  %6350 = vmatmul.f32.gmra.mxu0 %v6072
  %v6351 = vpop.f32.mrf.mxu0
  %v6352 = vadd.f32 %v6332, %v6351
  %6353 = vdwg.mxu0
  %6354 = vmatpush.msra.mxu0 %v1066
  %6355 = vmatpush.msra.mxu0 %v1058
  %6356 = vmatpush.msra.mxu0 %v1050
  %6357 = vmatpush.msra.mxu0 %v1042
  %6358 = vmatpush.msra.mxu0 %v1034
  %6359 = vmatpush.msra.mxu0 %v1026
  %6360 = vmatpush.msra.mxu0 %v1018
  %6361 = vmatpush.msra.mxu0 %v1010
  %6362 = vmatpush.msra.mxu0 %v1002
  %6363 = vmatpush.msra.mxu0 %v994
  %6364 = vmatpush.msra.mxu0 %v986
  %6365 = vmatpush.msra.mxu0 %v978
  %6366 = vmatpush.msra.mxu0 %v970
  %6367 = vmatpush.msra.mxu0 %v962
  %6368 = vmatpush.msra.mxu0 %v954
  %6369 = vmatpush.msra.mxu0 %v946
  %6370 = vmatmul.f32.gmra.mxu0 %v6059
  %v6371 = vpop.f32.mrf.mxu0
  %v6372 = vadd.f32 0.0, %v6371
  %6373 = vdwg.mxu0
  %6374 = vmatpush.msra.mxu0 0.0
  %6375 = vmatpush.msra.mxu0 0.0
  %6376 = vmatpush.msra.mxu0 0.0
  %6377 = vmatpush.msra.mxu0 0.0
  %6378 = vmatpush.msra.mxu0 0.0
  %6379 = vmatpush.msra.mxu0 0.0
  %6380 = vmatpush.msra.mxu0 0.0
  %6381 = vmatpush.msra.mxu0 0.0
  %6382 = vmatpush.msra.mxu0 0.0
  %6383 = vmatpush.msra.mxu0 0.0
  %6384 = vmatpush.msra.mxu0 0.0
  %6385 = vmatpush.msra.mxu0 0.0
  %6386 = vmatpush.msra.mxu0 0.0
  %6387 = vmatpush.msra.mxu0 0.0
  %6388 = vmatpush.msra.mxu0 %v1082
  %6389 = vmatpush.msra.mxu0 %v1074
  %6390 = vmatmul.f32.gmra.mxu0 %v6072
  %v6391 = vpop.f32.mrf.mxu0
  %v6392 = vadd.f32 %v6372, %v6391
  %6393 = vdwg.mxu0
  %v6394 = vadd.f32 %v6063, %v6112
  %v6395 = vadd.f32 %v6064, %v6152
  %v6396 = vadd.f32 %v6065, %v6192
  %v6397 = vadd.f32 %v6066, %v6232
  %v6398 = vadd.f32 %v6067, %v6272
  %v6399 = vadd.f32 %v6068, %v6312
  %v6400 = vadd.f32 %v6069, %v6352
  %v6401 = vadd.f32 %v6070, %v6392
  %v6402 = vsub.f32 0.0, %v6394
  %v6403 = vsub.f32 0.0, %v6395
  %v6404 = vmul.f32 %v6402, 1.442695
  %v6405 = vpow.pop %v6404
  %v6406 = vmul.f32 %v6403, 1.442695
  %v6407 = vpow.pop %v6406
  %v6408 = vadd.f32 %v6405, 1.0
  %v6409 = vadd.f32 %v6407, 1.0
  %v6410 = vrcp.pop %v6408
  %v6411 = vrcp.pop %v6409
  %v6412 = vsub.f32 0.0, %v6396
  %v6413 = vsub.f32 0.0, %v6397
  %v6414 = vmul.f32 %v6412, 1.442695
  %v6415 = vpow.pop %v6414
  %v6416 = vmul.f32 %v6413, 1.442695
  %v6417 = vpow.pop %v6416
  %v6418 = vadd.f32 %v6415, 1.0
  %v6419 = vadd.f32 %v6417, 1.0
  %v6420 = vrcp.pop %v6418
  %v6421 = vrcp.pop %v6419
  %v6422 = vtanh.pop %v6398
  %v6423 = vtanh.pop %v6399
  %v6424 = vsub.f32 0.0, %v6400
  %v6425 = vsub.f32 0.0, %v6401
  %v6426 = vmul.f32 %v6424, 1.442695
  %v6427 = vpow.pop %v6426
  %v6428 = vmul.f32 %v6425, 1.442695
  %v6429 = vpow.pop %v6428
  %v6430 = vadd.f32 %v6427, 1.0
  %v6431 = vadd.f32 %v6429, 1.0
  %v6432 = vrcp.pop %v6430
  %v6433 = vrcp.pop %v6431
  %v6434 = vmul.f32 %v6420, %v6055
  %v6435 = vmul.f32 %v6421, %v6056
  %v6436 = vmul.f32 %v6410, %v6422
  %v6437 = vmul.f32 %v6411, %v6423
  %v6438 = vadd.f32 %v6434, %v6436
  %v6439 = vadd.f32 %v6435, %v6437
  %v6440 = vtanh.pop %v6438
  %v6441 = vtanh.pop %v6439
  %v6442 = vmul.f32 %v6432, %v6440
  %v6443 = vmul.f32 %v6433, %v6441
  %6444 = vst [vmem:[#allocation3 + $0xd0] sm:$0xff] %v6442
  %6445 = vst.msk [vmem:[#allocation3 + $0xd8] sm:$0xff] %vm1091, %v6443
  %v6446 = vld [vmem:[#allocation2 + $0x380] sm:$0xff]
  %v6447 = vld [vmem:[#allocation2 + $0x388] sm:$0xff]
  %v6448 = vld [vmem:[#allocation2 + $0x390] sm:$0xff]
  %v6449 = vld [vmem:[#allocation2 + $0x398] sm:$0xff]
  %v6450 = vld [vmem:[#allocation2 + $0x3a0] sm:$0xff]
  %v6451 = vld [vmem:[#allocation2 + $0x3a8] sm:$0xff]
  %v6452 = vld [vmem:[#allocation2 + $0x3b0] sm:$0xff]
  %v6453 = vld [vmem:[#allocation2 + $0x3b8] sm:$0xff]
  %v6455 = vsel %vm1091, %v6443, 0
  %6457 = vmatpush.msra.mxu0 %v1059
  %6458 = vmatpush.msra.mxu0 %v1051
  %6459 = vmatpush.msra.mxu0 %v1043
  %6460 = vmatpush.msra.mxu0 %v1035
  %6461 = vmatpush.msra.mxu0 %v1027
  %6462 = vmatpush.msra.mxu0 %v1019
  %6463 = vmatpush.msra.mxu0 %v1011
  %6464 = vmatpush.msra.mxu0 %v1003
  %6465 = vmatpush.msra.mxu0 %v995
  %6466 = vmatpush.msra.mxu0 %v987
  %6467 = vmatpush.msra.mxu0 %v979
  %6468 = vmatpush.msra.mxu0 %v971
  %6469 = vmatpush.msra.mxu0 %v963
  %6470 = vmatpush.msra.mxu0 %v955
  %6471 = vmatpush.msra.mxu0 %v947
  %6472 = vmatpush.msra.mxu0 %v939
  %6473 = vmatmul.f32.gmra.mxu0 %v6442
  %v6474 = vpop.f32.mrf.mxu0
  %v6475 = vadd.f32 0.0, %v6474
  %6476 = vdwg.mxu0
  %6477 = vmatpush.msra.mxu0 0.0
  %6478 = vmatpush.msra.mxu0 0.0
  %6479 = vmatpush.msra.mxu0 0.0
  %6480 = vmatpush.msra.mxu0 0.0
  %6481 = vmatpush.msra.mxu0 0.0
  %6482 = vmatpush.msra.mxu0 0.0
  %6483 = vmatpush.msra.mxu0 0.0
  %6484 = vmatpush.msra.mxu0 0.0
  %6485 = vmatpush.msra.mxu0 0.0
  %6486 = vmatpush.msra.mxu0 0.0
  %6487 = vmatpush.msra.mxu0 0.0
  %6488 = vmatpush.msra.mxu0 0.0
  %6489 = vmatpush.msra.mxu0 0.0
  %6490 = vmatpush.msra.mxu0 0.0
  %6491 = vmatpush.msra.mxu0 %v1075
  %6492 = vmatpush.msra.mxu0 %v1067
  %6493 = vmatmul.f32.gmra.mxu0 %v6455
  %v6494 = vpop.f32.mrf.mxu0
  %v6495 = vadd.f32 %v6475, %v6494
  %6496 = vdwg.mxu0
  %6497 = vmatpush.msra.mxu0 %v1060
  %6498 = vmatpush.msra.mxu0 %v1052
  %6499 = vmatpush.msra.mxu0 %v1044
  %6500 = vmatpush.msra.mxu0 %v1036
  %6501 = vmatpush.msra.mxu0 %v1028
  %6502 = vmatpush.msra.mxu0 %v1020
  %6503 = vmatpush.msra.mxu0 %v1012
  %6504 = vmatpush.msra.mxu0 %v1004
  %6505 = vmatpush.msra.mxu0 %v996
  %6506 = vmatpush.msra.mxu0 %v988
  %6507 = vmatpush.msra.mxu0 %v980
  %6508 = vmatpush.msra.mxu0 %v972
  %6509 = vmatpush.msra.mxu0 %v964
  %6510 = vmatpush.msra.mxu0 %v956
  %6511 = vmatpush.msra.mxu0 %v948
  %6512 = vmatpush.msra.mxu0 %v940
  %6513 = vmatmul.f32.gmra.mxu0 %v6442
  %v6514 = vpop.f32.mrf.mxu0
  %v6515 = vadd.f32 0.0, %v6514
  %6516 = vdwg.mxu0
  %6517 = vmatpush.msra.mxu0 0.0
  %6518 = vmatpush.msra.mxu0 0.0
  %6519 = vmatpush.msra.mxu0 0.0
  %6520 = vmatpush.msra.mxu0 0.0
  %6521 = vmatpush.msra.mxu0 0.0
  %6522 = vmatpush.msra.mxu0 0.0
  %6523 = vmatpush.msra.mxu0 0.0
  %6524 = vmatpush.msra.mxu0 0.0
  %6525 = vmatpush.msra.mxu0 0.0
  %6526 = vmatpush.msra.mxu0 0.0
  %6527 = vmatpush.msra.mxu0 0.0
  %6528 = vmatpush.msra.mxu0 0.0
  %6529 = vmatpush.msra.mxu0 0.0
  %6530 = vmatpush.msra.mxu0 0.0
  %6531 = vmatpush.msra.mxu0 %v1076
  %6532 = vmatpush.msra.mxu0 %v1068
  %6533 = vmatmul.f32.gmra.mxu0 %v6455
  %v6534 = vpop.f32.mrf.mxu0
  %v6535 = vadd.f32 %v6515, %v6534
  %6536 = vdwg.mxu0
  %6537 = vmatpush.msra.mxu0 %v1061
  %6538 = vmatpush.msra.mxu0 %v1053
  %6539 = vmatpush.msra.mxu0 %v1045
  %6540 = vmatpush.msra.mxu0 %v1037
  %6541 = vmatpush.msra.mxu0 %v1029
  %6542 = vmatpush.msra.mxu0 %v1021
  %6543 = vmatpush.msra.mxu0 %v1013
  %6544 = vmatpush.msra.mxu0 %v1005
  %6545 = vmatpush.msra.mxu0 %v997
  %6546 = vmatpush.msra.mxu0 %v989
  %6547 = vmatpush.msra.mxu0 %v981
  %6548 = vmatpush.msra.mxu0 %v973
  %6549 = vmatpush.msra.mxu0 %v965
  %6550 = vmatpush.msra.mxu0 %v957
  %6551 = vmatpush.msra.mxu0 %v949
  %6552 = vmatpush.msra.mxu0 %v941
  %6553 = vmatmul.f32.gmra.mxu0 %v6442
  %v6554 = vpop.f32.mrf.mxu0
  %v6555 = vadd.f32 0.0, %v6554
  %6556 = vdwg.mxu0
  %6557 = vmatpush.msra.mxu0 0.0
  %6558 = vmatpush.msra.mxu0 0.0
  %6559 = vmatpush.msra.mxu0 0.0
  %6560 = vmatpush.msra.mxu0 0.0
  %6561 = vmatpush.msra.mxu0 0.0
  %6562 = vmatpush.msra.mxu0 0.0
  %6563 = vmatpush.msra.mxu0 0.0
  %6564 = vmatpush.msra.mxu0 0.0
  %6565 = vmatpush.msra.mxu0 0.0
  %6566 = vmatpush.msra.mxu0 0.0
  %6567 = vmatpush.msra.mxu0 0.0
  %6568 = vmatpush.msra.mxu0 0.0
  %6569 = vmatpush.msra.mxu0 0.0
  %6570 = vmatpush.msra.mxu0 0.0
  %6571 = vmatpush.msra.mxu0 %v1077
  %6572 = vmatpush.msra.mxu0 %v1069
  %6573 = vmatmul.f32.gmra.mxu0 %v6455
  %v6574 = vpop.f32.mrf.mxu0
  %v6575 = vadd.f32 %v6555, %v6574
  %6576 = vdwg.mxu0
  %6577 = vmatpush.msra.mxu0 %v1062
  %6578 = vmatpush.msra.mxu0 %v1054
  %6579 = vmatpush.msra.mxu0 %v1046
  %6580 = vmatpush.msra.mxu0 %v1038
  %6581 = vmatpush.msra.mxu0 %v1030
  %6582 = vmatpush.msra.mxu0 %v1022
  %6583 = vmatpush.msra.mxu0 %v1014
  %6584 = vmatpush.msra.mxu0 %v1006
  %6585 = vmatpush.msra.mxu0 %v998
  %6586 = vmatpush.msra.mxu0 %v990
  %6587 = vmatpush.msra.mxu0 %v982
  %6588 = vmatpush.msra.mxu0 %v974
  %6589 = vmatpush.msra.mxu0 %v966
  %6590 = vmatpush.msra.mxu0 %v958
  %6591 = vmatpush.msra.mxu0 %v950
  %6592 = vmatpush.msra.mxu0 %v942
  %6593 = vmatmul.f32.gmra.mxu0 %v6442
  %v6594 = vpop.f32.mrf.mxu0
  %v6595 = vadd.f32 0.0, %v6594
  %6596 = vdwg.mxu0
  %6597 = vmatpush.msra.mxu0 0.0
  %6598 = vmatpush.msra.mxu0 0.0
  %6599 = vmatpush.msra.mxu0 0.0
  %6600 = vmatpush.msra.mxu0 0.0
  %6601 = vmatpush.msra.mxu0 0.0
  %6602 = vmatpush.msra.mxu0 0.0
  %6603 = vmatpush.msra.mxu0 0.0
  %6604 = vmatpush.msra.mxu0 0.0
  %6605 = vmatpush.msra.mxu0 0.0
  %6606 = vmatpush.msra.mxu0 0.0
  %6607 = vmatpush.msra.mxu0 0.0
  %6608 = vmatpush.msra.mxu0 0.0
  %6609 = vmatpush.msra.mxu0 0.0
  %6610 = vmatpush.msra.mxu0 0.0
  %6611 = vmatpush.msra.mxu0 %v1078
  %6612 = vmatpush.msra.mxu0 %v1070
  %6613 = vmatmul.f32.gmra.mxu0 %v6455
  %v6614 = vpop.f32.mrf.mxu0
  %v6615 = vadd.f32 %v6595, %v6614
  %6616 = vdwg.mxu0
  %6617 = vmatpush.msra.mxu0 %v1063
  %6618 = vmatpush.msra.mxu0 %v1055
  %6619 = vmatpush.msra.mxu0 %v1047
  %6620 = vmatpush.msra.mxu0 %v1039
  %6621 = vmatpush.msra.mxu0 %v1031
  %6622 = vmatpush.msra.mxu0 %v1023
  %6623 = vmatpush.msra.mxu0 %v1015
  %6624 = vmatpush.msra.mxu0 %v1007
  %6625 = vmatpush.msra.mxu0 %v999
  %6626 = vmatpush.msra.mxu0 %v991
  %6627 = vmatpush.msra.mxu0 %v983
  %6628 = vmatpush.msra.mxu0 %v975
  %6629 = vmatpush.msra.mxu0 %v967
  %6630 = vmatpush.msra.mxu0 %v959
  %6631 = vmatpush.msra.mxu0 %v951
  %6632 = vmatpush.msra.mxu0 %v943
  %6633 = vmatmul.f32.gmra.mxu0 %v6442
  %v6634 = vpop.f32.mrf.mxu0
  %v6635 = vadd.f32 0.0, %v6634
  %6636 = vdwg.mxu0
  %6637 = vmatpush.msra.mxu0 0.0
  %6638 = vmatpush.msra.mxu0 0.0
  %6639 = vmatpush.msra.mxu0 0.0
  %6640 = vmatpush.msra.mxu0 0.0
  %6641 = vmatpush.msra.mxu0 0.0
  %6642 = vmatpush.msra.mxu0 0.0
  %6643 = vmatpush.msra.mxu0 0.0
  %6644 = vmatpush.msra.mxu0 0.0
  %6645 = vmatpush.msra.mxu0 0.0
  %6646 = vmatpush.msra.mxu0 0.0
  %6647 = vmatpush.msra.mxu0 0.0
  %6648 = vmatpush.msra.mxu0 0.0
  %6649 = vmatpush.msra.mxu0 0.0
  %6650 = vmatpush.msra.mxu0 0.0
  %6651 = vmatpush.msra.mxu0 %v1079
  %6652 = vmatpush.msra.mxu0 %v1071
  %6653 = vmatmul.f32.gmra.mxu0 %v6455
  %v6654 = vpop.f32.mrf.mxu0
  %v6655 = vadd.f32 %v6635, %v6654
  %6656 = vdwg.mxu0
  %6657 = vmatpush.msra.mxu0 %v1064
  %6658 = vmatpush.msra.mxu0 %v1056
  %6659 = vmatpush.msra.mxu0 %v1048
  %6660 = vmatpush.msra.mxu0 %v1040
  %6661 = vmatpush.msra.mxu0 %v1032
  %6662 = vmatpush.msra.mxu0 %v1024
  %6663 = vmatpush.msra.mxu0 %v1016
  %6664 = vmatpush.msra.mxu0 %v1008
  %6665 = vmatpush.msra.mxu0 %v1000
  %6666 = vmatpush.msra.mxu0 %v992
  %6667 = vmatpush.msra.mxu0 %v984
  %6668 = vmatpush.msra.mxu0 %v976
  %6669 = vmatpush.msra.mxu0 %v968
  %6670 = vmatpush.msra.mxu0 %v960
  %6671 = vmatpush.msra.mxu0 %v952
  %6672 = vmatpush.msra.mxu0 %v944
  %6673 = vmatmul.f32.gmra.mxu0 %v6442
  %v6674 = vpop.f32.mrf.mxu0
  %v6675 = vadd.f32 0.0, %v6674
  %6676 = vdwg.mxu0
  %6677 = vmatpush.msra.mxu0 0.0
  %6678 = vmatpush.msra.mxu0 0.0
  %6679 = vmatpush.msra.mxu0 0.0
  %6680 = vmatpush.msra.mxu0 0.0
  %6681 = vmatpush.msra.mxu0 0.0
  %6682 = vmatpush.msra.mxu0 0.0
  %6683 = vmatpush.msra.mxu0 0.0
  %6684 = vmatpush.msra.mxu0 0.0
  %6685 = vmatpush.msra.mxu0 0.0
  %6686 = vmatpush.msra.mxu0 0.0
  %6687 = vmatpush.msra.mxu0 0.0
  %6688 = vmatpush.msra.mxu0 0.0
  %6689 = vmatpush.msra.mxu0 0.0
  %6690 = vmatpush.msra.mxu0 0.0
  %6691 = vmatpush.msra.mxu0 %v1080
  %6692 = vmatpush.msra.mxu0 %v1072
  %6693 = vmatmul.f32.gmra.mxu0 %v6455
  %v6694 = vpop.f32.mrf.mxu0
  %v6695 = vadd.f32 %v6675, %v6694
  %6696 = vdwg.mxu0
  %6697 = vmatpush.msra.mxu0 %v1065
  %6698 = vmatpush.msra.mxu0 %v1057
  %6699 = vmatpush.msra.mxu0 %v1049
  %6700 = vmatpush.msra.mxu0 %v1041
  %6701 = vmatpush.msra.mxu0 %v1033
  %6702 = vmatpush.msra.mxu0 %v1025
  %6703 = vmatpush.msra.mxu0 %v1017
  %6704 = vmatpush.msra.mxu0 %v1009
  %6705 = vmatpush.msra.mxu0 %v1001
  %6706 = vmatpush.msra.mxu0 %v993
  %6707 = vmatpush.msra.mxu0 %v985
  %6708 = vmatpush.msra.mxu0 %v977
  %6709 = vmatpush.msra.mxu0 %v969
  %6710 = vmatpush.msra.mxu0 %v961
  %6711 = vmatpush.msra.mxu0 %v953
  %6712 = vmatpush.msra.mxu0 %v945
  %6713 = vmatmul.f32.gmra.mxu0 %v6442
  %v6714 = vpop.f32.mrf.mxu0
  %v6715 = vadd.f32 0.0, %v6714
  %6716 = vdwg.mxu0
  %6717 = vmatpush.msra.mxu0 0.0
  %6718 = vmatpush.msra.mxu0 0.0
  %6719 = vmatpush.msra.mxu0 0.0
  %6720 = vmatpush.msra.mxu0 0.0
  %6721 = vmatpush.msra.mxu0 0.0
  %6722 = vmatpush.msra.mxu0 0.0
  %6723 = vmatpush.msra.mxu0 0.0
  %6724 = vmatpush.msra.mxu0 0.0
  %6725 = vmatpush.msra.mxu0 0.0
  %6726 = vmatpush.msra.mxu0 0.0
  %6727 = vmatpush.msra.mxu0 0.0
  %6728 = vmatpush.msra.mxu0 0.0
  %6729 = vmatpush.msra.mxu0 0.0
  %6730 = vmatpush.msra.mxu0 0.0
  %6731 = vmatpush.msra.mxu0 %v1081
  %6732 = vmatpush.msra.mxu0 %v1073
  %6733 = vmatmul.f32.gmra.mxu0 %v6455
  %v6734 = vpop.f32.mrf.mxu0
  %v6735 = vadd.f32 %v6715, %v6734
  %6736 = vdwg.mxu0
  %6737 = vmatpush.msra.mxu0 %v1066
  %6738 = vmatpush.msra.mxu0 %v1058
  %6739 = vmatpush.msra.mxu0 %v1050
  %6740 = vmatpush.msra.mxu0 %v1042
  %6741 = vmatpush.msra.mxu0 %v1034
  %6742 = vmatpush.msra.mxu0 %v1026
  %6743 = vmatpush.msra.mxu0 %v1018
  %6744 = vmatpush.msra.mxu0 %v1010
  %6745 = vmatpush.msra.mxu0 %v1002
  %6746 = vmatpush.msra.mxu0 %v994
  %6747 = vmatpush.msra.mxu0 %v986
  %6748 = vmatpush.msra.mxu0 %v978
  %6749 = vmatpush.msra.mxu0 %v970
  %6750 = vmatpush.msra.mxu0 %v962
  %6751 = vmatpush.msra.mxu0 %v954
  %6752 = vmatpush.msra.mxu0 %v946
  %6753 = vmatmul.f32.gmra.mxu0 %v6442
  %v6754 = vpop.f32.mrf.mxu0
  %v6755 = vadd.f32 0.0, %v6754
  %6756 = vdwg.mxu0
  %6757 = vmatpush.msra.mxu0 0.0
  %6758 = vmatpush.msra.mxu0 0.0
  %6759 = vmatpush.msra.mxu0 0.0
  %6760 = vmatpush.msra.mxu0 0.0
  %6761 = vmatpush.msra.mxu0 0.0
  %6762 = vmatpush.msra.mxu0 0.0
  %6763 = vmatpush.msra.mxu0 0.0
  %6764 = vmatpush.msra.mxu0 0.0
  %6765 = vmatpush.msra.mxu0 0.0
  %6766 = vmatpush.msra.mxu0 0.0
  %6767 = vmatpush.msra.mxu0 0.0
  %6768 = vmatpush.msra.mxu0 0.0
  %6769 = vmatpush.msra.mxu0 0.0
  %6770 = vmatpush.msra.mxu0 0.0
  %6771 = vmatpush.msra.mxu0 %v1082
  %6772 = vmatpush.msra.mxu0 %v1074
  %6773 = vmatmul.f32.gmra.mxu0 %v6455
  %v6774 = vpop.f32.mrf.mxu0
  %v6775 = vadd.f32 %v6755, %v6774
  %6776 = vdwg.mxu0
  %v6777 = vadd.f32 %v6446, %v6495
  %v6778 = vadd.f32 %v6447, %v6535
  %v6779 = vadd.f32 %v6448, %v6575
  %v6780 = vadd.f32 %v6449, %v6615
  %v6781 = vadd.f32 %v6450, %v6655
  %v6782 = vadd.f32 %v6451, %v6695
  %v6783 = vadd.f32 %v6452, %v6735
  %v6784 = vadd.f32 %v6453, %v6775
  %v6785 = vsub.f32 0.0, %v6777
  %v6786 = vsub.f32 0.0, %v6778
  %v6787 = vmul.f32 %v6785, 1.442695
  %v6788 = vpow.pop %v6787
  %v6789 = vmul.f32 %v6786, 1.442695
  %v6790 = vpow.pop %v6789
  %v6791 = vadd.f32 %v6788, 1.0
  %v6792 = vadd.f32 %v6790, 1.0
  %v6793 = vrcp.pop %v6791
  %v6794 = vrcp.pop %v6792
  %v6795 = vsub.f32 0.0, %v6779
  %v6796 = vsub.f32 0.0, %v6780
  %v6797 = vmul.f32 %v6795, 1.442695
  %v6798 = vpow.pop %v6797
  %v6799 = vmul.f32 %v6796, 1.442695
  %v6800 = vpow.pop %v6799
  %v6801 = vadd.f32 %v6798, 1.0
  %v6802 = vadd.f32 %v6800, 1.0
  %v6803 = vrcp.pop %v6801
  %v6804 = vrcp.pop %v6802
  %v6805 = vtanh.pop %v6781
  %v6806 = vtanh.pop %v6782
  %v6807 = vsub.f32 0.0, %v6783
  %v6808 = vsub.f32 0.0, %v6784
  %v6809 = vmul.f32 %v6807, 1.442695
  %v6810 = vpow.pop %v6809
  %v6811 = vmul.f32 %v6808, 1.442695
  %v6812 = vpow.pop %v6811
  %v6813 = vadd.f32 %v6810, 1.0
  %v6814 = vadd.f32 %v6812, 1.0
  %v6815 = vrcp.pop %v6813
  %v6816 = vrcp.pop %v6814
  %v6817 = vmul.f32 %v6803, %v6438
  %v6818 = vmul.f32 %v6804, %v6439
  %v6819 = vmul.f32 %v6793, %v6805
  %v6820 = vmul.f32 %v6794, %v6806
  %v6821 = vadd.f32 %v6817, %v6819
  %v6822 = vadd.f32 %v6818, %v6820
  %v6823 = vtanh.pop %v6821
  %v6824 = vtanh.pop %v6822
  %v6825 = vmul.f32 %v6815, %v6823
  %v6826 = vmul.f32 %v6816, %v6824
  %6827 = vst [vmem:[#allocation3 + $0xe0] sm:$0xff] %v6825
  %6828 = vst.msk [vmem:[#allocation3 + $0xe8] sm:$0xff] %vm1091, %v6826
  %v6829 = vld [vmem:[#allocation2 + $0x3c0] sm:$0xff]
  %v6830 = vld [vmem:[#allocation2 + $0x3c8] sm:$0xff]
  %v6831 = vld [vmem:[#allocation2 + $0x3d0] sm:$0xff]
  %v6832 = vld [vmem:[#allocation2 + $0x3d8] sm:$0xff]
  %v6833 = vld [vmem:[#allocation2 + $0x3e0] sm:$0xff]
  %v6834 = vld [vmem:[#allocation2 + $0x3e8] sm:$0xff]
  %v6835 = vld [vmem:[#allocation2 + $0x3f0] sm:$0xff]
  %v6836 = vld [vmem:[#allocation2 + $0x3f8] sm:$0xff]
  %v6838 = vsel %vm1091, %v6826, 0
  %6840 = vmatpush.msra.mxu0 %v1059
  %6841 = vmatpush.msra.mxu0 %v1051
  %6842 = vmatpush.msra.mxu0 %v1043
  %6843 = vmatpush.msra.mxu0 %v1035
  %6844 = vmatpush.msra.mxu0 %v1027
  %6845 = vmatpush.msra.mxu0 %v1019
  %6846 = vmatpush.msra.mxu0 %v1011
  %6847 = vmatpush.msra.mxu0 %v1003
  %6848 = vmatpush.msra.mxu0 %v995
  %6849 = vmatpush.msra.mxu0 %v987
  %6850 = vmatpush.msra.mxu0 %v979
  %6851 = vmatpush.msra.mxu0 %v971
  %6852 = vmatpush.msra.mxu0 %v963
  %6853 = vmatpush.msra.mxu0 %v955
  %6854 = vmatpush.msra.mxu0 %v947
  %6855 = vmatpush.msra.mxu0 %v939
  %6856 = vmatmul.f32.gmra.mxu0 %v6825
  %v6857 = vpop.f32.mrf.mxu0
  %v6858 = vadd.f32 0.0, %v6857
  %6859 = vdwg.mxu0
  %6860 = vmatpush.msra.mxu0 0.0
  %6861 = vmatpush.msra.mxu0 0.0
  %6862 = vmatpush.msra.mxu0 0.0
  %6863 = vmatpush.msra.mxu0 0.0
  %6864 = vmatpush.msra.mxu0 0.0
  %6865 = vmatpush.msra.mxu0 0.0
  %6866 = vmatpush.msra.mxu0 0.0
  %6867 = vmatpush.msra.mxu0 0.0
  %6868 = vmatpush.msra.mxu0 0.0
  %6869 = vmatpush.msra.mxu0 0.0
  %6870 = vmatpush.msra.mxu0 0.0
  %6871 = vmatpush.msra.mxu0 0.0
  %6872 = vmatpush.msra.mxu0 0.0
  %6873 = vmatpush.msra.mxu0 0.0
  %6874 = vmatpush.msra.mxu0 %v1075
  %6875 = vmatpush.msra.mxu0 %v1067
  %6876 = vmatmul.f32.gmra.mxu0 %v6838
  %v6877 = vpop.f32.mrf.mxu0
  %v6878 = vadd.f32 %v6858, %v6877
  %6879 = vdwg.mxu0
  %6880 = vmatpush.msra.mxu0 %v1060
  %6881 = vmatpush.msra.mxu0 %v1052
  %6882 = vmatpush.msra.mxu0 %v1044
  %6883 = vmatpush.msra.mxu0 %v1036
  %6884 = vmatpush.msra.mxu0 %v1028
  %6885 = vmatpush.msra.mxu0 %v1020
  %6886 = vmatpush.msra.mxu0 %v1012
  %6887 = vmatpush.msra.mxu0 %v1004
  %6888 = vmatpush.msra.mxu0 %v996
  %6889 = vmatpush.msra.mxu0 %v988
  %6890 = vmatpush.msra.mxu0 %v980
  %6891 = vmatpush.msra.mxu0 %v972
  %6892 = vmatpush.msra.mxu0 %v964
  %6893 = vmatpush.msra.mxu0 %v956
  %6894 = vmatpush.msra.mxu0 %v948
  %6895 = vmatpush.msra.mxu0 %v940
  %6896 = vmatmul.f32.gmra.mxu0 %v6825
  %v6897 = vpop.f32.mrf.mxu0
  %v6898 = vadd.f32 0.0, %v6897
  %6899 = vdwg.mxu0
  %6900 = vmatpush.msra.mxu0 0.0
  %6901 = vmatpush.msra.mxu0 0.0
  %6902 = vmatpush.msra.mxu0 0.0
  %6903 = vmatpush.msra.mxu0 0.0
  %6904 = vmatpush.msra.mxu0 0.0
  %6905 = vmatpush.msra.mxu0 0.0
  %6906 = vmatpush.msra.mxu0 0.0
  %6907 = vmatpush.msra.mxu0 0.0
  %6908 = vmatpush.msra.mxu0 0.0
  %6909 = vmatpush.msra.mxu0 0.0
  %6910 = vmatpush.msra.mxu0 0.0
  %6911 = vmatpush.msra.mxu0 0.0
  %6912 = vmatpush.msra.mxu0 0.0
  %6913 = vmatpush.msra.mxu0 0.0
  %6914 = vmatpush.msra.mxu0 %v1076
  %6915 = vmatpush.msra.mxu0 %v1068
  %6916 = vmatmul.f32.gmra.mxu0 %v6838
  %v6917 = vpop.f32.mrf.mxu0
  %v6918 = vadd.f32 %v6898, %v6917
  %6919 = vdwg.mxu0
  %6920 = vmatpush.msra.mxu0 %v1061
  %6921 = vmatpush.msra.mxu0 %v1053
  %6922 = vmatpush.msra.mxu0 %v1045
  %6923 = vmatpush.msra.mxu0 %v1037
  %6924 = vmatpush.msra.mxu0 %v1029
  %6925 = vmatpush.msra.mxu0 %v1021
  %6926 = vmatpush.msra.mxu0 %v1013
  %6927 = vmatpush.msra.mxu0 %v1005
  %6928 = vmatpush.msra.mxu0 %v997
  %6929 = vmatpush.msra.mxu0 %v989
  %6930 = vmatpush.msra.mxu0 %v981
  %6931 = vmatpush.msra.mxu0 %v973
  %6932 = vmatpush.msra.mxu0 %v965
  %6933 = vmatpush.msra.mxu0 %v957
  %6934 = vmatpush.msra.mxu0 %v949
  %6935 = vmatpush.msra.mxu0 %v941
  %6936 = vmatmul.f32.gmra.mxu0 %v6825
  %v6937 = vpop.f32.mrf.mxu0
  %v6938 = vadd.f32 0.0, %v6937
  %6939 = vdwg.mxu0
  %6940 = vmatpush.msra.mxu0 0.0
  %6941 = vmatpush.msra.mxu0 0.0
  %6942 = vmatpush.msra.mxu0 0.0
  %6943 = vmatpush.msra.mxu0 0.0
  %6944 = vmatpush.msra.mxu0 0.0
  %6945 = vmatpush.msra.mxu0 0.0
  %6946 = vmatpush.msra.mxu0 0.0
  %6947 = vmatpush.msra.mxu0 0.0
  %6948 = vmatpush.msra.mxu0 0.0
  %6949 = vmatpush.msra.mxu0 0.0
  %6950 = vmatpush.msra.mxu0 0.0
  %6951 = vmatpush.msra.mxu0 0.0
  %6952 = vmatpush.msra.mxu0 0.0
  %6953 = vmatpush.msra.mxu0 0.0
  %6954 = vmatpush.msra.mxu0 %v1077
  %6955 = vmatpush.msra.mxu0 %v1069
  %6956 = vmatmul.f32.gmra.mxu0 %v6838
  %v6957 = vpop.f32.mrf.mxu0
  %v6958 = vadd.f32 %v6938, %v6957
  %6959 = vdwg.mxu0
  %6960 = vmatpush.msra.mxu0 %v1062
  %6961 = vmatpush.msra.mxu0 %v1054
  %6962 = vmatpush.msra.mxu0 %v1046
  %6963 = vmatpush.msra.mxu0 %v1038
  %6964 = vmatpush.msra.mxu0 %v1030
  %6965 = vmatpush.msra.mxu0 %v1022
  %6966 = vmatpush.msra.mxu0 %v1014
  %6967 = vmatpush.msra.mxu0 %v1006
  %6968 = vmatpush.msra.mxu0 %v998
  %6969 = vmatpush.msra.mxu0 %v990
  %6970 = vmatpush.msra.mxu0 %v982
  %6971 = vmatpush.msra.mxu0 %v974
  %6972 = vmatpush.msra.mxu0 %v966
  %6973 = vmatpush.msra.mxu0 %v958
  %6974 = vmatpush.msra.mxu0 %v950
  %6975 = vmatpush.msra.mxu0 %v942
  %6976 = vmatmul.f32.gmra.mxu0 %v6825
  %v6977 = vpop.f32.mrf.mxu0
  %v6978 = vadd.f32 0.0, %v6977
  %6979 = vdwg.mxu0
  %6980 = vmatpush.msra.mxu0 0.0
  %6981 = vmatpush.msra.mxu0 0.0
  %6982 = vmatpush.msra.mxu0 0.0
  %6983 = vmatpush.msra.mxu0 0.0
  %6984 = vmatpush.msra.mxu0 0.0
  %6985 = vmatpush.msra.mxu0 0.0
  %6986 = vmatpush.msra.mxu0 0.0
  %6987 = vmatpush.msra.mxu0 0.0
  %6988 = vmatpush.msra.mxu0 0.0
  %6989 = vmatpush.msra.mxu0 0.0
  %6990 = vmatpush.msra.mxu0 0.0
  %6991 = vmatpush.msra.mxu0 0.0
  %6992 = vmatpush.msra.mxu0 0.0
  %6993 = vmatpush.msra.mxu0 0.0
  %6994 = vmatpush.msra.mxu0 %v1078
  %6995 = vmatpush.msra.mxu0 %v1070
  %6996 = vmatmul.f32.gmra.mxu0 %v6838
  %v6997 = vpop.f32.mrf.mxu0
  %v6998 = vadd.f32 %v6978, %v6997
  %6999 = vdwg.mxu0
  %7000 = vmatpush.msra.mxu0 %v1063
  %7001 = vmatpush.msra.mxu0 %v1055
  %7002 = vmatpush.msra.mxu0 %v1047
  %7003 = vmatpush.msra.mxu0 %v1039
  %7004 = vmatpush.msra.mxu0 %v1031
  %7005 = vmatpush.msra.mxu0 %v1023
  %7006 = vmatpush.msra.mxu0 %v1015
  %7007 = vmatpush.msra.mxu0 %v1007
  %7008 = vmatpush.msra.mxu0 %v999
  %7009 = vmatpush.msra.mxu0 %v991
  %7010 = vmatpush.msra.mxu0 %v983
  %7011 = vmatpush.msra.mxu0 %v975
  %7012 = vmatpush.msra.mxu0 %v967
  %7013 = vmatpush.msra.mxu0 %v959
  %7014 = vmatpush.msra.mxu0 %v951
  %7015 = vmatpush.msra.mxu0 %v943
  %7016 = vmatmul.f32.gmra.mxu0 %v6825
  %v7017 = vpop.f32.mrf.mxu0
  %v7018 = vadd.f32 0.0, %v7017
  %7019 = vdwg.mxu0
  %7020 = vmatpush.msra.mxu0 0.0
  %7021 = vmatpush.msra.mxu0 0.0
  %7022 = vmatpush.msra.mxu0 0.0
  %7023 = vmatpush.msra.mxu0 0.0
  %7024 = vmatpush.msra.mxu0 0.0
  %7025 = vmatpush.msra.mxu0 0.0
  %7026 = vmatpush.msra.mxu0 0.0
  %7027 = vmatpush.msra.mxu0 0.0
  %7028 = vmatpush.msra.mxu0 0.0
  %7029 = vmatpush.msra.mxu0 0.0
  %7030 = vmatpush.msra.mxu0 0.0
  %7031 = vmatpush.msra.mxu0 0.0
  %7032 = vmatpush.msra.mxu0 0.0
  %7033 = vmatpush.msra.mxu0 0.0
  %7034 = vmatpush.msra.mxu0 %v1079
  %7035 = vmatpush.msra.mxu0 %v1071
  %7036 = vmatmul.f32.gmra.mxu0 %v6838
  %v7037 = vpop.f32.mrf.mxu0
  %v7038 = vadd.f32 %v7018, %v7037
  %7039 = vdwg.mxu0
  %7040 = vmatpush.msra.mxu0 %v1064
  %7041 = vmatpush.msra.mxu0 %v1056
  %7042 = vmatpush.msra.mxu0 %v1048
  %7043 = vmatpush.msra.mxu0 %v1040
  %7044 = vmatpush.msra.mxu0 %v1032
  %7045 = vmatpush.msra.mxu0 %v1024
  %7046 = vmatpush.msra.mxu0 %v1016
  %7047 = vmatpush.msra.mxu0 %v1008
  %7048 = vmatpush.msra.mxu0 %v1000
  %7049 = vmatpush.msra.mxu0 %v992
  %7050 = vmatpush.msra.mxu0 %v984
  %7051 = vmatpush.msra.mxu0 %v976
  %7052 = vmatpush.msra.mxu0 %v968
  %7053 = vmatpush.msra.mxu0 %v960
  %7054 = vmatpush.msra.mxu0 %v952
  %7055 = vmatpush.msra.mxu0 %v944
  %7056 = vmatmul.f32.gmra.mxu0 %v6825
  %v7057 = vpop.f32.mrf.mxu0
  %v7058 = vadd.f32 0.0, %v7057
  %7059 = vdwg.mxu0
  %7060 = vmatpush.msra.mxu0 0.0
  %7061 = vmatpush.msra.mxu0 0.0
  %7062 = vmatpush.msra.mxu0 0.0
  %7063 = vmatpush.msra.mxu0 0.0
  %7064 = vmatpush.msra.mxu0 0.0
  %7065 = vmatpush.msra.mxu0 0.0
  %7066 = vmatpush.msra.mxu0 0.0
  %7067 = vmatpush.msra.mxu0 0.0
  %7068 = vmatpush.msra.mxu0 0.0
  %7069 = vmatpush.msra.mxu0 0.0
  %7070 = vmatpush.msra.mxu0 0.0
  %7071 = vmatpush.msra.mxu0 0.0
  %7072 = vmatpush.msra.mxu0 0.0
  %7073 = vmatpush.msra.mxu0 0.0
  %7074 = vmatpush.msra.mxu0 %v1080
  %7075 = vmatpush.msra.mxu0 %v1072
  %7076 = vmatmul.f32.gmra.mxu0 %v6838
  %v7077 = vpop.f32.mrf.mxu0
  %v7078 = vadd.f32 %v7058, %v7077
  %7079 = vdwg.mxu0
  %7080 = vmatpush.msra.mxu0 %v1065
  %7081 = vmatpush.msra.mxu0 %v1057
  %7082 = vmatpush.msra.mxu0 %v1049
  %7083 = vmatpush.msra.mxu0 %v1041
  %7084 = vmatpush.msra.mxu0 %v1033
  %7085 = vmatpush.msra.mxu0 %v1025
  %7086 = vmatpush.msra.mxu0 %v1017
  %7087 = vmatpush.msra.mxu0 %v1009
  %7088 = vmatpush.msra.mxu0 %v1001
  %7089 = vmatpush.msra.mxu0 %v993
  %7090 = vmatpush.msra.mxu0 %v985
  %7091 = vmatpush.msra.mxu0 %v977
  %7092 = vmatpush.msra.mxu0 %v969
  %7093 = vmatpush.msra.mxu0 %v961
  %7094 = vmatpush.msra.mxu0 %v953
  %7095 = vmatpush.msra.mxu0 %v945
  %7096 = vmatmul.f32.gmra.mxu0 %v6825
  %v7097 = vpop.f32.mrf.mxu0
  %v7098 = vadd.f32 0.0, %v7097
  %7099 = vdwg.mxu0
  %7100 = vmatpush.msra.mxu0 0.0
  %7101 = vmatpush.msra.mxu0 0.0
  %7102 = vmatpush.msra.mxu0 0.0
  %7103 = vmatpush.msra.mxu0 0.0
  %7104 = vmatpush.msra.mxu0 0.0
  %7105 = vmatpush.msra.mxu0 0.0
  %7106 = vmatpush.msra.mxu0 0.0
  %7107 = vmatpush.msra.mxu0 0.0
  %7108 = vmatpush.msra.mxu0 0.0
  %7109 = vmatpush.msra.mxu0 0.0
  %7110 = vmatpush.msra.mxu0 0.0
  %7111 = vmatpush.msra.mxu0 0.0
  %7112 = vmatpush.msra.mxu0 0.0
  %7113 = vmatpush.msra.mxu0 0.0
  %7114 = vmatpush.msra.mxu0 %v1081
  %7115 = vmatpush.msra.mxu0 %v1073
  %7116 = vmatmul.f32.gmra.mxu0 %v6838
  %v7117 = vpop.f32.mrf.mxu0
  %v7118 = vadd.f32 %v7098, %v7117
  %7119 = vdwg.mxu0
  %7120 = vmatpush.msra.mxu0 %v1066
  %7121 = vmatpush.msra.mxu0 %v1058
  %7122 = vmatpush.msra.mxu0 %v1050
  %7123 = vmatpush.msra.mxu0 %v1042
  %7124 = vmatpush.msra.mxu0 %v1034
  %7125 = vmatpush.msra.mxu0 %v1026
  %7126 = vmatpush.msra.mxu0 %v1018
  %7127 = vmatpush.msra.mxu0 %v1010
  %7128 = vmatpush.msra.mxu0 %v1002
  %7129 = vmatpush.msra.mxu0 %v994
  %7130 = vmatpush.msra.mxu0 %v986
  %7131 = vmatpush.msra.mxu0 %v978
  %7132 = vmatpush.msra.mxu0 %v970
  %7133 = vmatpush.msra.mxu0 %v962
  %7134 = vmatpush.msra.mxu0 %v954
  %7135 = vmatpush.msra.mxu0 %v946
  %7136 = vmatmul.f32.gmra.mxu0 %v6825
  %v7137 = vpop.f32.mrf.mxu0
  %v7138 = vadd.f32 0.0, %v7137
  %7139 = vdwg.mxu0
  %7140 = vmatpush.msra.mxu0 0.0
  %7141 = vmatpush.msra.mxu0 0.0
  %7142 = vmatpush.msra.mxu0 0.0
  %7143 = vmatpush.msra.mxu0 0.0
  %7144 = vmatpush.msra.mxu0 0.0
  %7145 = vmatpush.msra.mxu0 0.0
  %7146 = vmatpush.msra.mxu0 0.0
  %7147 = vmatpush.msra.mxu0 0.0
  %7148 = vmatpush.msra.mxu0 0.0
  %7149 = vmatpush.msra.mxu0 0.0
  %7150 = vmatpush.msra.mxu0 0.0
  %7151 = vmatpush.msra.mxu0 0.0
  %7152 = vmatpush.msra.mxu0 0.0
  %7153 = vmatpush.msra.mxu0 0.0
  %7154 = vmatpush.msra.mxu0 %v1082
  %7155 = vmatpush.msra.mxu0 %v1074
  %7156 = vmatmul.f32.gmra.mxu0 %v6838
  %v7157 = vpop.f32.mrf.mxu0
  %v7158 = vadd.f32 %v7138, %v7157
  %7159 = vdwg.mxu0
  %v7160 = vadd.f32 %v6829, %v6878
  %v7161 = vadd.f32 %v6830, %v6918
  %v7162 = vadd.f32 %v6831, %v6958
  %v7163 = vadd.f32 %v6832, %v6998
  %v7164 = vadd.f32 %v6833, %v7038
  %v7165 = vadd.f32 %v6834, %v7078
  %v7166 = vadd.f32 %v6835, %v7118
  %v7167 = vadd.f32 %v6836, %v7158
  %v7168 = vsub.f32 0.0, %v7160
  %v7169 = vsub.f32 0.0, %v7161
  %v7170 = vmul.f32 %v7168, 1.442695
  %v7171 = vpow.pop %v7170
  %v7172 = vmul.f32 %v7169, 1.442695
  %v7173 = vpow.pop %v7172
  %v7174 = vadd.f32 %v7171, 1.0
  %v7175 = vadd.f32 %v7173, 1.0
  %v7176 = vrcp.pop %v7174
  %v7177 = vrcp.pop %v7175
  %v7178 = vsub.f32 0.0, %v7162
  %v7179 = vsub.f32 0.0, %v7163
  %v7180 = vmul.f32 %v7178, 1.442695
  %v7181 = vpow.pop %v7180
  %v7182 = vmul.f32 %v7179, 1.442695
  %v7183 = vpow.pop %v7182
  %v7184 = vadd.f32 %v7181, 1.0
  %v7185 = vadd.f32 %v7183, 1.0
  %v7186 = vrcp.pop %v7184
  %v7187 = vrcp.pop %v7185
  %v7188 = vtanh.pop %v7164
  %v7189 = vtanh.pop %v7165
  %v7190 = vsub.f32 0.0, %v7166
  %v7191 = vsub.f32 0.0, %v7167
  %v7192 = vmul.f32 %v7190, 1.442695
  %v7193 = vpow.pop %v7192
  %v7194 = vmul.f32 %v7191, 1.442695
  %v7195 = vpow.pop %v7194
  %v7196 = vadd.f32 %v7193, 1.0
  %v7197 = vadd.f32 %v7195, 1.0
  %v7198 = vrcp.pop %v7196
  %v7199 = vrcp.pop %v7197
  %v7200 = vmul.f32 %v7186, %v6821
  %v7201 = vmul.f32 %v7187, %v6822
  %v7202 = vmul.f32 %v7176, %v7188
  %v7203 = vmul.f32 %v7177, %v7189
  %v7204 = vadd.f32 %v7200, %v7202
  %v7205 = vadd.f32 %v7201, %v7203
  %v7206 = vtanh.pop %v7204
  %v7207 = vtanh.pop %v7205
  %v7208 = vmul.f32 %v7198, %v7206
  %v7209 = vmul.f32 %v7199, %v7207
  %7210 = vst [vmem:[#allocation3 + $0xf0] sm:$0xff] %v7208
  %7211 = vst.msk [vmem:[#allocation3 + $0xf8] sm:$0xff] %vm1091, %v7209
  %v7212 = vld [vmem:[#allocation2 + $0x400] sm:$0xff]
  %v7213 = vld [vmem:[#allocation2 + $0x408] sm:$0xff]
  %v7214 = vld [vmem:[#allocation2 + $0x410] sm:$0xff]
  %v7215 = vld [vmem:[#allocation2 + $0x418] sm:$0xff]
  %v7216 = vld [vmem:[#allocation2 + $0x420] sm:$0xff]
  %v7217 = vld [vmem:[#allocation2 + $0x428] sm:$0xff]
  %v7218 = vld [vmem:[#allocation2 + $0x430] sm:$0xff]
  %v7219 = vld [vmem:[#allocation2 + $0x438] sm:$0xff]
  %v7221 = vsel %vm1091, %v7209, 0
  %7223 = vmatpush.msra.mxu0 %v1059
  %7224 = vmatpush.msra.mxu0 %v1051
  %7225 = vmatpush.msra.mxu0 %v1043
  %7226 = vmatpush.msra.mxu0 %v1035
  %7227 = vmatpush.msra.mxu0 %v1027
  %7228 = vmatpush.msra.mxu0 %v1019
  %7229 = vmatpush.msra.mxu0 %v1011
  %7230 = vmatpush.msra.mxu0 %v1003
  %7231 = vmatpush.msra.mxu0 %v995
  %7232 = vmatpush.msra.mxu0 %v987
  %7233 = vmatpush.msra.mxu0 %v979
  %7234 = vmatpush.msra.mxu0 %v971
  %7235 = vmatpush.msra.mxu0 %v963
  %7236 = vmatpush.msra.mxu0 %v955
  %7237 = vmatpush.msra.mxu0 %v947
  %7238 = vmatpush.msra.mxu0 %v939
  %7239 = vmatmul.f32.gmra.mxu0 %v7208
  %v7240 = vpop.f32.mrf.mxu0
  %v7241 = vadd.f32 0.0, %v7240
  %7242 = vdwg.mxu0
  %7243 = vmatpush.msra.mxu0 0.0
  %7244 = vmatpush.msra.mxu0 0.0
  %7245 = vmatpush.msra.mxu0 0.0
  %7246 = vmatpush.msra.mxu0 0.0
  %7247 = vmatpush.msra.mxu0 0.0
  %7248 = vmatpush.msra.mxu0 0.0
  %7249 = vmatpush.msra.mxu0 0.0
  %7250 = vmatpush.msra.mxu0 0.0
  %7251 = vmatpush.msra.mxu0 0.0
  %7252 = vmatpush.msra.mxu0 0.0
  %7253 = vmatpush.msra.mxu0 0.0
  %7254 = vmatpush.msra.mxu0 0.0
  %7255 = vmatpush.msra.mxu0 0.0
  %7256 = vmatpush.msra.mxu0 0.0
  %7257 = vmatpush.msra.mxu0 %v1075
  %7258 = vmatpush.msra.mxu0 %v1067
  %7259 = vmatmul.f32.gmra.mxu0 %v7221
  %v7260 = vpop.f32.mrf.mxu0
  %v7261 = vadd.f32 %v7241, %v7260
  %7262 = vdwg.mxu0
  %7263 = vmatpush.msra.mxu0 %v1060
  %7264 = vmatpush.msra.mxu0 %v1052
  %7265 = vmatpush.msra.mxu0 %v1044
  %7266 = vmatpush.msra.mxu0 %v1036
  %7267 = vmatpush.msra.mxu0 %v1028
  %7268 = vmatpush.msra.mxu0 %v1020
  %7269 = vmatpush.msra.mxu0 %v1012
  %7270 = vmatpush.msra.mxu0 %v1004
  %7271 = vmatpush.msra.mxu0 %v996
  %7272 = vmatpush.msra.mxu0 %v988
  %7273 = vmatpush.msra.mxu0 %v980
  %7274 = vmatpush.msra.mxu0 %v972
  %7275 = vmatpush.msra.mxu0 %v964
  %7276 = vmatpush.msra.mxu0 %v956
  %7277 = vmatpush.msra.mxu0 %v948
  %7278 = vmatpush.msra.mxu0 %v940
  %7279 = vmatmul.f32.gmra.mxu0 %v7208
  %v7280 = vpop.f32.mrf.mxu0
  %v7281 = vadd.f32 0.0, %v7280
  %7282 = vdwg.mxu0
  %7283 = vmatpush.msra.mxu0 0.0
  %7284 = vmatpush.msra.mxu0 0.0
  %7285 = vmatpush.msra.mxu0 0.0
  %7286 = vmatpush.msra.mxu0 0.0
  %7287 = vmatpush.msra.mxu0 0.0
  %7288 = vmatpush.msra.mxu0 0.0
  %7289 = vmatpush.msra.mxu0 0.0
  %7290 = vmatpush.msra.mxu0 0.0
  %7291 = vmatpush.msra.mxu0 0.0
  %7292 = vmatpush.msra.mxu0 0.0
  %7293 = vmatpush.msra.mxu0 0.0
  %7294 = vmatpush.msra.mxu0 0.0
  %7295 = vmatpush.msra.mxu0 0.0
  %7296 = vmatpush.msra.mxu0 0.0
  %7297 = vmatpush.msra.mxu0 %v1076
  %7298 = vmatpush.msra.mxu0 %v1068
  %7299 = vmatmul.f32.gmra.mxu0 %v7221
  %v7300 = vpop.f32.mrf.mxu0
  %v7301 = vadd.f32 %v7281, %v7300
  %7302 = vdwg.mxu0
  %7303 = vmatpush.msra.mxu0 %v1061
  %7304 = vmatpush.msra.mxu0 %v1053
  %7305 = vmatpush.msra.mxu0 %v1045
  %7306 = vmatpush.msra.mxu0 %v1037
  %7307 = vmatpush.msra.mxu0 %v1029
  %7308 = vmatpush.msra.mxu0 %v1021
  %7309 = vmatpush.msra.mxu0 %v1013
  %7310 = vmatpush.msra.mxu0 %v1005
  %7311 = vmatpush.msra.mxu0 %v997
  %7312 = vmatpush.msra.mxu0 %v989
  %7313 = vmatpush.msra.mxu0 %v981
  %7314 = vmatpush.msra.mxu0 %v973
  %7315 = vmatpush.msra.mxu0 %v965
  %7316 = vmatpush.msra.mxu0 %v957
  %7317 = vmatpush.msra.mxu0 %v949
  %7318 = vmatpush.msra.mxu0 %v941
  %7319 = vmatmul.f32.gmra.mxu0 %v7208
  %v7320 = vpop.f32.mrf.mxu0
  %v7321 = vadd.f32 0.0, %v7320
  %7322 = vdwg.mxu0
  %7323 = vmatpush.msra.mxu0 0.0
  %7324 = vmatpush.msra.mxu0 0.0
  %7325 = vmatpush.msra.mxu0 0.0
  %7326 = vmatpush.msra.mxu0 0.0
  %7327 = vmatpush.msra.mxu0 0.0
  %7328 = vmatpush.msra.mxu0 0.0
  %7329 = vmatpush.msra.mxu0 0.0
  %7330 = vmatpush.msra.mxu0 0.0
  %7331 = vmatpush.msra.mxu0 0.0
  %7332 = vmatpush.msra.mxu0 0.0
  %7333 = vmatpush.msra.mxu0 0.0
  %7334 = vmatpush.msra.mxu0 0.0
  %7335 = vmatpush.msra.mxu0 0.0
  %7336 = vmatpush.msra.mxu0 0.0
  %7337 = vmatpush.msra.mxu0 %v1077
  %7338 = vmatpush.msra.mxu0 %v1069
  %7339 = vmatmul.f32.gmra.mxu0 %v7221
  %v7340 = vpop.f32.mrf.mxu0
  %v7341 = vadd.f32 %v7321, %v7340
  %7342 = vdwg.mxu0
  %7343 = vmatpush.msra.mxu0 %v1062
  %7344 = vmatpush.msra.mxu0 %v1054
  %7345 = vmatpush.msra.mxu0 %v1046
  %7346 = vmatpush.msra.mxu0 %v1038
  %7347 = vmatpush.msra.mxu0 %v1030
  %7348 = vmatpush.msra.mxu0 %v1022
  %7349 = vmatpush.msra.mxu0 %v1014
  %7350 = vmatpush.msra.mxu0 %v1006
  %7351 = vmatpush.msra.mxu0 %v998
  %7352 = vmatpush.msra.mxu0 %v990
  %7353 = vmatpush.msra.mxu0 %v982
  %7354 = vmatpush.msra.mxu0 %v974
  %7355 = vmatpush.msra.mxu0 %v966
  %7356 = vmatpush.msra.mxu0 %v958
  %7357 = vmatpush.msra.mxu0 %v950
  %7358 = vmatpush.msra.mxu0 %v942
  %7359 = vmatmul.f32.gmra.mxu0 %v7208
  %v7360 = vpop.f32.mrf.mxu0
  %v7361 = vadd.f32 0.0, %v7360
  %7362 = vdwg.mxu0
  %7363 = vmatpush.msra.mxu0 0.0
  %7364 = vmatpush.msra.mxu0 0.0
  %7365 = vmatpush.msra.mxu0 0.0
  %7366 = vmatpush.msra.mxu0 0.0
  %7367 = vmatpush.msra.mxu0 0.0
  %7368 = vmatpush.msra.mxu0 0.0
  %7369 = vmatpush.msra.mxu0 0.0
  %7370 = vmatpush.msra.mxu0 0.0
  %7371 = vmatpush.msra.mxu0 0.0
  %7372 = vmatpush.msra.mxu0 0.0
  %7373 = vmatpush.msra.mxu0 0.0
  %7374 = vmatpush.msra.mxu0 0.0
  %7375 = vmatpush.msra.mxu0 0.0
  %7376 = vmatpush.msra.mxu0 0.0
  %7377 = vmatpush.msra.mxu0 %v1078
  %7378 = vmatpush.msra.mxu0 %v1070
  %7379 = vmatmul.f32.gmra.mxu0 %v7221
  %v7380 = vpop.f32.mrf.mxu0
  %v7381 = vadd.f32 %v7361, %v7380
  %7382 = vdwg.mxu0
  %7383 = vmatpush.msra.mxu0 %v1063
  %7384 = vmatpush.msra.mxu0 %v1055
  %7385 = vmatpush.msra.mxu0 %v1047
  %7386 = vmatpush.msra.mxu0 %v1039
  %7387 = vmatpush.msra.mxu0 %v1031
  %7388 = vmatpush.msra.mxu0 %v1023
  %7389 = vmatpush.msra.mxu0 %v1015
  %7390 = vmatpush.msra.mxu0 %v1007
  %7391 = vmatpush.msra.mxu0 %v999
  %7392 = vmatpush.msra.mxu0 %v991
  %7393 = vmatpush.msra.mxu0 %v983
  %7394 = vmatpush.msra.mxu0 %v975
  %7395 = vmatpush.msra.mxu0 %v967
  %7396 = vmatpush.msra.mxu0 %v959
  %7397 = vmatpush.msra.mxu0 %v951
  %7398 = vmatpush.msra.mxu0 %v943
  %7399 = vmatmul.f32.gmra.mxu0 %v7208
  %v7400 = vpop.f32.mrf.mxu0
  %v7401 = vadd.f32 0.0, %v7400
  %7402 = vdwg.mxu0
  %7403 = vmatpush.msra.mxu0 0.0
  %7404 = vmatpush.msra.mxu0 0.0
  %7405 = vmatpush.msra.mxu0 0.0
  %7406 = vmatpush.msra.mxu0 0.0
  %7407 = vmatpush.msra.mxu0 0.0
  %7408 = vmatpush.msra.mxu0 0.0
  %7409 = vmatpush.msra.mxu0 0.0
  %7410 = vmatpush.msra.mxu0 0.0
  %7411 = vmatpush.msra.mxu0 0.0
  %7412 = vmatpush.msra.mxu0 0.0
  %7413 = vmatpush.msra.mxu0 0.0
  %7414 = vmatpush.msra.mxu0 0.0
  %7415 = vmatpush.msra.mxu0 0.0
  %7416 = vmatpush.msra.mxu0 0.0
  %7417 = vmatpush.msra.mxu0 %v1079
  %7418 = vmatpush.msra.mxu0 %v1071
  %7419 = vmatmul.f32.gmra.mxu0 %v7221
  %v7420 = vpop.f32.mrf.mxu0
  %v7421 = vadd.f32 %v7401, %v7420
  %7422 = vdwg.mxu0
  %7423 = vmatpush.msra.mxu0 %v1064
  %7424 = vmatpush.msra.mxu0 %v1056
  %7425 = vmatpush.msra.mxu0 %v1048
  %7426 = vmatpush.msra.mxu0 %v1040
  %7427 = vmatpush.msra.mxu0 %v1032
  %7428 = vmatpush.msra.mxu0 %v1024
  %7429 = vmatpush.msra.mxu0 %v1016
  %7430 = vmatpush.msra.mxu0 %v1008
  %7431 = vmatpush.msra.mxu0 %v1000
  %7432 = vmatpush.msra.mxu0 %v992
  %7433 = vmatpush.msra.mxu0 %v984
  %7434 = vmatpush.msra.mxu0 %v976
  %7435 = vmatpush.msra.mxu0 %v968
  %7436 = vmatpush.msra.mxu0 %v960
  %7437 = vmatpush.msra.mxu0 %v952
  %7438 = vmatpush.msra.mxu0 %v944
  %7439 = vmatmul.f32.gmra.mxu0 %v7208
  %v7440 = vpop.f32.mrf.mxu0
  %v7441 = vadd.f32 0.0, %v7440
  %7442 = vdwg.mxu0
  %7443 = vmatpush.msra.mxu0 0.0
  %7444 = vmatpush.msra.mxu0 0.0
  %7445 = vmatpush.msra.mxu0 0.0
  %7446 = vmatpush.msra.mxu0 0.0
  %7447 = vmatpush.msra.mxu0 0.0
  %7448 = vmatpush.msra.mxu0 0.0
  %7449 = vmatpush.msra.mxu0 0.0
  %7450 = vmatpush.msra.mxu0 0.0
  %7451 = vmatpush.msra.mxu0 0.0
  %7452 = vmatpush.msra.mxu0 0.0
  %7453 = vmatpush.msra.mxu0 0.0
  %7454 = vmatpush.msra.mxu0 0.0
  %7455 = vmatpush.msra.mxu0 0.0
  %7456 = vmatpush.msra.mxu0 0.0
  %7457 = vmatpush.msra.mxu0 %v1080
  %7458 = vmatpush.msra.mxu0 %v1072
  %7459 = vmatmul.f32.gmra.mxu0 %v7221
  %v7460 = vpop.f32.mrf.mxu0
  %v7461 = vadd.f32 %v7441, %v7460
  %7462 = vdwg.mxu0
  %7463 = vmatpush.msra.mxu0 %v1065
  %7464 = vmatpush.msra.mxu0 %v1057
  %7465 = vmatpush.msra.mxu0 %v1049
  %7466 = vmatpush.msra.mxu0 %v1041
  %7467 = vmatpush.msra.mxu0 %v1033
  %7468 = vmatpush.msra.mxu0 %v1025
  %7469 = vmatpush.msra.mxu0 %v1017
  %7470 = vmatpush.msra.mxu0 %v1009
  %7471 = vmatpush.msra.mxu0 %v1001
  %7472 = vmatpush.msra.mxu0 %v993
  %7473 = vmatpush.msra.mxu0 %v985
  %7474 = vmatpush.msra.mxu0 %v977
  %7475 = vmatpush.msra.mxu0 %v969
  %7476 = vmatpush.msra.mxu0 %v961
  %7477 = vmatpush.msra.mxu0 %v953
  %7478 = vmatpush.msra.mxu0 %v945
  %7479 = vmatmul.f32.gmra.mxu0 %v7208
  %v7480 = vpop.f32.mrf.mxu0
  %v7481 = vadd.f32 0.0, %v7480
  %7482 = vdwg.mxu0
  %7483 = vmatpush.msra.mxu0 0.0
  %7484 = vmatpush.msra.mxu0 0.0
  %7485 = vmatpush.msra.mxu0 0.0
  %7486 = vmatpush.msra.mxu0 0.0
  %7487 = vmatpush.msra.mxu0 0.0
  %7488 = vmatpush.msra.mxu0 0.0
  %7489 = vmatpush.msra.mxu0 0.0
  %7490 = vmatpush.msra.mxu0 0.0
  %7491 = vmatpush.msra.mxu0 0.0
  %7492 = vmatpush.msra.mxu0 0.0
  %7493 = vmatpush.msra.mxu0 0.0
  %7494 = vmatpush.msra.mxu0 0.0
  %7495 = vmatpush.msra.mxu0 0.0
  %7496 = vmatpush.msra.mxu0 0.0
  %7497 = vmatpush.msra.mxu0 %v1081
  %7498 = vmatpush.msra.mxu0 %v1073
  %7499 = vmatmul.f32.gmra.mxu0 %v7221
  %v7500 = vpop.f32.mrf.mxu0
  %v7501 = vadd.f32 %v7481, %v7500
  %7502 = vdwg.mxu0
  %7503 = vmatpush.msra.mxu0 %v1066
  %7504 = vmatpush.msra.mxu0 %v1058
  %7505 = vmatpush.msra.mxu0 %v1050
  %7506 = vmatpush.msra.mxu0 %v1042
  %7507 = vmatpush.msra.mxu0 %v1034
  %7508 = vmatpush.msra.mxu0 %v1026
  %7509 = vmatpush.msra.mxu0 %v1018
  %7510 = vmatpush.msra.mxu0 %v1010
  %7511 = vmatpush.msra.mxu0 %v1002
  %7512 = vmatpush.msra.mxu0 %v994
  %7513 = vmatpush.msra.mxu0 %v986
  %7514 = vmatpush.msra.mxu0 %v978
  %7515 = vmatpush.msra.mxu0 %v970
  %7516 = vmatpush.msra.mxu0 %v962
  %7517 = vmatpush.msra.mxu0 %v954
  %7518 = vmatpush.msra.mxu0 %v946
  %7519 = vmatmul.f32.gmra.mxu0 %v7208
  %v7520 = vpop.f32.mrf.mxu0
  %v7521 = vadd.f32 0.0, %v7520
  %7522 = vdwg.mxu0
  %7523 = vmatpush.msra.mxu0 0.0
  %7524 = vmatpush.msra.mxu0 0.0
  %7525 = vmatpush.msra.mxu0 0.0
  %7526 = vmatpush.msra.mxu0 0.0
  %7527 = vmatpush.msra.mxu0 0.0
  %7528 = vmatpush.msra.mxu0 0.0
  %7529 = vmatpush.msra.mxu0 0.0
  %7530 = vmatpush.msra.mxu0 0.0
  %7531 = vmatpush.msra.mxu0 0.0
  %7532 = vmatpush.msra.mxu0 0.0
  %7533 = vmatpush.msra.mxu0 0.0
  %7534 = vmatpush.msra.mxu0 0.0
  %7535 = vmatpush.msra.mxu0 0.0
  %7536 = vmatpush.msra.mxu0 0.0
  %7537 = vmatpush.msra.mxu0 %v1082
  %7538 = vmatpush.msra.mxu0 %v1074
  %7539 = vmatmul.f32.gmra.mxu0 %v7221
  %v7540 = vpop.f32.mrf.mxu0
  %v7541 = vadd.f32 %v7521, %v7540
  %7542 = vdwg.mxu0
  %v7543 = vadd.f32 %v7212, %v7261
  %v7544 = vadd.f32 %v7213, %v7301
  %v7545 = vadd.f32 %v7214, %v7341
  %v7546 = vadd.f32 %v7215, %v7381
  %v7547 = vadd.f32 %v7216, %v7421
  %v7548 = vadd.f32 %v7217, %v7461
  %v7549 = vadd.f32 %v7218, %v7501
  %v7550 = vadd.f32 %v7219, %v7541
  %v7551 = vsub.f32 0.0, %v7543
  %v7552 = vsub.f32 0.0, %v7544
  %v7553 = vmul.f32 %v7551, 1.442695
  %v7554 = vpow.pop %v7553
  %v7555 = vmul.f32 %v7552, 1.442695
  %v7556 = vpow.pop %v7555
  %v7557 = vadd.f32 %v7554, 1.0
  %v7558 = vadd.f32 %v7556, 1.0
  %v7559 = vrcp.pop %v7557
  %v7560 = vrcp.pop %v7558
  %v7561 = vsub.f32 0.0, %v7545
  %v7562 = vsub.f32 0.0, %v7546
  %v7563 = vmul.f32 %v7561, 1.442695
  %v7564 = vpow.pop %v7563
  %v7565 = vmul.f32 %v7562, 1.442695
  %v7566 = vpow.pop %v7565
  %v7567 = vadd.f32 %v7564, 1.0
  %v7568 = vadd.f32 %v7566, 1.0
  %v7569 = vrcp.pop %v7567
  %v7570 = vrcp.pop %v7568
  %v7571 = vtanh.pop %v7547
  %v7572 = vtanh.pop %v7548
  %v7573 = vsub.f32 0.0, %v7549
  %v7574 = vsub.f32 0.0, %v7550
  %v7575 = vmul.f32 %v7573, 1.442695
  %v7576 = vpow.pop %v7575
  %v7577 = vmul.f32 %v7574, 1.442695
  %v7578 = vpow.pop %v7577
  %v7579 = vadd.f32 %v7576, 1.0
  %v7580 = vadd.f32 %v7578, 1.0
  %v7581 = vrcp.pop %v7579
  %v7582 = vrcp.pop %v7580
  %v7583 = vmul.f32 %v7569, %v7204
  %v7584 = vmul.f32 %v7570, %v7205
  %v7585 = vmul.f32 %v7559, %v7571
  %v7586 = vmul.f32 %v7560, %v7572
  %v7587 = vadd.f32 %v7583, %v7585
  %v7588 = vadd.f32 %v7584, %v7586
  %v7589 = vtanh.pop %v7587
  %v7590 = vtanh.pop %v7588
  %v7591 = vmul.f32 %v7581, %v7589
  %v7592 = vmul.f32 %v7582, %v7590
  %7593 = vst [vmem:[#allocation3 + $0x100] sm:$0xff] %v7591
  %7594 = vst.msk [vmem:[#allocation3 + $0x108] sm:$0xff] %vm1091, %v7592
  %v7595 = vld [vmem:[#allocation3] sm:$0xff]
  %v7596 = vld [vmem:[#allocation3 + $0x8] sm:$0xff]
  %v7597 = vld [vmem:[#allocation3 + $0x10] sm:$0xff]
  %v7598 = vld [vmem:[#allocation3 + $0x18] sm:$0xff]
  %v7599 = vld [vmem:[#allocation3 + $0x20] sm:$0xff]
  %v7600 = vld [vmem:[#allocation3 + $0x28] sm:$0xff]
  %v7601 = vld [vmem:[#allocation3 + $0x30] sm:$0xff]
  %v7602 = vld [vmem:[#allocation3 + $0x38] sm:$0xff]
  %v7603 = vld [vmem:[#allocation3 + $0x40] sm:$0xff]
  %v7604 = vld [vmem:[#allocation3 + $0x48] sm:$0xff]
  %v7605 = vld [vmem:[#allocation3 + $0x50] sm:$0xff]
  %v7606 = vld [vmem:[#allocation3 + $0x58] sm:$0xff]
  %v7607 = vld [vmem:[#allocation3 + $0x60] sm:$0xff]
  %v7608 = vld [vmem:[#allocation3 + $0x68] sm:$0xff]
  %v7609 = vld [vmem:[#allocation3 + $0x70] sm:$0xff]
  %v7610 = vld [vmem:[#allocation3 + $0x78] sm:$0xff]
  %v7611 = vld [vmem:[#allocation3 + $0x80] sm:$0xff]
  %v7612 = vld [vmem:[#allocation3 + $0x88] sm:$0xff]
  %v7613 = vld [vmem:[#allocation3 + $0x90] sm:$0xff]
  %v7614 = vld [vmem:[#allocation3 + $0x98] sm:$0xff]
  %v7615 = vld [vmem:[#allocation3 + $0xa0] sm:$0xff]
  %v7616 = vld [vmem:[#allocation3 + $0xa8] sm:$0xff]
  %v7617 = vld [vmem:[#allocation3 + $0xb0] sm:$0xff]
  %v7618 = vld [vmem:[#allocation3 + $0xb8] sm:$0xff]
  %v7619 = vld [vmem:[#allocation3 + $0xc0] sm:$0xff]
  %v7620 = vld [vmem:[#allocation3 + $0xc8] sm:$0xff]
  %v7621 = vld [vmem:[#allocation3 + $0xd0] sm:$0xff]
  %v7622 = vld [vmem:[#allocation3 + $0xd8] sm:$0xff]
  %v7623 = vld [vmem:[#allocation3 + $0xe0] sm:$0xff]
  %v7624 = vld [vmem:[#allocation3 + $0xe8] sm:$0xff]
  %v7625 = vld [vmem:[#allocation3 + $0xf0] sm:$0xff]
  %v7626 = vld [vmem:[#allocation3 + $0xf8] sm:$0xff]
  %v7627 = vld [vmem:[#allocation3 + $0x100] sm:$0xff]
  %v7628 = vld [vmem:[#allocation3 + $0x108] sm:$0xff]
  %v7629 = vld [vmem:[%s4] sm:$0xff]
  %v7630 = vld [vmem:[%s4 + $0x8] sm:$0xff]
  %v7631 = vld [vmem:[%s4 + $0x10] sm:$0xff]
  %v7632 = vld [vmem:[%s4 + $0x18] sm:$0xff]
  %v7633 = vld [vmem:[%s4 + $0x20] sm:$0xff]
  %v7634 = vld [vmem:[%s4 + $0x28] sm:$0xff]
  %v7635 = vld [vmem:[%s4 + $0x30] sm:$0xff]
  %v7636 = vld [vmem:[%s4 + $0x38] sm:$0xff]
  %v7637 = vld [vmem:[%s4 + $0x40] sm:$0xff]
  %v7638 = vld [vmem:[%s4 + $0x48] sm:$0xff]
  %v7639 = vld [vmem:[%s4 + $0x50] sm:$0xff]
  %v7640 = vld [vmem:[%s4 + $0x58] sm:$0xff]
  %v7641 = vld [vmem:[%s4 + $0x60] sm:$0xff]
  %v7642 = vld [vmem:[%s4 + $0x68] sm:$0xff]
  %v7643 = vld [vmem:[%s4 + $0x70] sm:$0xff]
  %v7644 = vld [vmem:[%s4 + $0x78] sm:$0xff]
  %v7645 = vld [vmem:[%s4 + $0x80] sm:$0xff]
  %v7646 = vld [vmem:[%s4 + $0x88] sm:$0xff]
  %v7647 = vld [vmem:[%s4 + $0x90] sm:$0xff]
  %v7648 = vld [vmem:[%s4 + $0x98] sm:$0xff]
  %v7649 = vld [vmem:[%s4 + $0xa0] sm:$0xff]
  %v7650 = vld [vmem:[%s4 + $0xa8] sm:$0xff]
  %v7651 = vld [vmem:[%s4 + $0xb0] sm:$0xff]
  %v7652 = vld [vmem:[%s4 + $0xb8] sm:$0xff]
  %v7653 = vld [vmem:[%s4 + $0xc0] sm:$0xff]
  %v7654 = vld [vmem:[%s4 + $0xc8] sm:$0xff]
  %v7655 = vld [vmem:[%s4 + $0xd0] sm:$0xff]
  %v7656 = vld [vmem:[%s4 + $0xd8] sm:$0xff]
  %v7657 = vld [vmem:[%s4 + $0xe0] sm:$0xff]
  %v7658 = vld [vmem:[%s4 + $0xe8] sm:$0xff]
  %v7659 = vld [vmem:[%s4 + $0xf0] sm:$0xff]
  %v7660 = vld [vmem:[%s4 + $0xf8] sm:$0xff]
  %v7661 = vld [vmem:[%s4 + $0x100] sm:$0xff]
  %v7662 = vld [vmem:[%s4 + $0x108] sm:$0xff]
  %v7663 = vld [vmem:[%s4 + $0x110] sm:$0xff]
  %v7664 = vld [vmem:[%s4 + $0x118] sm:$0xff]
  %v7665 = vld [vmem:[%s5] sm:$0x3]
  %v7667 = vperm.slane %v7665, 0
  %v7668 = vperm.slane %v7665, 1
  %v7672 = vsel %vm1091, %v7596, 0
  %v7675 = vsel %vm1091, %v7598, 0
  %v7678 = vsel %vm1091, %v7600, 0
  %v7681 = vsel %vm1091, %v7602, 0
  %v7684 = vsel %vm1091, %v7604, 0
  %v7687 = vsel %vm1091, %v7606, 0
  %v7690 = vsel %vm1091, %v7608, 0
  %v7693 = vsel %vm1091, %v7610, 0
  %v7696 = vsel %vm1091, %v7612, 0
  %v7699 = vsel %vm1091, %v7614, 0
  %v7702 = vsel %vm1091, %v7616, 0
  %v7705 = vsel %vm1091, %v7618, 0
  %v7708 = vsel %vm1091, %v7620, 0
  %v7711 = vsel %vm1091, %v7622, 0
  %v7714 = vsel %vm1091, %v7624, 0
  %v7717 = vsel %vm1091, %v7626, 0
  %v7720 = vsel %vm1091, %v7628, 0
  %7722 = vmatpush.msra.mxu0 %v7659
  %7723 = vmatpush.msra.mxu0 %v7657
  %7724 = vmatpush.msra.mxu0 %v7655
  %7725 = vmatpush.msra.mxu0 %v7653
  %7726 = vmatpush.msra.mxu0 %v7651
  %7727 = vmatpush.msra.mxu0 %v7649
  %7728 = vmatpush.msra.mxu0 %v7647
  %7729 = vmatpush.msra.mxu0 %v7645
  %7730 = vmatpush.msra.mxu0 %v7643
  %7731 = vmatpush.msra.mxu0 %v7641
  %7732 = vmatpush.msra.mxu0 %v7639
  %7733 = vmatpush.msra.mxu0 %v7637
  %7734 = vmatpush.msra.mxu0 %v7635
  %7735 = vmatpush.msra.mxu0 %v7633
  %7736 = vmatpush.msra.mxu0 %v7631
  %7737 = vmatpush.msra.mxu0 %v7629
  %7738 = vmatmul.f32.gmra.mxu0 %v7595
  %v7739 = vpop.f32.mrf.mxu0
  %v7740 = vadd.f32 %v7667, %v7739
  %7741 = vmatmul.f32.gmra.mxu0 %v7597
  %v7742 = vpop.f32.mrf.mxu0
  %v7743 = vadd.f32 %v7667, %v7742
  %7744 = vmatmul.f32.gmra.mxu0 %v7599
  %v7745 = vpop.f32.mrf.mxu0
  %v7746 = vadd.f32 %v7667, %v7745
  %7747 = vmatmul.f32.gmra.mxu0 %v7601
  %v7748 = vpop.f32.mrf.mxu0
  %v7749 = vadd.f32 %v7667, %v7748
  %7750 = vmatmul.f32.gmra.mxu0 %v7603
  %v7751 = vpop.f32.mrf.mxu0
  %v7752 = vadd.f32 %v7667, %v7751
  %7753 = vmatmul.f32.gmra.mxu0 %v7605
  %v7754 = vpop.f32.mrf.mxu0
  %v7755 = vadd.f32 %v7667, %v7754
  %7756 = vmatmul.f32.gmra.mxu0 %v7607
  %v7757 = vpop.f32.mrf.mxu0
  %v7758 = vadd.f32 %v7667, %v7757
  %7759 = vmatmul.f32.gmra.mxu0 %v7609
  %v7760 = vpop.f32.mrf.mxu0
  %v7761 = vadd.f32 %v7667, %v7760
  %7762 = vmatmul.f32.gmra.mxu0 %v7611
  %v7763 = vpop.f32.mrf.mxu0
  %v7764 = vadd.f32 %v7667, %v7763
  %7765 = vmatmul.f32.gmra.mxu0 %v7613
  %v7766 = vpop.f32.mrf.mxu0
  %v7767 = vadd.f32 %v7667, %v7766
  %7768 = vmatmul.f32.gmra.mxu0 %v7615
  %v7769 = vpop.f32.mrf.mxu0
  %v7770 = vadd.f32 %v7667, %v7769
  %7771 = vmatmul.f32.gmra.mxu0 %v7617
  %v7772 = vpop.f32.mrf.mxu0
  %v7773 = vadd.f32 %v7667, %v7772
  %7774 = vmatmul.f32.gmra.mxu0 %v7619
  %v7775 = vpop.f32.mrf.mxu0
  %v7776 = vadd.f32 %v7667, %v7775
  %7777 = vmatmul.f32.gmra.mxu0 %v7621
  %v7778 = vpop.f32.mrf.mxu0
  %v7779 = vadd.f32 %v7667, %v7778
  %7780 = vmatmul.f32.gmra.mxu0 %v7623
  %v7781 = vpop.f32.mrf.mxu0
  %v7782 = vadd.f32 %v7667, %v7781
  %7783 = vmatmul.f32.gmra.mxu0 %v7625
  %v7784 = vpop.f32.mrf.mxu0
  %v7785 = vadd.f32 %v7667, %v7784
  %7786 = vmatmul.f32.gmra.mxu0 %v7627
  %v7787 = vpop.f32.mrf.mxu0
  %v7788 = vadd.f32 %v7667, %v7787
  %7789 = vdwg.mxu0
  %7790 = vmatpush.msra.mxu0 0.0
  %7791 = vmatpush.msra.mxu0 0.0
  %7792 = vmatpush.msra.mxu0 0.0
  %7793 = vmatpush.msra.mxu0 0.0
  %7794 = vmatpush.msra.mxu0 0.0
  %7795 = vmatpush.msra.mxu0 0.0
  %7796 = vmatpush.msra.mxu0 0.0
  %7797 = vmatpush.msra.mxu0 0.0
  %7798 = vmatpush.msra.mxu0 0.0
  %7799 = vmatpush.msra.mxu0 0.0
  %7800 = vmatpush.msra.mxu0 0.0
  %7801 = vmatpush.msra.mxu0 0.0
  %7802 = vmatpush.msra.mxu0 0.0
  %7803 = vmatpush.msra.mxu0 0.0
  %7804 = vmatpush.msra.mxu0 %v7663
  %7805 = vmatpush.msra.mxu0 %v7661
  %7806 = vmatmul.f32.gmra.mxu0 %v7672
  %v7807 = vpop.f32.mrf.mxu0
  %v7808 = vadd.f32 %v7740, %v7807
  %7809 = vmatmul.f32.gmra.mxu0 %v7675
  %v7810 = vpop.f32.mrf.mxu0
  %v7811 = vadd.f32 %v7743, %v7810
  %7812 = vmatmul.f32.gmra.mxu0 %v7678
  %v7813 = vpop.f32.mrf.mxu0
  %v7814 = vadd.f32 %v7746, %v7813
  %7815 = vmatmul.f32.gmra.mxu0 %v7681
  %v7816 = vpop.f32.mrf.mxu0
  %v7817 = vadd.f32 %v7749, %v7816
  %7818 = vmatmul.f32.gmra.mxu0 %v7684
  %v7819 = vpop.f32.mrf.mxu0
  %v7820 = vadd.f32 %v7752, %v7819
  %7821 = vmatmul.f32.gmra.mxu0 %v7687
  %v7822 = vpop.f32.mrf.mxu0
  %v7823 = vadd.f32 %v7755, %v7822
  %7824 = vmatmul.f32.gmra.mxu0 %v7690
  %v7825 = vpop.f32.mrf.mxu0
  %v7826 = vadd.f32 %v7758, %v7825
  %7827 = vmatmul.f32.gmra.mxu0 %v7693
  %v7828 = vpop.f32.mrf.mxu0
  %v7829 = vadd.f32 %v7761, %v7828
  %7830 = vmatmul.f32.gmra.mxu0 %v7696
  %v7831 = vpop.f32.mrf.mxu0
  %v7832 = vadd.f32 %v7764, %v7831
  %7833 = vmatmul.f32.gmra.mxu0 %v7699
  %v7834 = vpop.f32.mrf.mxu0
  %v7835 = vadd.f32 %v7767, %v7834
  %7836 = vmatmul.f32.gmra.mxu0 %v7702
  %v7837 = vpop.f32.mrf.mxu0
  %v7838 = vadd.f32 %v7770, %v7837
  %7839 = vmatmul.f32.gmra.mxu0 %v7705
  %v7840 = vpop.f32.mrf.mxu0
  %v7841 = vadd.f32 %v7773, %v7840
  %7842 = vmatmul.f32.gmra.mxu0 %v7708
  %v7843 = vpop.f32.mrf.mxu0
  %v7844 = vadd.f32 %v7776, %v7843
  %7845 = vmatmul.f32.gmra.mxu0 %v7711
  %v7846 = vpop.f32.mrf.mxu0
  %v7847 = vadd.f32 %v7779, %v7846
  %7848 = vmatmul.f32.gmra.mxu0 %v7714
  %v7849 = vpop.f32.mrf.mxu0
  %v7850 = vadd.f32 %v7782, %v7849
  %7851 = vmatmul.f32.gmra.mxu0 %v7717
  %v7852 = vpop.f32.mrf.mxu0
  %v7853 = vadd.f32 %v7785, %v7852
  %7854 = vmatmul.f32.gmra.mxu0 %v7720
  %v7855 = vpop.f32.mrf.mxu0
  %v7856 = vadd.f32 %v7788, %v7855
  %7857 = vdwg.mxu0
  %7858 = vmatpush.msra.mxu0 %v7660
  %7859 = vmatpush.msra.mxu0 %v7658
  %7860 = vmatpush.msra.mxu0 %v7656
  %7861 = vmatpush.msra.mxu0 %v7654
  %7862 = vmatpush.msra.mxu0 %v7652
  %7863 = vmatpush.msra.mxu0 %v7650
  %7864 = vmatpush.msra.mxu0 %v7648
  %7865 = vmatpush.msra.mxu0 %v7646
  %7866 = vmatpush.msra.mxu0 %v7644
  %7867 = vmatpush.msra.mxu0 %v7642
  %7868 = vmatpush.msra.mxu0 %v7640
  %7869 = vmatpush.msra.mxu0 %v7638
  %7870 = vmatpush.msra.mxu0 %v7636
  %7871 = vmatpush.msra.mxu0 %v7634
  %7872 = vmatpush.msra.mxu0 %v7632
  %7873 = vmatpush.msra.mxu0 %v7630
  %7874 = vmatmul.f32.gmra.mxu0 %v7595
  %v7875 = vpop.f32.mrf.mxu0
  %v7876 = vadd.f32 %v7668, %v7875
  %7877 = vmatmul.f32.gmra.mxu0 %v7597
  %v7878 = vpop.f32.mrf.mxu0
  %v7879 = vadd.f32 %v7668, %v7878
  %7880 = vmatmul.f32.gmra.mxu0 %v7599
  %v7881 = vpop.f32.mrf.mxu0
  %v7882 = vadd.f32 %v7668, %v7881
  %7883 = vmatmul.f32.gmra.mxu0 %v7601
  %v7884 = vpop.f32.mrf.mxu0
  %v7885 = vadd.f32 %v7668, %v7884
  %7886 = vmatmul.f32.gmra.mxu0 %v7603
  %v7887 = vpop.f32.mrf.mxu0
  %v7888 = vadd.f32 %v7668, %v7887
  %7889 = vmatmul.f32.gmra.mxu0 %v7605
  %v7890 = vpop.f32.mrf.mxu0
  %v7891 = vadd.f32 %v7668, %v7890
  %7892 = vmatmul.f32.gmra.mxu0 %v7607
  %v7893 = vpop.f32.mrf.mxu0
  %v7894 = vadd.f32 %v7668, %v7893
  %7895 = vmatmul.f32.gmra.mxu0 %v7609
  %v7896 = vpop.f32.mrf.mxu0
  %v7897 = vadd.f32 %v7668, %v7896
  %7898 = vmatmul.f32.gmra.mxu0 %v7611
  %v7899 = vpop.f32.mrf.mxu0
  %v7900 = vadd.f32 %v7668, %v7899
  %7901 = vmatmul.f32.gmra.mxu0 %v7613
  %v7902 = vpop.f32.mrf.mxu0
  %v7903 = vadd.f32 %v7668, %v7902
  %7904 = vmatmul.f32.gmra.mxu0 %v7615
  %v7905 = vpop.f32.mrf.mxu0
  %v7906 = vadd.f32 %v7668, %v7905
  %7907 = vmatmul.f32.gmra.mxu0 %v7617
  %v7908 = vpop.f32.mrf.mxu0
  %v7909 = vadd.f32 %v7668, %v7908
  %7910 = vmatmul.f32.gmra.mxu0 %v7619
  %v7911 = vpop.f32.mrf.mxu0
  %v7912 = vadd.f32 %v7668, %v7911
  %7913 = vmatmul.f32.gmra.mxu0 %v7621
  %v7914 = vpop.f32.mrf.mxu0
  %v7915 = vadd.f32 %v7668, %v7914
  %7916 = vmatmul.f32.gmra.mxu0 %v7623
  %v7917 = vpop.f32.mrf.mxu0
  %v7918 = vadd.f32 %v7668, %v7917
  %7919 = vmatmul.f32.gmra.mxu0 %v7625
  %v7920 = vpop.f32.mrf.mxu0
  %v7921 = vadd.f32 %v7668, %v7920
  %7922 = vmatmul.f32.gmra.mxu0 %v7627
  %v7923 = vpop.f32.mrf.mxu0
  %v7924 = vadd.f32 %v7668, %v7923
  %7925 = vdwg.mxu0
  %7926 = vmatpush.msra.mxu0 0.0
  %7927 = vmatpush.msra.mxu0 0.0
  %7928 = vmatpush.msra.mxu0 0.0
  %7929 = vmatpush.msra.mxu0 0.0
  %7930 = vmatpush.msra.mxu0 0.0
  %7931 = vmatpush.msra.mxu0 0.0
  %7932 = vmatpush.msra.mxu0 0.0
  %7933 = vmatpush.msra.mxu0 0.0
  %7934 = vmatpush.msra.mxu0 0.0
  %7935 = vmatpush.msra.mxu0 0.0
  %7936 = vmatpush.msra.mxu0 0.0
  %7937 = vmatpush.msra.mxu0 0.0
  %7938 = vmatpush.msra.mxu0 0.0
  %7939 = vmatpush.msra.mxu0 0.0
  %7940 = vmatpush.msra.mxu0 %v7664
  %7941 = vmatpush.msra.mxu0 %v7662
  %7942 = vmatmul.f32.gmra.mxu0 %v7672
  %v7943 = vpop.f32.mrf.mxu0
  %v7944 = vadd.f32 %v7876, %v7943
  %7945 = vmatmul.f32.gmra.mxu0 %v7675
  %v7946 = vpop.f32.mrf.mxu0
  %v7947 = vadd.f32 %v7879, %v7946
  %7948 = vmatmul.f32.gmra.mxu0 %v7678
  %v7949 = vpop.f32.mrf.mxu0
  %v7950 = vadd.f32 %v7882, %v7949
  %7951 = vmatmul.f32.gmra.mxu0 %v7681
  %v7952 = vpop.f32.mrf.mxu0
  %v7953 = vadd.f32 %v7885, %v7952
  %7954 = vmatmul.f32.gmra.mxu0 %v7684
  %v7955 = vpop.f32.mrf.mxu0
  %v7956 = vadd.f32 %v7888, %v7955
  %7957 = vmatmul.f32.gmra.mxu0 %v7687
  %v7958 = vpop.f32.mrf.mxu0
  %v7959 = vadd.f32 %v7891, %v7958
  %7960 = vmatmul.f32.gmra.mxu0 %v7690
  %v7961 = vpop.f32.mrf.mxu0
  %v7962 = vadd.f32 %v7894, %v7961
  %7963 = vmatmul.f32.gmra.mxu0 %v7693
  %v7964 = vpop.f32.mrf.mxu0
  %v7965 = vadd.f32 %v7897, %v7964
  %7966 = vmatmul.f32.gmra.mxu0 %v7696
  %v7967 = vpop.f32.mrf.mxu0
  %v7968 = vadd.f32 %v7900, %v7967
  %7969 = vmatmul.f32.gmra.mxu0 %v7699
  %v7970 = vpop.f32.mrf.mxu0
  %v7971 = vadd.f32 %v7903, %v7970
  %7972 = vmatmul.f32.gmra.mxu0 %v7702
  %v7973 = vpop.f32.mrf.mxu0
  %v7974 = vadd.f32 %v7906, %v7973
  %7975 = vmatmul.f32.gmra.mxu0 %v7705
  %v7976 = vpop.f32.mrf.mxu0
  %v7977 = vadd.f32 %v7909, %v7976
  %7978 = vmatmul.f32.gmra.mxu0 %v7708
  %v7979 = vpop.f32.mrf.mxu0
  %v7980 = vadd.f32 %v7912, %v7979
  %7981 = vmatmul.f32.gmra.mxu0 %v7711
  %v7982 = vpop.f32.mrf.mxu0
  %v7983 = vadd.f32 %v7915, %v7982
  %7984 = vmatmul.f32.gmra.mxu0 %v7714
  %v7985 = vpop.f32.mrf.mxu0
  %v7986 = vadd.f32 %v7918, %v7985
  %7987 = vmatmul.f32.gmra.mxu0 %v7717
  %v7988 = vpop.f32.mrf.mxu0
  %v7989 = vadd.f32 %v7921, %v7988
  %7990 = vmatmul.f32.gmra.mxu0 %v7720
  %v7991 = vpop.f32.mrf.mxu0
  %v7992 = vadd.f32 %v7924, %v7991
  %7993 = vdwg.mxu0
  %v7994 = vtanh.pop %v7808
  %v7995 = vtanh.pop %v7944
  %v7996 = vtanh.pop %v7811
  %v7997 = vtanh.pop %v7947
  %v7998 = vtanh.pop %v7814
  %v7999 = vtanh.pop %v7950
  %v8000 = vtanh.pop %v7817
  %v8001 = vtanh.pop %v7953
  %v8002 = vtanh.pop %v7820
  %v8003 = vtanh.pop %v7956
  %v8004 = vtanh.pop %v7823
  %v8005 = vtanh.pop %v7959
  %v8006 = vtanh.pop %v7826
  %v8007 = vtanh.pop %v7962
  %v8008 = vtanh.pop %v7829
  %v8009 = vtanh.pop %v7965
  %v8010 = vtanh.pop %v7832
  %v8011 = vtanh.pop %v7968
  %v8012 = vtanh.pop %v7835
  %v8013 = vtanh.pop %v7971
  %v8014 = vtanh.pop %v7838
  %v8015 = vtanh.pop %v7974
  %v8016 = vtanh.pop %v7841
  %v8017 = vtanh.pop %v7977
  %v8018 = vtanh.pop %v7844
  %v8019 = vtanh.pop %v7980
  %v8020 = vtanh.pop %v7847
  %v8021 = vtanh.pop %v7983
  %v8022 = vtanh.pop %v7850
  %v8023 = vtanh.pop %v7986
  %v8024 = vtanh.pop %v7853
  %v8025 = vtanh.pop %v7989
  %v8026 = vtanh.pop %v7856
  %v8027 = vtanh.pop %v7992
  %v8028 = vld [vmem:[%s6] sm:$0x3]
  %v8030 = vperm.slane %v8028, 0
  %v8031 = vperm.slane %v8028, 1
  %v8034 = vmul.f32 %v7994, %v8030
  %v8035 = vmul.f32 %v7995, %v8031
  %v8036 = vmul.f32 %v7996, %v8030
  %v8037 = vmul.f32 %v7997, %v8031
  %v8038 = vmul.f32 %v7998, %v8030
  %v8039 = vmul.f32 %v7999, %v8031
  %v8040 = vmul.f32 %v8000, %v8030
  %v8041 = vmul.f32 %v8001, %v8031
  %v8042 = vmul.f32 %v8002, %v8030
  %v8043 = vmul.f32 %v8003, %v8031
  %v8044 = vmul.f32 %v8004, %v8030
  %v8045 = vmul.f32 %v8005, %v8031
  %v8046 = vmul.f32 %v8006, %v8030
  %v8047 = vmul.f32 %v8007, %v8031
  %v8048 = vmul.f32 %v8008, %v8030
  %v8049 = vmul.f32 %v8009, %v8031
  %v8050 = vmul.f32 %v8010, %v8030
  %v8051 = vmul.f32 %v8011, %v8031
  %v8052 = vmul.f32 %v8012, %v8030
  %v8053 = vmul.f32 %v8013, %v8031
  %v8054 = vmul.f32 %v8014, %v8030
  %v8055 = vmul.f32 %v8015, %v8031
  %v8056 = vmul.f32 %v8016, %v8030
  %v8057 = vmul.f32 %v8017, %v8031
  %v8058 = vmul.f32 %v8018, %v8030
  %v8059 = vmul.f32 %v8019, %v8031
  %v8060 = vmul.f32 %v8020, %v8030
  %v8061 = vmul.f32 %v8021, %v8031
  %v8062 = vmul.f32 %v8022, %v8030
  %v8063 = vmul.f32 %v8023, %v8031
  %v8064 = vmul.f32 %v8024, %v8030
  %v8065 = vmul.f32 %v8025, %v8031
  %v8066 = vmul.f32 %v8026, %v8030
  %v8067 = vmul.f32 %v8027, %v8031
  %v8068 = vld [vmem:[%s7] sm:$0xff]
  %v8069 = vld [vmem:[%s7 + $0x8] sm:$0xff]
  %v8070 = vld [vmem:[%s7 + $0x10] sm:$0xff]
  %v8071 = vld [vmem:[%s7 + $0x18] sm:$0xff]
  %v8072 = vld [vmem:[%s7 + $0x20] sm:$0xff]
  %v8073 = vld [vmem:[%s7 + $0x28] sm:$0xff]
  %v8074 = vld [vmem:[%s7 + $0x30] sm:$0xff]
  %v8075 = vld [vmem:[%s7 + $0x38] sm:$0xff]
  %v8076 = vld [vmem:[%s7 + $0x40] sm:$0xff]
  %v8077 = vld [vmem:[%s7 + $0x48] sm:$0xff]
  %v8078 = vld [vmem:[%s7 + $0x50] sm:$0xff]
  %v8079 = vld [vmem:[%s7 + $0x58] sm:$0xff]
  %v8080 = vld [vmem:[%s7 + $0x60] sm:$0xff]
  %v8081 = vld [vmem:[%s7 + $0x68] sm:$0xff]
  %v8082 = vld [vmem:[%s7 + $0x70] sm:$0xff]
  %v8083 = vld [vmem:[%s7 + $0x78] sm:$0xff]
  %v8084 = vld [vmem:[%s7 + $0x80] sm:$0xff]
  %v8085 = vld [vmem:[%s7 + $0x88] sm:$0xff]
  %v8086 = vld [vmem:[%s7 + $0x90] sm:$0xff]
  %v8087 = vld [vmem:[%s7 + $0x98] sm:$0xff]
  %v8088 = vld [vmem:[%s7 + $0xa0] sm:$0xff]
  %v8089 = vld [vmem:[%s7 + $0xa8] sm:$0xff]
  %v8090 = vld [vmem:[%s7 + $0xb0] sm:$0xff]
  %v8091 = vld [vmem:[%s7 + $0xb8] sm:$0xff]
  %v8092 = vld [vmem:[%s7 + $0xc0] sm:$0xff]
  %v8093 = vld [vmem:[%s7 + $0xc8] sm:$0xff]
  %v8094 = vld [vmem:[%s7 + $0xd0] sm:$0xff]
  %v8095 = vld [vmem:[%s7 + $0xd8] sm:$0xff]
  %v8096 = vld [vmem:[%s7 + $0xe0] sm:$0xff]
  %v8097 = vld [vmem:[%s7 + $0xe8] sm:$0xff]
  %v8098 = vld [vmem:[%s7 + $0xf0] sm:$0xff]
  %v8099 = vld [vmem:[%s7 + $0xf8] sm:$0xff]
  %v8100 = vld [vmem:[%s7 + $0x100] sm:$0xff]
  %v8101 = vld [vmem:[%s7 + $0x108] sm:$0xff]
  %v8102 = vld [vmem:[%s7 + $0x110] sm:$0xff]
  %v8103 = vld [vmem:[%s7 + $0x118] sm:$0xff]
  %v8104 = vld [vmem:[%s8] sm:$0xff]
  %v8105 = vld [vmem:[%s8 + $0x8] sm:$0xff]
  %v8106 = vld [vmem:[%s8 + $0x10] sm:$0xff]
  %v8107 = vld [vmem:[%s8 + $0x18] sm:$0xff]
  %v8108 = vld [vmem:[%s8 + $0x20] sm:$0xff]
  %v8109 = vld [vmem:[%s8 + $0x28] sm:$0xff]
  %v8110 = vld [vmem:[%s8 + $0x30] sm:$0xff]
  %v8111 = vld [vmem:[%s8 + $0x38] sm:$0xff]
  %v8112 = vld [vmem:[%s8 + $0x40] sm:$0xff]
  %v8113 = vld [vmem:[%s8 + $0x48] sm:$0xff]
  %v8114 = vld [vmem:[%s8 + $0x50] sm:$0xff]
  %v8115 = vld [vmem:[%s8 + $0x58] sm:$0xff]
  %v8116 = vld [vmem:[%s8 + $0x60] sm:$0xff]
  %v8117 = vld [vmem:[%s8 + $0x68] sm:$0xff]
  %v8118 = vld [vmem:[%s8 + $0x70] sm:$0xff]
  %v8119 = vld [vmem:[%s8 + $0x78] sm:$0xff]
  %v8120 = vld [vmem:[%s8 + $0x80] sm:$0xff]
  %v8121 = vld [vmem:[%s8 + $0x88] sm:$0xff]
  %v8122 = vld [vmem:[%s8 + $0x90] sm:$0xff]
  %v8123 = vld [vmem:[%s8 + $0x98] sm:$0xff]
  %v8124 = vld [vmem:[%s8 + $0xa0] sm:$0xff]
  %v8125 = vld [vmem:[%s8 + $0xa8] sm:$0xff]
  %v8126 = vld [vmem:[%s8 + $0xb0] sm:$0xff]
  %v8127 = vld [vmem:[%s8 + $0xb8] sm:$0xff]
  %v8128 = vld [vmem:[%s8 + $0xc0] sm:$0xff]
  %v8129 = vld [vmem:[%s8 + $0xc8] sm:$0xff]
  %v8130 = vld [vmem:[%s8 + $0xd0] sm:$0xff]
  %v8131 = vld [vmem:[%s8 + $0xd8] sm:$0xff]
  %v8132 = vld [vmem:[%s8 + $0xe0] sm:$0xff]
  %v8133 = vld [vmem:[%s8 + $0xe8] sm:$0xff]
  %v8134 = vld [vmem:[%s8 + $0xf0] sm:$0xff]
  %v8135 = vld [vmem:[%s8 + $0xf8] sm:$0xff]
  %v8136 = vld [vmem:[%s8 + $0x100] sm:$0xff]
  %v8137 = vld [vmem:[%s8 + $0x108] sm:$0xff]
  %v8139 = vsel %vm1091, %v8035, 0
  %v8142 = vsel %vm1091, %v8037, 0
  %v8145 = vsel %vm1091, %v8039, 0
  %v8148 = vsel %vm1091, %v8041, 0
  %v8151 = vsel %vm1091, %v8043, 0
  %v8154 = vsel %vm1091, %v8045, 0
  %v8157 = vsel %vm1091, %v8047, 0
  %v8160 = vsel %vm1091, %v8049, 0
  %v8163 = vsel %vm1091, %v8051, 0
  %v8166 = vsel %vm1091, %v8053, 0
  %v8169 = vsel %vm1091, %v8055, 0
  %v8172 = vsel %vm1091, %v8057, 0
  %v8175 = vsel %vm1091, %v8059, 0
  %v8178 = vsel %vm1091, %v8061, 0
  %v8181 = vsel %vm1091, %v8063, 0
  %v8184 = vsel %vm1091, %v8065, 0
  %v8187 = vsel %vm1091, %v8067, 0
  %8189 = vmatpush.msra.mxu0 %v8098
  %8190 = vmatpush.msra.mxu0 %v8096
  %8191 = vmatpush.msra.mxu0 %v8094
  %8192 = vmatpush.msra.mxu0 %v8092
  %8193 = vmatpush.msra.mxu0 %v8090
  %8194 = vmatpush.msra.mxu0 %v8088
  %8195 = vmatpush.msra.mxu0 %v8086
  %8196 = vmatpush.msra.mxu0 %v8084
  %8197 = vmatpush.msra.mxu0 %v8082
  %8198 = vmatpush.msra.mxu0 %v8080
  %8199 = vmatpush.msra.mxu0 %v8078
  %8200 = vmatpush.msra.mxu0 %v8076
  %8201 = vmatpush.msra.mxu0 %v8074
  %8202 = vmatpush.msra.mxu0 %v8072
  %8203 = vmatpush.msra.mxu0 %v8070
  %8204 = vmatpush.msra.mxu0 %v8068
  %8205 = vmatmul.f32.gmra.mxu0 %v8034
  %v8206 = vpop.f32.mrf.mxu0
  %v8207 = vadd.f32 %v8104, %v8206
  %8208 = vmatmul.f32.gmra.mxu0 %v8036
  %v8209 = vpop.f32.mrf.mxu0
  %v8210 = vadd.f32 %v8106, %v8209
  %8211 = vmatmul.f32.gmra.mxu0 %v8038
  %v8212 = vpop.f32.mrf.mxu0
  %v8213 = vadd.f32 %v8108, %v8212
  %8214 = vmatmul.f32.gmra.mxu0 %v8040
  %v8215 = vpop.f32.mrf.mxu0
  %v8216 = vadd.f32 %v8110, %v8215
  %8217 = vmatmul.f32.gmra.mxu0 %v8042
  %v8218 = vpop.f32.mrf.mxu0
  %v8219 = vadd.f32 %v8112, %v8218
  %8220 = vmatmul.f32.gmra.mxu0 %v8044
  %v8221 = vpop.f32.mrf.mxu0
  %v8222 = vadd.f32 %v8114, %v8221
  %8223 = vmatmul.f32.gmra.mxu0 %v8046
  %v8224 = vpop.f32.mrf.mxu0
  %v8225 = vadd.f32 %v8116, %v8224
  %8226 = vmatmul.f32.gmra.mxu0 %v8048
  %v8227 = vpop.f32.mrf.mxu0
  %v8228 = vadd.f32 %v8118, %v8227
  %8229 = vmatmul.f32.gmra.mxu0 %v8050
  %v8230 = vpop.f32.mrf.mxu0
  %v8231 = vadd.f32 %v8120, %v8230
  %8232 = vmatmul.f32.gmra.mxu0 %v8052
  %v8233 = vpop.f32.mrf.mxu0
  %v8234 = vadd.f32 %v8122, %v8233
  %8235 = vmatmul.f32.gmra.mxu0 %v8054
  %v8236 = vpop.f32.mrf.mxu0
  %v8237 = vadd.f32 %v8124, %v8236
  %8238 = vmatmul.f32.gmra.mxu0 %v8056
  %v8239 = vpop.f32.mrf.mxu0
  %v8240 = vadd.f32 %v8126, %v8239
  %8241 = vmatmul.f32.gmra.mxu0 %v8058
  %v8242 = vpop.f32.mrf.mxu0
  %v8243 = vadd.f32 %v8128, %v8242
  %8244 = vmatmul.f32.gmra.mxu0 %v8060
  %v8245 = vpop.f32.mrf.mxu0
  %v8246 = vadd.f32 %v8130, %v8245
  %8247 = vmatmul.f32.gmra.mxu0 %v8062
  %v8248 = vpop.f32.mrf.mxu0
  %v8249 = vadd.f32 %v8132, %v8248
  %8250 = vmatmul.f32.gmra.mxu0 %v8064
  %v8251 = vpop.f32.mrf.mxu0
  %v8252 = vadd.f32 %v8134, %v8251
  %8253 = vmatmul.f32.gmra.mxu0 %v8066
  %v8254 = vpop.f32.mrf.mxu0
  %v8255 = vadd.f32 %v8136, %v8254
  %8256 = vdwg.mxu0
  %8257 = vmatpush.msra.mxu0 0.0
  %8258 = vmatpush.msra.mxu0 0.0
  %8259 = vmatpush.msra.mxu0 0.0
  %8260 = vmatpush.msra.mxu0 0.0
  %8261 = vmatpush.msra.mxu0 0.0
  %8262 = vmatpush.msra.mxu0 0.0
  %8263 = vmatpush.msra.mxu0 0.0
  %8264 = vmatpush.msra.mxu0 0.0
  %8265 = vmatpush.msra.mxu0 0.0
  %8266 = vmatpush.msra.mxu0 0.0
  %8267 = vmatpush.msra.mxu0 0.0
  %8268 = vmatpush.msra.mxu0 0.0
  %8269 = vmatpush.msra.mxu0 0.0
  %8270 = vmatpush.msra.mxu0 0.0
  %8271 = vmatpush.msra.mxu0 %v8102
  %8272 = vmatpush.msra.mxu0 %v8100
  %8273 = vmatmul.f32.gmra.mxu0 %v8139
  %v8274 = vpop.f32.mrf.mxu0
  %v8275 = vadd.f32 %v8207, %v8274
  %8276 = vmatmul.f32.gmra.mxu0 %v8142
  %v8277 = vpop.f32.mrf.mxu0
  %v8278 = vadd.f32 %v8210, %v8277
  %8279 = vmatmul.f32.gmra.mxu0 %v8145
  %v8280 = vpop.f32.mrf.mxu0
  %v8281 = vadd.f32 %v8213, %v8280
  %8282 = vmatmul.f32.gmra.mxu0 %v8148
  %v8283 = vpop.f32.mrf.mxu0
  %v8284 = vadd.f32 %v8216, %v8283
  %8285 = vmatmul.f32.gmra.mxu0 %v8151
  %v8286 = vpop.f32.mrf.mxu0
  %v8287 = vadd.f32 %v8219, %v8286
  %8288 = vmatmul.f32.gmra.mxu0 %v8154
  %v8289 = vpop.f32.mrf.mxu0
  %v8290 = vadd.f32 %v8222, %v8289
  %8291 = vmatmul.f32.gmra.mxu0 %v8157
  %v8292 = vpop.f32.mrf.mxu0
  %v8293 = vadd.f32 %v8225, %v8292
  %8294 = vmatmul.f32.gmra.mxu0 %v8160
  %v8295 = vpop.f32.mrf.mxu0
  %v8296 = vadd.f32 %v8228, %v8295
  %8297 = vmatmul.f32.gmra.mxu0 %v8163
  %v8298 = vpop.f32.mrf.mxu0
  %v8299 = vadd.f32 %v8231, %v8298
  %8300 = vmatmul.f32.gmra.mxu0 %v8166
  %v8301 = vpop.f32.mrf.mxu0
  %v8302 = vadd.f32 %v8234, %v8301
  %8303 = vmatmul.f32.gmra.mxu0 %v8169
  %v8304 = vpop.f32.mrf.mxu0
  %v8305 = vadd.f32 %v8237, %v8304
  %8306 = vmatmul.f32.gmra.mxu0 %v8172
  %v8307 = vpop.f32.mrf.mxu0
  %v8308 = vadd.f32 %v8240, %v8307
  %8309 = vmatmul.f32.gmra.mxu0 %v8175
  %v8310 = vpop.f32.mrf.mxu0
  %v8311 = vadd.f32 %v8243, %v8310
  %8312 = vmatmul.f32.gmra.mxu0 %v8178
  %v8313 = vpop.f32.mrf.mxu0
  %v8314 = vadd.f32 %v8246, %v8313
  %8315 = vmatmul.f32.gmra.mxu0 %v8181
  %v8316 = vpop.f32.mrf.mxu0
  %v8317 = vadd.f32 %v8249, %v8316
  %8318 = vmatmul.f32.gmra.mxu0 %v8184
  %v8319 = vpop.f32.mrf.mxu0
  %v8320 = vadd.f32 %v8252, %v8319
  %8321 = vmatmul.f32.gmra.mxu0 %v8187
  %v8322 = vpop.f32.mrf.mxu0
  %v8323 = vadd.f32 %v8255, %v8322
  %8324 = vdwg.mxu0
  %8325 = vmatpush.msra.mxu0 %v8099
  %8326 = vmatpush.msra.mxu0 %v8097
  %8327 = vmatpush.msra.mxu0 %v8095
  %8328 = vmatpush.msra.mxu0 %v8093
  %8329 = vmatpush.msra.mxu0 %v8091
  %8330 = vmatpush.msra.mxu0 %v8089
  %8331 = vmatpush.msra.mxu0 %v8087
  %8332 = vmatpush.msra.mxu0 %v8085
  %8333 = vmatpush.msra.mxu0 %v8083
  %8334 = vmatpush.msra.mxu0 %v8081
  %8335 = vmatpush.msra.mxu0 %v8079
  %8336 = vmatpush.msra.mxu0 %v8077
  %8337 = vmatpush.msra.mxu0 %v8075
  %8338 = vmatpush.msra.mxu0 %v8073
  %8339 = vmatpush.msra.mxu0 %v8071
  %8340 = vmatpush.msra.mxu0 %v8069
  %8341 = vmatmul.f32.gmra.mxu0 %v8034
  %v8342 = vpop.f32.mrf.mxu0
  %v8343 = vadd.f32 %v8105, %v8342
  %8344 = vmatmul.f32.gmra.mxu0 %v8036
  %v8345 = vpop.f32.mrf.mxu0
  %v8346 = vadd.f32 %v8107, %v8345
  %8347 = vmatmul.f32.gmra.mxu0 %v8038
  %v8348 = vpop.f32.mrf.mxu0
  %v8349 = vadd.f32 %v8109, %v8348
  %8350 = vmatmul.f32.gmra.mxu0 %v8040
  %v8351 = vpop.f32.mrf.mxu0
  %v8352 = vadd.f32 %v8111, %v8351
  %8353 = vmatmul.f32.gmra.mxu0 %v8042
  %v8354 = vpop.f32.mrf.mxu0
  %v8355 = vadd.f32 %v8113, %v8354
  %8356 = vmatmul.f32.gmra.mxu0 %v8044
  %v8357 = vpop.f32.mrf.mxu0
  %v8358 = vadd.f32 %v8115, %v8357
  %8359 = vmatmul.f32.gmra.mxu0 %v8046
  %v8360 = vpop.f32.mrf.mxu0
  %v8361 = vadd.f32 %v8117, %v8360
  %8362 = vmatmul.f32.gmra.mxu0 %v8048
  %v8363 = vpop.f32.mrf.mxu0
  %v8364 = vadd.f32 %v8119, %v8363
  %8365 = vmatmul.f32.gmra.mxu0 %v8050
  %v8366 = vpop.f32.mrf.mxu0
  %v8367 = vadd.f32 %v8121, %v8366
  %8368 = vmatmul.f32.gmra.mxu0 %v8052
  %v8369 = vpop.f32.mrf.mxu0
  %v8370 = vadd.f32 %v8123, %v8369
  %8371 = vmatmul.f32.gmra.mxu0 %v8054
  %v8372 = vpop.f32.mrf.mxu0
  %v8373 = vadd.f32 %v8125, %v8372
  %8374 = vmatmul.f32.gmra.mxu0 %v8056
  %v8375 = vpop.f32.mrf.mxu0
  %v8376 = vadd.f32 %v8127, %v8375
  %8377 = vmatmul.f32.gmra.mxu0 %v8058
  %v8378 = vpop.f32.mrf.mxu0
  %v8379 = vadd.f32 %v8129, %v8378
  %8380 = vmatmul.f32.gmra.mxu0 %v8060
  %v8381 = vpop.f32.mrf.mxu0
  %v8382 = vadd.f32 %v8131, %v8381
  %8383 = vmatmul.f32.gmra.mxu0 %v8062
  %v8384 = vpop.f32.mrf.mxu0
  %v8385 = vadd.f32 %v8133, %v8384
  %8386 = vmatmul.f32.gmra.mxu0 %v8064
  %v8387 = vpop.f32.mrf.mxu0
  %v8388 = vadd.f32 %v8135, %v8387
  %8389 = vmatmul.f32.gmra.mxu0 %v8066
  %v8390 = vpop.f32.mrf.mxu0
  %v8391 = vadd.f32 %v8137, %v8390
  %8392 = vdwg.mxu0
  %8393 = vmatpush.msra.mxu0 0.0
  %8394 = vmatpush.msra.mxu0 0.0
  %8395 = vmatpush.msra.mxu0 0.0
  %8396 = vmatpush.msra.mxu0 0.0
  %8397 = vmatpush.msra.mxu0 0.0
  %8398 = vmatpush.msra.mxu0 0.0
  %8399 = vmatpush.msra.mxu0 0.0
  %8400 = vmatpush.msra.mxu0 0.0
  %8401 = vmatpush.msra.mxu0 0.0
  %8402 = vmatpush.msra.mxu0 0.0
  %8403 = vmatpush.msra.mxu0 0.0
  %8404 = vmatpush.msra.mxu0 0.0
  %8405 = vmatpush.msra.mxu0 0.0
  %8406 = vmatpush.msra.mxu0 0.0
  %8407 = vmatpush.msra.mxu0 %v8103
  %8408 = vmatpush.msra.mxu0 %v8101
  %8409 = vmatmul.f32.gmra.mxu0 %v8139
  %v8410 = vpop.f32.mrf.mxu0
  %v8411 = vadd.f32 %v8343, %v8410
  %8412 = vmatmul.f32.gmra.mxu0 %v8142
  %v8413 = vpop.f32.mrf.mxu0
  %v8414 = vadd.f32 %v8346, %v8413
  %8415 = vmatmul.f32.gmra.mxu0 %v8145
  %v8416 = vpop.f32.mrf.mxu0
  %v8417 = vadd.f32 %v8349, %v8416
  %8418 = vmatmul.f32.gmra.mxu0 %v8148
  %v8419 = vpop.f32.mrf.mxu0
  %v8420 = vadd.f32 %v8352, %v8419
  %8421 = vmatmul.f32.gmra.mxu0 %v8151
  %v8422 = vpop.f32.mrf.mxu0
  %v8423 = vadd.f32 %v8355, %v8422
  %8424 = vmatmul.f32.gmra.mxu0 %v8154
  %v8425 = vpop.f32.mrf.mxu0
  %v8426 = vadd.f32 %v8358, %v8425
  %8427 = vmatmul.f32.gmra.mxu0 %v8157
  %v8428 = vpop.f32.mrf.mxu0
  %v8429 = vadd.f32 %v8361, %v8428
  %8430 = vmatmul.f32.gmra.mxu0 %v8160
  %v8431 = vpop.f32.mrf.mxu0
  %v8432 = vadd.f32 %v8364, %v8431
  %8433 = vmatmul.f32.gmra.mxu0 %v8163
  %v8434 = vpop.f32.mrf.mxu0
  %v8435 = vadd.f32 %v8367, %v8434
  %8436 = vmatmul.f32.gmra.mxu0 %v8166
  %v8437 = vpop.f32.mrf.mxu0
  %v8438 = vadd.f32 %v8370, %v8437
  %8439 = vmatmul.f32.gmra.mxu0 %v8169
  %v8440 = vpop.f32.mrf.mxu0
  %v8441 = vadd.f32 %v8373, %v8440
  %8442 = vmatmul.f32.gmra.mxu0 %v8172
  %v8443 = vpop.f32.mrf.mxu0
  %v8444 = vadd.f32 %v8376, %v8443
  %8445 = vmatmul.f32.gmra.mxu0 %v8175
  %v8446 = vpop.f32.mrf.mxu0
  %v8447 = vadd.f32 %v8379, %v8446
  %8448 = vmatmul.f32.gmra.mxu0 %v8178
  %v8449 = vpop.f32.mrf.mxu0
  %v8450 = vadd.f32 %v8382, %v8449
  %8451 = vmatmul.f32.gmra.mxu0 %v8181
  %v8452 = vpop.f32.mrf.mxu0
  %v8453 = vadd.f32 %v8385, %v8452
  %8454 = vmatmul.f32.gmra.mxu0 %v8184
  %v8455 = vpop.f32.mrf.mxu0
  %v8456 = vadd.f32 %v8388, %v8455
  %8457 = vmatmul.f32.gmra.mxu0 %v8187
  %v8458 = vpop.f32.mrf.mxu0
  %v8459 = vadd.f32 %v8391, %v8458
  %8460 = vdwg.mxu0
  %8461 = vst [vmem:[#allocation4] sm:$0xff] %v8275
  %8462 = vst.msk [vmem:[#allocation4 + $0x8] sm:$0xff] %vm1091, %v8411
  %8463 = vst [vmem:[#allocation4 + $0x10] sm:$0xff] %v8278
  %8464 = vst.msk [vmem:[#allocation4 + $0x18] sm:$0xff] %vm1091, %v8414
  %8465 = vst [vmem:[#allocation4 + $0x20] sm:$0xff] %v8281
  %8466 = vst.msk [vmem:[#allocation4 + $0x28] sm:$0xff] %vm1091, %v8417
  %8467 = vst [vmem:[#allocation4 + $0x30] sm:$0xff] %v8284
  %8468 = vst.msk [vmem:[#allocation4 + $0x38] sm:$0xff] %vm1091, %v8420
  %8469 = vst [vmem:[#allocation4 + $0x40] sm:$0xff] %v8287
  %8470 = vst.msk [vmem:[#allocation4 + $0x48] sm:$0xff] %vm1091, %v8423
  %8471 = vst [vmem:[#allocation4 + $0x50] sm:$0xff] %v8290
  %8472 = vst.msk [vmem:[#allocation4 + $0x58] sm:$0xff] %vm1091, %v8426
  %8473 = vst [vmem:[#allocation4 + $0x60] sm:$0xff] %v8293
  %8474 = vst.msk [vmem:[#allocation4 + $0x68] sm:$0xff] %vm1091, %v8429
  %8475 = vst [vmem:[#allocation4 + $0x70] sm:$0xff] %v8296
  %8476 = vst.msk [vmem:[#allocation4 + $0x78] sm:$0xff] %vm1091, %v8432
  %8477 = vst [vmem:[#allocation4 + $0x80] sm:$0xff] %v8299
  %8478 = vst.msk [vmem:[#allocation4 + $0x88] sm:$0xff] %vm1091, %v8435
  %8479 = vst [vmem:[#allocation4 + $0x90] sm:$0xff] %v8302
  %8480 = vst.msk [vmem:[#allocation4 + $0x98] sm:$0xff] %vm1091, %v8438
  %8481 = vst [vmem:[#allocation4 + $0xa0] sm:$0xff] %v8305
  %8482 = vst.msk [vmem:[#allocation4 + $0xa8] sm:$0xff] %vm1091, %v8441
  %8483 = vst [vmem:[#allocation4 + $0xb0] sm:$0xff] %v8308
  %8484 = vst.msk [vmem:[#allocation4 + $0xb8] sm:$0xff] %vm1091, %v8444
  %8485 = vst [vmem:[#allocation4 + $0xc0] sm:$0xff] %v8311
  %8486 = vst.msk [vmem:[#allocation4 + $0xc8] sm:$0xff] %vm1091, %v8447
  %8487 = vst [vmem:[#allocation4 + $0xd0] sm:$0xff] %v8314
  %8488 = vst.msk [vmem:[#allocation4 + $0xd8] sm:$0xff] %vm1091, %v8450
  %8489 = vst [vmem:[#allocation4 + $0xe0] sm:$0xff] %v8317
  %8490 = vst.msk [vmem:[#allocation4 + $0xe8] sm:$0xff] %vm1091, %v8453
  %8491 = vst [vmem:[#allocation4 + $0xf0] sm:$0xff] %v8320
  %8492 = vst.msk [vmem:[#allocation4 + $0xf8] sm:$0xff] %vm1091, %v8456
  %8493 = vst [vmem:[#allocation4 + $0x100] sm:$0xff] %v8323
  %8494 = vst.msk [vmem:[#allocation4 + $0x108] sm:$0xff] %vm1091, %v8459
  %v8495 = vld [vmem:[#allocation4] sm:$0xff]
  %v8496 = vld [vmem:[#allocation4 + $0x8] sm:$0xff]
  %v8497 = vld [vmem:[#allocation4 + $0x10] sm:$0xff]
  %v8498 = vld [vmem:[#allocation4 + $0x18] sm:$0xff]
  %v8499 = vmax.f32 %v8495, %v8497
  %v8500 = vmax.f32 %v8496, %v8498
  %v8501 = vld [vmem:[#allocation4 + $0x20] sm:$0xff]
  %v8502 = vld [vmem:[#allocation4 + $0x28] sm:$0xff]
  %v8503 = vmax.f32 %v8499, %v8501
  %v8504 = vmax.f32 %v8500, %v8502
  %v8505 = vld [vmem:[#allocation4 + $0x30] sm:$0xff]
  %v8506 = vld [vmem:[#allocation4 + $0x38] sm:$0xff]
  %v8507 = vmax.f32 %v8503, %v8505
  %v8508 = vmax.f32 %v8504, %v8506
  %v8509 = vld [vmem:[#allocation4 + $0x40] sm:$0xff]
  %v8510 = vld [vmem:[#allocation4 + $0x48] sm:$0xff]
  %v8511 = vmax.f32 %v8507, %v8509
  %v8512 = vmax.f32 %v8508, %v8510
  %v8513 = vld [vmem:[#allocation4 + $0x50] sm:$0xff]
  %v8514 = vld [vmem:[#allocation4 + $0x58] sm:$0xff]
  %v8515 = vmax.f32 %v8511, %v8513
  %v8516 = vmax.f32 %v8512, %v8514
  %v8517 = vld [vmem:[#allocation4 + $0x60] sm:$0xff]
  %v8518 = vld [vmem:[#allocation4 + $0x68] sm:$0xff]
  %v8519 = vmax.f32 %v8515, %v8517
  %v8520 = vmax.f32 %v8516, %v8518
  %v8521 = vld [vmem:[#allocation4 + $0x70] sm:$0xff]
  %v8522 = vld [vmem:[#allocation4 + $0x78] sm:$0xff]
  %v8523 = vmax.f32 %v8519, %v8521
  %v8524 = vmax.f32 %v8520, %v8522
  %v8525 = vld [vmem:[#allocation4 + $0x80] sm:$0xff]
  %v8526 = vld [vmem:[#allocation4 + $0x88] sm:$0xff]
  %v8527 = vmax.f32 %v8523, %v8525
  %v8528 = vmax.f32 %v8524, %v8526
  %v8529 = vld [vmem:[#allocation4 + $0x90] sm:$0xff]
  %v8530 = vld [vmem:[#allocation4 + $0x98] sm:$0xff]
  %v8531 = vmax.f32 %v8527, %v8529
  %v8532 = vmax.f32 %v8528, %v8530
  %v8533 = vld [vmem:[#allocation4 + $0xa0] sm:$0xff]
  %v8534 = vld [vmem:[#allocation4 + $0xa8] sm:$0xff]
  %v8535 = vmax.f32 %v8531, %v8533
  %v8536 = vmax.f32 %v8532, %v8534
  %v8537 = vld [vmem:[#allocation4 + $0xb0] sm:$0xff]
  %v8538 = vld [vmem:[#allocation4 + $0xb8] sm:$0xff]
  %v8539 = vmax.f32 %v8535, %v8537
  %v8540 = vmax.f32 %v8536, %v8538
  %v8541 = vld [vmem:[#allocation4 + $0xc0] sm:$0xff]
  %v8542 = vld [vmem:[#allocation4 + $0xc8] sm:$0xff]
  %v8543 = vmax.f32 %v8539, %v8541
  %v8544 = vmax.f32 %v8540, %v8542
  %v8545 = vld [vmem:[#allocation4 + $0xd0] sm:$0xff]
  %v8546 = vld [vmem:[#allocation4 + $0xd8] sm:$0xff]
  %v8547 = vmax.f32 %v8543, %v8545
  %v8548 = vmax.f32 %v8544, %v8546
  %v8549 = vld [vmem:[#allocation4 + $0xe0] sm:$0xff]
  %v8550 = vld [vmem:[#allocation4 + $0xe8] sm:$0xff]
  %v8551 = vmax.f32 %v8547, %v8549
  %v8552 = vmax.f32 %v8548, %v8550
  %v8553 = vld [vmem:[#allocation4 + $0xf0] sm:$0xff]
  %v8554 = vld [vmem:[#allocation4 + $0xf8] sm:$0xff]
  %v8555 = vmax.f32 %v8551, %v8553
  %v8556 = vmax.f32 %v8552, %v8554
  %v8557 = vld [vmem:[#allocation4 + $0x100] sm:$0xff]
  %v8558 = vld [vmem:[#allocation4 + $0x108] sm:$0xff]
  %v8559 = vmax.f32 %v8555, %v8557
  %v8560 = vmax.f32 %v8556, %v8558
  %v8561 = vsub.f32 %v8495, %v8559
  %v8562 = vsub.f32 %v8496, %v8560
  %v8563 = vmul.f32 %v8561, 1.442695
  %v8564 = vpow.pop %v8563
  %v8565 = vmul.f32 %v8562, 1.442695
  %v8566 = vpow.pop %v8565
  %v8567 = vadd.f32 %v8564, 0.0
  %v8568 = vadd.f32 %v8566, 0.0
  %v8569 = vld [vmem:[#allocation3] sm:$0xff]
  %v8570 = vld [vmem:[#allocation3 + $0x8] sm:$0xff]
  %v8571 = vmul.f32 %v8564, %v8569
  %v8572 = vmul.f32 %v8566, %v8570
  %v8573 = vadd.f32 %v8571, 0.0
  %v8574 = vadd.f32 %v8572, 0.0
  %v8575 = vsub.f32 %v8497, %v8559
  %v8576 = vsub.f32 %v8498, %v8560
  %v8577 = vmul.f32 %v8575, 1.442695
  %v8578 = vpow.pop %v8577
  %v8579 = vmul.f32 %v8576, 1.442695
  %v8580 = vpow.pop %v8579
  %v8581 = vadd.f32 %v8567, %v8578
  %v8582 = vadd.f32 %v8568, %v8580
  %v8583 = vld [vmem:[#allocation3 + $0x10] sm:$0xff]
  %v8584 = vld [vmem:[#allocation3 + $0x18] sm:$0xff]
  %v8585 = vmul.f32 %v8578, %v8583
  %v8586 = vmul.f32 %v8580, %v8584
  %v8587 = vadd.f32 %v8573, %v8585
  %v8588 = vadd.f32 %v8574, %v8586
  %v8589 = vsub.f32 %v8501, %v8559
  %v8590 = vsub.f32 %v8502, %v8560
  %v8591 = vmul.f32 %v8589, 1.442695
  %v8592 = vpow.pop %v8591
  %v8593 = vmul.f32 %v8590, 1.442695
  %v8594 = vpow.pop %v8593
  %v8595 = vadd.f32 %v8581, %v8592
  %v8596 = vadd.f32 %v8582, %v8594
  %v8597 = vld [vmem:[#allocation3 + $0x20] sm:$0xff]
  %v8598 = vld [vmem:[#allocation3 + $0x28] sm:$0xff]
  %v8599 = vmul.f32 %v8592, %v8597
  %v8600 = vmul.f32 %v8594, %v8598
  %v8601 = vadd.f32 %v8587, %v8599
  %v8602 = vadd.f32 %v8588, %v8600
  %v8603 = vsub.f32 %v8505, %v8559
  %v8604 = vsub.f32 %v8506, %v8560
  %v8605 = vmul.f32 %v8603, 1.442695
  %v8606 = vpow.pop %v8605
  %v8607 = vmul.f32 %v8604, 1.442695
  %v8608 = vpow.pop %v8607
  %v8609 = vadd.f32 %v8595, %v8606
  %v8610 = vadd.f32 %v8596, %v8608
  %v8611 = vld [vmem:[#allocation3 + $0x30] sm:$0xff]
  %v8612 = vld [vmem:[#allocation3 + $0x38] sm:$0xff]
  %v8613 = vmul.f32 %v8606, %v8611
  %v8614 = vmul.f32 %v8608, %v8612
  %v8615 = vadd.f32 %v8601, %v8613
  %v8616 = vadd.f32 %v8602, %v8614
  %v8617 = vsub.f32 %v8509, %v8559
  %v8618 = vsub.f32 %v8510, %v8560
  %v8619 = vmul.f32 %v8617, 1.442695
  %v8620 = vpow.pop %v8619
  %v8621 = vmul.f32 %v8618, 1.442695
  %v8622 = vpow.pop %v8621
  %v8623 = vadd.f32 %v8609, %v8620
  %v8624 = vadd.f32 %v8610, %v8622
  %v8625 = vld [vmem:[#allocation3 + $0x40] sm:$0xff]
  %v8626 = vld [vmem:[#allocation3 + $0x48] sm:$0xff]
  %v8627 = vmul.f32 %v8620, %v8625
  %v8628 = vmul.f32 %v8622, %v8626
  %v8629 = vadd.f32 %v8615, %v8627
  %v8630 = vadd.f32 %v8616, %v8628
  %v8631 = vsub.f32 %v8513, %v8559
  %v8632 = vsub.f32 %v8514, %v8560
  %v8633 = vmul.f32 %v8631, 1.442695
  %v8634 = vpow.pop %v8633
  %v8635 = vmul.f32 %v8632, 1.442695
  %v8636 = vpow.pop %v8635
  %v8637 = vadd.f32 %v8623, %v8634
  %v8638 = vadd.f32 %v8624, %v8636
  %v8639 = vld [vmem:[#allocation3 + $0x50] sm:$0xff]
  %v8640 = vld [vmem:[#allocation3 + $0x58] sm:$0xff]
  %v8641 = vmul.f32 %v8634, %v8639
  %v8642 = vmul.f32 %v8636, %v8640
  %v8643 = vadd.f32 %v8629, %v8641
  %v8644 = vadd.f32 %v8630, %v8642
  %v8645 = vsub.f32 %v8517, %v8559
  %v8646 = vsub.f32 %v8518, %v8560
  %v8647 = vmul.f32 %v8645, 1.442695
  %v8648 = vpow.pop %v8647
  %v8649 = vmul.f32 %v8646, 1.442695
  %v8650 = vpow.pop %v8649
  %v8651 = vadd.f32 %v8637, %v8648
  %v8652 = vadd.f32 %v8638, %v8650
  %v8653 = vld [vmem:[#allocation3 + $0x60] sm:$0xff]
  %v8654 = vld [vmem:[#allocation3 + $0x68] sm:$0xff]
  %v8655 = vmul.f32 %v8648, %v8653
  %v8656 = vmul.f32 %v8650, %v8654
  %v8657 = vadd.f32 %v8643, %v8655
  %v8658 = vadd.f32 %v8644, %v8656
  %v8659 = vsub.f32 %v8521, %v8559
  %v8660 = vsub.f32 %v8522, %v8560
  %v8661 = vmul.f32 %v8659, 1.442695
  %v8662 = vpow.pop %v8661
  %v8663 = vmul.f32 %v8660, 1.442695
  %v8664 = vpow.pop %v8663
  %v8665 = vadd.f32 %v8651, %v8662
  %v8666 = vadd.f32 %v8652, %v8664
  %v8667 = vld [vmem:[#allocation3 + $0x70] sm:$0xff]
  %v8668 = vld [vmem:[#allocation3 + $0x78] sm:$0xff]
  %v8669 = vmul.f32 %v8662, %v8667
  %v8670 = vmul.f32 %v8664, %v8668
  %v8671 = vadd.f32 %v8657, %v8669
  %v8672 = vadd.f32 %v8658, %v8670
  %v8673 = vsub.f32 %v8525, %v8559
  %v8674 = vsub.f32 %v8526, %v8560
  %v8675 = vmul.f32 %v8673, 1.442695
  %v8676 = vpow.pop %v8675
  %v8677 = vmul.f32 %v8674, 1.442695
  %v8678 = vpow.pop %v8677
  %v8679 = vadd.f32 %v8665, %v8676
  %v8680 = vadd.f32 %v8666, %v8678
  %v8681 = vld [vmem:[#allocation3 + $0x80] sm:$0xff]
  %v8682 = vld [vmem:[#allocation3 + $0x88] sm:$0xff]
  %v8683 = vmul.f32 %v8676, %v8681
  %v8684 = vmul.f32 %v8678, %v8682
  %v8685 = vadd.f32 %v8671, %v8683
  %v8686 = vadd.f32 %v8672, %v8684
  %v8687 = vsub.f32 %v8529, %v8559
  %v8688 = vsub.f32 %v8530, %v8560
  %v8689 = vmul.f32 %v8687, 1.442695
  %v8690 = vpow.pop %v8689
  %v8691 = vmul.f32 %v8688, 1.442695
  %v8692 = vpow.pop %v8691
  %v8693 = vadd.f32 %v8679, %v8690
  %v8694 = vadd.f32 %v8680, %v8692
  %v8695 = vld [vmem:[#allocation3 + $0x90] sm:$0xff]
  %v8696 = vld [vmem:[#allocation3 + $0x98] sm:$0xff]
  %v8697 = vmul.f32 %v8690, %v8695
  %v8698 = vmul.f32 %v8692, %v8696
  %v8699 = vadd.f32 %v8685, %v8697
  %v8700 = vadd.f32 %v8686, %v8698
  %v8701 = vsub.f32 %v8533, %v8559
  %v8702 = vsub.f32 %v8534, %v8560
  %v8703 = vmul.f32 %v8701, 1.442695
  %v8704 = vpow.pop %v8703
  %v8705 = vmul.f32 %v8702, 1.442695
  %v8706 = vpow.pop %v8705
  %v8707 = vadd.f32 %v8693, %v8704
  %v8708 = vadd.f32 %v8694, %v8706
  %v8709 = vld [vmem:[#allocation3 + $0xa0] sm:$0xff]
  %v8710 = vld [vmem:[#allocation3 + $0xa8] sm:$0xff]
  %v8711 = vmul.f32 %v8704, %v8709
  %v8712 = vmul.f32 %v8706, %v8710
  %v8713 = vadd.f32 %v8699, %v8711
  %v8714 = vadd.f32 %v8700, %v8712
  %v8715 = vsub.f32 %v8537, %v8559
  %v8716 = vsub.f32 %v8538, %v8560
  %v8717 = vmul.f32 %v8715, 1.442695
  %v8718 = vpow.pop %v8717
  %v8719 = vmul.f32 %v8716, 1.442695
  %v8720 = vpow.pop %v8719
  %v8721 = vadd.f32 %v8707, %v8718
  %v8722 = vadd.f32 %v8708, %v8720
  %v8723 = vld [vmem:[#allocation3 + $0xb0] sm:$0xff]
  %v8724 = vld [vmem:[#allocation3 + $0xb8] sm:$0xff]
  %v8725 = vmul.f32 %v8718, %v8723
  %v8726 = vmul.f32 %v8720, %v8724
  %v8727 = vadd.f32 %v8713, %v8725
  %v8728 = vadd.f32 %v8714, %v8726
  %v8729 = vsub.f32 %v8541, %v8559
  %v8730 = vsub.f32 %v8542, %v8560
  %v8731 = vmul.f32 %v8729, 1.442695
  %v8732 = vpow.pop %v8731
  %v8733 = vmul.f32 %v8730, 1.442695
  %v8734 = vpow.pop %v8733
  %v8735 = vadd.f32 %v8721, %v8732
  %v8736 = vadd.f32 %v8722, %v8734
  %v8737 = vld [vmem:[#allocation3 + $0xc0] sm:$0xff]
  %v8738 = vld [vmem:[#allocation3 + $0xc8] sm:$0xff]
  %v8739 = vmul.f32 %v8732, %v8737
  %v8740 = vmul.f32 %v8734, %v8738
  %v8741 = vadd.f32 %v8727, %v8739
  %v8742 = vadd.f32 %v8728, %v8740
  %v8743 = vsub.f32 %v8545, %v8559
  %v8744 = vsub.f32 %v8546, %v8560
  %v8745 = vmul.f32 %v8743, 1.442695
  %v8746 = vpow.pop %v8745
  %v8747 = vmul.f32 %v8744, 1.442695
  %v8748 = vpow.pop %v8747
  %v8749 = vadd.f32 %v8735, %v8746
  %v8750 = vadd.f32 %v8736, %v8748
  %v8751 = vld [vmem:[#allocation3 + $0xd0] sm:$0xff]
  %v8752 = vld [vmem:[#allocation3 + $0xd8] sm:$0xff]
  %v8753 = vmul.f32 %v8746, %v8751
  %v8754 = vmul.f32 %v8748, %v8752
  %v8755 = vadd.f32 %v8741, %v8753
  %v8756 = vadd.f32 %v8742, %v8754
  %v8757 = vsub.f32 %v8549, %v8559
  %v8758 = vsub.f32 %v8550, %v8560
  %v8759 = vmul.f32 %v8757, 1.442695
  %v8760 = vpow.pop %v8759
  %v8761 = vmul.f32 %v8758, 1.442695
  %v8762 = vpow.pop %v8761
  %v8763 = vadd.f32 %v8749, %v8760
  %v8764 = vadd.f32 %v8750, %v8762
  %v8765 = vld [vmem:[#allocation3 + $0xe0] sm:$0xff]
  %v8766 = vld [vmem:[#allocation3 + $0xe8] sm:$0xff]
  %v8767 = vmul.f32 %v8760, %v8765
  %v8768 = vmul.f32 %v8762, %v8766
  %v8769 = vadd.f32 %v8755, %v8767
  %v8770 = vadd.f32 %v8756, %v8768
  %v8771 = vsub.f32 %v8553, %v8559
  %v8772 = vsub.f32 %v8554, %v8560
  %v8773 = vmul.f32 %v8771, 1.442695
  %v8774 = vpow.pop %v8773
  %v8775 = vmul.f32 %v8772, 1.442695
  %v8776 = vpow.pop %v8775
  %v8777 = vadd.f32 %v8763, %v8774
  %v8778 = vadd.f32 %v8764, %v8776
  %v8779 = vld [vmem:[#allocation3 + $0xf0] sm:$0xff]
  %v8780 = vld [vmem:[#allocation3 + $0xf8] sm:$0xff]
  %v8781 = vmul.f32 %v8774, %v8779
  %v8782 = vmul.f32 %v8776, %v8780
  %v8783 = vadd.f32 %v8769, %v8781
  %v8784 = vadd.f32 %v8770, %v8782
  %v8785 = vsub.f32 %v8557, %v8559
  %v8786 = vsub.f32 %v8558, %v8560
  %v8787 = vmul.f32 %v8785, 1.442695
  %v8788 = vpow.pop %v8787
  %v8789 = vmul.f32 %v8786, 1.442695
  %v8790 = vpow.pop %v8789
  %v8791 = vadd.f32 %v8777, %v8788
  %v8792 = vadd.f32 %v8778, %v8790
  %v8793 = vld [vmem:[#allocation3 + $0x100] sm:$0xff]
  %v8794 = vld [vmem:[#allocation3 + $0x108] sm:$0xff]
  %v8795 = vmul.f32 %v8788, %v8793
  %v8796 = vmul.f32 %v8790, %v8794
  %v8797 = vadd.f32 %v8783, %v8795
  %v8798 = vadd.f32 %v8784, %v8796
  %v8799 = vrcp.pop %v8791
  %v8800 = vrcp.pop %v8792
  %v8801 = vmul.f32 %v8797, %v8799
  %v8802 = vmul.f32 %v8798, %v8800
  %v8803 = vld [vmem:[%s9] sm:$0xff]
  %v8804 = vld [vmem:[%s9 + $0x8] sm:$0xff]
  %v8805 = vld [vmem:[%s9 + $0x10] sm:$0xff]
  %v8806 = vld [vmem:[%s9 + $0x18] sm:$0xff]
  %v8807 = vld [vmem:[%s9 + $0x20] sm:$0xff]
  %v8808 = vld [vmem:[%s9 + $0x28] sm:$0xff]
  %v8809 = vld [vmem:[%s9 + $0x30] sm:$0xff]
  %v8810 = vld [vmem:[%s9 + $0x38] sm:$0xff]
  %v8811 = vld [vmem:[%s9 + $0x40] sm:$0xff]
  %v8812 = vld [vmem:[%s9 + $0x48] sm:$0xff]
  %v8813 = vld [vmem:[%s9 + $0x50] sm:$0xff]
  %v8814 = vld [vmem:[%s9 + $0x58] sm:$0xff]
  %v8815 = vld [vmem:[%s9 + $0x60] sm:$0xff]
  %v8816 = vld [vmem:[%s9 + $0x68] sm:$0xff]
  %v8817 = vld [vmem:[%s9 + $0x70] sm:$0xff]
  %v8818 = vld [vmem:[%s9 + $0x78] sm:$0xff]
  %v8819 = vld [vmem:[%s9 + $0x80] sm:$0xff]
  %v8820 = vld [vmem:[%s9 + $0x88] sm:$0xff]
  %v8821 = vld [vmem:[%s10] sm:$0x1]
  %v8823 = vperm.slane %v8821, 0
  %v8826 = vsel %vm1091, %v8802, 0
  %8828 = vmatpush.msra.mxu0 %v8818
  %8829 = vmatpush.msra.mxu0 %v8817
  %8830 = vmatpush.msra.mxu0 %v8816
  %8831 = vmatpush.msra.mxu0 %v8815
  %8832 = vmatpush.msra.mxu0 %v8814
  %8833 = vmatpush.msra.mxu0 %v8813
  %8834 = vmatpush.msra.mxu0 %v8812
  %8835 = vmatpush.msra.mxu0 %v8811
  %8836 = vmatpush.msra.mxu0 %v8810
  %8837 = vmatpush.msra.mxu0 %v8809
  %8838 = vmatpush.msra.mxu0 %v8808
  %8839 = vmatpush.msra.mxu0 %v8807
  %8840 = vmatpush.msra.mxu0 %v8806
  %8841 = vmatpush.msra.mxu0 %v8805
  %8842 = vmatpush.msra.mxu0 %v8804
  %8843 = vmatpush.msra.mxu0 %v8803
  %8844 = vmatmul.f32.gmra.mxu0 %v8801
  %v8845 = vpop.f32.mrf.mxu0
  %v8846 = vadd.f32 %v8823, %v8845
  %8847 = vdwg.mxu0
  %8848 = vmatpush.msra.mxu0 0.0
  %8849 = vmatpush.msra.mxu0 0.0
  %8850 = vmatpush.msra.mxu0 0.0
  %8851 = vmatpush.msra.mxu0 0.0
  %8852 = vmatpush.msra.mxu0 0.0
  %8853 = vmatpush.msra.mxu0 0.0
  %8854 = vmatpush.msra.mxu0 0.0
  %8855 = vmatpush.msra.mxu0 0.0
  %8856 = vmatpush.msra.mxu0 0.0
  %8857 = vmatpush.msra.mxu0 0.0
  %8858 = vmatpush.msra.mxu0 0.0
  %8859 = vmatpush.msra.mxu0 0.0
  %8860 = vmatpush.msra.mxu0 0.0
  %8861 = vmatpush.msra.mxu0 0.0
  %8862 = vmatpush.msra.mxu0 %v8820
  %8863 = vmatpush.msra.mxu0 %v8819
  %8864 = vmatmul.f32.gmra.mxu0 %v8826
  %v8865 = vpop.f32.mrf.mxu0
  %v8866 = vadd.f32 %v8846, %v8865
  %8867 = vdwg.mxu0
  %v8868 = vmax.f32 %v8866, 0.0
  %v8869 = vld [vmem:[%s11] sm:$0xff]
  %v8870 = vld [vmem:[%s11 + $0x8] sm:$0xff]
  %v8871 = vld [vmem:[%s11 + $0x10] sm:$0xff]
  %v8872 = vld [vmem:[%s11 + $0x18] sm:$0xff]
  %v8873 = vld [vmem:[%s11 + $0x20] sm:$0xff]
  %v8874 = vld [vmem:[%s11 + $0x28] sm:$0xff]
  %v8875 = vld [vmem:[%s11 + $0x30] sm:$0xff]
  %v8876 = vld [vmem:[%s11 + $0x38] sm:$0xff]
  %v8877 = vld [vmem:[#allocation5] sm:$0x1]
  %v8879 = vperm.slane %v8877, 0
  %vm8881 = vcmask 523264
  %v8883 = vsel %vm8881, %v8868, 0
  %8885 = vmatpush.msra.mxu0 0.0
  %8886 = vmatpush.msra.mxu0 0.0
  %8887 = vmatpush.msra.mxu0 0.0
  %8888 = vmatpush.msra.mxu0 0.0
  %8889 = vmatpush.msra.mxu0 0.0
  %8890 = vmatpush.msra.mxu0 0.0
  %8891 = vmatpush.msra.mxu0 0.0
  %8892 = vmatpush.msra.mxu0 0.0
  %8893 = vmatpush.msra.mxu0 %v8876
  %8894 = vmatpush.msra.mxu0 %v8875
  %8895 = vmatpush.msra.mxu0 %v8874
  %8896 = vmatpush.msra.mxu0 %v8873
  %8897 = vmatpush.msra.mxu0 %v8872
  %8898 = vmatpush.msra.mxu0 %v8871
  %8899 = vmatpush.msra.mxu0 %v8870
  %8900 = vmatpush.msra.mxu0 %v8869
  %8901 = vmatmul.f32.gmra.mxu0 %v8883
  %v8902 = vpop.f32.mrf.mxu0
  %v8903 = vadd.f32 %v8879, %v8902
  %8904 = vdwg.mxu0
  %v8905 = vsub.f32 0.0, %v8903
  %v8906 = vmul.f32 %v8905, 1.442695
  %v8907 = vpow.pop %v8906
  %v8908 = vadd.f32 %v8907, 1.0
  %v8909 = vrcp.pop %v8908
  %vm8910 = vcmask 7168
  %8911 = vst.msk [vmem:[%s13] sm:$0xff] %vm8910, %v8909
  // Predicated region
  $region54: #{embed_attention_net.1} parent=0 // pred_check
    _
  $region55: #{embed_attention_net.1} parent=0 // pred_check_branch
    %8913 = sbr.rel (0) target = $region57
  $region56: #{embed_attention_net.1} parent=0 // pred_region
    _
  $region57: #{embed_attention_net.1} parent=0 // pred_fallthru
    _
  // Predicated region
  $region58: #{embed_attention_net.1} parent=0 // pred_check
    _
  $region59: #{embed_attention_net.1} parent=0 // pred_check_branch
    %8915 = sbr.rel (0) target = $region61
  $region60: #{embed_attention_net.1} parent=0 // pred_region
    _
  $region61: #{embed_attention_net.1} parent=0 // pred_fallthru
    _

</llo_original>
